<compile_context>
chip_gen: v7x
topology: tpu7x:2x2x1
jax: 0.10.0
libtpu: 0.0.40
codegen_flags: <defaults>
</compile_context>

<pallas_src>
import numpy as np

import jax
import jax.numpy as jnp
from jax import lax
from jax.experimental import pallas as pl
from jax.experimental.pallas import tpu as pltpu


# ---------------------------------------------------------------------------
# Fused Pallas kernel (one grid step == B_TILE images)
# ---------------------------------------------------------------------------
def _convnet_kernel(a1_ref, k1_ref, k2_ref, wfc1_ref, wfc2_ref,
                    b1_ref, b2_ref, bf1_ref, bf2_ref, o_ref):
    f32, bf16 = jnp.float32, jnp.bfloat16
    bt = o_ref.shape[0]                       # images in this grid step

    # ---- conv1 (1->32, k=5) + FULL 3x3 max-pool -------------------------------
    # a1_ref[dh] : (bt*16, 200) bf16, rows = b*16 + ph1 (ph1 0..11 valid),
    # lanes = kh*40 + w.  kh is folded into the contraction (K=200), the pool
    # column offset dw into 3 weight variants, the pool row offset dh into the
    # leading dim of A1, so the pool is just an elementwise max over 9 products.
    cm1 = None
    for dh in range(3):
        lhs = a1_ref[dh]                                            # (bt*16, 200)
        for dw in range(3):
            p = jnp.dot(lhs, k1_ref[dw], preferred_element_type=f32)  # (bt*16,384)
            cm1 = p if cm1 is None else jnp.maximum(cm1, p)
    y1 = jnp.maximum(cm1 + b1_ref[...], 0.0)          # (bt*16, 384)  f32
    y1v = y1.reshape(bt, 16, 384)                     # tile-aligned, layout-free

    # ---- conv2 (32->64, k=5) + horizontal half of 2x2 max-pool ----------------
    # kh-outer / dw-inner: 5 row-window slices total, reused by both dw variants.
    acc0 = None
    acc1 = None
    for kh in range(5):
        sl = y1v[:, kh:kh + 8, :].reshape(bt * 8, 384).astype(bf16)   # (bt*8, 384)
        p0 = jnp.dot(sl, k2_ref[kh, 0], preferred_element_type=f32)   # (bt*8, 256)
        p1 = jnp.dot(sl, k2_ref[kh, 1], preferred_element_type=f32)
        acc0 = p0 if acc0 is None else acc0 + p0
        acc1 = p1 if acc1 is None else acc1 + p1
    # bias + relu commute with the (per-channel) vertical max, so apply them now.
    y2 = jnp.maximum(jnp.maximum(acc0, acc1) + b2_ref[...], 0.0)       # (bt*8, 256)
    y2v = y2.reshape(bt, 8, 256)                      # rows per image: h2 = 0..7

    # ---- vertical half of 2x2 max-pool + NCHW-consistent flatten --------------
    # feats[:, p*256 + pw2*64 + oc] = y2_pooled[b, ph2=p, pw2, oc]
    feats = jnp.concatenate(
        [jnp.maximum(y2v[:, 2 * p, :], y2v[:, 2 * p + 1, :]) for p in range(4)],
        axis=1)                                        # (bt, 1024)

    # ---- fc1 (1024 -> 100, lane-padded to 128) + relu -------------------------
    # Dropout(p=0.25) is identity in eval/inference mode.
    # TODO(synk): training-mode dropout masking not implemented.
    h = jnp.dot(feats.astype(bf16), wfc1_ref[...], preferred_element_type=f32)
    h = jnp.maximum(h + bf1_ref[...], 0.0)             # (bt, 128); cols 100..127 = 0

    # ---- fc2 (100 -> 10, lane-padded to 128 so the store is lane-dense) -------
    out = jnp.dot(h.astype(bf16), wfc2_ref[...], preferred_element_type=f32)
    o_ref[...] = out + bf2_ref[...]                     # (bt, 128)


# ---------------------------------------------------------------------------
# One-time weight preparation (hoisted out of the per-call forward)
# ---------------------------------------------------------------------------
def _prepare_weights(params):
    """PyTorch-layout parameters -> lane-dense bf16 operands for the kernel."""
    f32, bf16 = jnp.float32, jnp.bfloat16
    w1 = jnp.asarray(params["w1"], f32)                # (32, 1, 5, 5)  (oc,ic,kh,kw)
    w2 = jnp.asarray(params["w2"], f32)                # (64, 32, 5, 5)

    # Selection tensors:
    #   S1[dw, w, pw, kw]  = 1 iff w  == 3*pw + dw + kw   (conv1 + pool-3 columns)
    #   S2[dw, W, pw2, kw] = 1 iff W  == 2*pw2 + dw + kw  (conv2 + pool-2 columns)
    S1 = np.zeros((3, 40, 12, 5), np.float32)
    for dw in range(3):
        for pw in range(12):
            for kw in range(5):
                S1[dw, 3 * pw + dw + kw, pw, kw] = 1.0
    S2 = np.zeros((2, 12, 4, 5), np.float32)
    for dw in range(2):
        for pw in range(4):
            for kw in range(5):
                S2[dw, 2 * pw + dw + kw, pw, kw] = 1.0

    # conv1: K1[dw] : (200, 384);  row = kh*40 + w,  col = pw1*32 + oc
    K1 = jnp.einsum("dWpk,chk->dhWpc", jnp.asarray(S1), w1[:, 0])   # (3,5,40,12,32)
    K1 = K1.reshape(3, 200, 384).astype(bf16)
    # conv2: K2[kh, dw] : (384, 256); row = pw1*32 + ic, col = pw2*64 + oc
    K2 = jnp.einsum("dWpk,oihk->hdWipo", jnp.asarray(S2), w2)       # (5,2,12,32,4,64)
    K2 = K2.reshape(5, 2, 384, 256).astype(bf16)

    # fc1: permute rows so the kernel's (ph2, pw2, oc) flatten order matches
    # PyTorch's NCHW .view(-1, 1024) order (oc*16 + ph2*4 + pw2); pad 100 -> 128.
    ph, pw, oc = np.meshgrid(np.arange(4), np.arange(4), np.arange(64),
                             indexing="ij")
    torch_idx = (oc * 16 + ph * 4 + pw).reshape(-1)                  # (1024,)
    wfc1 = jnp.asarray(params["fc1_w"], f32)[jnp.asarray(torch_idx), :]  # (1024,100)
    wfc1 = jnp.pad(wfc1, ((0, 0), (0, 28))).astype(bf16)                 # (1024,128)
    # fc2: pad (zero-activation) input rows 100 -> 128 and output cols 10 -> 128.
    wfc2 = jnp.pad(jnp.asarray(params["fc2_w"], f32),
                   ((0, 28), (0, 118))).astype(bf16)                     # (128, 128)

    b1w = jnp.tile(jnp.asarray(params["b1"], f32), 12).reshape(1, 384)
    b2w = jnp.tile(jnp.asarray(params["b2"], f32), 4).reshape(1, 256)
    bf1 = jnp.pad(jnp.asarray(params["fc1_b"], f32), (0, 28)).reshape(1, 128)
    bf2 = jnp.pad(jnp.asarray(params["fc2_b"], f32), (0, 118)).reshape(1, 128)
    return (K1, K2, wfc1, wfc2, b1w, b2w, bf1, bf2)


# ---------------------------------------------------------------------------
# Per-call input preparation: conv1 LHS with kh folded and dh pre-split
# ---------------------------------------------------------------------------
# _R_IDX[ph1, dh, kh] = 3*ph1 + dh + kh   (input row feeding pool row ph1,
#                                          pool offset dh, kernel row kh)
_R_IDX = (3 * np.arange(12)[:, None, None]
          + np.arange(3)[None, :, None]
          + np.arange(5)[None, None, :])                 # (12, 3, 5), max 39


def _build_conv1_lhs(x, b_tile):
    """x: (B, 1, 40, 40) -> A1: (3, Bp*16, 200) bf16 with 4 zero pad-rows/image."""
    B = x.shape[0]
    Bp = ((B + b_tile - 1) // b_tile) * b_tile
    x2 = x.reshape(B, 40, 40).astype(jnp.float32)
    if Bp != B:
        x2 = jnp.pad(x2, ((0, Bp - B), (0, 0), (0, 0)))
    a = x2[:, jnp.asarray(_R_IDX), :]                    # (Bp, 12, 3, 5, 40)
    a = jnp.transpose(a, (2, 0, 1, 3, 4))                # (3, Bp, 12, 5, 40)
    a = a.reshape(3, Bp, 12, 200)
    a = jnp.pad(a, ((0, 0), (0, 0), (0, 4), (0, 0)))     # (3, Bp, 16, 200)
    return a.reshape(3, Bp * 16, 200).astype(jnp.bfloat16), Bp


def _forward_impl(x, prepared, b_tile):
    K1, K2, wfc1, wfc2, b1w, b2w, bf1, bf2 = prepared
    B = x.shape[0]
    assert x.shape[1:] == (1, 40, 40), x.shape
    A1, Bp = _build_conv1_lhs(x, b_tile)
    nb = Bp // b_tile

    flops = int(2 * (9 * (Bp * 16) * 200 * 384          # conv1 (+pool3)
                     + 10 * (Bp * 8) * 384 * 256        # conv2 (+pool2 cols)
                     + Bp * 1024 * 128                  # fc1
                     + Bp * 128 * 128))                 # fc2
    bytes_accessed = int(2 * (A1.size + K1.size + K2.size + wfc1.size + wfc2.size)
                         + 4 * (b1w.size + b2w.size + bf1.size + bf2.size)
                         + 4 * Bp * 128)

    out = pl.pallas_call(
        _convnet_kernel,
        out_shape=jax.ShapeDtypeStruct((Bp, 128), jnp.float32),
        grid=(nb,),
        in_specs=[
            pl.BlockSpec((3, b_tile * 16, 200), lambda i: (0, i, 0)),   # conv1 LHS
            pl.BlockSpec((3, 200, 384), lambda i: (0, 0, 0)),           # conv1 W
            pl.BlockSpec((5, 2, 384, 256), lambda i: (0, 0, 0, 0)),     # conv2 W
            pl.BlockSpec((1024, 128), lambda i: (0, 0)),                # fc1 W
            pl.BlockSpec((128, 128), lambda i: (0, 0)),                 # fc2 W
            pl.BlockSpec((1, 384), lambda i: (0, 0)),                   # conv1 b
            pl.BlockSpec((1, 256), lambda i: (0, 0)),                   # conv2 b
            pl.BlockSpec((1, 128), lambda i: (0, 0)),                   # fc1 b
            pl.BlockSpec((1, 128), lambda i: (0, 0)),                   # fc2 b
        ],
        out_specs=pl.BlockSpec((b_tile, 128), lambda i: (i, 0)),
        compiler_params=pltpu.CompilerParams(
            dimension_semantics=("parallel",),          # v7x: shard batch tiles
            vmem_limit_bytes=32 * 1024 * 1024),
        cost_estimate=pl.CostEstimate(flops=flops, transcendentals=0,
                                      bytes_accessed=bytes_accessed),
    )(A1, K1, K2, wfc1, wfc2, b1w, b2w, bf1, bf2)
    return out[:B, :10]


def build_convnet(params, b_tile=8):
    """Prepare weights ONCE and return a jitted forward: x (B,1,40,40) -> (B,10)."""
    prepared = _prepare_weights(params)       # eager, once per parameter set

    @jax.jit
    def _fwd(x, prep):
        return _forward_impl(x, prep, b_tile)

    return lambda x: _fwd(x, prepared)


# ---------------------------------------------------------------------------
# Pure-JAX reference (f32) for the correctness check
# ---------------------------------------------------------------------------
def convnet_reference(x, params):
    dn = ("NCHW", "OIHW", "NCHW")
    y = lax.conv_general_dilated(x, params["w1"], (1, 1), "VALID", dimension_numbers=dn)
    y = y + params["b1"].reshape(1, -1, 1, 1)
    y = lax.reduce_window(y, -jnp.inf, lax.max, (1, 1, 3, 3), (1, 1, 3, 3), "VALID")
    y = jnp.maximum(y, 0.0)
    y = lax.conv_general_dilated(y, params["w2"], (1, 1), "VALID", dimension_numbers=dn)
    y = y + params["b2"].reshape(1, -1, 1, 1)
    y = lax.reduce_window(y, -jnp.inf, lax.max, (1, 1, 2, 2), (1, 1, 2, 2), "VALID")
    y = jnp.maximum(y, 0.0)
    y = y.reshape(y.shape[0], -1)
    y = jnp.maximum(y @ params["fc1_w"] + params["fc1_b"], 0.0)
    y = y @ params["fc2_w"] + params["fc2_b"]
    return y


def init_params(key):
    ks = jax.random.split(key, 8)
    s = 0.05
    return {
        "w1": s * jax.random.normal(ks[0], (32, 1, 5, 5), jnp.float32),
        "b1": s * jax.random.normal(ks[1], (32,), jnp.float32),
        "w2": s * jax.random.normal(ks[2], (64, 32, 5, 5), jnp.float32),
        "b2": s * jax.random.normal(ks[3], (64,), jnp.float32),
        "fc1_w": s * jax.random.normal(ks[4], (1024, 100), jnp.float32),
        "fc1_b": s * jax.random.normal(ks[5], (100,), jnp.float32),
        "fc2_w": s * jax.random.normal(ks[6], (100, 10), jnp.float32),
        "fc2_b": s * jax.random.normal(ks[7], (10,), jnp.float32),
    }


if __name__ == "__main__":
    key = jax.random.PRNGKey(0)
    pkey, xkey = jax.random.split(key)
    params = init_params(pkey)
    # 40x40 single-channel input implied by fc1's 1024 = 64*4*4 flatten.
    # batch=16 with B_TILE=8 -> grid of 2 steps (exercises pipelining and the
    # "parallel" batch axis on v7x's two TensorCores).
    x = jax.random.normal(xkey, (16, 1, 40, 40), jnp.float32)

    forward = build_convnet(params, b_tile=8)
    out = jax.block_until_ready(forward(x))
    assert out.shape == (16, 10), out.shape

    ref = jax.block_until_ready(convnet_reference(x, params))
    max_err = float(jnp.max(jnp.abs(out - ref)))
    # bf16 matmul operands -> relaxed tolerance vs. the f32 reference.
    assert max_err < 5e-2, f"max abs err {max_err}"

    print("KERNEL_OK")
</pallas_src>

<mosaic_0001>
module attributes {stable_mosaic.version = 11 : i64} {
  func.func @_convnet_kernel(%arg0: i32, %arg1: memref<3x128x200xbf16, #tpu.memory_space<vmem>>, %arg2: memref<3x200x384xbf16, #tpu.memory_space<vmem>>, %arg3: memref<5x2x384x256xbf16, #tpu.memory_space<vmem>>, %arg4: memref<1024x128xbf16, #tpu.memory_space<vmem>>, %arg5: memref<128x128xbf16, #tpu.memory_space<vmem>>, %arg6: memref<1x384xf32, #tpu.memory_space<vmem>>, %arg7: memref<1x256xf32, #tpu.memory_space<vmem>>, %arg8: memref<1x128xf32, #tpu.memory_space<vmem>>, %arg9: memref<1x128xf32, #tpu.memory_space<vmem>>, %arg10: memref<8x128xf32, #tpu.memory_space<vmem>>) attributes {dimension_semantics = [#tpu.dimension_semantics<parallel>], iteration_bounds = array<i64: 2>, scalar_prefetch = 0 : i64, scratch_operands = 0 : i64, tpu.core_type = #tpu.core_type<tc>, window_params = [{transform_indices = @transform_0, window_bounds = array<i64: 3, 128, 200>}, {pipeline_mode = #tpu.pipeline_mode<synchronous>, transform_indices = @transform_1, window_bounds = array<i64: 3, 200, 384>}, {pipeline_mode = #tpu.pipeline_mode<synchronous>, transform_indices = @transform_2, window_bounds = array<i64: 5, 2, 384, 256>}, {pipeline_mode = #tpu.pipeline_mode<synchronous>, transform_indices = @transform_3, window_bounds = array<i64: 1024, 128>}, {pipeline_mode = #tpu.pipeline_mode<synchronous>, transform_indices = @transform_4, window_bounds = array<i64: 128, 128>}, {pipeline_mode = #tpu.pipeline_mode<synchronous>, transform_indices = @transform_5, window_bounds = array<i64: 1, 384>}, {pipeline_mode = #tpu.pipeline_mode<synchronous>, transform_indices = @transform_6, window_bounds = array<i64: 1, 256>}, {pipeline_mode = #tpu.pipeline_mode<synchronous>, transform_indices = @transform_7, window_bounds = array<i64: 1, 128>}, {pipeline_mode = #tpu.pipeline_mode<synchronous>, transform_indices = @transform_8, window_bounds = array<i64: 1, 128>}, {transform_indices = @transform_9, window_bounds = array<i64: 8, 128>}]} {
    %c0 = arith.constant 0 : index
    %c0_0 = arith.constant 0 : index
    %c0_1 = arith.constant 0 : index
    %0 = vector.load %arg1[%c0, %c0_0, %c0_1] : memref<3x128x200xbf16, #tpu.memory_space<vmem>>, vector<1x128x200xbf16>
    %1 = vector.shape_cast %0 : vector<1x128x200xbf16> to vector<128x200xbf16>
    %c0_2 = arith.constant 0 : index
    %c0_3 = arith.constant 0 : index
    %c0_4 = arith.constant 0 : index
    %2 = vector.load %arg2[%c0_2, %c0_3, %c0_4] : memref<3x200x384xbf16, #tpu.memory_space<vmem>>, vector<1x200x384xbf16>
    %3 = vector.shape_cast %2 : vector<1x200x384xbf16> to vector<200x384xbf16>
    %cst = arith.constant dense<0.000000e+00> : vector<128x384xf32>
    %4 = tpu.matmul %1, %3, %cst {dimension_numbers = #tpu.dot_dimension_numbers<[1], [0], [0], [1], [0, 0, 1, 1], [], []>} : vector<128x200xbf16>, vector<200x384xbf16>, vector<128x384xf32> -> vector<128x384xf32>
    %c1 = arith.constant 1 : index
    %c0_5 = arith.constant 0 : index
    %c0_6 = arith.constant 0 : index
    %5 = vector.load %arg2[%c1, %c0_5, %c0_6] : memref<3x200x384xbf16, #tpu.memory_space<vmem>>, vector<1x200x384xbf16>
    %6 = vector.shape_cast %5 : vector<1x200x384xbf16> to vector<200x384xbf16>
    %cst_7 = arith.constant dense<0.000000e+00> : vector<128x384xf32>
    %7 = tpu.matmul %1, %6, %cst_7 {dimension_numbers = #tpu.dot_dimension_numbers<[1], [0], [0], [1], [0, 0, 1, 1], [], []>} : vector<128x200xbf16>, vector<200x384xbf16>, vector<128x384xf32> -> vector<128x384xf32>
    %8 = arith.maximumf %4, %7 : vector<128x384xf32>
    %c2 = arith.constant 2 : index
    %c0_8 = arith.constant 0 : index
    %c0_9 = arith.constant 0 : index
    %9 = vector.load %arg2[%c2, %c0_8, %c0_9] : memref<3x200x384xbf16, #tpu.memory_space<vmem>>, vector<1x200x384xbf16>
    %10 = vector.shape_cast %9 : vector<1x200x384xbf16> to vector<200x384xbf16>
    %cst_10 = arith.constant dense<0.000000e+00> : vector<128x384xf32>
    %11 = tpu.matmul %1, %10, %cst_10 {dimension_numbers = #tpu.dot_dimension_numbers<[1], [0], [0], [1], [0, 0, 1, 1], [], []>} : vector<128x200xbf16>, vector<200x384xbf16>, vector<128x384xf32> -> vector<128x384xf32>
    %12 = arith.maximumf %8, %11 : vector<128x384xf32>
    %c1_11 = arith.constant 1 : index
    %c0_12 = arith.constant 0 : index
    %c0_13 = arith.constant 0 : index
    %13 = vector.load %arg1[%c1_11, %c0_12, %c0_13] : memref<3x128x200xbf16, #tpu.memory_space<vmem>>, vector<1x128x200xbf16>
    %14 = vector.shape_cast %13 : vector<1x128x200xbf16> to vector<128x200xbf16>
    %c0_14 = arith.constant 0 : index
    %c0_15 = arith.constant 0 : index
    %c0_16 = arith.constant 0 : index
    %15 = vector.load %arg2[%c0_14, %c0_15, %c0_16] : memref<3x200x384xbf16, #tpu.memory_space<vmem>>, vector<1x200x384xbf16>
    %16 = vector.shape_cast %15 : vector<1x200x384xbf16> to vector<200x384xbf16>
    %cst_17 = arith.constant dense<0.000000e+00> : vector<128x384xf32>
    %17 = tpu.matmul %14, %16, %cst_17 {dimension_numbers = #tpu.dot_dimension_numbers<[1], [0], [0], [1], [0, 0, 1, 1], [], []>} : vector<128x200xbf16>, vector<200x384xbf16>, vector<128x384xf32> -> vector<128x384xf32>
    %18 = arith.maximumf %12, %17 : vector<128x384xf32>
    %c1_18 = arith.constant 1 : index
    %c0_19 = arith.constant 0 : index
    %c0_20 = arith.constant 0 : index
    %19 = vector.load %arg2[%c1_18, %c0_19, %c0_20] : memref<3x200x384xbf16, #tpu.memory_space<vmem>>, vector<1x200x384xbf16>
    %20 = vector.shape_cast %19 : vector<1x200x384xbf16> to vector<200x384xbf16>
    %cst_21 = arith.constant dense<0.000000e+00> : vector<128x384xf32>
    %21 = tpu.matmul %14, %20, %cst_21 {dimension_numbers = #tpu.dot_dimension_numbers<[1], [0], [0], [1], [0, 0, 1, 1], [], []>} : vector<128x200xbf16>, vector<200x384xbf16>, vector<128x384xf32> -> vector<128x384xf32>
    %22 = arith.maximumf %18, %21 : vector<128x384xf32>
    %c2_22 = arith.constant 2 : index
    %c0_23 = arith.constant 0 : index
    %c0_24 = arith.constant 0 : index
    %23 = vector.load %arg2[%c2_22, %c0_23, %c0_24] : memref<3x200x384xbf16, #tpu.memory_space<vmem>>, vector<1x200x384xbf16>
    %24 = vector.shape_cast %23 : vector<1x200x384xbf16> to vector<200x384xbf16>
    %cst_25 = arith.constant dense<0.000000e+00> : vector<128x384xf32>
    %25 = tpu.matmul %14, %24, %cst_25 {dimension_numbers = #tpu.dot_dimension_numbers<[1], [0], [0], [1], [0, 0, 1, 1], [], []>} : vector<128x200xbf16>, vector<200x384xbf16>, vector<128x384xf32> -> vector<128x384xf32>
    %26 = arith.maximumf %22, %25 : vector<128x384xf32>
    %c2_26 = arith.constant 2 : index
    %c0_27 = arith.constant 0 : index
    %c0_28 = arith.constant 0 : index
    %27 = vector.load %arg1[%c2_26, %c0_27, %c0_28] : memref<3x128x200xbf16, #tpu.memory_space<vmem>>, vector<1x128x200xbf16>
    %28 = vector.shape_cast %27 : vector<1x128x200xbf16> to vector<128x200xbf16>
    %c0_29 = arith.constant 0 : index
    %c0_30 = arith.constant 0 : index
    %c0_31 = arith.constant 0 : index
    %29 = vector.load %arg2[%c0_29, %c0_30, %c0_31] : memref<3x200x384xbf16, #tpu.memory_space<vmem>>, vector<1x200x384xbf16>
    %30 = vector.shape_cast %29 : vector<1x200x384xbf16> to vector<200x384xbf16>
    %cst_32 = arith.constant dense<0.000000e+00> : vector<128x384xf32>
    %31 = tpu.matmul %28, %30, %cst_32 {dimension_numbers = #tpu.dot_dimension_numbers<[1], [0], [0], [1], [0, 0, 1, 1], [], []>} : vector<128x200xbf16>, vector<200x384xbf16>, vector<128x384xf32> -> vector<128x384xf32>
    %32 = arith.maximumf %26, %31 : vector<128x384xf32>
    %c1_33 = arith.constant 1 : index
    %c0_34 = arith.constant 0 : index
    %c0_35 = arith.constant 0 : index
    %33 = vector.load %arg2[%c1_33, %c0_34, %c0_35] : memref<3x200x384xbf16, #tpu.memory_space<vmem>>, vector<1x200x384xbf16>
    %34 = vector.shape_cast %33 : vector<1x200x384xbf16> to vector<200x384xbf16>
    %cst_36 = arith.constant dense<0.000000e+00> : vector<128x384xf32>
    %35 = tpu.matmul %28, %34, %cst_36 {dimension_numbers = #tpu.dot_dimension_numbers<[1], [0], [0], [1], [0, 0, 1, 1], [], []>} : vector<128x200xbf16>, vector<200x384xbf16>, vector<128x384xf32> -> vector<128x384xf32>
    %36 = arith.maximumf %32, %35 : vector<128x384xf32>
    %c2_37 = arith.constant 2 : index
    %c0_38 = arith.constant 0 : index
    %c0_39 = arith.constant 0 : index
    %37 = vector.load %arg2[%c2_37, %c0_38, %c0_39] : memref<3x200x384xbf16, #tpu.memory_space<vmem>>, vector<1x200x384xbf16>
    %38 = vector.shape_cast %37 : vector<1x200x384xbf16> to vector<200x384xbf16>
    %cst_40 = arith.constant dense<0.000000e+00> : vector<128x384xf32>
    %39 = tpu.matmul %28, %38, %cst_40 {dimension_numbers = #tpu.dot_dimension_numbers<[1], [0], [0], [1], [0, 0, 1, 1], [], []>} : vector<128x200xbf16>, vector<200x384xbf16>, vector<128x384xf32> -> vector<128x384xf32>
    %40 = arith.maximumf %36, %39 : vector<128x384xf32>
    %c0_41 = arith.constant 0 : index
    %c0_42 = arith.constant 0 : index
    %41 = vector.load %arg6[%c0_41, %c0_42] : memref<1x384xf32, #tpu.memory_space<vmem>>, vector<1x384xf32>
    %42 = vector.broadcast %41 : vector<1x384xf32> to vector<128x384xf32>
    %43 = arith.addf %40, %42 : vector<128x384xf32>
    %cst_43 = arith.constant 0.000000e+00 : f32
    %44 = vector.broadcast %cst_43 : f32 to vector<128x384xf32>
    %45 = arith.maximumf %43, %44 : vector<128x384xf32>
    %46 = vector.shape_cast %45 : vector<128x384xf32> to vector<8x16x384xf32>
    %47 = vector.extract_strided_slice %46 {offsets = [0, 0, 0], sizes = [8, 8, 384], strides = [1, 1, 1]} : vector<8x16x384xf32> to vector<8x8x384xf32>
    %48 = vector.shape_cast %47 : vector<8x8x384xf32> to vector<64x384xf32>
    %49 = arith.truncf %48 : vector<64x384xf32> to vector<64x384xbf16>
    %c0_44 = arith.constant 0 : index
    %c0_45 = arith.constant 0 : index
    %c0_46 = arith.constant 0 : index
    %c0_47 = arith.constant 0 : index
    %50 = vector.load %arg3[%c0_44, %c0_45, %c0_46, %c0_47] : memref<5x2x384x256xbf16, #tpu.memory_space<vmem>>, vector<1x1x384x256xbf16>
    %51 = vector.shape_cast %50 : vector<1x1x384x256xbf16> to vector<384x256xbf16>
    %cst_48 = arith.constant dense<0.000000e+00> : vector<64x256xf32>
    %52 = tpu.matmul %49, %51, %cst_48 {dimension_numbers = #tpu.dot_dimension_numbers<[1], [0], [0], [1], [0, 0, 1, 1], [], []>} : vector<64x384xbf16>, vector<384x256xbf16>, vector<64x256xf32> -> vector<64x256xf32>
    %c0_49 = arith.constant 0 : index
    %c1_50 = arith.constant 1 : index
    %c0_51 = arith.constant 0 : index
    %c0_52 = arith.constant 0 : index
    %53 = vector.load %arg3[%c0_49, %c1_50, %c0_51, %c0_52] : memref<5x2x384x256xbf16, #tpu.memory_space<vmem>>, vector<1x1x384x256xbf16>
    %54 = vector.shape_cast %53 : vector<1x1x384x256xbf16> to vector<384x256xbf16>
    %cst_53 = arith.constant dense<0.000000e+00> : vector<64x256xf32>
    %55 = tpu.matmul %49, %54, %cst_53 {dimension_numbers = #tpu.dot_dimension_numbers<[1], [0], [0], [1], [0, 0, 1, 1], [], []>} : vector<64x384xbf16>, vector<384x256xbf16>, vector<64x256xf32> -> vector<64x256xf32>
    %56 = vector.extract_strided_slice %46 {offsets = [0, 1, 0], sizes = [8, 8, 384], strides = [1, 1, 1]} : vector<8x16x384xf32> to vector<8x8x384xf32>
    %57 = vector.shape_cast %56 : vector<8x8x384xf32> to vector<64x384xf32>
    %58 = arith.truncf %57 : vector<64x384xf32> to vector<64x384xbf16>
    %c1_54 = arith.constant 1 : index
    %c0_55 = arith.constant 0 : index
    %c0_56 = arith.constant 0 : index
    %c0_57 = arith.constant 0 : index
    %59 = vector.load %arg3[%c1_54, %c0_55, %c0_56, %c0_57] : memref<5x2x384x256xbf16, #tpu.memory_space<vmem>>, vector<1x1x384x256xbf16>
    %60 = vector.shape_cast %59 : vector<1x1x384x256xbf16> to vector<384x256xbf16>
    %cst_58 = arith.constant dense<0.000000e+00> : vector<64x256xf32>
    %61 = tpu.matmul %58, %60, %cst_58 {dimension_numbers = #tpu.dot_dimension_numbers<[1], [0], [0], [1], [0, 0, 1, 1], [], []>} : vector<64x384xbf16>, vector<384x256xbf16>, vector<64x256xf32> -> vector<64x256xf32>
    %c1_59 = arith.constant 1 : index
    %c1_60 = arith.constant 1 : index
    %c0_61 = arith.constant 0 : index
    %c0_62 = arith.constant 0 : index
    %62 = vector.load %arg3[%c1_59, %c1_60, %c0_61, %c0_62] : memref<5x2x384x256xbf16, #tpu.memory_space<vmem>>, vector<1x1x384x256xbf16>
    %63 = vector.shape_cast %62 : vector<1x1x384x256xbf16> to vector<384x256xbf16>
    %cst_63 = arith.constant dense<0.000000e+00> : vector<64x256xf32>
    %64 = tpu.matmul %58, %63, %cst_63 {dimension_numbers = #tpu.dot_dimension_numbers<[1], [0], [0], [1], [0, 0, 1, 1], [], []>} : vector<64x384xbf16>, vector<384x256xbf16>, vector<64x256xf32> -> vector<64x256xf32>
    %65 = arith.addf %52, %61 : vector<64x256xf32>
    %66 = arith.addf %55, %64 : vector<64x256xf32>
    %67 = vector.extract_strided_slice %46 {offsets = [0, 2, 0], sizes = [8, 8, 384], strides = [1, 1, 1]} : vector<8x16x384xf32> to vector<8x8x384xf32>
    %68 = vector.shape_cast %67 : vector<8x8x384xf32> to vector<64x384xf32>
    %69 = arith.truncf %68 : vector<64x384xf32> to vector<64x384xbf16>
    %c2_64 = arith.constant 2 : index
    %c0_65 = arith.constant 0 : index
    %c0_66 = arith.constant 0 : index
    %c0_67 = arith.constant 0 : index
    %70 = vector.load %arg3[%c2_64, %c0_65, %c0_66, %c0_67] : memref<5x2x384x256xbf16, #tpu.memory_space<vmem>>, vector<1x1x384x256xbf16>
    %71 = vector.shape_cast %70 : vector<1x1x384x256xbf16> to vector<384x256xbf16>
    %cst_68 = arith.constant dense<0.000000e+00> : vector<64x256xf32>
    %72 = tpu.matmul %69, %71, %cst_68 {dimension_numbers = #tpu.dot_dimension_numbers<[1], [0], [0], [1], [0, 0, 1, 1], [], []>} : vector<64x384xbf16>, vector<384x256xbf16>, vector<64x256xf32> -> vector<64x256xf32>
    %c2_69 = arith.constant 2 : index
    %c1_70 = arith.constant 1 : index
    %c0_71 = arith.constant 0 : index
    %c0_72 = arith.constant 0 : index
    %73 = vector.load %arg3[%c2_69, %c1_70, %c0_71, %c0_72] : memref<5x2x384x256xbf16, #tpu.memory_space<vmem>>, vector<1x1x384x256xbf16>
    %74 = vector.shape_cast %73 : vector<1x1x384x256xbf16> to vector<384x256xbf16>
    %cst_73 = arith.constant dense<0.000000e+00> : vector<64x256xf32>
    %75 = tpu.matmul %69, %74, %cst_73 {dimension_numbers = #tpu.dot_dimension_numbers<[1], [0], [0], [1], [0, 0, 1, 1], [], []>} : vector<64x384xbf16>, vector<384x256xbf16>, vector<64x256xf32> -> vector<64x256xf32>
    %76 = arith.addf %65, %72 : vector<64x256xf32>
    %77 = arith.addf %66, %75 : vector<64x256xf32>
    %78 = vector.extract_strided_slice %46 {offsets = [0, 3, 0], sizes = [8, 8, 384], strides = [1, 1, 1]} : vector<8x16x384xf32> to vector<8x8x384xf32>
    %79 = vector.shape_cast %78 : vector<8x8x384xf32> to vector<64x384xf32>
    %80 = arith.truncf %79 : vector<64x384xf32> to vector<64x384xbf16>
    %c3 = arith.constant 3 : index
    %c0_74 = arith.constant 0 : index
    %c0_75 = arith.constant 0 : index
    %c0_76 = arith.constant 0 : index
    %81 = vector.load %arg3[%c3, %c0_74, %c0_75, %c0_76] : memref<5x2x384x256xbf16, #tpu.memory_space<vmem>>, vector<1x1x384x256xbf16>
    %82 = vector.shape_cast %81 : vector<1x1x384x256xbf16> to vector<384x256xbf16>
    %cst_77 = arith.constant dense<0.000000e+00> : vector<64x256xf32>
    %83 = tpu.matmul %80, %82, %cst_77 {dimension_numbers = #tpu.dot_dimension_numbers<[1], [0], [0], [1], [0, 0, 1, 1], [], []>} : vector<64x384xbf16>, vector<384x256xbf16>, vector<64x256xf32> -> vector<64x256xf32>
    %c3_78 = arith.constant 3 : index
    %c1_79 = arith.constant 1 : index
    %c0_80 = arith.constant 0 : index
    %c0_81 = arith.constant 0 : index
    %84 = vector.load %arg3[%c3_78, %c1_79, %c0_80, %c0_81] : memref<5x2x384x256xbf16, #tpu.memory_space<vmem>>, vector<1x1x384x256xbf16>
    %85 = vector.shape_cast %84 : vector<1x1x384x256xbf16> to vector<384x256xbf16>
    %cst_82 = arith.constant dense<0.000000e+00> : vector<64x256xf32>
    %86 = tpu.matmul %80, %85, %cst_82 {dimension_numbers = #tpu.dot_dimension_numbers<[1], [0], [0], [1], [0, 0, 1, 1], [], []>} : vector<64x384xbf16>, vector<384x256xbf16>, vector<64x256xf32> -> vector<64x256xf32>
    %87 = arith.addf %76, %83 : vector<64x256xf32>
    %88 = arith.addf %77, %86 : vector<64x256xf32>
    %89 = vector.extract_strided_slice %46 {offsets = [0, 4, 0], sizes = [8, 8, 384], strides = [1, 1, 1]} : vector<8x16x384xf32> to vector<8x8x384xf32>
    %90 = vector.shape_cast %89 : vector<8x8x384xf32> to vector<64x384xf32>
    %91 = arith.truncf %90 : vector<64x384xf32> to vector<64x384xbf16>
    %c4 = arith.constant 4 : index
    %c0_83 = arith.constant 0 : index
    %c0_84 = arith.constant 0 : index
    %c0_85 = arith.constant 0 : index
    %92 = vector.load %arg3[%c4, %c0_83, %c0_84, %c0_85] : memref<5x2x384x256xbf16, #tpu.memory_space<vmem>>, vector<1x1x384x256xbf16>
    %93 = vector.shape_cast %92 : vector<1x1x384x256xbf16> to vector<384x256xbf16>
    %cst_86 = arith.constant dense<0.000000e+00> : vector<64x256xf32>
    %94 = tpu.matmul %91, %93, %cst_86 {dimension_numbers = #tpu.dot_dimension_numbers<[1], [0], [0], [1], [0, 0, 1, 1], [], []>} : vector<64x384xbf16>, vector<384x256xbf16>, vector<64x256xf32> -> vector<64x256xf32>
    %c4_87 = arith.constant 4 : index
    %c1_88 = arith.constant 1 : index
    %c0_89 = arith.constant 0 : index
    %c0_90 = arith.constant 0 : index
    %95 = vector.load %arg3[%c4_87, %c1_88, %c0_89, %c0_90] : memref<5x2x384x256xbf16, #tpu.memory_space<vmem>>, vector<1x1x384x256xbf16>
    %96 = vector.shape_cast %95 : vector<1x1x384x256xbf16> to vector<384x256xbf16>
    %cst_91 = arith.constant dense<0.000000e+00> : vector<64x256xf32>
    %97 = tpu.matmul %91, %96, %cst_91 {dimension_numbers = #tpu.dot_dimension_numbers<[1], [0], [0], [1], [0, 0, 1, 1], [], []>} : vector<64x384xbf16>, vector<384x256xbf16>, vector<64x256xf32> -> vector<64x256xf32>
    %98 = arith.addf %87, %94 : vector<64x256xf32>
    %99 = arith.addf %88, %97 : vector<64x256xf32>
    %100 = arith.maximumf %98, %99 : vector<64x256xf32>
    %c0_92 = arith.constant 0 : index
    %c0_93 = arith.constant 0 : index
    %101 = vector.load %arg7[%c0_92, %c0_93] : memref<1x256xf32, #tpu.memory_space<vmem>>, vector<1x256xf32>
    %102 = vector.broadcast %101 : vector<1x256xf32> to vector<64x256xf32>
    %103 = arith.addf %100, %102 : vector<64x256xf32>
    %cst_94 = arith.constant 0.000000e+00 : f32
    %104 = vector.broadcast %cst_94 : f32 to vector<64x256xf32>
    %105 = arith.maximumf %103, %104 : vector<64x256xf32>
    %106 = vector.shape_cast %105 : vector<64x256xf32> to vector<8x8x256xf32>
    %107 = vector.extract_strided_slice %106 {offsets = [0, 0, 0], sizes = [8, 1, 256], strides = [1, 1, 1]} : vector<8x8x256xf32> to vector<8x1x256xf32>
    %108 = vector.shape_cast %107 : vector<8x1x256xf32> to vector<8x256xf32>
    %109 = vector.extract_strided_slice %106 {offsets = [0, 1, 0], sizes = [8, 1, 256], strides = [1, 1, 1]} : vector<8x8x256xf32> to vector<8x1x256xf32>
    %110 = vector.shape_cast %109 : vector<8x1x256xf32> to vector<8x256xf32>
    %111 = arith.maximumf %108, %110 : vector<8x256xf32>
    %112 = vector.extract_strided_slice %106 {offsets = [0, 2, 0], sizes = [8, 1, 256], strides = [1, 1, 1]} : vector<8x8x256xf32> to vector<8x1x256xf32>
    %113 = vector.shape_cast %112 : vector<8x1x256xf32> to vector<8x256xf32>
    %114 = vector.extract_strided_slice %106 {offsets = [0, 3, 0], sizes = [8, 1, 256], strides = [1, 1, 1]} : vector<8x8x256xf32> to vector<8x1x256xf32>
    %115 = vector.shape_cast %114 : vector<8x1x256xf32> to vector<8x256xf32>
    %116 = arith.maximumf %113, %115 : vector<8x256xf32>
    %117 = vector.extract_strided_slice %106 {offsets = [0, 4, 0], sizes = [8, 1, 256], strides = [1, 1, 1]} : vector<8x8x256xf32> to vector<8x1x256xf32>
    %118 = vector.shape_cast %117 : vector<8x1x256xf32> to vector<8x256xf32>
    %119 = vector.extract_strided_slice %106 {offsets = [0, 5, 0], sizes = [8, 1, 256], strides = [1, 1, 1]} : vector<8x8x256xf32> to vector<8x1x256xf32>
    %120 = vector.shape_cast %119 : vector<8x1x256xf32> to vector<8x256xf32>
    %121 = arith.maximumf %118, %120 : vector<8x256xf32>
    %122 = vector.extract_strided_slice %106 {offsets = [0, 6, 0], sizes = [8, 1, 256], strides = [1, 1, 1]} : vector<8x8x256xf32> to vector<8x1x256xf32>
    %123 = vector.shape_cast %122 : vector<8x1x256xf32> to vector<8x256xf32>
    %124 = vector.extract_strided_slice %106 {offsets = [0, 7, 0], sizes = [8, 1, 256], strides = [1, 1, 1]} : vector<8x8x256xf32> to vector<8x1x256xf32>
    %125 = vector.shape_cast %124 : vector<8x1x256xf32> to vector<8x256xf32>
    %126 = arith.maximumf %123, %125 : vector<8x256xf32>
    %127 = tpu.concatenate %111, %116, %121, %126 in 1 : vector<8x256xf32>, vector<8x256xf32>, vector<8x256xf32>, vector<8x256xf32> -> vector<8x1024xf32>
    %128 = arith.truncf %127 : vector<8x1024xf32> to vector<8x1024xbf16>
    %c0_95 = arith.constant 0 : index
    %c0_96 = arith.constant 0 : index
    %129 = vector.load %arg4[%c0_95, %c0_96] : memref<1024x128xbf16, #tpu.memory_space<vmem>>, vector<1024x128xbf16>
    %cst_97 = arith.constant dense<0.000000e+00> : vector<8x128xf32>
    %130 = tpu.matmul %128, %129, %cst_97 {dimension_numbers = #tpu.dot_dimension_numbers<[1], [0], [0], [1], [0, 0, 1, 1], [], []>} : vector<8x1024xbf16>, vector<1024x128xbf16>, vector<8x128xf32> -> vector<8x128xf32>
    %c0_98 = arith.constant 0 : index
    %c0_99 = arith.constant 0 : index
    %131 = vector.load %arg8[%c0_98, %c0_99] : memref<1x128xf32, #tpu.memory_space<vmem>>, vector<1x128xf32>
    %132 = vector.broadcast %131 : vector<1x128xf32> to vector<8x128xf32>
    %133 = arith.addf %130, %132 : vector<8x128xf32>
    %cst_100 = arith.constant 0.000000e+00 : f32
    %134 = vector.broadcast %cst_100 : f32 to vector<8x128xf32>
    %135 = arith.maximumf %133, %134 : vector<8x128xf32>
    %136 = arith.truncf %135 : vector<8x128xf32> to vector<8x128xbf16>
    %c0_101 = arith.constant 0 : index
    %c0_102 = arith.constant 0 : index
    %137 = vector.load %arg5[%c0_101, %c0_102] : memref<128x128xbf16, #tpu.memory_space<vmem>>, vector<128x128xbf16>
    %cst_103 = arith.constant dense<0.000000e+00> : vector<8x128xf32>
    %138 = tpu.matmul %136, %137, %cst_103 {dimension_numbers = #tpu.dot_dimension_numbers<[1], [0], [0], [1], [0, 0, 1, 1], [], []>} : vector<8x128xbf16>, vector<128x128xbf16>, vector<8x128xf32> -> vector<8x128xf32>
    %c0_104 = arith.constant 0 : index
    %c0_105 = arith.constant 0 : index
    %139 = vector.load %arg9[%c0_104, %c0_105] : memref<1x128xf32, #tpu.memory_space<vmem>>, vector<1x128xf32>
    %140 = vector.broadcast %139 : vector<1x128xf32> to vector<8x128xf32>
    %141 = arith.addf %138, %140 : vector<8x128xf32>
    %c0_106 = arith.constant 0 : index
    %c0_107 = arith.constant 0 : index
    %142 = vector.load %arg10[%c0_106, %c0_107] : memref<8x128xf32, #tpu.memory_space<vmem>>, vector<8x128xf32>
    tpu.vector_store %arg10[%c0_106, %c0_107], %141 {strides = array<i32>} : memref<8x128xf32, #tpu.memory_space<vmem>>, vector<8x128xf32>,
    return
  }
  func.func @transform_0(%arg0: i32) -> (i32, i32, i32) {
    %c0_i32 = arith.constant 0 : i32
    %c0_i32_0 = arith.constant 0 : i32
    %c0_i32_1 = arith.constant 0 : i32
    return %c0_i32, %arg0, %c0_i32_0 : i32, i32, i32
  }
  func.func @transform_1(%arg0: i32) -> (i32, i32, i32) {
    %c0_i32 = arith.constant 0 : i32
    %c0_i32_0 = arith.constant 0 : i32
    %c0_i32_1 = arith.constant 0 : i32
    %c0_i32_2 = arith.constant 0 : i32
    return %c0_i32, %c0_i32_0, %c0_i32_1 : i32, i32, i32
  }
  func.func @transform_2(%arg0: i32) -> (i32, i32, i32, i32) {
    %c0_i32 = arith.constant 0 : i32
    %c0_i32_0 = arith.constant 0 : i32
    %c0_i32_1 = arith.constant 0 : i32
    %c0_i32_2 = arith.constant 0 : i32
    %c0_i32_3 = arith.constant 0 : i32
    return %c0_i32, %c0_i32_0, %c0_i32_1, %c0_i32_2 : i32, i32, i32, i32
  }
  func.func @transform_3(%arg0: i32) -> (i32, i32) {
    %c0_i32 = arith.constant 0 : i32
    %c0_i32_0 = arith.constant 0 : i32
    %c0_i32_1 = arith.constant 0 : i32
    return %c0_i32, %c0_i32_0 : i32, i32
  }
  func.func @transform_4(%arg0: i32) -> (i32, i32) {
    %c0_i32 = arith.constant 0 : i32
    %c0_i32_0 = arith.constant 0 : i32
    %c0_i32_1 = arith.constant 0 : i32
    return %c0_i32, %c0_i32_0 : i32, i32
  }
  func.func @transform_5(%arg0: i32) -> (i32, i32) {
    %c0_i32 = arith.constant 0 : i32
    %c0_i32_0 = arith.constant 0 : i32
    %c0_i32_1 = arith.constant 0 : i32
    return %c0_i32, %c0_i32_0 : i32, i32
  }
  func.func @transform_6(%arg0: i32) -> (i32, i32) {
    %c0_i32 = arith.constant 0 : i32
    %c0_i32_0 = arith.constant 0 : i32
    %c0_i32_1 = arith.constant 0 : i32
    return %c0_i32, %c0_i32_0 : i32, i32
  }
  func.func @transform_7(%arg0: i32) -> (i32, i32) {
    %c0_i32 = arith.constant 0 : i32
    %c0_i32_0 = arith.constant 0 : i32
    %c0_i32_1 = arith.constant 0 : i32
    return %c0_i32, %c0_i32_0 : i32, i32
  }
  func.func @transform_8(%arg0: i32) -> (i32, i32) {
    %c0_i32 = arith.constant 0 : i32
    %c0_i32_0 = arith.constant 0 : i32
    %c0_i32_1 = arith.constant 0 : i32
    return %c0_i32, %c0_i32_0 : i32, i32
  }
  func.func @transform_9(%arg0: i32) -> (i32, i32) {
    %c0_i32 = arith.constant 0 : i32
    %c0_i32_0 = arith.constant 0 : i32
    return %arg0, %c0_i32 : i32, i32
  }
}

</mosaic_0001>

<llo_original>
// kernel: _fwd.1
$region0: #{_fwd.1}
  #allocation0 [shape = 'u32[]', space=smem, size = 0x4, offset = 0x4, fixed_abs, tag = 'smem constant byte address 0x4 - core index']
  #allocation1 [shape = 'u32[144,128]{1,0:T(1,128)}', space=vmem, size = 0x12000, scoped, tag = 'internal scratch']
  %s0 = inlined_call_operand.vmem [shape: bf16[3,256,200], index: 0, kind: input, shape index: {}]
  %s1 = inlined_call_operand.vmem [shape: bf16[3,200,384], index: 1, kind: input, shape index: {}]
  %s2 = inlined_call_operand.vmem [shape: bf16[5,2,384,256], index: 2, kind: input, shape index: {}]
  %s3 = inlined_call_operand.vmem [shape: bf16[1024,128], index: 3, kind: input, shape index: {}]
  %s4 = inlined_call_operand.vmem [shape: bf16[128,128], index: 4, kind: input, shape index: {}]
  %s5 = inlined_call_operand.vmem [shape: f32[1,384], index: 5, kind: input, shape index: {}]
  %s6 = inlined_call_operand.vmem [shape: f32[1,256], index: 6, kind: input, shape index: {}]
  %s7 = inlined_call_operand.vmem [shape: f32[1,128], index: 7, kind: input, shape index: {}]
  %s8 = inlined_call_operand.vmem [shape: f32[1,128], index: 8, kind: input, shape index: {}]
  %s9 = inlined_call_operand.hbm [shape: f32[16,128], index: 9, kind: output, shape index: {}]
  %s10 = sld [smem:[#allocation0]]
  $region107: #{_fwd.1} parent=0
    _
  %s12 = ssub.s32 1, %s10
  %s13 = scalar_select 0, %s12, %s10
  $region1: #{_fwd.1} parent=0
    #allocation2 [shape = 'u8[393216]{0}', space=vmem, size = 0x60000, scoped, tag = 'input window, operand 0']
    #allocation3 [shape = 'u8[8192]{0}', space=vmem, size = 0x2000, scoped, tag = 'output window, operand 0']
    #allocation4 [shape = 's32[2]{0}', space=sflag, size = 0x8, scoped, tag = 'scoped memory for _fwd.1']
    %14 = vsyncpa [#allocation4], 0
    %s15 = scalar_lea.sflag [#allocation4], 1
    %16 = vsyncpa %s15, 0
    loop: start=0, step=1, limit=4
    $region2: #{_fwd.1} parent=1 // loop_pre_header
      _
    $region3: #{_fwd.1} parent=1 // loop_header
      %s18 = sphi 0, %s22
      %p19 = scmp.ge.s32.totalorder %s18, 4
      %s28 = sphi 0, %s30
      %s31 = sphi 0, %s28
      %s32 = sphi 0, %s31
      %s48 = sphi 0, %s32
      %s52 = sphi 0, %s52
      %s54 = sphi 0, %s52
      %s55 = sphi 0, %s54
      %s69 = sphi 0, %s55
      %s73 = sphi 0, %s73
      %s75 = sphi 0, %s73
      %s76 = sphi 0, %s75
      %s90 = sphi 0, %s76
      %s94 = sphi 0, %s94
      %s96 = sphi 0, %s94
      %s97 = sphi 0, %s96
      %s111 = sphi 0, %s97
      %s115 = sphi 0, %s115
      %s117 = sphi 0, %s115
      %s118 = sphi 0, %s117
      %s132 = sphi 0, %s118
      %s136 = sphi 0, %s136
      %s138 = sphi 0, %s136
      %s139 = sphi 0, %s138
      %s153 = sphi 0, %s139
      %s157 = sphi 0, %s157
      %s159 = sphi 0, %s157
      %s160 = sphi 0, %s159
      %s174 = sphi 0, %s160
      %s178 = sphi 0, %s178
      %s180 = sphi 0, %s178
      %s181 = sphi 0, %s180
      %s195 = sphi 0, %s181
      %s199 = sphi 0, %s199
      %s201 = sphi 0, %s199
      %s202 = sphi 0, %s201
      %s216 = sphi 0, %s202
      %s222 = sphi 0, %s224
      %s225 = sphi 0, %s222
      %s226 = sphi 0, %s225
      %s242 = sphi 0, %s226
    $region4: #{_fwd.1} parent=1 // loop_header_branch
      %21 = sbr.rel (%p19) target = $region8
    $region5: #{_fwd.1} parent=1 // loop_body
      %s23 = ssub.s32 %s18, 1
      %s24 = ssub.s32 %s18, 2
      %s25 = sadd.s32 %s18, 1
      %s26 = ssub.s32 %s18, %s25
      %p27 = scmp.eq.s32.totalorder %s26, 0
      %s29 = sadd.s32 %s28, 1
      %s30 = scalar_select %p27, %s28, %s29
      %p33 = pneg %p27
      %p34 = scmp.eq.s32.totalorder %s18, 1
      %p35 = por %p33, %p34
      %p36 = scmp.ne.s32.totalorder %s28, %s31
      %p37 = scmp.eq.s32.totalorder %s18, 0
      %p38 = por %p36, %p37
      %p39 = scmp.ne.s32.totalorder %s28, %s31
      %p40 = scmp.eq.s32.totalorder %s23, 1
      %p41 = por %p39, %p40
      %p42 = scmp.ne.s32.totalorder %s31, %s32
      %p43 = scmp.eq.s32.totalorder %s23, 0
      %p44 = por %p42, %p43
      %p45 = scmp.ne.s32.totalorder %s31, %s32
      %p46 = scmp.eq.s32.totalorder %s24, 1
      %p47 = por %p45, %p46
      %p49 = scmp.ne.s32.totalorder %s32, %s48
      %p50 = scmp.eq.s32.totalorder %s24, 0
      %p51 = por %p49, %p50
      %s53 = sadd.s32 %s52, 1
      %p56 = scmp.eq.s32.totalorder %s18, 1
      %p57 = scmp.ne.s32.totalorder %s52, %s54
      %p58 = scmp.eq.s32.totalorder %s18, 0
      %p59 = por %p57, %p58
      %p60 = scmp.ne.s32.totalorder %s52, %s54
      %p61 = scmp.eq.s32.totalorder %s23, 1
      %p62 = por %p60, %p61
      %p63 = scmp.ne.s32.totalorder %s54, %s55
      %p64 = scmp.eq.s32.totalorder %s23, 0
      %p65 = por %p63, %p64
      %p66 = scmp.ne.s32.totalorder %s54, %s55
      %p67 = scmp.eq.s32.totalorder %s24, 1
      %p68 = por %p66, %p67
      %p70 = scmp.ne.s32.totalorder %s55, %s69
      %p71 = scmp.eq.s32.totalorder %s24, 0
      %p72 = por %p70, %p71
      %s74 = sadd.s32 %s73, 1
      %p77 = scmp.eq.s32.totalorder %s18, 1
      %p78 = scmp.ne.s32.totalorder %s73, %s75
      %p79 = scmp.eq.s32.totalorder %s18, 0
      %p80 = por %p78, %p79
      %p81 = scmp.ne.s32.totalorder %s73, %s75
      %p82 = scmp.eq.s32.totalorder %s23, 1
      %p83 = por %p81, %p82
      %p84 = scmp.ne.s32.totalorder %s75, %s76
      %p85 = scmp.eq.s32.totalorder %s23, 0
      %p86 = por %p84, %p85
      %p87 = scmp.ne.s32.totalorder %s75, %s76
      %p88 = scmp.eq.s32.totalorder %s24, 1
      %p89 = por %p87, %p88
      %p91 = scmp.ne.s32.totalorder %s76, %s90
      %p92 = scmp.eq.s32.totalorder %s24, 0
      %p93 = por %p91, %p92
      %s95 = sadd.s32 %s94, 1
      %p98 = scmp.eq.s32.totalorder %s18, 1
      %p99 = scmp.ne.s32.totalorder %s94, %s96
      %p100 = scmp.eq.s32.totalorder %s18, 0
      %p101 = por %p99, %p100
      %p102 = scmp.ne.s32.totalorder %s94, %s96
      %p103 = scmp.eq.s32.totalorder %s23, 1
      %p104 = por %p102, %p103
      %p105 = scmp.ne.s32.totalorder %s96, %s97
      %p106 = scmp.eq.s32.totalorder %s23, 0
      %p107 = por %p105, %p106
      %p108 = scmp.ne.s32.totalorder %s96, %s97
      %p109 = scmp.eq.s32.totalorder %s24, 1
      %p110 = por %p108, %p109
      %p112 = scmp.ne.s32.totalorder %s97, %s111
      %p113 = scmp.eq.s32.totalorder %s24, 0
      %p114 = por %p112, %p113
      %s116 = sadd.s32 %s115, 1
      %p119 = scmp.eq.s32.totalorder %s18, 1
      %p120 = scmp.ne.s32.totalorder %s115, %s117
      %p121 = scmp.eq.s32.totalorder %s18, 0
      %p122 = por %p120, %p121
      %p123 = scmp.ne.s32.totalorder %s115, %s117
      %p124 = scmp.eq.s32.totalorder %s23, 1
      %p125 = por %p123, %p124
      %p126 = scmp.ne.s32.totalorder %s117, %s118
      %p127 = scmp.eq.s32.totalorder %s23, 0
      %p128 = por %p126, %p127
      %p129 = scmp.ne.s32.totalorder %s117, %s118
      %p130 = scmp.eq.s32.totalorder %s24, 1
      %p131 = por %p129, %p130
      %p133 = scmp.ne.s32.totalorder %s118, %s132
      %p134 = scmp.eq.s32.totalorder %s24, 0
      %p135 = por %p133, %p134
      %s137 = sadd.s32 %s136, 1
      %p140 = scmp.eq.s32.totalorder %s18, 1
      %p141 = scmp.ne.s32.totalorder %s136, %s138
      %p142 = scmp.eq.s32.totalorder %s18, 0
      %p143 = por %p141, %p142
      %p144 = scmp.ne.s32.totalorder %s136, %s138
      %p145 = scmp.eq.s32.totalorder %s23, 1
      %p146 = por %p144, %p145
      %p147 = scmp.ne.s32.totalorder %s138, %s139
      %p148 = scmp.eq.s32.totalorder %s23, 0
      %p149 = por %p147, %p148
      %p150 = scmp.ne.s32.totalorder %s138, %s139
      %p151 = scmp.eq.s32.totalorder %s24, 1
      %p152 = por %p150, %p151
      %p154 = scmp.ne.s32.totalorder %s139, %s153
      %p155 = scmp.eq.s32.totalorder %s24, 0
      %p156 = por %p154, %p155
      %s158 = sadd.s32 %s157, 1
      %p161 = scmp.eq.s32.totalorder %s18, 1
      %p162 = scmp.ne.s32.totalorder %s157, %s159
      %p163 = scmp.eq.s32.totalorder %s18, 0
      %p164 = por %p162, %p163
      %p165 = scmp.ne.s32.totalorder %s157, %s159
      %p166 = scmp.eq.s32.totalorder %s23, 1
      %p167 = por %p165, %p166
      %p168 = scmp.ne.s32.totalorder %s159, %s160
      %p169 = scmp.eq.s32.totalorder %s23, 0
      %p170 = por %p168, %p169
      %p171 = scmp.ne.s32.totalorder %s159, %s160
      %p172 = scmp.eq.s32.totalorder %s24, 1
      %p173 = por %p171, %p172
      %p175 = scmp.ne.s32.totalorder %s160, %s174
      %p176 = scmp.eq.s32.totalorder %s24, 0
      %p177 = por %p175, %p176
      %s179 = sadd.s32 %s178, 1
      %p182 = scmp.eq.s32.totalorder %s18, 1
      %p183 = scmp.ne.s32.totalorder %s178, %s180
      %p184 = scmp.eq.s32.totalorder %s18, 0
      %p185 = por %p183, %p184
      %p186 = scmp.ne.s32.totalorder %s178, %s180
      %p187 = scmp.eq.s32.totalorder %s23, 1
      %p188 = por %p186, %p187
      %p189 = scmp.ne.s32.totalorder %s180, %s181
      %p190 = scmp.eq.s32.totalorder %s23, 0
      %p191 = por %p189, %p190
      %p192 = scmp.ne.s32.totalorder %s180, %s181
      %p193 = scmp.eq.s32.totalorder %s24, 1
      %p194 = por %p192, %p193
      %p196 = scmp.ne.s32.totalorder %s181, %s195
      %p197 = scmp.eq.s32.totalorder %s24, 0
      %p198 = por %p196, %p197
      %s200 = sadd.s32 %s199, 1
      %p203 = scmp.eq.s32.totalorder %s18, 1
      %p204 = scmp.ne.s32.totalorder %s199, %s201
      %p205 = scmp.eq.s32.totalorder %s18, 0
      %p206 = por %p204, %p205
      %p207 = scmp.ne.s32.totalorder %s199, %s201
      %p208 = scmp.eq.s32.totalorder %s23, 1
      %p209 = por %p207, %p208
      %p210 = scmp.ne.s32.totalorder %s201, %s202
      %p211 = scmp.eq.s32.totalorder %s23, 0
      %p212 = por %p210, %p211
      %p213 = scmp.ne.s32.totalorder %s201, %s202
      %p214 = scmp.eq.s32.totalorder %s24, 1
      %p215 = por %p213, %p214
      %p217 = scmp.ne.s32.totalorder %s202, %s216
      %p218 = scmp.eq.s32.totalorder %s24, 0
      %p219 = por %p217, %p218
      %s220 = ssub.s32 %s18, %s25
      %p221 = scmp.eq.s32.totalorder %s220, 0
      %s223 = sadd.s32 %s222, 1
      %s224 = scalar_select %p221, %s222, %s223
      %p227 = pneg %p221
      %p228 = scmp.eq.s32.totalorder %s18, 1
      %p229 = por %p227, %p228
      %p230 = scmp.ne.s32.totalorder %s222, %s225
      %p231 = scmp.eq.s32.totalorder %s18, 0
      %p232 = por %p230, %p231
      %p233 = scmp.ne.s32.totalorder %s222, %s225
      %p234 = scmp.eq.s32.totalorder %s23, 1
      %p235 = por %p233, %p234
      %p236 = scmp.ne.s32.totalorder %s225, %s226
      %p237 = scmp.eq.s32.totalorder %s23, 0
      %p238 = por %p236, %p237
      %p239 = scmp.ne.s32.totalorder %s225, %s226
      %p240 = scmp.eq.s32.totalorder %s24, 1
      %p241 = por %p239, %p240
      %p243 = scmp.ne.s32.totalorder %s226, %s242
      %p244 = scmp.eq.s32.totalorder %s24, 0
      %p245 = por %p243, %p244
      %p246 = scmp.le.s32.totalorder 1, %s18
      %p247 = scmp.lt.s32.totalorder %s18, 3
      %p248 = pnand %p246, %p247
      %p249 = pneg %p248
      // Predicated region
      $region9: #{_fwd.1} parent=5 // pred_check
        _
      $region10: #{_fwd.1} parent=5 // pred_check_branch
        %251 = sbr.rel (%p248) target = $region12
      $region11: #{_fwd.1} parent=5 // pred_region
        %s252 = ssub.s32 %s18, 1
        // Predicated region
        $region13: #{_fwd.1} parent=11 // pred_check
          %p253 = pneg %p65
        $region14: #{_fwd.1} parent=11 // pred_check_branch
          %255 = sbr.rel (%p253) target = $region16
        $region15: #{_fwd.1} parent=11 // pred_region
          _
        $region16: #{_fwd.1} parent=11 // pred_fallthru
          _
        // Predicated region
        $region17: #{_fwd.1} parent=11 // pred_check
          %p256 = pneg %p86
        $region18: #{_fwd.1} parent=11 // pred_check_branch
          %258 = sbr.rel (%p256) target = $region20
        $region19: #{_fwd.1} parent=11 // pred_region
          _
        $region20: #{_fwd.1} parent=11 // pred_fallthru
          _
        // Predicated region
        $region21: #{_fwd.1} parent=11 // pred_check
          %p259 = pneg %p107
        $region22: #{_fwd.1} parent=11 // pred_check_branch
          %261 = sbr.rel (%p259) target = $region24
        $region23: #{_fwd.1} parent=11 // pred_region
          _
        $region24: #{_fwd.1} parent=11 // pred_fallthru
          _
        // Predicated region
        $region25: #{_fwd.1} parent=11 // pred_check
          %p262 = pneg %p128
        $region26: #{_fwd.1} parent=11 // pred_check_branch
          %264 = sbr.rel (%p262) target = $region28
        $region27: #{_fwd.1} parent=11 // pred_region
          _
        $region28: #{_fwd.1} parent=11 // pred_fallthru
          _
        // Predicated region
        $region29: #{_fwd.1} parent=11 // pred_check
          %p265 = pneg %p149
        $region30: #{_fwd.1} parent=11 // pred_check_branch
          %267 = sbr.rel (%p265) target = $region32
        $region31: #{_fwd.1} parent=11 // pred_region
          _
        $region32: #{_fwd.1} parent=11 // pred_fallthru
          _
        // Predicated region
        $region33: #{_fwd.1} parent=11 // pred_check
          %p268 = pneg %p170
        $region34: #{_fwd.1} parent=11 // pred_check_branch
          %270 = sbr.rel (%p268) target = $region36
        $region35: #{_fwd.1} parent=11 // pred_region
          _
        $region36: #{_fwd.1} parent=11 // pred_fallthru
          _
        // Predicated region
        $region37: #{_fwd.1} parent=11 // pred_check
          %p271 = pneg %p191
        $region38: #{_fwd.1} parent=11 // pred_check_branch
          %273 = sbr.rel (%p271) target = $region40
        $region39: #{_fwd.1} parent=11 // pred_region
          _
        $region40: #{_fwd.1} parent=11 // pred_fallthru
          _
        // Predicated region
        $region41: #{_fwd.1} parent=11 // pred_check
          %p274 = pneg %p212
        $region42: #{_fwd.1} parent=11 // pred_check_branch
          %276 = sbr.rel (%p274) target = $region44
        $region43: #{_fwd.1} parent=11 // pred_region
          _
        $region44: #{_fwd.1} parent=11 // pred_fallthru
          _
      $region12: #{_fwd.1} parent=5 // pred_fallthru
        _
      %p277 = scmp.lt.s32.totalorder %s18, 2
      // Predicated region
      $region45: #{_fwd.1} parent=5 // pred_check
        %p278 = pneg %p277
      $region46: #{_fwd.1} parent=5 // pred_check_branch
        %280 = sbr.rel (%p278) target = $region48
      $region47: #{_fwd.1} parent=5 // pred_region
        // Predicated region
        $region49: #{_fwd.1} parent=47 // pred_check
          %p281 = pneg %p38
        $region50: #{_fwd.1} parent=47 // pred_check_branch
          %283 = sbr.rel (%p281) target = $region52
        $region51: #{_fwd.1} parent=47 // pred_region
          %s284 = sand.u32 %s28, 1
          %s285 = sand.u32 %s28, 1
          %s286 = smul.addr %s285, 384
          %s287 = scalar_lea.vmem [#allocation2], %s286
          %s288 = smul.u32 16, %s18
          %s289 = smul.addr %s288, 2
          %s290 = smul.addr %s289, 4
          %s291 = scalar_lea.vmem %s0, %s290
          // Predicated region
          $region53: #{_fwd.1} parent=51 // pred_check
            _
          $region54: #{_fwd.1} parent=51 // pred_check_branch
            %293 = sbr.rel (0) target = $region56
          $region55: #{_fwd.1} parent=51 // pred_region
            // Predicated region
            $region57: #{_fwd.1} parent=55 // pred_check
              _
            $region58: #{_fwd.1} parent=55 // pred_check_branch
              %295 = sbr.rel (0) target = $region60
            $region59: #{_fwd.1} parent=55 // pred_region
              // Predicated region
              $region72: #{_fwd.1} parent=59 // pred_check
                _
              $region73: #{_fwd.1} parent=59 // pred_check_branch
                %404 = sbr.rel (0) target = $region75
              $region74: #{_fwd.1} parent=59 // pred_region
                loop: start=0, step=1, limit=1
                $region76: #{_fwd.1} parent=74 // loop_pre_header
                  _
                $region77: #{_fwd.1} parent=74 // loop_header
                  %s406 = sphi 0, %s410
                  %p407 = scmp.ge.s32.totalorder %s406, 1
                  %s411 = sphi %s291, %s291
                  %s412 = sphi %s287, %s287
                $region78: #{_fwd.1} parent=74 // loop_header_branch
                  %409 = sbr.rel (%p407) target = $region82
                $region79: #{_fwd.1} parent=74 // loop_body
                  %v413 = vld [vmem:[%s411] sm:$0xff]
                  %414 = vst [vmem:[%s412] sm:$0xff] %v413
                  %v415 = vld [vmem:[%s411 + $0x8] sm:$0xff]
                  %416 = vst [vmem:[%s412 + $0x8] sm:$0xff] %v415
                  %v417 = vld [vmem:[%s411 + $0x10] sm:$0xff]
                  %418 = vst [vmem:[%s412 + $0x10] sm:$0xff] %v417
                  %v419 = vld [vmem:[%s411 + $0x18] sm:$0xff]
                  %420 = vst [vmem:[%s412 + $0x18] sm:$0xff] %v419
                  %v421 = vld [vmem:[%s411 + $0x20] sm:$0xff]
                  %422 = vst [vmem:[%s412 + $0x20] sm:$0xff] %v421
                  %v423 = vld [vmem:[%s411 + $0x28] sm:$0xff]
                  %424 = vst [vmem:[%s412 + $0x28] sm:$0xff] %v423
                  %v425 = vld [vmem:[%s411 + $0x30] sm:$0xff]
                  %426 = vst [vmem:[%s412 + $0x30] sm:$0xff] %v425
                  %v427 = vld [vmem:[%s411 + $0x38] sm:$0xff]
                  %428 = vst [vmem:[%s412 + $0x38] sm:$0xff] %v427
                  %v429 = vld [vmem:[%s411 + $0x40] sm:$0xff]
                  %430 = vst [vmem:[%s412 + $0x40] sm:$0xff] %v429
                  %v431 = vld [vmem:[%s411 + $0x48] sm:$0xff]
                  %432 = vst [vmem:[%s412 + $0x48] sm:$0xff] %v431
                  %v433 = vld [vmem:[%s411 + $0x50] sm:$0xff]
                  %434 = vst [vmem:[%s412 + $0x50] sm:$0xff] %v433
                  %v435 = vld [vmem:[%s411 + $0x58] sm:$0xff]
                  %436 = vst [vmem:[%s412 + $0x58] sm:$0xff] %v435
                  %v437 = vld [vmem:[%s411 + $0x60] sm:$0xff]
                  %438 = vst [vmem:[%s412 + $0x60] sm:$0xff] %v437
                  %v439 = vld [vmem:[%s411 + $0x68] sm:$0xff]
                  %440 = vst [vmem:[%s412 + $0x68] sm:$0xff] %v439
                  %v441 = vld [vmem:[%s411 + $0x70] sm:$0xff]
                  %442 = vst [vmem:[%s412 + $0x70] sm:$0xff] %v441
                  %v443 = vld [vmem:[%s411 + $0x78] sm:$0xff]
                  %444 = vst [vmem:[%s412 + $0x78] sm:$0xff] %v443
                  %v445 = vld [vmem:[%s411 + $0x100] sm:$0xff]
                  %446 = vst [vmem:[%s412 + $0x80] sm:$0xff] %v445
                  %v447 = vld [vmem:[%s411 + $0x108] sm:$0xff]
                  %448 = vst [vmem:[%s412 + $0x88] sm:$0xff] %v447
                  %v449 = vld [vmem:[%s411 + $0x110] sm:$0xff]
                  %450 = vst [vmem:[%s412 + $0x90] sm:$0xff] %v449
                  %v451 = vld [vmem:[%s411 + $0x118] sm:$0xff]
                  %452 = vst [vmem:[%s412 + $0x98] sm:$0xff] %v451
                  %v453 = vld [vmem:[%s411 + $0x120] sm:$0xff]
                  %454 = vst [vmem:[%s412 + $0xa0] sm:$0xff] %v453
                  %v455 = vld [vmem:[%s411 + $0x128] sm:$0xff]
                  %456 = vst [vmem:[%s412 + $0xa8] sm:$0xff] %v455
                  %v457 = vld [vmem:[%s411 + $0x130] sm:$0xff]
                  %458 = vst [vmem:[%s412 + $0xb0] sm:$0xff] %v457
                  %v459 = vld [vmem:[%s411 + $0x138] sm:$0xff]
                  %460 = vst [vmem:[%s412 + $0xb8] sm:$0xff] %v459
                  %v461 = vld [vmem:[%s411 + $0x140] sm:$0xff]
                  %462 = vst [vmem:[%s412 + $0xc0] sm:$0xff] %v461
                  %v463 = vld [vmem:[%s411 + $0x148] sm:$0xff]
                  %464 = vst [vmem:[%s412 + $0xc8] sm:$0xff] %v463
                  %v465 = vld [vmem:[%s411 + $0x150] sm:$0xff]
                  %466 = vst [vmem:[%s412 + $0xd0] sm:$0xff] %v465
                  %v467 = vld [vmem:[%s411 + $0x158] sm:$0xff]
                  %468 = vst [vmem:[%s412 + $0xd8] sm:$0xff] %v467
                  %v469 = vld [vmem:[%s411 + $0x160] sm:$0xff]
                  %470 = vst [vmem:[%s412 + $0xe0] sm:$0xff] %v469
                  %v471 = vld [vmem:[%s411 + $0x168] sm:$0xff]
                  %472 = vst [vmem:[%s412 + $0xe8] sm:$0xff] %v471
                  %v473 = vld [vmem:[%s411 + $0x170] sm:$0xff]
                  %474 = vst [vmem:[%s412 + $0xf0] sm:$0xff] %v473
                  %v475 = vld [vmem:[%s411 + $0x178] sm:$0xff]
                  %476 = vst [vmem:[%s412 + $0xf8] sm:$0xff] %v475
                  %v477 = vld [vmem:[%s411 + $0x200] sm:$0xff]
                  %478 = vst [vmem:[%s412 + $0x100] sm:$0xff] %v477
                  %v479 = vld [vmem:[%s411 + $0x208] sm:$0xff]
                  %480 = vst [vmem:[%s412 + $0x108] sm:$0xff] %v479
                  %v481 = vld [vmem:[%s411 + $0x210] sm:$0xff]
                  %482 = vst [vmem:[%s412 + $0x110] sm:$0xff] %v481
                  %v483 = vld [vmem:[%s411 + $0x218] sm:$0xff]
                  %484 = vst [vmem:[%s412 + $0x118] sm:$0xff] %v483
                  %v485 = vld [vmem:[%s411 + $0x220] sm:$0xff]
                  %486 = vst [vmem:[%s412 + $0x120] sm:$0xff] %v485
                  %v487 = vld [vmem:[%s411 + $0x228] sm:$0xff]
                  %488 = vst [vmem:[%s412 + $0x128] sm:$0xff] %v487
                  %v489 = vld [vmem:[%s411 + $0x230] sm:$0xff]
                  %490 = vst [vmem:[%s412 + $0x130] sm:$0xff] %v489
                  %v491 = vld [vmem:[%s411 + $0x238] sm:$0xff]
                  %492 = vst [vmem:[%s412 + $0x138] sm:$0xff] %v491
                  %v493 = vld [vmem:[%s411 + $0x240] sm:$0xff]
                  %494 = vst [vmem:[%s412 + $0x140] sm:$0xff] %v493
                  %v495 = vld [vmem:[%s411 + $0x248] sm:$0xff]
                  %496 = vst [vmem:[%s412 + $0x148] sm:$0xff] %v495
                  %v497 = vld [vmem:[%s411 + $0x250] sm:$0xff]
                  %498 = vst [vmem:[%s412 + $0x150] sm:$0xff] %v497
                  %v499 = vld [vmem:[%s411 + $0x258] sm:$0xff]
                  %500 = vst [vmem:[%s412 + $0x158] sm:$0xff] %v499
                  %v501 = vld [vmem:[%s411 + $0x260] sm:$0xff]
                  %502 = vst [vmem:[%s412 + $0x160] sm:$0xff] %v501
                  %v503 = vld [vmem:[%s411 + $0x268] sm:$0xff]
                  %504 = vst [vmem:[%s412 + $0x168] sm:$0xff] %v503
                  %v505 = vld [vmem:[%s411 + $0x270] sm:$0xff]
                  %506 = vst [vmem:[%s412 + $0x170] sm:$0xff] %v505
                  %v507 = vld [vmem:[%s411 + $0x278] sm:$0xff]
                  %508 = vst [vmem:[%s412 + $0x178] sm:$0xff] %v507
                $region80: #{_fwd.1} parent=74 // loop_footer
                  %s410 = sadd.s32 1, %s406
                $region81: #{_fwd.1} parent=74 // loop_footer_branch
                  %405 = sbr.rel target = $region77
                $region82: #{_fwd.1} parent=74 // loop_exit
                  _
              $region75: #{_fwd.1} parent=59 // pred_fallthru
                _
              // Predicated region
              $region83: #{_fwd.1} parent=59 // pred_check
                _
              $region84: #{_fwd.1} parent=59 // pred_check_branch
                %510 = sbr.rel target = $region86
              $region85: #{_fwd.1} parent=59 // pred_region
                _
              $region86: #{_fwd.1} parent=59 // pred_fallthru
                _
            $region60: #{_fwd.1} parent=55 // pred_fallthru
              _
            // Predicated region
            $region61: #{_fwd.1} parent=55 // pred_check
              _
            $region62: #{_fwd.1} parent=55 // pred_check_branch
              %297 = sbr.rel target = $region64
            $region63: #{_fwd.1} parent=55 // pred_region
              loop: start=0, step=1, limit=1
              $region65: #{_fwd.1} parent=63 // loop_pre_header
                _
              $region66: #{_fwd.1} parent=63 // loop_header
                %s300 = sphi 0, %s304
                %p301 = scmp.ge.s32.totalorder %s300, 1
                %s305 = sphi %s291, %s291
                %s306 = sphi %s287, %s287
              $region67: #{_fwd.1} parent=63 // loop_header_branch
                %303 = sbr.rel (%p301) target = $region71
              $region68: #{_fwd.1} parent=63 // loop_body
                %v307 = vld [vmem:[%s305] sm:$0xff]
                %308 = vst [vmem:[%s306] sm:$0xff] %v307
                %v309 = vld [vmem:[%s305 + $0x8] sm:$0xff]
                %310 = vst [vmem:[%s306 + $0x8] sm:$0xff] %v309
                %v311 = vld [vmem:[%s305 + $0x10] sm:$0xff]
                %312 = vst [vmem:[%s306 + $0x10] sm:$0xff] %v311
                %v313 = vld [vmem:[%s305 + $0x18] sm:$0xff]
                %314 = vst [vmem:[%s306 + $0x18] sm:$0xff] %v313
                %v315 = vld [vmem:[%s305 + $0x20] sm:$0xff]
                %316 = vst [vmem:[%s306 + $0x20] sm:$0xff] %v315
                %v317 = vld [vmem:[%s305 + $0x28] sm:$0xff]
                %318 = vst [vmem:[%s306 + $0x28] sm:$0xff] %v317
                %v319 = vld [vmem:[%s305 + $0x30] sm:$0xff]
                %320 = vst [vmem:[%s306 + $0x30] sm:$0xff] %v319
                %v321 = vld [vmem:[%s305 + $0x38] sm:$0xff]
                %322 = vst [vmem:[%s306 + $0x38] sm:$0xff] %v321
                %v323 = vld [vmem:[%s305 + $0x40] sm:$0xff]
                %324 = vst [vmem:[%s306 + $0x40] sm:$0xff] %v323
                %v325 = vld [vmem:[%s305 + $0x48] sm:$0xff]
                %326 = vst [vmem:[%s306 + $0x48] sm:$0xff] %v325
                %v327 = vld [vmem:[%s305 + $0x50] sm:$0xff]
                %328 = vst [vmem:[%s306 + $0x50] sm:$0xff] %v327
                %v329 = vld [vmem:[%s305 + $0x58] sm:$0xff]
                %330 = vst [vmem:[%s306 + $0x58] sm:$0xff] %v329
                %v331 = vld [vmem:[%s305 + $0x60] sm:$0xff]
                %332 = vst [vmem:[%s306 + $0x60] sm:$0xff] %v331
                %v333 = vld [vmem:[%s305 + $0x68] sm:$0xff]
                %334 = vst [vmem:[%s306 + $0x68] sm:$0xff] %v333
                %v335 = vld [vmem:[%s305 + $0x70] sm:$0xff]
                %336 = vst [vmem:[%s306 + $0x70] sm:$0xff] %v335
                %v337 = vld [vmem:[%s305 + $0x78] sm:$0xff]
                %338 = vst [vmem:[%s306 + $0x78] sm:$0xff] %v337
                %v339 = vld [vmem:[%s305 + $0x100] sm:$0xff]
                %340 = vst [vmem:[%s306 + $0x80] sm:$0xff] %v339
                %v341 = vld [vmem:[%s305 + $0x108] sm:$0xff]
                %342 = vst [vmem:[%s306 + $0x88] sm:$0xff] %v341
                %v343 = vld [vmem:[%s305 + $0x110] sm:$0xff]
                %344 = vst [vmem:[%s306 + $0x90] sm:$0xff] %v343
                %v345 = vld [vmem:[%s305 + $0x118] sm:$0xff]
                %346 = vst [vmem:[%s306 + $0x98] sm:$0xff] %v345
                %v347 = vld [vmem:[%s305 + $0x120] sm:$0xff]
                %348 = vst [vmem:[%s306 + $0xa0] sm:$0xff] %v347
                %v349 = vld [vmem:[%s305 + $0x128] sm:$0xff]
                %350 = vst [vmem:[%s306 + $0xa8] sm:$0xff] %v349
                %v351 = vld [vmem:[%s305 + $0x130] sm:$0xff]
                %352 = vst [vmem:[%s306 + $0xb0] sm:$0xff] %v351
                %v353 = vld [vmem:[%s305 + $0x138] sm:$0xff]
                %354 = vst [vmem:[%s306 + $0xb8] sm:$0xff] %v353
                %v355 = vld [vmem:[%s305 + $0x140] sm:$0xff]
                %356 = vst [vmem:[%s306 + $0xc0] sm:$0xff] %v355
                %v357 = vld [vmem:[%s305 + $0x148] sm:$0xff]
                %358 = vst [vmem:[%s306 + $0xc8] sm:$0xff] %v357
                %v359 = vld [vmem:[%s305 + $0x150] sm:$0xff]
                %360 = vst [vmem:[%s306 + $0xd0] sm:$0xff] %v359
                %v361 = vld [vmem:[%s305 + $0x158] sm:$0xff]
                %362 = vst [vmem:[%s306 + $0xd8] sm:$0xff] %v361
                %v363 = vld [vmem:[%s305 + $0x160] sm:$0xff]
                %364 = vst [vmem:[%s306 + $0xe0] sm:$0xff] %v363
                %v365 = vld [vmem:[%s305 + $0x168] sm:$0xff]
                %366 = vst [vmem:[%s306 + $0xe8] sm:$0xff] %v365
                %v367 = vld [vmem:[%s305 + $0x170] sm:$0xff]
                %368 = vst [vmem:[%s306 + $0xf0] sm:$0xff] %v367
                %v369 = vld [vmem:[%s305 + $0x178] sm:$0xff]
                %370 = vst [vmem:[%s306 + $0xf8] sm:$0xff] %v369
                %v371 = vld [vmem:[%s305 + $0x200] sm:$0xff]
                %372 = vst [vmem:[%s306 + $0x100] sm:$0xff] %v371
                %v373 = vld [vmem:[%s305 + $0x208] sm:$0xff]
                %374 = vst [vmem:[%s306 + $0x108] sm:$0xff] %v373
                %v375 = vld [vmem:[%s305 + $0x210] sm:$0xff]
                %376 = vst [vmem:[%s306 + $0x110] sm:$0xff] %v375
                %v377 = vld [vmem:[%s305 + $0x218] sm:$0xff]
                %378 = vst [vmem:[%s306 + $0x118] sm:$0xff] %v377
                %v379 = vld [vmem:[%s305 + $0x220] sm:$0xff]
                %380 = vst [vmem:[%s306 + $0x120] sm:$0xff] %v379
                %v381 = vld [vmem:[%s305 + $0x228] sm:$0xff]
                %382 = vst [vmem:[%s306 + $0x128] sm:$0xff] %v381
                %v383 = vld [vmem:[%s305 + $0x230] sm:$0xff]
                %384 = vst [vmem:[%s306 + $0x130] sm:$0xff] %v383
                %v385 = vld [vmem:[%s305 + $0x238] sm:$0xff]
                %386 = vst [vmem:[%s306 + $0x138] sm:$0xff] %v385
                %v387 = vld [vmem:[%s305 + $0x240] sm:$0xff]
                %388 = vst [vmem:[%s306 + $0x140] sm:$0xff] %v387
                %v389 = vld [vmem:[%s305 + $0x248] sm:$0xff]
                %390 = vst [vmem:[%s306 + $0x148] sm:$0xff] %v389
                %v391 = vld [vmem:[%s305 + $0x250] sm:$0xff]
                %392 = vst [vmem:[%s306 + $0x150] sm:$0xff] %v391
                %v393 = vld [vmem:[%s305 + $0x258] sm:$0xff]
                %394 = vst [vmem:[%s306 + $0x158] sm:$0xff] %v393
                %v395 = vld [vmem:[%s305 + $0x260] sm:$0xff]
                %396 = vst [vmem:[%s306 + $0x160] sm:$0xff] %v395
                %v397 = vld [vmem:[%s305 + $0x268] sm:$0xff]
                %398 = vst [vmem:[%s306 + $0x168] sm:$0xff] %v397
                %v399 = vld [vmem:[%s305 + $0x270] sm:$0xff]
                %400 = vst [vmem:[%s306 + $0x170] sm:$0xff] %v399
                %v401 = vld [vmem:[%s305 + $0x278] sm:$0xff]
                %402 = vst [vmem:[%s306 + $0x178] sm:$0xff] %v401
              $region69: #{_fwd.1} parent=63 // loop_footer
                %s304 = sadd.s32 1, %s300
              $region70: #{_fwd.1} parent=63 // loop_footer_branch
                %299 = sbr.rel target = $region66
              $region71: #{_fwd.1} parent=63 // loop_exit
                _
            $region64: #{_fwd.1} parent=55 // pred_fallthru
              _
          $region56: #{_fwd.1} parent=51 // pred_fallthru
            _
          %511 = vnop
        $region52: #{_fwd.1} parent=47 // pred_fallthru
          _
      $region48: #{_fwd.1} parent=5 // pred_fallthru
        _
      %p512 = scmp.le.s32.totalorder 1, %s18
      %p513 = scmp.lt.s32.totalorder %s18, 3
      %p514 = pnand %p512, %p513
      %p515 = pneg %p514
      // Predicated region
      $region87: #{_fwd.1} parent=5 // pred_check
        _
      $region88: #{_fwd.1} parent=5 // pred_check_branch
        %517 = sbr.rel (%p514) target = $region90
      $region89: #{_fwd.1} parent=5 // pred_region
        %s518 = ssub.s32 %s18, 1
        %s519 = sand.u32 %s31, 1
        %s520 = sand.u32 %s31, 1
        %s521 = smul.addr %s520, 384
        %s522 = scalar_lea.vmem [#allocation2], %s521
        // Predicated region
        $region91: #{_fwd.1} parent=89 // pred_check
          %p523 = pneg %p44
        $region92: #{_fwd.1} parent=89 // pred_check_branch
          %525 = sbr.rel (%p523) target = $region94
        $region93: #{_fwd.1} parent=89 // pred_region
          _
        $region94: #{_fwd.1} parent=89 // pred_fallthru
          _
        %s526 = sand.u32 %s31, 1
        %s527 = sand.u32 %s31, 1
        %s528 = smul.addr %s527, 384
        %s529 = scalar_lea.vmem [#allocation2], %s528
        %p530 = pneg %p44
        %p531 = pneg %p41
        %p532 = pneg %p65
        %p533 = pneg %p62
        %p534 = pneg %p86
        %p535 = pneg %p83
        %p536 = pneg %p107
        %p537 = pneg %p104
        %p538 = pneg %p128
        %p539 = pneg %p125
        %p540 = pneg %p149
        %p541 = pneg %p146
        %p542 = pneg %p170
        %p543 = pneg %p167
        %p544 = pneg %p191
        %p545 = pneg %p188
        %p546 = pneg %p212
        %p547 = pneg %p209
        %p548 = pneg %p238
        %p549 = pneg %p235
        %s550 = sand.u32 %s225, 1
        %s551 = scalar_lea.sflag [#allocation4], %s550
        %s552 = sand.u32 %s225, 1
        %s553 = smul.addr %s552, 8
        %s554 = scalar_lea.vmem [#allocation3], %s553
        %s555 = smul.u32 16, %s23
        %v557 = vld [vmem:[%s522] sm:$0xff]
        %v558 = vld [vmem:[%s522 + $0x8] sm:$0xff]
        %v559 = vld [vmem:[%s522 + $0x10] sm:$0xff]
        %v560 = vld [vmem:[%s522 + $0x18] sm:$0xff]
        %v561 = vld [vmem:[%s522 + $0x20] sm:$0xff]
        %v562 = vld [vmem:[%s522 + $0x28] sm:$0xff]
        %v563 = vld [vmem:[%s522 + $0x30] sm:$0xff]
        %v564 = vld [vmem:[%s522 + $0x38] sm:$0xff]
        %v565 = vld [vmem:[%s522 + $0x40] sm:$0xff]
        %v566 = vld [vmem:[%s522 + $0x48] sm:$0xff]
        %v567 = vld [vmem:[%s522 + $0x50] sm:$0xff]
        %v568 = vld [vmem:[%s522 + $0x58] sm:$0xff]
        %v569 = vld [vmem:[%s522 + $0x60] sm:$0xff]
        %v570 = vld [vmem:[%s522 + $0x68] sm:$0xff]
        %v571 = vld [vmem:[%s522 + $0x70] sm:$0xff]
        %v572 = vld [vmem:[%s522 + $0x78] sm:$0xff]
        %v573 = vld [vmem:[%s1] sm:$0xff]
        %v574 = vld [vmem:[%s1 + $0x8] sm:$0xf]
        %v575 = vld [vmem:[%s1 + $0xc] sm:$0xff]
        %v576 = vld [vmem:[%s1 + $0x14] sm:$0xf]
        %v577 = vld [vmem:[%s1 + $0x18] sm:$0xff]
        %v578 = vld [vmem:[%s1 + $0x20] sm:$0xf]
        %v579 = vld [vmem:[%s1 + $0x24] sm:$0xff]
        %v580 = vld [vmem:[%s1 + $0x2c] sm:$0xf]
        %v581 = vld [vmem:[%s1 + $0x30] sm:$0xff]
        %v582 = vld [vmem:[%s1 + $0x38] sm:$0xf]
        %v583 = vld [vmem:[%s1 + $0x3c] sm:$0xff]
        %v584 = vld [vmem:[%s1 + $0x44] sm:$0xf]
        %v585 = vld [vmem:[%s1 + $0x48] sm:$0xff]
        %v586 = vld [vmem:[%s1 + $0x50] sm:$0xf]
        %v587 = vld [vmem:[%s1 + $0x54] sm:$0xff]
        %v588 = vld [vmem:[%s1 + $0x5c] sm:$0xf]
        %v589 = vld [vmem:[%s1 + $0x60] sm:$0xff]
        %v590 = vld [vmem:[%s1 + $0x68] sm:$0xf]
        %v591 = vld [vmem:[%s1 + $0x6c] sm:$0xff]
        %v592 = vld [vmem:[%s1 + $0x74] sm:$0xf]
        %v593 = vld [vmem:[%s1 + $0x78] sm:$0xff]
        %v594 = vld [vmem:[%s1 + $0x80] sm:$0xf]
        %v595 = vld [vmem:[%s1 + $0x84] sm:$0xff]
        %v596 = vld [vmem:[%s1 + $0x8c] sm:$0xf]
        %v597 = vld [vmem:[%s1 + $0x90] sm:$0xff]
        %v598 = vld [vmem:[%s1 + $0x98] sm:$0xf]
        %v599 = vld [vmem:[%s1 + $0x9c] sm:$0xff]
        %v600 = vld [vmem:[%s1 + $0xa4] sm:$0xf]
        %v601 = vld [vmem:[%s1 + $0xa8] sm:$0xff]
        %v602 = vld [vmem:[%s1 + $0xb0] sm:$0xf]
        %v603 = vld [vmem:[%s1 + $0xb4] sm:$0xff]
        %v604 = vld [vmem:[%s1 + $0xbc] sm:$0xf]
        %v605 = vld [vmem:[%s1 + $0xc0] sm:$0xff]
        %v606 = vld [vmem:[%s1 + $0xc8] sm:$0xf]
        %v607 = vld [vmem:[%s1 + $0xcc] sm:$0xff]
        %v608 = vld [vmem:[%s1 + $0xd4] sm:$0xf]
        %v609 = vld [vmem:[%s1 + $0xd8] sm:$0xff]
        %v610 = vld [vmem:[%s1 + $0xe0] sm:$0xf]
        %v611 = vld [vmem:[%s1 + $0xe4] sm:$0xff]
        %v612 = vld [vmem:[%s1 + $0xec] sm:$0xf]
        %v613 = vld [vmem:[%s1 + $0xf0] sm:$0xff]
        %v614 = vld [vmem:[%s1 + $0xf8] sm:$0xf]
        %v615 = vld [vmem:[%s1 + $0xfc] sm:$0xff]
        %v616 = vld [vmem:[%s1 + $0x104] sm:$0xf]
        %v617 = vld [vmem:[%s1 + $0x108] sm:$0xff]
        %v618 = vld [vmem:[%s1 + $0x110] sm:$0xf]
        %v619 = vld [vmem:[%s1 + $0x114] sm:$0xff]
        %v620 = vld [vmem:[%s1 + $0x11c] sm:$0xf]
        %v621 = vld [vmem:[%s1 + $0x120] sm:$0xff]
        %v622 = vld [vmem:[%s1 + $0x128] sm:$0xf]
        %v639 = vunpack.c.l.b16 %v557
        %v640 = vunpack.c.h.b16 %v557
        %v641 = vunpack.c.l.b16 %v558
        %v642 = vunpack.c.h.b16 %v558
        %v643 = vunpack.c.l.b16 %v559
        %v644 = vunpack.c.h.b16 %v559
        %v645 = vunpack.c.l.b16 %v560
        %v646 = vunpack.c.h.b16 %v560
        %v647 = vunpack.c.l.b16 %v561
        %v648 = vunpack.c.h.b16 %v561
        %v649 = vunpack.c.l.b16 %v562
        %v650 = vunpack.c.h.b16 %v562
        %v651 = vunpack.c.l.b16 %v563
        %v652 = vunpack.c.h.b16 %v563
        %v653 = vunpack.c.l.b16 %v564
        %v654 = vunpack.c.h.b16 %v564
        %v655 = vunpack.c.l.b16 %v565
        %v656 = vunpack.c.h.b16 %v565
        %v657 = vunpack.c.l.b16 %v566
        %v658 = vunpack.c.h.b16 %v566
        %v659 = vunpack.c.l.b16 %v567
        %v660 = vunpack.c.h.b16 %v567
        %v661 = vunpack.c.l.b16 %v568
        %v662 = vunpack.c.h.b16 %v568
        %v663 = vunpack.c.l.b16 %v569
        %v664 = vunpack.c.h.b16 %v569
        %v665 = vunpack.c.l.b16 %v570
        %v666 = vunpack.c.h.b16 %v570
        %v667 = vunpack.c.l.b16 %v571
        %v668 = vunpack.c.h.b16 %v571
        %v669 = vunpack.c.l.b16 %v572
        %v670 = vunpack.c.h.b16 %v572
        %v671 = vpack.c.b16 %v641, %v639
        %v672 = vpack.c.b16 %v642, %v640
        %v673 = vpack.c.b16 %v645, %v643
        %v674 = vpack.c.b16 %v646, %v644
        %v675 = vpack.c.b16 %v649, %v647
        %v676 = vpack.c.b16 %v650, %v648
        %v677 = vpack.c.b16 %v653, %v651
        %v678 = vpack.c.b16 %v654, %v652
        %v679 = vpack.c.b16 %v657, %v655
        %v680 = vpack.c.b16 %v658, %v656
        %v681 = vpack.c.b16 %v661, %v659
        %v682 = vpack.c.b16 %v662, %v660
        %v683 = vpack.c.b16 %v665, %v663
        %v684 = vpack.c.b16 %v666, %v664
        %v685 = vpack.c.b16 %v669, %v667
        %v686 = vpack.c.b16 %v670, %v668
        %v745 = vunpack.c.l.b16 %v573
        %v746 = vunpack.c.h.b16 %v573
        %v747 = vunpack.c.l.b16 %v574
        %v748 = vunpack.c.l.b16 %v575
        %v749 = vunpack.c.h.b16 %v575
        %v750 = vunpack.c.l.b16 %v576
        %v751 = vunpack.c.l.b16 %v577
        %v752 = vunpack.c.h.b16 %v577
        %v753 = vunpack.c.l.b16 %v578
        %v754 = vunpack.c.l.b16 %v579
        %v755 = vunpack.c.h.b16 %v579
        %v756 = vunpack.c.l.b16 %v580
        %v757 = vunpack.c.l.b16 %v581
        %v758 = vunpack.c.h.b16 %v581
        %v759 = vunpack.c.l.b16 %v582
        %v760 = vunpack.c.l.b16 %v583
        %v761 = vunpack.c.h.b16 %v583
        %v762 = vunpack.c.l.b16 %v584
        %v763 = vunpack.c.l.b16 %v585
        %v764 = vunpack.c.h.b16 %v585
        %v765 = vunpack.c.l.b16 %v586
        %v766 = vunpack.c.l.b16 %v587
        %v767 = vunpack.c.h.b16 %v587
        %v768 = vunpack.c.l.b16 %v588
        %v769 = vunpack.c.l.b16 %v589
        %v770 = vunpack.c.h.b16 %v589
        %v771 = vunpack.c.l.b16 %v590
        %v772 = vunpack.c.l.b16 %v591
        %v773 = vunpack.c.h.b16 %v591
        %v774 = vunpack.c.l.b16 %v592
        %v775 = vunpack.c.l.b16 %v593
        %v776 = vunpack.c.h.b16 %v593
        %v777 = vunpack.c.l.b16 %v594
        %v778 = vunpack.c.l.b16 %v595
        %v779 = vunpack.c.h.b16 %v595
        %v780 = vunpack.c.l.b16 %v596
        %v781 = vunpack.c.l.b16 %v597
        %v782 = vunpack.c.h.b16 %v597
        %v783 = vunpack.c.l.b16 %v598
        %v784 = vunpack.c.l.b16 %v599
        %v785 = vunpack.c.h.b16 %v599
        %v786 = vunpack.c.l.b16 %v600
        %v787 = vunpack.c.l.b16 %v601
        %v788 = vunpack.c.h.b16 %v601
        %v789 = vunpack.c.l.b16 %v602
        %v790 = vunpack.c.l.b16 %v603
        %v791 = vunpack.c.h.b16 %v603
        %v792 = vunpack.c.l.b16 %v604
        %v793 = vunpack.c.l.b16 %v605
        %v794 = vunpack.c.h.b16 %v605
        %v795 = vunpack.c.l.b16 %v606
        %v796 = vunpack.c.l.b16 %v607
        %v797 = vunpack.c.h.b16 %v607
        %v798 = vunpack.c.l.b16 %v608
        %v799 = vunpack.c.l.b16 %v609
        %v800 = vunpack.c.h.b16 %v609
        %v801 = vunpack.c.l.b16 %v610
        %v802 = vunpack.c.l.b16 %v611
        %v803 = vunpack.c.h.b16 %v611
        %v804 = vunpack.c.l.b16 %v612
        %v805 = vunpack.c.l.b16 %v613
        %v806 = vunpack.c.h.b16 %v613
        %v807 = vunpack.c.l.b16 %v614
        %v808 = vunpack.c.l.b16 %v615
        %v809 = vunpack.c.h.b16 %v615
        %v810 = vunpack.c.l.b16 %v616
        %v811 = vunpack.c.l.b16 %v617
        %v812 = vunpack.c.h.b16 %v617
        %v813 = vunpack.c.l.b16 %v618
        %v814 = vunpack.c.l.b16 %v619
        %v815 = vunpack.c.h.b16 %v619
        %v816 = vunpack.c.l.b16 %v620
        %v817 = vunpack.c.l.b16 %v621
        %v818 = vunpack.c.h.b16 %v621
        %v819 = vunpack.c.l.b16 %v622
        %v820 = vpack.c.b16 %v748, %v745
        %v821 = vpack.c.b16 %v749, %v746
        %v822 = vpack.c.b16 %v750, %v747
        %v823 = vpack.c.b16 %v754, %v751
        %v824 = vpack.c.b16 %v755, %v752
        %v825 = vpack.c.b16 %v756, %v753
        %v826 = vpack.c.b16 %v760, %v757
        %v827 = vpack.c.b16 %v761, %v758
        %v828 = vpack.c.b16 %v762, %v759
        %v829 = vpack.c.b16 %v766, %v763
        %v830 = vpack.c.b16 %v767, %v764
        %v831 = vpack.c.b16 %v768, %v765
        %v832 = vpack.c.b16 %v772, %v769
        %v833 = vpack.c.b16 %v773, %v770
        %v834 = vpack.c.b16 %v774, %v771
        %v835 = vpack.c.b16 %v778, %v775
        %v836 = vpack.c.b16 %v779, %v776
        %v837 = vpack.c.b16 %v780, %v777
        %v838 = vpack.c.b16 %v784, %v781
        %v839 = vpack.c.b16 %v785, %v782
        %v840 = vpack.c.b16 %v786, %v783
        %v841 = vpack.c.b16 %v790, %v787
        %v842 = vpack.c.b16 %v791, %v788
        %v843 = vpack.c.b16 %v792, %v789
        %v844 = vpack.c.b16 %v796, %v793
        %v845 = vpack.c.b16 %v797, %v794
        %v846 = vpack.c.b16 %v798, %v795
        %v847 = vpack.c.b16 %v802, %v799
        %v848 = vpack.c.b16 %v803, %v800
        %v849 = vpack.c.b16 %v804, %v801
        %v850 = vpack.c.b16 %v808, %v805
        %v851 = vpack.c.b16 %v809, %v806
        %v852 = vpack.c.b16 %v810, %v807
        %v853 = vpack.c.b16 %v814, %v811
        %v854 = vpack.c.b16 %v815, %v812
        %v855 = vpack.c.b16 %v816, %v813
        %v856 = vpack.c.b16 %v817, %v817
        %v857 = vpack.c.b16 %v818, %v818
        %v858 = vpack.c.b16 %v819, %v819
        %vm895 = vcmask 588800
        %v897 = vsel %vm895, %v672, 0
        %v900 = vsel %vm895, %v674, 0
        %v903 = vsel %vm895, %v676, 0
        %v906 = vsel %vm895, %v678, 0
        %v909 = vsel %vm895, %v680, 0
        %v912 = vsel %vm895, %v682, 0
        %v915 = vsel %vm895, %v684, 0
        %v918 = vsel %vm895, %v686, 0
        %vm920 = vcmask 1043456
        %v922 = vsel %vm920, %v856, 0
        %v925 = vsel %vm920, %v857, 0
        %v928 = vsel %vm920, %v858, 0
        %930 = vmatprep.subr.bf16.mxu0 %v821
        %931 = vmatpush1.bf16.msra.mxu0 %v820
        %932 = vmatprep.subr.bf16.mxu0 %v824
        %933 = vmatpush1.bf16.msra.mxu0 %v823
        %934 = vmatprep.subr.bf16.mxu0 %v827
        %935 = vmatpush1.bf16.msra.mxu0 %v826
        %936 = vmatprep.subr.bf16.mxu0 %v830
        %937 = vmatpush1.bf16.msra.mxu0 %v829
        %938 = vmatprep.subr.bf16.mxu0 %v833
        %939 = vmatpush1.bf16.msra.mxu0 %v832
        %940 = vmatprep.subr.bf16.mxu0 %v836
        %941 = vmatpush1.bf16.msra.mxu0 %v835
        %942 = vmatprep.subr.bf16.mxu0 %v839
        %943 = vmatpush1.bf16.msra.mxu0 %v838
        %944 = vmatprep.subr.bf16.mxu0 %v842
        %945 = vmatpush1.bf16.msra.mxu0 %v841
        %946 = vmatprep.subr.bf16.mxu0 %v845
        %947 = vmatpush1.bf16.msra.mxu0 %v844
        %948 = vmatprep.subr.bf16.mxu0 %v848
        %949 = vmatpush1.bf16.msra.mxu0 %v847
        %950 = vmatprep.subr.bf16.mxu0 %v851
        %951 = vmatpush1.bf16.msra.mxu0 %v850
        %952 = vmatprep.subr.bf16.mxu0 %v854
        %953 = vmatpush1.bf16.msra.mxu0 %v853
        %954 = vmatprep.subr.bf16.mxu0 %v925
        %955 = vmatpush1.bf16.msra.mxu0 %v922
        %956 = vmatprep.subr.bf16.mxu0 0
        %957 = vmatpush1.bf16.msra.mxu0 0
        %958 = vmatprep.subr.bf16.mxu0 0
        %959 = vmatpush1.bf16.msra.mxu0 0
        %960 = vmatprep.subr.bf16.mxu0 0
        %961 = vmatpush1.bf16.msra.mxu0 0
        %962 = vmatprep.mubr.bf16.mxu0 %v897
        %963 = vmatmul.mubr.bf16.gmra.mrb[0].mxu0 %v671
        %v964 = vpop.f32.mrb[0].mxu0
        %v965 = vadd.f32 0.0, %v964
        %v966 = vpop.f32.mrb[0].mxu0
        %v967 = vadd.f32 0.0, %v966
        %v968 = vpop.f32.mrb[0].mxu0
        %v969 = vadd.f32 0.0, %v968
        %v970 = vpop.f32.mrb[0].mxu0
        %v971 = vadd.f32 0.0, %v970
        %972 = vmatprep.mubr.bf16.mxu0 %v900
        %973 = vmatmul.mubr.bf16.gmra.mrb[0].mxu0 %v673
        %v974 = vpop.f32.mrb[0].mxu0
        %v975 = vadd.f32 0.0, %v974
        %v976 = vpop.f32.mrb[0].mxu0
        %v977 = vadd.f32 0.0, %v976
        %v978 = vpop.f32.mrb[0].mxu0
        %v979 = vadd.f32 0.0, %v978
        %v980 = vpop.f32.mrb[0].mxu0
        %v981 = vadd.f32 0.0, %v980
        %982 = vmatprep.mubr.bf16.mxu0 %v903
        %983 = vmatmul.mubr.bf16.gmra.mrb[0].mxu0 %v675
        %v984 = vpop.f32.mrb[0].mxu0
        %v985 = vadd.f32 0.0, %v984
        %v986 = vpop.f32.mrb[0].mxu0
        %v987 = vadd.f32 0.0, %v986
        %v988 = vpop.f32.mrb[0].mxu0
        %v989 = vadd.f32 0.0, %v988
        %v990 = vpop.f32.mrb[0].mxu0
        %v991 = vadd.f32 0.0, %v990
        %992 = vmatprep.mubr.bf16.mxu0 %v906
        %993 = vmatmul.mubr.bf16.gmra.mrb[0].mxu0 %v677
        %v994 = vpop.f32.mrb[0].mxu0
        %v995 = vadd.f32 0.0, %v994
        %v996 = vpop.f32.mrb[0].mxu0
        %v997 = vadd.f32 0.0, %v996
        %v998 = vpop.f32.mrb[0].mxu0
        %v999 = vadd.f32 0.0, %v998
        %v1000 = vpop.f32.mrb[0].mxu0
        %v1001 = vadd.f32 0.0, %v1000
        %1002 = vmatprep.mubr.bf16.mxu0 %v909
        %1003 = vmatmul.mubr.bf16.gmra.mrb[0].mxu0 %v679
        %v1004 = vpop.f32.mrb[0].mxu0
        %v1005 = vadd.f32 0.0, %v1004
        %v1006 = vpop.f32.mrb[0].mxu0
        %v1007 = vadd.f32 0.0, %v1006
        %v1008 = vpop.f32.mrb[0].mxu0
        %v1009 = vadd.f32 0.0, %v1008
        %v1010 = vpop.f32.mrb[0].mxu0
        %v1011 = vadd.f32 0.0, %v1010
        %1012 = vmatprep.mubr.bf16.mxu0 %v912
        %1013 = vmatmul.mubr.bf16.gmra.mrb[0].mxu0 %v681
        %v1014 = vpop.f32.mrb[0].mxu0
        %v1015 = vadd.f32 0.0, %v1014
        %v1016 = vpop.f32.mrb[0].mxu0
        %v1017 = vadd.f32 0.0, %v1016
        %v1018 = vpop.f32.mrb[0].mxu0
        %v1019 = vadd.f32 0.0, %v1018
        %v1020 = vpop.f32.mrb[0].mxu0
        %v1021 = vadd.f32 0.0, %v1020
        %1022 = vmatprep.mubr.bf16.mxu0 %v915
        %1023 = vmatmul.mubr.bf16.gmra.mrb[0].mxu0 %v683
        %v1024 = vpop.f32.mrb[0].mxu0
        %v1025 = vadd.f32 0.0, %v1024
        %v1026 = vpop.f32.mrb[0].mxu0
        %v1027 = vadd.f32 0.0, %v1026
        %v1028 = vpop.f32.mrb[0].mxu0
        %v1029 = vadd.f32 0.0, %v1028
        %v1030 = vpop.f32.mrb[0].mxu0
        %v1031 = vadd.f32 0.0, %v1030
        %1032 = vmatprep.mubr.bf16.mxu0 %v918
        %1033 = vmatmul.mubr.bf16.gmra.mrb[0].mxu0 %v685
        %v1034 = vpop.f32.mrb[0].mxu0
        %v1035 = vadd.f32 0.0, %v1034
        %v1036 = vpop.f32.mrb[0].mxu0
        %v1037 = vadd.f32 0.0, %v1036
        %v1038 = vpop.f32.mrb[0].mxu0
        %v1039 = vadd.f32 0.0, %v1038
        %v1040 = vpop.f32.mrb[0].mxu0
        %v1041 = vadd.f32 0.0, %v1040
        %1042 = vdwg.mxu0
        %1043 = vmatprep.subr.bf16.mxu0 0
        %1044 = vmatpush1.bf16.msra.mxu0 %v822
        %1045 = vmatprep.subr.bf16.mxu0 0
        %1046 = vmatpush1.bf16.msra.mxu0 %v825
        %1047 = vmatprep.subr.bf16.mxu0 0
        %1048 = vmatpush1.bf16.msra.mxu0 %v828
        %1049 = vmatprep.subr.bf16.mxu0 0
        %1050 = vmatpush1.bf16.msra.mxu0 %v831
        %1051 = vmatprep.subr.bf16.mxu0 0
        %1052 = vmatpush1.bf16.msra.mxu0 %v834
        %1053 = vmatprep.subr.bf16.mxu0 0
        %1054 = vmatpush1.bf16.msra.mxu0 %v837
        %1055 = vmatprep.subr.bf16.mxu0 0
        %1056 = vmatpush1.bf16.msra.mxu0 %v840
        %1057 = vmatprep.subr.bf16.mxu0 0
        %1058 = vmatpush1.bf16.msra.mxu0 %v843
        %1059 = vmatprep.subr.bf16.mxu0 0
        %1060 = vmatpush1.bf16.msra.mxu0 %v846
        %1061 = vmatprep.subr.bf16.mxu0 0
        %1062 = vmatpush1.bf16.msra.mxu0 %v849
        %1063 = vmatprep.subr.bf16.mxu0 0
        %1064 = vmatpush1.bf16.msra.mxu0 %v852
        %1065 = vmatprep.subr.bf16.mxu0 0
        %1066 = vmatpush1.bf16.msra.mxu0 %v855
        %1067 = vmatprep.subr.bf16.mxu0 0
        %1068 = vmatpush1.bf16.msra.mxu0 %v928
        %1069 = vmatprep.subr.bf16.mxu0 0
        %1070 = vmatpush1.bf16.msra.mxu0 0
        %1071 = vmatprep.subr.bf16.mxu0 0
        %1072 = vmatpush1.bf16.msra.mxu0 0
        %1073 = vmatprep.subr.bf16.mxu0 0
        %1074 = vmatpush1.bf16.msra.mxu0 0
        %1075 = vmatprep.mubr.bf16.mxu0 %v897
        %1076 = vmatmul.mubr.bf16.gmra.mrb[0].mxu0 %v671
        %v1077 = vpop.f32.mrb[0].mxu0
        %v1078 = vadd.f32 0.0, %v1077
        %v1079 = vpop.f32.mrb[0].mxu0
        %v1080 = vpop.f32.mrb[0].mxu0
        %v1081 = vadd.f32 0.0, %v1080
        %v1082 = vpop.f32.mrb[0].mxu0
        %1083 = vmatprep.mubr.bf16.mxu0 %v900
        %1084 = vmatmul.mubr.bf16.gmra.mrb[0].mxu0 %v673
        %v1085 = vpop.f32.mrb[0].mxu0
        %v1086 = vadd.f32 0.0, %v1085
        %v1087 = vpop.f32.mrb[0].mxu0
        %v1088 = vpop.f32.mrb[0].mxu0
        %v1089 = vadd.f32 0.0, %v1088
        %v1090 = vpop.f32.mrb[0].mxu0
        %1091 = vmatprep.mubr.bf16.mxu0 %v903
        %1092 = vmatmul.mubr.bf16.gmra.mrb[0].mxu0 %v675
        %v1093 = vpop.f32.mrb[0].mxu0
        %v1094 = vadd.f32 0.0, %v1093
        %v1095 = vpop.f32.mrb[0].mxu0
        %v1096 = vpop.f32.mrb[0].mxu0
        %v1097 = vadd.f32 0.0, %v1096
        %v1098 = vpop.f32.mrb[0].mxu0
        %1099 = vmatprep.mubr.bf16.mxu0 %v906
        %1100 = vmatmul.mubr.bf16.gmra.mrb[0].mxu0 %v677
        %v1101 = vpop.f32.mrb[0].mxu0
        %v1102 = vadd.f32 0.0, %v1101
        %v1103 = vpop.f32.mrb[0].mxu0
        %v1104 = vpop.f32.mrb[0].mxu0
        %v1105 = vadd.f32 0.0, %v1104
        %v1106 = vpop.f32.mrb[0].mxu0
        %1107 = vmatprep.mubr.bf16.mxu0 %v909
        %1108 = vmatmul.mubr.bf16.gmra.mrb[0].mxu0 %v679
        %v1109 = vpop.f32.mrb[0].mxu0
        %v1110 = vadd.f32 0.0, %v1109
        %v1111 = vpop.f32.mrb[0].mxu0
        %v1112 = vpop.f32.mrb[0].mxu0
        %v1113 = vadd.f32 0.0, %v1112
        %v1114 = vpop.f32.mrb[0].mxu0
        %1115 = vmatprep.mubr.bf16.mxu0 %v912
        %1116 = vmatmul.mubr.bf16.gmra.mrb[0].mxu0 %v681
        %v1117 = vpop.f32.mrb[0].mxu0
        %v1118 = vadd.f32 0.0, %v1117
        %v1119 = vpop.f32.mrb[0].mxu0
        %v1120 = vpop.f32.mrb[0].mxu0
        %v1121 = vadd.f32 0.0, %v1120
        %v1122 = vpop.f32.mrb[0].mxu0
        %1123 = vmatprep.mubr.bf16.mxu0 %v915
        %1124 = vmatmul.mubr.bf16.gmra.mrb[0].mxu0 %v683
        %v1125 = vpop.f32.mrb[0].mxu0
        %v1126 = vadd.f32 0.0, %v1125
        %v1127 = vpop.f32.mrb[0].mxu0
        %v1128 = vpop.f32.mrb[0].mxu0
        %v1129 = vadd.f32 0.0, %v1128
        %v1130 = vpop.f32.mrb[0].mxu0
        %1131 = vmatprep.mubr.bf16.mxu0 %v918
        %1132 = vmatmul.mubr.bf16.gmra.mrb[0].mxu0 %v685
        %v1133 = vpop.f32.mrb[0].mxu0
        %v1134 = vadd.f32 0.0, %v1133
        %v1135 = vpop.f32.mrb[0].mxu0
        %v1136 = vpop.f32.mrb[0].mxu0
        %v1137 = vadd.f32 0.0, %v1136
        %v1138 = vpop.f32.mrb[0].mxu0
        %1139 = vdwg.mxu0
        %s1140 = scalar_lea.vmem %s1, 300
        %v1141 = vld [vmem:[%s1140] sm:$0xff]
        %v1142 = vld [vmem:[%s1140 + $0x8] sm:$0xf]
        %v1143 = vld [vmem:[%s1140 + $0xc] sm:$0xff]
        %v1144 = vld [vmem:[%s1140 + $0x14] sm:$0xf]
        %v1145 = vld [vmem:[%s1140 + $0x18] sm:$0xff]
        %v1146 = vld [vmem:[%s1140 + $0x20] sm:$0xf]
        %v1147 = vld [vmem:[%s1140 + $0x24] sm:$0xff]
        %v1148 = vld [vmem:[%s1140 + $0x2c] sm:$0xf]
        %v1149 = vld [vmem:[%s1140 + $0x30] sm:$0xff]
        %v1150 = vld [vmem:[%s1140 + $0x38] sm:$0xf]
        %v1151 = vld [vmem:[%s1140 + $0x3c] sm:$0xff]
        %v1152 = vld [vmem:[%s1140 + $0x44] sm:$0xf]
        %v1153 = vld [vmem:[%s1140 + $0x48] sm:$0xff]
        %v1154 = vld [vmem:[%s1140 + $0x50] sm:$0xf]
        %v1155 = vld [vmem:[%s1140 + $0x54] sm:$0xff]
        %v1156 = vld [vmem:[%s1140 + $0x5c] sm:$0xf]
        %v1157 = vld [vmem:[%s1140 + $0x60] sm:$0xff]
        %v1158 = vld [vmem:[%s1140 + $0x68] sm:$0xf]
        %v1159 = vld [vmem:[%s1140 + $0x6c] sm:$0xff]
        %v1160 = vld [vmem:[%s1140 + $0x74] sm:$0xf]
        %v1161 = vld [vmem:[%s1140 + $0x78] sm:$0xff]
        %v1162 = vld [vmem:[%s1140 + $0x80] sm:$0xf]
        %v1163 = vld [vmem:[%s1140 + $0x84] sm:$0xff]
        %v1164 = vld [vmem:[%s1140 + $0x8c] sm:$0xf]
        %v1165 = vld [vmem:[%s1140 + $0x90] sm:$0xff]
        %v1166 = vld [vmem:[%s1140 + $0x98] sm:$0xf]
        %v1167 = vld [vmem:[%s1140 + $0x9c] sm:$0xff]
        %v1168 = vld [vmem:[%s1140 + $0xa4] sm:$0xf]
        %v1169 = vld [vmem:[%s1140 + $0xa8] sm:$0xff]
        %v1170 = vld [vmem:[%s1140 + $0xb0] sm:$0xf]
        %v1171 = vld [vmem:[%s1140 + $0xb4] sm:$0xff]
        %v1172 = vld [vmem:[%s1140 + $0xbc] sm:$0xf]
        %v1173 = vld [vmem:[%s1140 + $0xc0] sm:$0xff]
        %v1174 = vld [vmem:[%s1140 + $0xc8] sm:$0xf]
        %v1175 = vld [vmem:[%s1140 + $0xcc] sm:$0xff]
        %v1176 = vld [vmem:[%s1140 + $0xd4] sm:$0xf]
        %v1177 = vld [vmem:[%s1140 + $0xd8] sm:$0xff]
        %v1178 = vld [vmem:[%s1140 + $0xe0] sm:$0xf]
        %v1179 = vld [vmem:[%s1140 + $0xe4] sm:$0xff]
        %v1180 = vld [vmem:[%s1140 + $0xec] sm:$0xf]
        %v1181 = vld [vmem:[%s1140 + $0xf0] sm:$0xff]
        %v1182 = vld [vmem:[%s1140 + $0xf8] sm:$0xf]
        %v1183 = vld [vmem:[%s1140 + $0xfc] sm:$0xff]
        %v1184 = vld [vmem:[%s1140 + $0x104] sm:$0xf]
        %v1185 = vld [vmem:[%s1140 + $0x108] sm:$0xff]
        %v1186 = vld [vmem:[%s1140 + $0x110] sm:$0xf]
        %v1187 = vld [vmem:[%s1140 + $0x114] sm:$0xff]
        %v1188 = vld [vmem:[%s1140 + $0x11c] sm:$0xf]
        %v1189 = vld [vmem:[%s1140 + $0x120] sm:$0xff]
        %v1190 = vld [vmem:[%s1140 + $0x128] sm:$0xf]
        %v1241 = vunpack.c.l.b16 %v1141
        %v1242 = vunpack.c.h.b16 %v1141
        %v1243 = vunpack.c.l.b16 %v1142
        %v1244 = vunpack.c.l.b16 %v1143
        %v1245 = vunpack.c.h.b16 %v1143
        %v1246 = vunpack.c.l.b16 %v1144
        %v1247 = vunpack.c.l.b16 %v1145
        %v1248 = vunpack.c.h.b16 %v1145
        %v1249 = vunpack.c.l.b16 %v1146
        %v1250 = vunpack.c.l.b16 %v1147
        %v1251 = vunpack.c.h.b16 %v1147
        %v1252 = vunpack.c.l.b16 %v1148
        %v1253 = vunpack.c.l.b16 %v1149
        %v1254 = vunpack.c.h.b16 %v1149
        %v1255 = vunpack.c.l.b16 %v1150
        %v1256 = vunpack.c.l.b16 %v1151
        %v1257 = vunpack.c.h.b16 %v1151
        %v1258 = vunpack.c.l.b16 %v1152
        %v1259 = vunpack.c.l.b16 %v1153
        %v1260 = vunpack.c.h.b16 %v1153
        %v1261 = vunpack.c.l.b16 %v1154
        %v1262 = vunpack.c.l.b16 %v1155
        %v1263 = vunpack.c.h.b16 %v1155
        %v1264 = vunpack.c.l.b16 %v1156
        %v1265 = vunpack.c.l.b16 %v1157
        %v1266 = vunpack.c.h.b16 %v1157
        %v1267 = vunpack.c.l.b16 %v1158
        %v1268 = vunpack.c.l.b16 %v1159
        %v1269 = vunpack.c.h.b16 %v1159
        %v1270 = vunpack.c.l.b16 %v1160
        %v1271 = vunpack.c.l.b16 %v1161
        %v1272 = vunpack.c.h.b16 %v1161
        %v1273 = vunpack.c.l.b16 %v1162
        %v1274 = vunpack.c.l.b16 %v1163
        %v1275 = vunpack.c.h.b16 %v1163
        %v1276 = vunpack.c.l.b16 %v1164
        %v1277 = vunpack.c.l.b16 %v1165
        %v1278 = vunpack.c.h.b16 %v1165
        %v1279 = vunpack.c.l.b16 %v1166
        %v1280 = vunpack.c.l.b16 %v1167
        %v1281 = vunpack.c.h.b16 %v1167
        %v1282 = vunpack.c.l.b16 %v1168
        %v1283 = vunpack.c.l.b16 %v1169
        %v1284 = vunpack.c.h.b16 %v1169
        %v1285 = vunpack.c.l.b16 %v1170
        %v1286 = vunpack.c.l.b16 %v1171
        %v1287 = vunpack.c.h.b16 %v1171
        %v1288 = vunpack.c.l.b16 %v1172
        %v1289 = vunpack.c.l.b16 %v1173
        %v1290 = vunpack.c.h.b16 %v1173
        %v1291 = vunpack.c.l.b16 %v1174
        %v1292 = vunpack.c.l.b16 %v1175
        %v1293 = vunpack.c.h.b16 %v1175
        %v1294 = vunpack.c.l.b16 %v1176
        %v1295 = vunpack.c.l.b16 %v1177
        %v1296 = vunpack.c.h.b16 %v1177
        %v1297 = vunpack.c.l.b16 %v1178
        %v1298 = vunpack.c.l.b16 %v1179
        %v1299 = vunpack.c.h.b16 %v1179
        %v1300 = vunpack.c.l.b16 %v1180
        %v1301 = vunpack.c.l.b16 %v1181
        %v1302 = vunpack.c.h.b16 %v1181
        %v1303 = vunpack.c.l.b16 %v1182
        %v1304 = vunpack.c.l.b16 %v1183
        %v1305 = vunpack.c.h.b16 %v1183
        %v1306 = vunpack.c.l.b16 %v1184
        %v1307 = vunpack.c.l.b16 %v1185
        %v1308 = vunpack.c.h.b16 %v1185
        %v1309 = vunpack.c.l.b16 %v1186
        %v1310 = vunpack.c.l.b16 %v1187
        %v1311 = vunpack.c.h.b16 %v1187
        %v1312 = vunpack.c.l.b16 %v1188
        %v1313 = vunpack.c.l.b16 %v1189
        %v1314 = vunpack.c.h.b16 %v1189
        %v1315 = vunpack.c.l.b16 %v1190
        %v1316 = vpack.c.b16 %v1244, %v1241
        %v1317 = vpack.c.b16 %v1245, %v1242
        %v1318 = vpack.c.b16 %v1246, %v1243
        %v1319 = vpack.c.b16 %v1250, %v1247
        %v1320 = vpack.c.b16 %v1251, %v1248
        %v1321 = vpack.c.b16 %v1252, %v1249
        %v1322 = vpack.c.b16 %v1256, %v1253
        %v1323 = vpack.c.b16 %v1257, %v1254
        %v1324 = vpack.c.b16 %v1258, %v1255
        %v1325 = vpack.c.b16 %v1262, %v1259
        %v1326 = vpack.c.b16 %v1263, %v1260
        %v1327 = vpack.c.b16 %v1264, %v1261
        %v1328 = vpack.c.b16 %v1268, %v1265
        %v1329 = vpack.c.b16 %v1269, %v1266
        %v1330 = vpack.c.b16 %v1270, %v1267
        %v1331 = vpack.c.b16 %v1274, %v1271
        %v1332 = vpack.c.b16 %v1275, %v1272
        %v1333 = vpack.c.b16 %v1276, %v1273
        %v1334 = vpack.c.b16 %v1280, %v1277
        %v1335 = vpack.c.b16 %v1281, %v1278
        %v1336 = vpack.c.b16 %v1282, %v1279
        %v1337 = vpack.c.b16 %v1286, %v1283
        %v1338 = vpack.c.b16 %v1287, %v1284
        %v1339 = vpack.c.b16 %v1288, %v1285
        %v1340 = vpack.c.b16 %v1292, %v1289
        %v1341 = vpack.c.b16 %v1293, %v1290
        %v1342 = vpack.c.b16 %v1294, %v1291
        %v1343 = vpack.c.b16 %v1298, %v1295
        %v1344 = vpack.c.b16 %v1299, %v1296
        %v1345 = vpack.c.b16 %v1300, %v1297
        %v1346 = vpack.c.b16 %v1304, %v1301
        %v1347 = vpack.c.b16 %v1305, %v1302
        %v1348 = vpack.c.b16 %v1306, %v1303
        %v1349 = vpack.c.b16 %v1310, %v1307
        %v1350 = vpack.c.b16 %v1311, %v1308
        %v1351 = vpack.c.b16 %v1312, %v1309
        %v1352 = vpack.c.b16 %v1313, %v1313
        %v1353 = vpack.c.b16 %v1314, %v1314
        %v1354 = vpack.c.b16 %v1315, %v1315
        %v1392 = vsel %vm920, %v1352, 0
        %v1395 = vsel %vm920, %v1353, 0
        %v1398 = vsel %vm920, %v1354, 0
        %1400 = vmatprep.subr.bf16.mxu0 %v1317
        %1401 = vmatpush1.bf16.msra.mxu0 %v1316
        %1402 = vmatprep.subr.bf16.mxu0 %v1320
        %1403 = vmatpush1.bf16.msra.mxu0 %v1319
        %1404 = vmatprep.subr.bf16.mxu0 %v1323
        %1405 = vmatpush1.bf16.msra.mxu0 %v1322
        %1406 = vmatprep.subr.bf16.mxu0 %v1326
        %1407 = vmatpush1.bf16.msra.mxu0 %v1325
        %1408 = vmatprep.subr.bf16.mxu0 %v1329
        %1409 = vmatpush1.bf16.msra.mxu0 %v1328
        %1410 = vmatprep.subr.bf16.mxu0 %v1332
        %1411 = vmatpush1.bf16.msra.mxu0 %v1331
        %1412 = vmatprep.subr.bf16.mxu0 %v1335
        %1413 = vmatpush1.bf16.msra.mxu0 %v1334
        %1414 = vmatprep.subr.bf16.mxu0 %v1338
        %1415 = vmatpush1.bf16.msra.mxu0 %v1337
        %1416 = vmatprep.subr.bf16.mxu0 %v1341
        %1417 = vmatpush1.bf16.msra.mxu0 %v1340
        %1418 = vmatprep.subr.bf16.mxu0 %v1344
        %1419 = vmatpush1.bf16.msra.mxu0 %v1343
        %1420 = vmatprep.subr.bf16.mxu0 %v1347
        %1421 = vmatpush1.bf16.msra.mxu0 %v1346
        %1422 = vmatprep.subr.bf16.mxu0 %v1350
        %1423 = vmatpush1.bf16.msra.mxu0 %v1349
        %1424 = vmatprep.subr.bf16.mxu0 %v1395
        %1425 = vmatpush1.bf16.msra.mxu0 %v1392
        %1426 = vmatprep.subr.bf16.mxu0 0
        %1427 = vmatpush1.bf16.msra.mxu0 0
        %1428 = vmatprep.subr.bf16.mxu0 0
        %1429 = vmatpush1.bf16.msra.mxu0 0
        %1430 = vmatprep.subr.bf16.mxu0 0
        %1431 = vmatpush1.bf16.msra.mxu0 0
        %1432 = vmatprep.mubr.bf16.mxu0 %v897
        %1433 = vmatmul.mubr.bf16.gmra.mrb[0].mxu0 %v671
        %v1434 = vpop.f32.mrb[0].mxu0
        %v1435 = vadd.f32 0.0, %v1434
        %v1436 = vpop.f32.mrb[0].mxu0
        %v1437 = vadd.f32 0.0, %v1436
        %v1438 = vpop.f32.mrb[0].mxu0
        %v1439 = vadd.f32 0.0, %v1438
        %v1440 = vpop.f32.mrb[0].mxu0
        %v1441 = vadd.f32 0.0, %v1440
        %1442 = vmatprep.mubr.bf16.mxu0 %v900
        %1443 = vmatmul.mubr.bf16.gmra.mrb[0].mxu0 %v673
        %v1444 = vpop.f32.mrb[0].mxu0
        %v1445 = vadd.f32 0.0, %v1444
        %v1446 = vpop.f32.mrb[0].mxu0
        %v1447 = vadd.f32 0.0, %v1446
        %v1448 = vpop.f32.mrb[0].mxu0
        %v1449 = vadd.f32 0.0, %v1448
        %v1450 = vpop.f32.mrb[0].mxu0
        %v1451 = vadd.f32 0.0, %v1450
        %1452 = vmatprep.mubr.bf16.mxu0 %v903
        %1453 = vmatmul.mubr.bf16.gmra.mrb[0].mxu0 %v675
        %v1454 = vpop.f32.mrb[0].mxu0
        %v1455 = vadd.f32 0.0, %v1454
        %v1456 = vpop.f32.mrb[0].mxu0
        %v1457 = vadd.f32 0.0, %v1456
        %v1458 = vpop.f32.mrb[0].mxu0
        %v1459 = vadd.f32 0.0, %v1458
        %v1460 = vpop.f32.mrb[0].mxu0
        %v1461 = vadd.f32 0.0, %v1460
        %1462 = vmatprep.mubr.bf16.mxu0 %v906
        %1463 = vmatmul.mubr.bf16.gmra.mrb[0].mxu0 %v677
        %v1464 = vpop.f32.mrb[0].mxu0
        %v1465 = vadd.f32 0.0, %v1464
        %v1466 = vpop.f32.mrb[0].mxu0
        %v1467 = vadd.f32 0.0, %v1466
        %v1468 = vpop.f32.mrb[0].mxu0
        %v1469 = vadd.f32 0.0, %v1468
        %v1470 = vpop.f32.mrb[0].mxu0
        %v1471 = vadd.f32 0.0, %v1470
        %1472 = vmatprep.mubr.bf16.mxu0 %v909
        %1473 = vmatmul.mubr.bf16.gmra.mrb[0].mxu0 %v679
        %v1474 = vpop.f32.mrb[0].mxu0
        %v1475 = vadd.f32 0.0, %v1474
        %v1476 = vpop.f32.mrb[0].mxu0
        %v1477 = vadd.f32 0.0, %v1476
        %v1478 = vpop.f32.mrb[0].mxu0
        %v1479 = vadd.f32 0.0, %v1478
        %v1480 = vpop.f32.mrb[0].mxu0
        %v1481 = vadd.f32 0.0, %v1480
        %1482 = vmatprep.mubr.bf16.mxu0 %v912
        %1483 = vmatmul.mubr.bf16.gmra.mrb[0].mxu0 %v681
        %v1484 = vpop.f32.mrb[0].mxu0
        %v1485 = vadd.f32 0.0, %v1484
        %v1486 = vpop.f32.mrb[0].mxu0
        %v1487 = vadd.f32 0.0, %v1486
        %v1488 = vpop.f32.mrb[0].mxu0
        %v1489 = vadd.f32 0.0, %v1488
        %v1490 = vpop.f32.mrb[0].mxu0
        %v1491 = vadd.f32 0.0, %v1490
        %1492 = vmatprep.mubr.bf16.mxu0 %v915
        %1493 = vmatmul.mubr.bf16.gmra.mrb[0].mxu0 %v683
        %v1494 = vpop.f32.mrb[0].mxu0
        %v1495 = vadd.f32 0.0, %v1494
        %v1496 = vpop.f32.mrb[0].mxu0
        %v1497 = vadd.f32 0.0, %v1496
        %v1498 = vpop.f32.mrb[0].mxu0
        %v1499 = vadd.f32 0.0, %v1498
        %v1500 = vpop.f32.mrb[0].mxu0
        %v1501 = vadd.f32 0.0, %v1500
        %1502 = vmatprep.mubr.bf16.mxu0 %v918
        %1503 = vmatmul.mubr.bf16.gmra.mrb[0].mxu0 %v685
        %v1504 = vpop.f32.mrb[0].mxu0
        %v1505 = vadd.f32 0.0, %v1504
        %v1506 = vpop.f32.mrb[0].mxu0
        %v1507 = vadd.f32 0.0, %v1506
        %v1508 = vpop.f32.mrb[0].mxu0
        %v1509 = vadd.f32 0.0, %v1508
        %v1510 = vpop.f32.mrb[0].mxu0
        %v1511 = vadd.f32 0.0, %v1510
        %1512 = vdwg.mxu0
        %1513 = vmatprep.subr.bf16.mxu0 0
        %1514 = vmatpush1.bf16.msra.mxu0 %v1318
        %1515 = vmatprep.subr.bf16.mxu0 0
        %1516 = vmatpush1.bf16.msra.mxu0 %v1321
        %1517 = vmatprep.subr.bf16.mxu0 0
        %1518 = vmatpush1.bf16.msra.mxu0 %v1324
        %1519 = vmatprep.subr.bf16.mxu0 0
        %1520 = vmatpush1.bf16.msra.mxu0 %v1327
        %1521 = vmatprep.subr.bf16.mxu0 0
        %1522 = vmatpush1.bf16.msra.mxu0 %v1330
        %1523 = vmatprep.subr.bf16.mxu0 0
        %1524 = vmatpush1.bf16.msra.mxu0 %v1333
        %1525 = vmatprep.subr.bf16.mxu0 0
        %1526 = vmatpush1.bf16.msra.mxu0 %v1336
        %1527 = vmatprep.subr.bf16.mxu0 0
        %1528 = vmatpush1.bf16.msra.mxu0 %v1339
        %1529 = vmatprep.subr.bf16.mxu0 0
        %1530 = vmatpush1.bf16.msra.mxu0 %v1342
        %1531 = vmatprep.subr.bf16.mxu0 0
        %1532 = vmatpush1.bf16.msra.mxu0 %v1345
        %1533 = vmatprep.subr.bf16.mxu0 0
        %1534 = vmatpush1.bf16.msra.mxu0 %v1348
        %1535 = vmatprep.subr.bf16.mxu0 0
        %1536 = vmatpush1.bf16.msra.mxu0 %v1351
        %1537 = vmatprep.subr.bf16.mxu0 0
        %1538 = vmatpush1.bf16.msra.mxu0 %v1398
        %1539 = vmatprep.subr.bf16.mxu0 0
        %1540 = vmatpush1.bf16.msra.mxu0 0
        %1541 = vmatprep.subr.bf16.mxu0 0
        %1542 = vmatpush1.bf16.msra.mxu0 0
        %1543 = vmatprep.subr.bf16.mxu0 0
        %1544 = vmatpush1.bf16.msra.mxu0 0
        %1545 = vmatprep.mubr.bf16.mxu0 %v897
        %1546 = vmatmul.mubr.bf16.gmra.mrb[0].mxu0 %v671
        %v1547 = vpop.f32.mrb[0].mxu0
        %v1548 = vadd.f32 0.0, %v1547
        %v1549 = vpop.f32.mrb[0].mxu0
        %v1550 = vpop.f32.mrb[0].mxu0
        %v1551 = vadd.f32 0.0, %v1550
        %v1552 = vpop.f32.mrb[0].mxu0
        %1553 = vmatprep.mubr.bf16.mxu0 %v900
        %1554 = vmatmul.mubr.bf16.gmra.mrb[0].mxu0 %v673
        %v1555 = vpop.f32.mrb[0].mxu0
        %v1556 = vadd.f32 0.0, %v1555
        %v1557 = vpop.f32.mrb[0].mxu0
        %v1558 = vpop.f32.mrb[0].mxu0
        %v1559 = vadd.f32 0.0, %v1558
        %v1560 = vpop.f32.mrb[0].mxu0
        %1561 = vmatprep.mubr.bf16.mxu0 %v903
        %1562 = vmatmul.mubr.bf16.gmra.mrb[0].mxu0 %v675
        %v1563 = vpop.f32.mrb[0].mxu0
        %v1564 = vadd.f32 0.0, %v1563
        %v1565 = vpop.f32.mrb[0].mxu0
        %v1566 = vpop.f32.mrb[0].mxu0
        %v1567 = vadd.f32 0.0, %v1566
        %v1568 = vpop.f32.mrb[0].mxu0
        %1569 = vmatprep.mubr.bf16.mxu0 %v906
        %1570 = vmatmul.mubr.bf16.gmra.mrb[0].mxu0 %v677
        %v1571 = vpop.f32.mrb[0].mxu0
        %v1572 = vadd.f32 0.0, %v1571
        %v1573 = vpop.f32.mrb[0].mxu0
        %v1574 = vpop.f32.mrb[0].mxu0
        %v1575 = vadd.f32 0.0, %v1574
        %v1576 = vpop.f32.mrb[0].mxu0
        %1577 = vmatprep.mubr.bf16.mxu0 %v909
        %1578 = vmatmul.mubr.bf16.gmra.mrb[0].mxu0 %v679
        %v1579 = vpop.f32.mrb[0].mxu0
        %v1580 = vadd.f32 0.0, %v1579
        %v1581 = vpop.f32.mrb[0].mxu0
        %v1582 = vpop.f32.mrb[0].mxu0
        %v1583 = vadd.f32 0.0, %v1582
        %v1584 = vpop.f32.mrb[0].mxu0
        %1585 = vmatprep.mubr.bf16.mxu0 %v912
        %1586 = vmatmul.mubr.bf16.gmra.mrb[0].mxu0 %v681
        %v1587 = vpop.f32.mrb[0].mxu0
        %v1588 = vadd.f32 0.0, %v1587
        %v1589 = vpop.f32.mrb[0].mxu0
        %v1590 = vpop.f32.mrb[0].mxu0
        %v1591 = vadd.f32 0.0, %v1590
        %v1592 = vpop.f32.mrb[0].mxu0
        %1593 = vmatprep.mubr.bf16.mxu0 %v915
        %1594 = vmatmul.mubr.bf16.gmra.mrb[0].mxu0 %v683
        %v1595 = vpop.f32.mrb[0].mxu0
        %v1596 = vadd.f32 0.0, %v1595
        %v1597 = vpop.f32.mrb[0].mxu0
        %v1598 = vpop.f32.mrb[0].mxu0
        %v1599 = vadd.f32 0.0, %v1598
        %v1600 = vpop.f32.mrb[0].mxu0
        %1601 = vmatprep.mubr.bf16.mxu0 %v918
        %1602 = vmatmul.mubr.bf16.gmra.mrb[0].mxu0 %v685
        %v1603 = vpop.f32.mrb[0].mxu0
        %v1604 = vadd.f32 0.0, %v1603
        %v1605 = vpop.f32.mrb[0].mxu0
        %v1606 = vpop.f32.mrb[0].mxu0
        %v1607 = vadd.f32 0.0, %v1606
        %v1608 = vpop.f32.mrb[0].mxu0
        %1609 = vdwg.mxu0
        %v1610 = vmax.f32 %v965, %v1435
        %v1611 = vmax.f32 %v967, %v1437
        %v1612 = vmax.f32 %v1078, %v1548
        %v1613 = vmax.f32 %v969, %v1439
        %v1614 = vmax.f32 %v971, %v1441
        %v1615 = vmax.f32 %v1081, %v1551
        %v1616 = vmax.f32 %v975, %v1445
        %v1617 = vmax.f32 %v977, %v1447
        %v1618 = vmax.f32 %v1086, %v1556
        %v1619 = vmax.f32 %v979, %v1449
        %v1620 = vmax.f32 %v981, %v1451
        %v1621 = vmax.f32 %v1089, %v1559
        %v1622 = vmax.f32 %v985, %v1455
        %v1623 = vmax.f32 %v987, %v1457
        %v1624 = vmax.f32 %v1094, %v1564
        %v1625 = vmax.f32 %v989, %v1459
        %v1626 = vmax.f32 %v991, %v1461
        %v1627 = vmax.f32 %v1097, %v1567
        %v1628 = vmax.f32 %v995, %v1465
        %v1629 = vmax.f32 %v997, %v1467
        %v1630 = vmax.f32 %v1102, %v1572
        %v1631 = vmax.f32 %v999, %v1469
        %v1632 = vmax.f32 %v1001, %v1471
        %v1633 = vmax.f32 %v1105, %v1575
        %v1634 = vmax.f32 %v1005, %v1475
        %v1635 = vmax.f32 %v1007, %v1477
        %v1636 = vmax.f32 %v1110, %v1580
        %v1637 = vmax.f32 %v1009, %v1479
        %v1638 = vmax.f32 %v1011, %v1481
        %v1639 = vmax.f32 %v1113, %v1583
        %v1640 = vmax.f32 %v1015, %v1485
        %v1641 = vmax.f32 %v1017, %v1487
        %v1642 = vmax.f32 %v1118, %v1588
        %v1643 = vmax.f32 %v1019, %v1489
        %v1644 = vmax.f32 %v1021, %v1491
        %v1645 = vmax.f32 %v1121, %v1591
        %v1646 = vmax.f32 %v1025, %v1495
        %v1647 = vmax.f32 %v1027, %v1497
        %v1648 = vmax.f32 %v1126, %v1596
        %v1649 = vmax.f32 %v1029, %v1499
        %v1650 = vmax.f32 %v1031, %v1501
        %v1651 = vmax.f32 %v1129, %v1599
        %v1652 = vmax.f32 %v1035, %v1505
        %v1653 = vmax.f32 %v1037, %v1507
        %v1654 = vmax.f32 %v1134, %v1604
        %v1655 = vmax.f32 %v1039, %v1509
        %v1656 = vmax.f32 %v1041, %v1511
        %v1657 = vmax.f32 %v1137, %v1607
        %s1658 = scalar_lea.vmem %s1, 600
        %v1659 = vld [vmem:[%s1658] sm:$0xff]
        %v1660 = vld [vmem:[%s1658 + $0x8] sm:$0xf]
        %v1661 = vld [vmem:[%s1658 + $0xc] sm:$0xff]
        %v1662 = vld [vmem:[%s1658 + $0x14] sm:$0xf]
        %v1663 = vld [vmem:[%s1658 + $0x18] sm:$0xff]
        %v1664 = vld [vmem:[%s1658 + $0x20] sm:$0xf]
        %v1665 = vld [vmem:[%s1658 + $0x24] sm:$0xff]
        %v1666 = vld [vmem:[%s1658 + $0x2c] sm:$0xf]
        %v1667 = vld [vmem:[%s1658 + $0x30] sm:$0xff]
        %v1668 = vld [vmem:[%s1658 + $0x38] sm:$0xf]
        %v1669 = vld [vmem:[%s1658 + $0x3c] sm:$0xff]
        %v1670 = vld [vmem:[%s1658 + $0x44] sm:$0xf]
        %v1671 = vld [vmem:[%s1658 + $0x48] sm:$0xff]
        %v1672 = vld [vmem:[%s1658 + $0x50] sm:$0xf]
        %v1673 = vld [vmem:[%s1658 + $0x54] sm:$0xff]
        %v1674 = vld [vmem:[%s1658 + $0x5c] sm:$0xf]
        %v1675 = vld [vmem:[%s1658 + $0x60] sm:$0xff]
        %v1676 = vld [vmem:[%s1658 + $0x68] sm:$0xf]
        %v1677 = vld [vmem:[%s1658 + $0x6c] sm:$0xff]
        %v1678 = vld [vmem:[%s1658 + $0x74] sm:$0xf]
        %v1679 = vld [vmem:[%s1658 + $0x78] sm:$0xff]
        %v1680 = vld [vmem:[%s1658 + $0x80] sm:$0xf]
        %v1681 = vld [vmem:[%s1658 + $0x84] sm:$0xff]
        %v1682 = vld [vmem:[%s1658 + $0x8c] sm:$0xf]
        %v1683 = vld [vmem:[%s1658 + $0x90] sm:$0xff]
        %v1684 = vld [vmem:[%s1658 + $0x98] sm:$0xf]
        %v1685 = vld [vmem:[%s1658 + $0x9c] sm:$0xff]
        %v1686 = vld [vmem:[%s1658 + $0xa4] sm:$0xf]
        %v1687 = vld [vmem:[%s1658 + $0xa8] sm:$0xff]
        %v1688 = vld [vmem:[%s1658 + $0xb0] sm:$0xf]
        %v1689 = vld [vmem:[%s1658 + $0xb4] sm:$0xff]
        %v1690 = vld [vmem:[%s1658 + $0xbc] sm:$0xf]
        %v1691 = vld [vmem:[%s1658 + $0xc0] sm:$0xff]
        %v1692 = vld [vmem:[%s1658 + $0xc8] sm:$0xf]
        %v1693 = vld [vmem:[%s1658 + $0xcc] sm:$0xff]
        %v1694 = vld [vmem:[%s1658 + $0xd4] sm:$0xf]
        %v1695 = vld [vmem:[%s1658 + $0xd8] sm:$0xff]
        %v1696 = vld [vmem:[%s1658 + $0xe0] sm:$0xf]
        %v1697 = vld [vmem:[%s1658 + $0xe4] sm:$0xff]
        %v1698 = vld [vmem:[%s1658 + $0xec] sm:$0xf]
        %v1699 = vld [vmem:[%s1658 + $0xf0] sm:$0xff]
        %v1700 = vld [vmem:[%s1658 + $0xf8] sm:$0xf]
        %v1701 = vld [vmem:[%s1658 + $0xfc] sm:$0xff]
        %v1702 = vld [vmem:[%s1658 + $0x104] sm:$0xf]
        %v1703 = vld [vmem:[%s1658 + $0x108] sm:$0xff]
        %v1704 = vld [vmem:[%s1658 + $0x110] sm:$0xf]
        %v1705 = vld [vmem:[%s1658 + $0x114] sm:$0xff]
        %v1706 = vld [vmem:[%s1658 + $0x11c] sm:$0xf]
        %v1707 = vld [vmem:[%s1658 + $0x120] sm:$0xff]
        %v1708 = vld [vmem:[%s1658 + $0x128] sm:$0xf]
        %v1759 = vunpack.c.l.b16 %v1659
        %v1760 = vunpack.c.h.b16 %v1659
        %v1761 = vunpack.c.l.b16 %v1660
        %v1762 = vunpack.c.l.b16 %v1661
        %v1763 = vunpack.c.h.b16 %v1661
        %v1764 = vunpack.c.l.b16 %v1662
        %v1765 = vunpack.c.l.b16 %v1663
        %v1766 = vunpack.c.h.b16 %v1663
        %v1767 = vunpack.c.l.b16 %v1664
        %v1768 = vunpack.c.l.b16 %v1665
        %v1769 = vunpack.c.h.b16 %v1665
        %v1770 = vunpack.c.l.b16 %v1666
        %v1771 = vunpack.c.l.b16 %v1667
        %v1772 = vunpack.c.h.b16 %v1667
        %v1773 = vunpack.c.l.b16 %v1668
        %v1774 = vunpack.c.l.b16 %v1669
        %v1775 = vunpack.c.h.b16 %v1669
        %v1776 = vunpack.c.l.b16 %v1670
        %v1777 = vunpack.c.l.b16 %v1671
        %v1778 = vunpack.c.h.b16 %v1671
        %v1779 = vunpack.c.l.b16 %v1672
        %v1780 = vunpack.c.l.b16 %v1673
        %v1781 = vunpack.c.h.b16 %v1673
        %v1782 = vunpack.c.l.b16 %v1674
        %v1783 = vunpack.c.l.b16 %v1675
        %v1784 = vunpack.c.h.b16 %v1675
        %v1785 = vunpack.c.l.b16 %v1676
        %v1786 = vunpack.c.l.b16 %v1677
        %v1787 = vunpack.c.h.b16 %v1677
        %v1788 = vunpack.c.l.b16 %v1678
        %v1789 = vunpack.c.l.b16 %v1679
        %v1790 = vunpack.c.h.b16 %v1679
        %v1791 = vunpack.c.l.b16 %v1680
        %v1792 = vunpack.c.l.b16 %v1681
        %v1793 = vunpack.c.h.b16 %v1681
        %v1794 = vunpack.c.l.b16 %v1682
        %v1795 = vunpack.c.l.b16 %v1683
        %v1796 = vunpack.c.h.b16 %v1683
        %v1797 = vunpack.c.l.b16 %v1684
        %v1798 = vunpack.c.l.b16 %v1685
        %v1799 = vunpack.c.h.b16 %v1685
        %v1800 = vunpack.c.l.b16 %v1686
        %v1801 = vunpack.c.l.b16 %v1687
        %v1802 = vunpack.c.h.b16 %v1687
        %v1803 = vunpack.c.l.b16 %v1688
        %v1804 = vunpack.c.l.b16 %v1689
        %v1805 = vunpack.c.h.b16 %v1689
        %v1806 = vunpack.c.l.b16 %v1690
        %v1807 = vunpack.c.l.b16 %v1691
        %v1808 = vunpack.c.h.b16 %v1691
        %v1809 = vunpack.c.l.b16 %v1692
        %v1810 = vunpack.c.l.b16 %v1693
        %v1811 = vunpack.c.h.b16 %v1693
        %v1812 = vunpack.c.l.b16 %v1694
        %v1813 = vunpack.c.l.b16 %v1695
        %v1814 = vunpack.c.h.b16 %v1695
        %v1815 = vunpack.c.l.b16 %v1696
        %v1816 = vunpack.c.l.b16 %v1697
        %v1817 = vunpack.c.h.b16 %v1697
        %v1818 = vunpack.c.l.b16 %v1698
        %v1819 = vunpack.c.l.b16 %v1699
        %v1820 = vunpack.c.h.b16 %v1699
        %v1821 = vunpack.c.l.b16 %v1700
        %v1822 = vunpack.c.l.b16 %v1701
        %v1823 = vunpack.c.h.b16 %v1701
        %v1824 = vunpack.c.l.b16 %v1702
        %v1825 = vunpack.c.l.b16 %v1703
        %v1826 = vunpack.c.h.b16 %v1703
        %v1827 = vunpack.c.l.b16 %v1704
        %v1828 = vunpack.c.l.b16 %v1705
        %v1829 = vunpack.c.h.b16 %v1705
        %v1830 = vunpack.c.l.b16 %v1706
        %v1831 = vunpack.c.l.b16 %v1707
        %v1832 = vunpack.c.h.b16 %v1707
        %v1833 = vunpack.c.l.b16 %v1708
        %v1834 = vpack.c.b16 %v1762, %v1759
        %v1835 = vpack.c.b16 %v1763, %v1760
        %v1836 = vpack.c.b16 %v1764, %v1761
        %v1837 = vpack.c.b16 %v1768, %v1765
        %v1838 = vpack.c.b16 %v1769, %v1766
        %v1839 = vpack.c.b16 %v1770, %v1767
        %v1840 = vpack.c.b16 %v1774, %v1771
        %v1841 = vpack.c.b16 %v1775, %v1772
        %v1842 = vpack.c.b16 %v1776, %v1773
        %v1843 = vpack.c.b16 %v1780, %v1777
        %v1844 = vpack.c.b16 %v1781, %v1778
        %v1845 = vpack.c.b16 %v1782, %v1779
        %v1846 = vpack.c.b16 %v1786, %v1783
        %v1847 = vpack.c.b16 %v1787, %v1784
        %v1848 = vpack.c.b16 %v1788, %v1785
        %v1849 = vpack.c.b16 %v1792, %v1789
        %v1850 = vpack.c.b16 %v1793, %v1790
        %v1851 = vpack.c.b16 %v1794, %v1791
        %v1852 = vpack.c.b16 %v1798, %v1795
        %v1853 = vpack.c.b16 %v1799, %v1796
        %v1854 = vpack.c.b16 %v1800, %v1797
        %v1855 = vpack.c.b16 %v1804, %v1801
        %v1856 = vpack.c.b16 %v1805, %v1802
        %v1857 = vpack.c.b16 %v1806, %v1803
        %v1858 = vpack.c.b16 %v1810, %v1807
        %v1859 = vpack.c.b16 %v1811, %v1808
        %v1860 = vpack.c.b16 %v1812, %v1809
        %v1861 = vpack.c.b16 %v1816, %v1813
        %v1862 = vpack.c.b16 %v1817, %v1814
        %v1863 = vpack.c.b16 %v1818, %v1815
        %v1864 = vpack.c.b16 %v1822, %v1819
        %v1865 = vpack.c.b16 %v1823, %v1820
        %v1866 = vpack.c.b16 %v1824, %v1821
        %v1867 = vpack.c.b16 %v1828, %v1825
        %v1868 = vpack.c.b16 %v1829, %v1826
        %v1869 = vpack.c.b16 %v1830, %v1827
        %v1870 = vpack.c.b16 %v1831, %v1831
        %v1871 = vpack.c.b16 %v1832, %v1832
        %v1872 = vpack.c.b16 %v1833, %v1833
        %v1910 = vsel %vm920, %v1870, 0
        %v1913 = vsel %vm920, %v1871, 0
        %v1916 = vsel %vm920, %v1872, 0
        %1918 = vmatprep.subr.bf16.mxu0 %v1835
        %1919 = vmatpush1.bf16.msra.mxu0 %v1834
        %1920 = vmatprep.subr.bf16.mxu0 %v1838
        %1921 = vmatpush1.bf16.msra.mxu0 %v1837
        %1922 = vmatprep.subr.bf16.mxu0 %v1841
        %1923 = vmatpush1.bf16.msra.mxu0 %v1840
        %1924 = vmatprep.subr.bf16.mxu0 %v1844
        %1925 = vmatpush1.bf16.msra.mxu0 %v1843
        %1926 = vmatprep.subr.bf16.mxu0 %v1847
        %1927 = vmatpush1.bf16.msra.mxu0 %v1846
        %1928 = vmatprep.subr.bf16.mxu0 %v1850
        %1929 = vmatpush1.bf16.msra.mxu0 %v1849
        %1930 = vmatprep.subr.bf16.mxu0 %v1853
        %1931 = vmatpush1.bf16.msra.mxu0 %v1852
        %1932 = vmatprep.subr.bf16.mxu0 %v1856
        %1933 = vmatpush1.bf16.msra.mxu0 %v1855
        %1934 = vmatprep.subr.bf16.mxu0 %v1859
        %1935 = vmatpush1.bf16.msra.mxu0 %v1858
        %1936 = vmatprep.subr.bf16.mxu0 %v1862
        %1937 = vmatpush1.bf16.msra.mxu0 %v1861
        %1938 = vmatprep.subr.bf16.mxu0 %v1865
        %1939 = vmatpush1.bf16.msra.mxu0 %v1864
        %1940 = vmatprep.subr.bf16.mxu0 %v1868
        %1941 = vmatpush1.bf16.msra.mxu0 %v1867
        %1942 = vmatprep.subr.bf16.mxu0 %v1913
        %1943 = vmatpush1.bf16.msra.mxu0 %v1910
        %1944 = vmatprep.subr.bf16.mxu0 0
        %1945 = vmatpush1.bf16.msra.mxu0 0
        %1946 = vmatprep.subr.bf16.mxu0 0
        %1947 = vmatpush1.bf16.msra.mxu0 0
        %1948 = vmatprep.subr.bf16.mxu0 0
        %1949 = vmatpush1.bf16.msra.mxu0 0
        %1950 = vmatprep.mubr.bf16.mxu0 %v897
        %1951 = vmatmul.mubr.bf16.gmra.mrb[0].mxu0 %v671
        %v1952 = vpop.f32.mrb[0].mxu0
        %v1953 = vadd.f32 0.0, %v1952
        %v1954 = vpop.f32.mrb[0].mxu0
        %v1955 = vadd.f32 0.0, %v1954
        %v1956 = vpop.f32.mrb[0].mxu0
        %v1957 = vadd.f32 0.0, %v1956
        %v1958 = vpop.f32.mrb[0].mxu0
        %v1959 = vadd.f32 0.0, %v1958
        %1960 = vmatprep.mubr.bf16.mxu0 %v900
        %1961 = vmatmul.mubr.bf16.gmra.mrb[0].mxu0 %v673
        %v1962 = vpop.f32.mrb[0].mxu0
        %v1963 = vadd.f32 0.0, %v1962
        %v1964 = vpop.f32.mrb[0].mxu0
        %v1965 = vadd.f32 0.0, %v1964
        %v1966 = vpop.f32.mrb[0].mxu0
        %v1967 = vadd.f32 0.0, %v1966
        %v1968 = vpop.f32.mrb[0].mxu0
        %v1969 = vadd.f32 0.0, %v1968
        %1970 = vmatprep.mubr.bf16.mxu0 %v903
        %1971 = vmatmul.mubr.bf16.gmra.mrb[0].mxu0 %v675
        %v1972 = vpop.f32.mrb[0].mxu0
        %v1973 = vadd.f32 0.0, %v1972
        %v1974 = vpop.f32.mrb[0].mxu0
        %v1975 = vadd.f32 0.0, %v1974
        %v1976 = vpop.f32.mrb[0].mxu0
        %v1977 = vadd.f32 0.0, %v1976
        %v1978 = vpop.f32.mrb[0].mxu0
        %v1979 = vadd.f32 0.0, %v1978
        %1980 = vmatprep.mubr.bf16.mxu0 %v906
        %1981 = vmatmul.mubr.bf16.gmra.mrb[0].mxu0 %v677
        %v1982 = vpop.f32.mrb[0].mxu0
        %v1983 = vadd.f32 0.0, %v1982
        %v1984 = vpop.f32.mrb[0].mxu0
        %v1985 = vadd.f32 0.0, %v1984
        %v1986 = vpop.f32.mrb[0].mxu0
        %v1987 = vadd.f32 0.0, %v1986
        %v1988 = vpop.f32.mrb[0].mxu0
        %v1989 = vadd.f32 0.0, %v1988
        %1990 = vmatprep.mubr.bf16.mxu0 %v909
        %1991 = vmatmul.mubr.bf16.gmra.mrb[0].mxu0 %v679
        %v1992 = vpop.f32.mrb[0].mxu0
        %v1993 = vadd.f32 0.0, %v1992
        %v1994 = vpop.f32.mrb[0].mxu0
        %v1995 = vadd.f32 0.0, %v1994
        %v1996 = vpop.f32.mrb[0].mxu0
        %v1997 = vadd.f32 0.0, %v1996
        %v1998 = vpop.f32.mrb[0].mxu0
        %v1999 = vadd.f32 0.0, %v1998
        %2000 = vmatprep.mubr.bf16.mxu0 %v912
        %2001 = vmatmul.mubr.bf16.gmra.mrb[0].mxu0 %v681
        %v2002 = vpop.f32.mrb[0].mxu0
        %v2003 = vadd.f32 0.0, %v2002
        %v2004 = vpop.f32.mrb[0].mxu0
        %v2005 = vadd.f32 0.0, %v2004
        %v2006 = vpop.f32.mrb[0].mxu0
        %v2007 = vadd.f32 0.0, %v2006
        %v2008 = vpop.f32.mrb[0].mxu0
        %v2009 = vadd.f32 0.0, %v2008
        %2010 = vmatprep.mubr.bf16.mxu0 %v915
        %2011 = vmatmul.mubr.bf16.gmra.mrb[0].mxu0 %v683
        %v2012 = vpop.f32.mrb[0].mxu0
        %v2013 = vadd.f32 0.0, %v2012
        %v2014 = vpop.f32.mrb[0].mxu0
        %v2015 = vadd.f32 0.0, %v2014
        %v2016 = vpop.f32.mrb[0].mxu0
        %v2017 = vadd.f32 0.0, %v2016
        %v2018 = vpop.f32.mrb[0].mxu0
        %v2019 = vadd.f32 0.0, %v2018
        %2020 = vmatprep.mubr.bf16.mxu0 %v918
        %2021 = vmatmul.mubr.bf16.gmra.mrb[0].mxu0 %v685
        %v2022 = vpop.f32.mrb[0].mxu0
        %v2023 = vadd.f32 0.0, %v2022
        %v2024 = vpop.f32.mrb[0].mxu0
        %v2025 = vadd.f32 0.0, %v2024
        %v2026 = vpop.f32.mrb[0].mxu0
        %v2027 = vadd.f32 0.0, %v2026
        %v2028 = vpop.f32.mrb[0].mxu0
        %v2029 = vadd.f32 0.0, %v2028
        %2030 = vdwg.mxu0
        %2031 = vmatprep.subr.bf16.mxu0 0
        %2032 = vmatpush1.bf16.msra.mxu0 %v1836
        %2033 = vmatprep.subr.bf16.mxu0 0
        %2034 = vmatpush1.bf16.msra.mxu0 %v1839
        %2035 = vmatprep.subr.bf16.mxu0 0
        %2036 = vmatpush1.bf16.msra.mxu0 %v1842
        %2037 = vmatprep.subr.bf16.mxu0 0
        %2038 = vmatpush1.bf16.msra.mxu0 %v1845
        %2039 = vmatprep.subr.bf16.mxu0 0
        %2040 = vmatpush1.bf16.msra.mxu0 %v1848
        %2041 = vmatprep.subr.bf16.mxu0 0
        %2042 = vmatpush1.bf16.msra.mxu0 %v1851
        %2043 = vmatprep.subr.bf16.mxu0 0
        %2044 = vmatpush1.bf16.msra.mxu0 %v1854
        %2045 = vmatprep.subr.bf16.mxu0 0
        %2046 = vmatpush1.bf16.msra.mxu0 %v1857
        %2047 = vmatprep.subr.bf16.mxu0 0
        %2048 = vmatpush1.bf16.msra.mxu0 %v1860
        %2049 = vmatprep.subr.bf16.mxu0 0
        %2050 = vmatpush1.bf16.msra.mxu0 %v1863
        %2051 = vmatprep.subr.bf16.mxu0 0
        %2052 = vmatpush1.bf16.msra.mxu0 %v1866
        %2053 = vmatprep.subr.bf16.mxu0 0
        %2054 = vmatpush1.bf16.msra.mxu0 %v1869
        %2055 = vmatprep.subr.bf16.mxu0 0
        %2056 = vmatpush1.bf16.msra.mxu0 %v1916
        %2057 = vmatprep.subr.bf16.mxu0 0
        %2058 = vmatpush1.bf16.msra.mxu0 0
        %2059 = vmatprep.subr.bf16.mxu0 0
        %2060 = vmatpush1.bf16.msra.mxu0 0
        %2061 = vmatprep.subr.bf16.mxu0 0
        %2062 = vmatpush1.bf16.msra.mxu0 0
        %2063 = vmatprep.mubr.bf16.mxu0 %v897
        %2064 = vmatmul.mubr.bf16.gmra.mrb[0].mxu0 %v671
        %v2065 = vpop.f32.mrb[0].mxu0
        %v2066 = vadd.f32 0.0, %v2065
        %v2067 = vpop.f32.mrb[0].mxu0
        %v2068 = vpop.f32.mrb[0].mxu0
        %v2069 = vadd.f32 0.0, %v2068
        %v2070 = vpop.f32.mrb[0].mxu0
        %2071 = vmatprep.mubr.bf16.mxu0 %v900
        %2072 = vmatmul.mubr.bf16.gmra.mrb[0].mxu0 %v673
        %v2073 = vpop.f32.mrb[0].mxu0
        %v2074 = vadd.f32 0.0, %v2073
        %v2075 = vpop.f32.mrb[0].mxu0
        %v2076 = vpop.f32.mrb[0].mxu0
        %v2077 = vadd.f32 0.0, %v2076
        %v2078 = vpop.f32.mrb[0].mxu0
        %2079 = vmatprep.mubr.bf16.mxu0 %v903
        %2080 = vmatmul.mubr.bf16.gmra.mrb[0].mxu0 %v675
        %v2081 = vpop.f32.mrb[0].mxu0
        %v2082 = vadd.f32 0.0, %v2081
        %v2083 = vpop.f32.mrb[0].mxu0
        %v2084 = vpop.f32.mrb[0].mxu0
        %v2085 = vadd.f32 0.0, %v2084
        %v2086 = vpop.f32.mrb[0].mxu0
        %2087 = vmatprep.mubr.bf16.mxu0 %v906
        %2088 = vmatmul.mubr.bf16.gmra.mrb[0].mxu0 %v677
        %v2089 = vpop.f32.mrb[0].mxu0
        %v2090 = vadd.f32 0.0, %v2089
        %v2091 = vpop.f32.mrb[0].mxu0
        %v2092 = vpop.f32.mrb[0].mxu0
        %v2093 = vadd.f32 0.0, %v2092
        %v2094 = vpop.f32.mrb[0].mxu0
        %2095 = vmatprep.mubr.bf16.mxu0 %v909
        %2096 = vmatmul.mubr.bf16.gmra.mrb[0].mxu0 %v679
        %v2097 = vpop.f32.mrb[0].mxu0
        %v2098 = vadd.f32 0.0, %v2097
        %v2099 = vpop.f32.mrb[0].mxu0
        %v2100 = vpop.f32.mrb[0].mxu0
        %v2101 = vadd.f32 0.0, %v2100
        %v2102 = vpop.f32.mrb[0].mxu0
        %2103 = vmatprep.mubr.bf16.mxu0 %v912
        %2104 = vmatmul.mubr.bf16.gmra.mrb[0].mxu0 %v681
        %v2105 = vpop.f32.mrb[0].mxu0
        %v2106 = vadd.f32 0.0, %v2105
        %v2107 = vpop.f32.mrb[0].mxu0
        %v2108 = vpop.f32.mrb[0].mxu0
        %v2109 = vadd.f32 0.0, %v2108
        %v2110 = vpop.f32.mrb[0].mxu0
        %2111 = vmatprep.mubr.bf16.mxu0 %v915
        %2112 = vmatmul.mubr.bf16.gmra.mrb[0].mxu0 %v683
        %v2113 = vpop.f32.mrb[0].mxu0
        %v2114 = vadd.f32 0.0, %v2113
        %v2115 = vpop.f32.mrb[0].mxu0
        %v2116 = vpop.f32.mrb[0].mxu0
        %v2117 = vadd.f32 0.0, %v2116
        %v2118 = vpop.f32.mrb[0].mxu0
        %2119 = vmatprep.mubr.bf16.mxu0 %v918
        %2120 = vmatmul.mubr.bf16.gmra.mrb[0].mxu0 %v685
        %v2121 = vpop.f32.mrb[0].mxu0
        %v2122 = vadd.f32 0.0, %v2121
        %v2123 = vpop.f32.mrb[0].mxu0
        %v2124 = vpop.f32.mrb[0].mxu0
        %v2125 = vadd.f32 0.0, %v2124
        %v2126 = vpop.f32.mrb[0].mxu0
        %2127 = vdwg.mxu0
        %v2128 = vmax.f32 %v1610, %v1953
        %v2129 = vmax.f32 %v1611, %v1955
        %v2130 = vmax.f32 %v1612, %v2066
        %v2131 = vmax.f32 %v1613, %v1957
        %v2132 = vmax.f32 %v1614, %v1959
        %v2133 = vmax.f32 %v1615, %v2069
        %v2134 = vmax.f32 %v1616, %v1963
        %v2135 = vmax.f32 %v1617, %v1965
        %v2136 = vmax.f32 %v1618, %v2074
        %v2137 = vmax.f32 %v1619, %v1967
        %v2138 = vmax.f32 %v1620, %v1969
        %v2139 = vmax.f32 %v1621, %v2077
        %v2140 = vmax.f32 %v1622, %v1973
        %v2141 = vmax.f32 %v1623, %v1975
        %v2142 = vmax.f32 %v1624, %v2082
        %v2143 = vmax.f32 %v1625, %v1977
        %v2144 = vmax.f32 %v1626, %v1979
        %v2145 = vmax.f32 %v1627, %v2085
        %v2146 = vmax.f32 %v1628, %v1983
        %v2147 = vmax.f32 %v1629, %v1985
        %v2148 = vmax.f32 %v1630, %v2090
        %v2149 = vmax.f32 %v1631, %v1987
        %v2150 = vmax.f32 %v1632, %v1989
        %v2151 = vmax.f32 %v1633, %v2093
        %v2152 = vmax.f32 %v1634, %v1993
        %v2153 = vmax.f32 %v1635, %v1995
        %v2154 = vmax.f32 %v1636, %v2098
        %v2155 = vmax.f32 %v1637, %v1997
        %v2156 = vmax.f32 %v1638, %v1999
        %v2157 = vmax.f32 %v1639, %v2101
        %v2158 = vmax.f32 %v1640, %v2003
        %v2159 = vmax.f32 %v1641, %v2005
        %v2160 = vmax.f32 %v1642, %v2106
        %v2161 = vmax.f32 %v1643, %v2007
        %v2162 = vmax.f32 %v1644, %v2009
        %v2163 = vmax.f32 %v1645, %v2109
        %v2164 = vmax.f32 %v1646, %v2013
        %v2165 = vmax.f32 %v1647, %v2015
        %v2166 = vmax.f32 %v1648, %v2114
        %v2167 = vmax.f32 %v1649, %v2017
        %v2168 = vmax.f32 %v1650, %v2019
        %v2169 = vmax.f32 %v1651, %v2117
        %v2170 = vmax.f32 %v1652, %v2023
        %v2171 = vmax.f32 %v1653, %v2025
        %v2172 = vmax.f32 %v1654, %v2122
        %v2173 = vmax.f32 %v1655, %v2027
        %v2174 = vmax.f32 %v1656, %v2029
        %v2175 = vmax.f32 %v1657, %v2125
        %s2176 = scalar_lea.vmem %s522, 128 [#allocation2]
        %v2177 = vld [vmem:[%s2176] sm:$0xff]
        %v2178 = vld [vmem:[%s2176 + $0x8] sm:$0xff]
        %v2179 = vld [vmem:[%s2176 + $0x10] sm:$0xff]
        %v2180 = vld [vmem:[%s2176 + $0x18] sm:$0xff]
        %v2181 = vld [vmem:[%s2176 + $0x20] sm:$0xff]
        %v2182 = vld [vmem:[%s2176 + $0x28] sm:$0xff]
        %v2183 = vld [vmem:[%s2176 + $0x30] sm:$0xff]
        %v2184 = vld [vmem:[%s2176 + $0x38] sm:$0xff]
        %v2185 = vld [vmem:[%s2176 + $0x40] sm:$0xff]
        %v2186 = vld [vmem:[%s2176 + $0x48] sm:$0xff]
        %v2187 = vld [vmem:[%s2176 + $0x50] sm:$0xff]
        %v2188 = vld [vmem:[%s2176 + $0x58] sm:$0xff]
        %v2189 = vld [vmem:[%s2176 + $0x60] sm:$0xff]
        %v2190 = vld [vmem:[%s2176 + $0x68] sm:$0xff]
        %v2191 = vld [vmem:[%s2176 + $0x70] sm:$0xff]
        %v2192 = vld [vmem:[%s2176 + $0x78] sm:$0xff]
        %v2209 = vunpack.c.l.b16 %v2177
        %v2210 = vunpack.c.h.b16 %v2177
        %v2211 = vunpack.c.l.b16 %v2178
        %v2212 = vunpack.c.h.b16 %v2178
        %v2213 = vunpack.c.l.b16 %v2179
        %v2214 = vunpack.c.h.b16 %v2179
        %v2215 = vunpack.c.l.b16 %v2180
        %v2216 = vunpack.c.h.b16 %v2180
        %v2217 = vunpack.c.l.b16 %v2181
        %v2218 = vunpack.c.h.b16 %v2181
        %v2219 = vunpack.c.l.b16 %v2182
        %v2220 = vunpack.c.h.b16 %v2182
        %v2221 = vunpack.c.l.b16 %v2183
        %v2222 = vunpack.c.h.b16 %v2183
        %v2223 = vunpack.c.l.b16 %v2184
        %v2224 = vunpack.c.h.b16 %v2184
        %v2225 = vunpack.c.l.b16 %v2185
        %v2226 = vunpack.c.h.b16 %v2185
        %v2227 = vunpack.c.l.b16 %v2186
        %v2228 = vunpack.c.h.b16 %v2186
        %v2229 = vunpack.c.l.b16 %v2187
        %v2230 = vunpack.c.h.b16 %v2187
        %v2231 = vunpack.c.l.b16 %v2188
        %v2232 = vunpack.c.h.b16 %v2188
        %v2233 = vunpack.c.l.b16 %v2189
        %v2234 = vunpack.c.h.b16 %v2189
        %v2235 = vunpack.c.l.b16 %v2190
        %v2236 = vunpack.c.h.b16 %v2190
        %v2237 = vunpack.c.l.b16 %v2191
        %v2238 = vunpack.c.h.b16 %v2191
        %v2239 = vunpack.c.l.b16 %v2192
        %v2240 = vunpack.c.h.b16 %v2192
        %v2241 = vpack.c.b16 %v2211, %v2209
        %v2242 = vpack.c.b16 %v2212, %v2210
        %v2243 = vpack.c.b16 %v2215, %v2213
        %v2244 = vpack.c.b16 %v2216, %v2214
        %v2245 = vpack.c.b16 %v2219, %v2217
        %v2246 = vpack.c.b16 %v2220, %v2218
        %v2247 = vpack.c.b16 %v2223, %v2221
        %v2248 = vpack.c.b16 %v2224, %v2222
        %v2249 = vpack.c.b16 %v2227, %v2225
        %v2250 = vpack.c.b16 %v2228, %v2226
        %v2251 = vpack.c.b16 %v2231, %v2229
        %v2252 = vpack.c.b16 %v2232, %v2230
        %v2253 = vpack.c.b16 %v2235, %v2233
        %v2254 = vpack.c.b16 %v2236, %v2234
        %v2255 = vpack.c.b16 %v2239, %v2237
        %v2256 = vpack.c.b16 %v2240, %v2238
        %v2266 = vsel %vm895, %v2242, 0
        %v2269 = vsel %vm895, %v2244, 0
        %v2272 = vsel %vm895, %v2246, 0
        %v2275 = vsel %vm895, %v2248, 0
        %v2278 = vsel %vm895, %v2250, 0
        %v2281 = vsel %vm895, %v2252, 0
        %v2284 = vsel %vm895, %v2254, 0
        %v2287 = vsel %vm895, %v2256, 0
        %2289 = vmatprep.subr.bf16.mxu0 %v821
        %2290 = vmatpush1.bf16.msra.mxu0 %v820
        %2291 = vmatprep.subr.bf16.mxu0 %v824
        %2292 = vmatpush1.bf16.msra.mxu0 %v823
        %2293 = vmatprep.subr.bf16.mxu0 %v827
        %2294 = vmatpush1.bf16.msra.mxu0 %v826
        %2295 = vmatprep.subr.bf16.mxu0 %v830
        %2296 = vmatpush1.bf16.msra.mxu0 %v829
        %2297 = vmatprep.subr.bf16.mxu0 %v833
        %2298 = vmatpush1.bf16.msra.mxu0 %v832
        %2299 = vmatprep.subr.bf16.mxu0 %v836
        %2300 = vmatpush1.bf16.msra.mxu0 %v835
        %2301 = vmatprep.subr.bf16.mxu0 %v839
        %2302 = vmatpush1.bf16.msra.mxu0 %v838
        %2303 = vmatprep.subr.bf16.mxu0 %v842
        %2304 = vmatpush1.bf16.msra.mxu0 %v841
        %2305 = vmatprep.subr.bf16.mxu0 %v845
        %2306 = vmatpush1.bf16.msra.mxu0 %v844
        %2307 = vmatprep.subr.bf16.mxu0 %v848
        %2308 = vmatpush1.bf16.msra.mxu0 %v847
        %2309 = vmatprep.subr.bf16.mxu0 %v851
        %2310 = vmatpush1.bf16.msra.mxu0 %v850
        %2311 = vmatprep.subr.bf16.mxu0 %v854
        %2312 = vmatpush1.bf16.msra.mxu0 %v853
        %2313 = vmatprep.subr.bf16.mxu0 %v925
        %2314 = vmatpush1.bf16.msra.mxu0 %v922
        %2315 = vmatprep.subr.bf16.mxu0 0
        %2316 = vmatpush1.bf16.msra.mxu0 0
        %2317 = vmatprep.subr.bf16.mxu0 0
        %2318 = vmatpush1.bf16.msra.mxu0 0
        %2319 = vmatprep.subr.bf16.mxu0 0
        %2320 = vmatpush1.bf16.msra.mxu0 0
        %2321 = vmatprep.mubr.bf16.mxu0 %v2266
        %2322 = vmatmul.mubr.bf16.gmra.mrb[0].mxu0 %v2241
        %v2323 = vpop.f32.mrb[0].mxu0
        %v2324 = vadd.f32 0.0, %v2323
        %v2325 = vpop.f32.mrb[0].mxu0
        %v2326 = vadd.f32 0.0, %v2325
        %v2327 = vpop.f32.mrb[0].mxu0
        %v2328 = vadd.f32 0.0, %v2327
        %v2329 = vpop.f32.mrb[0].mxu0
        %v2330 = vadd.f32 0.0, %v2329
        %2331 = vmatprep.mubr.bf16.mxu0 %v2269
        %2332 = vmatmul.mubr.bf16.gmra.mrb[0].mxu0 %v2243
        %v2333 = vpop.f32.mrb[0].mxu0
        %v2334 = vadd.f32 0.0, %v2333
        %v2335 = vpop.f32.mrb[0].mxu0
        %v2336 = vadd.f32 0.0, %v2335
        %v2337 = vpop.f32.mrb[0].mxu0
        %v2338 = vadd.f32 0.0, %v2337
        %v2339 = vpop.f32.mrb[0].mxu0
        %v2340 = vadd.f32 0.0, %v2339
        %2341 = vmatprep.mubr.bf16.mxu0 %v2272
        %2342 = vmatmul.mubr.bf16.gmra.mrb[0].mxu0 %v2245
        %v2343 = vpop.f32.mrb[0].mxu0
        %v2344 = vadd.f32 0.0, %v2343
        %v2345 = vpop.f32.mrb[0].mxu0
        %v2346 = vadd.f32 0.0, %v2345
        %v2347 = vpop.f32.mrb[0].mxu0
        %v2348 = vadd.f32 0.0, %v2347
        %v2349 = vpop.f32.mrb[0].mxu0
        %v2350 = vadd.f32 0.0, %v2349
        %2351 = vmatprep.mubr.bf16.mxu0 %v2275
        %2352 = vmatmul.mubr.bf16.gmra.mrb[0].mxu0 %v2247
        %v2353 = vpop.f32.mrb[0].mxu0
        %v2354 = vadd.f32 0.0, %v2353
        %v2355 = vpop.f32.mrb[0].mxu0
        %v2356 = vadd.f32 0.0, %v2355
        %v2357 = vpop.f32.mrb[0].mxu0
        %v2358 = vadd.f32 0.0, %v2357
        %v2359 = vpop.f32.mrb[0].mxu0
        %v2360 = vadd.f32 0.0, %v2359
        %2361 = vmatprep.mubr.bf16.mxu0 %v2278
        %2362 = vmatmul.mubr.bf16.gmra.mrb[0].mxu0 %v2249
        %v2363 = vpop.f32.mrb[0].mxu0
        %v2364 = vadd.f32 0.0, %v2363
        %v2365 = vpop.f32.mrb[0].mxu0
        %v2366 = vadd.f32 0.0, %v2365
        %v2367 = vpop.f32.mrb[0].mxu0
        %v2368 = vadd.f32 0.0, %v2367
        %v2369 = vpop.f32.mrb[0].mxu0
        %v2370 = vadd.f32 0.0, %v2369
        %2371 = vmatprep.mubr.bf16.mxu0 %v2281
        %2372 = vmatmul.mubr.bf16.gmra.mrb[0].mxu0 %v2251
        %v2373 = vpop.f32.mrb[0].mxu0
        %v2374 = vadd.f32 0.0, %v2373
        %v2375 = vpop.f32.mrb[0].mxu0
        %v2376 = vadd.f32 0.0, %v2375
        %v2377 = vpop.f32.mrb[0].mxu0
        %v2378 = vadd.f32 0.0, %v2377
        %v2379 = vpop.f32.mrb[0].mxu0
        %v2380 = vadd.f32 0.0, %v2379
        %2381 = vmatprep.mubr.bf16.mxu0 %v2284
        %2382 = vmatmul.mubr.bf16.gmra.mrb[0].mxu0 %v2253
        %v2383 = vpop.f32.mrb[0].mxu0
        %v2384 = vadd.f32 0.0, %v2383
        %v2385 = vpop.f32.mrb[0].mxu0
        %v2386 = vadd.f32 0.0, %v2385
        %v2387 = vpop.f32.mrb[0].mxu0
        %v2388 = vadd.f32 0.0, %v2387
        %v2389 = vpop.f32.mrb[0].mxu0
        %v2390 = vadd.f32 0.0, %v2389
        %2391 = vmatprep.mubr.bf16.mxu0 %v2287
        %2392 = vmatmul.mubr.bf16.gmra.mrb[0].mxu0 %v2255
        %v2393 = vpop.f32.mrb[0].mxu0
        %v2394 = vadd.f32 0.0, %v2393
        %v2395 = vpop.f32.mrb[0].mxu0
        %v2396 = vadd.f32 0.0, %v2395
        %v2397 = vpop.f32.mrb[0].mxu0
        %v2398 = vadd.f32 0.0, %v2397
        %v2399 = vpop.f32.mrb[0].mxu0
        %v2400 = vadd.f32 0.0, %v2399
        %2401 = vdwg.mxu0
        %2402 = vmatprep.subr.bf16.mxu0 0
        %2403 = vmatpush1.bf16.msra.mxu0 %v822
        %2404 = vmatprep.subr.bf16.mxu0 0
        %2405 = vmatpush1.bf16.msra.mxu0 %v825
        %2406 = vmatprep.subr.bf16.mxu0 0
        %2407 = vmatpush1.bf16.msra.mxu0 %v828
        %2408 = vmatprep.subr.bf16.mxu0 0
        %2409 = vmatpush1.bf16.msra.mxu0 %v831
        %2410 = vmatprep.subr.bf16.mxu0 0
        %2411 = vmatpush1.bf16.msra.mxu0 %v834
        %2412 = vmatprep.subr.bf16.mxu0 0
        %2413 = vmatpush1.bf16.msra.mxu0 %v837
        %2414 = vmatprep.subr.bf16.mxu0 0
        %2415 = vmatpush1.bf16.msra.mxu0 %v840
        %2416 = vmatprep.subr.bf16.mxu0 0
        %2417 = vmatpush1.bf16.msra.mxu0 %v843
        %2418 = vmatprep.subr.bf16.mxu0 0
        %2419 = vmatpush1.bf16.msra.mxu0 %v846
        %2420 = vmatprep.subr.bf16.mxu0 0
        %2421 = vmatpush1.bf16.msra.mxu0 %v849
        %2422 = vmatprep.subr.bf16.mxu0 0
        %2423 = vmatpush1.bf16.msra.mxu0 %v852
        %2424 = vmatprep.subr.bf16.mxu0 0
        %2425 = vmatpush1.bf16.msra.mxu0 %v855
        %2426 = vmatprep.subr.bf16.mxu0 0
        %2427 = vmatpush1.bf16.msra.mxu0 %v928
        %2428 = vmatprep.subr.bf16.mxu0 0
        %2429 = vmatpush1.bf16.msra.mxu0 0
        %2430 = vmatprep.subr.bf16.mxu0 0
        %2431 = vmatpush1.bf16.msra.mxu0 0
        %2432 = vmatprep.subr.bf16.mxu0 0
        %2433 = vmatpush1.bf16.msra.mxu0 0
        %2434 = vmatprep.mubr.bf16.mxu0 %v2266
        %2435 = vmatmul.mubr.bf16.gmra.mrb[0].mxu0 %v2241
        %v2436 = vpop.f32.mrb[0].mxu0
        %v2437 = vadd.f32 0.0, %v2436
        %v2438 = vpop.f32.mrb[0].mxu0
        %v2439 = vpop.f32.mrb[0].mxu0
        %v2440 = vadd.f32 0.0, %v2439
        %v2441 = vpop.f32.mrb[0].mxu0
        %2442 = vmatprep.mubr.bf16.mxu0 %v2269
        %2443 = vmatmul.mubr.bf16.gmra.mrb[0].mxu0 %v2243
        %v2444 = vpop.f32.mrb[0].mxu0
        %v2445 = vadd.f32 0.0, %v2444
        %v2446 = vpop.f32.mrb[0].mxu0
        %v2447 = vpop.f32.mrb[0].mxu0
        %v2448 = vadd.f32 0.0, %v2447
        %v2449 = vpop.f32.mrb[0].mxu0
        %2450 = vmatprep.mubr.bf16.mxu0 %v2272
        %2451 = vmatmul.mubr.bf16.gmra.mrb[0].mxu0 %v2245
        %v2452 = vpop.f32.mrb[0].mxu0
        %v2453 = vadd.f32 0.0, %v2452
        %v2454 = vpop.f32.mrb[0].mxu0
        %v2455 = vpop.f32.mrb[0].mxu0
        %v2456 = vadd.f32 0.0, %v2455
        %v2457 = vpop.f32.mrb[0].mxu0
        %2458 = vmatprep.mubr.bf16.mxu0 %v2275
        %2459 = vmatmul.mubr.bf16.gmra.mrb[0].mxu0 %v2247
        %v2460 = vpop.f32.mrb[0].mxu0
        %v2461 = vadd.f32 0.0, %v2460
        %v2462 = vpop.f32.mrb[0].mxu0
        %v2463 = vpop.f32.mrb[0].mxu0
        %v2464 = vadd.f32 0.0, %v2463
        %v2465 = vpop.f32.mrb[0].mxu0
        %2466 = vmatprep.mubr.bf16.mxu0 %v2278
        %2467 = vmatmul.mubr.bf16.gmra.mrb[0].mxu0 %v2249
        %v2468 = vpop.f32.mrb[0].mxu0
        %v2469 = vadd.f32 0.0, %v2468
        %v2470 = vpop.f32.mrb[0].mxu0
        %v2471 = vpop.f32.mrb[0].mxu0
        %v2472 = vadd.f32 0.0, %v2471
        %v2473 = vpop.f32.mrb[0].mxu0
        %2474 = vmatprep.mubr.bf16.mxu0 %v2281
        %2475 = vmatmul.mubr.bf16.gmra.mrb[0].mxu0 %v2251
        %v2476 = vpop.f32.mrb[0].mxu0
        %v2477 = vadd.f32 0.0, %v2476
        %v2478 = vpop.f32.mrb[0].mxu0
        %v2479 = vpop.f32.mrb[0].mxu0
        %v2480 = vadd.f32 0.0, %v2479
        %v2481 = vpop.f32.mrb[0].mxu0
        %2482 = vmatprep.mubr.bf16.mxu0 %v2284
        %2483 = vmatmul.mubr.bf16.gmra.mrb[0].mxu0 %v2253
        %v2484 = vpop.f32.mrb[0].mxu0
        %v2485 = vadd.f32 0.0, %v2484
        %v2486 = vpop.f32.mrb[0].mxu0
        %v2487 = vpop.f32.mrb[0].mxu0
        %v2488 = vadd.f32 0.0, %v2487
        %v2489 = vpop.f32.mrb[0].mxu0
        %2490 = vmatprep.mubr.bf16.mxu0 %v2287
        %2491 = vmatmul.mubr.bf16.gmra.mrb[0].mxu0 %v2255
        %v2492 = vpop.f32.mrb[0].mxu0
        %v2493 = vadd.f32 0.0, %v2492
        %v2494 = vpop.f32.mrb[0].mxu0
        %v2495 = vpop.f32.mrb[0].mxu0
        %v2496 = vadd.f32 0.0, %v2495
        %v2497 = vpop.f32.mrb[0].mxu0
        %2498 = vdwg.mxu0
        %v2499 = vmax.f32 %v2128, %v2324
        %v2500 = vmax.f32 %v2129, %v2326
        %v2501 = vmax.f32 %v2130, %v2437
        %v2502 = vmax.f32 %v2131, %v2328
        %v2503 = vmax.f32 %v2132, %v2330
        %v2504 = vmax.f32 %v2133, %v2440
        %v2505 = vmax.f32 %v2134, %v2334
        %v2506 = vmax.f32 %v2135, %v2336
        %v2507 = vmax.f32 %v2136, %v2445
        %v2508 = vmax.f32 %v2137, %v2338
        %v2509 = vmax.f32 %v2138, %v2340
        %v2510 = vmax.f32 %v2139, %v2448
        %v2511 = vmax.f32 %v2140, %v2344
        %v2512 = vmax.f32 %v2141, %v2346
        %v2513 = vmax.f32 %v2142, %v2453
        %v2514 = vmax.f32 %v2143, %v2348
        %v2515 = vmax.f32 %v2144, %v2350
        %v2516 = vmax.f32 %v2145, %v2456
        %v2517 = vmax.f32 %v2146, %v2354
        %v2518 = vmax.f32 %v2147, %v2356
        %v2519 = vmax.f32 %v2148, %v2461
        %v2520 = vmax.f32 %v2149, %v2358
        %v2521 = vmax.f32 %v2150, %v2360
        %v2522 = vmax.f32 %v2151, %v2464
        %v2523 = vmax.f32 %v2152, %v2364
        %v2524 = vmax.f32 %v2153, %v2366
        %v2525 = vmax.f32 %v2154, %v2469
        %v2526 = vmax.f32 %v2155, %v2368
        %v2527 = vmax.f32 %v2156, %v2370
        %v2528 = vmax.f32 %v2157, %v2472
        %v2529 = vmax.f32 %v2158, %v2374
        %v2530 = vmax.f32 %v2159, %v2376
        %v2531 = vmax.f32 %v2160, %v2477
        %v2532 = vmax.f32 %v2161, %v2378
        %v2533 = vmax.f32 %v2162, %v2380
        %v2534 = vmax.f32 %v2163, %v2480
        %v2535 = vmax.f32 %v2164, %v2384
        %v2536 = vmax.f32 %v2165, %v2386
        %v2537 = vmax.f32 %v2166, %v2485
        %v2538 = vmax.f32 %v2167, %v2388
        %v2539 = vmax.f32 %v2168, %v2390
        %v2540 = vmax.f32 %v2169, %v2488
        %v2541 = vmax.f32 %v2170, %v2394
        %v2542 = vmax.f32 %v2171, %v2396
        %v2543 = vmax.f32 %v2172, %v2493
        %v2544 = vmax.f32 %v2173, %v2398
        %v2545 = vmax.f32 %v2174, %v2400
        %v2546 = vmax.f32 %v2175, %v2496
        %2547 = vmatprep.subr.bf16.mxu0 %v1317
        %2548 = vmatpush1.bf16.msra.mxu0 %v1316
        %2549 = vmatprep.subr.bf16.mxu0 %v1320
        %2550 = vmatpush1.bf16.msra.mxu0 %v1319
        %2551 = vmatprep.subr.bf16.mxu0 %v1323
        %2552 = vmatpush1.bf16.msra.mxu0 %v1322
        %2553 = vmatprep.subr.bf16.mxu0 %v1326
        %2554 = vmatpush1.bf16.msra.mxu0 %v1325
        %2555 = vmatprep.subr.bf16.mxu0 %v1329
        %2556 = vmatpush1.bf16.msra.mxu0 %v1328
        %2557 = vmatprep.subr.bf16.mxu0 %v1332
        %2558 = vmatpush1.bf16.msra.mxu0 %v1331
        %2559 = vmatprep.subr.bf16.mxu0 %v1335
        %2560 = vmatpush1.bf16.msra.mxu0 %v1334
        %2561 = vmatprep.subr.bf16.mxu0 %v1338
        %2562 = vmatpush1.bf16.msra.mxu0 %v1337
        %2563 = vmatprep.subr.bf16.mxu0 %v1341
        %2564 = vmatpush1.bf16.msra.mxu0 %v1340
        %2565 = vmatprep.subr.bf16.mxu0 %v1344
        %2566 = vmatpush1.bf16.msra.mxu0 %v1343
        %2567 = vmatprep.subr.bf16.mxu0 %v1347
        %2568 = vmatpush1.bf16.msra.mxu0 %v1346
        %2569 = vmatprep.subr.bf16.mxu0 %v1350
        %2570 = vmatpush1.bf16.msra.mxu0 %v1349
        %2571 = vmatprep.subr.bf16.mxu0 %v1395
        %2572 = vmatpush1.bf16.msra.mxu0 %v1392
        %2573 = vmatprep.subr.bf16.mxu0 0
        %2574 = vmatpush1.bf16.msra.mxu0 0
        %2575 = vmatprep.subr.bf16.mxu0 0
        %2576 = vmatpush1.bf16.msra.mxu0 0
        %2577 = vmatprep.subr.bf16.mxu0 0
        %2578 = vmatpush1.bf16.msra.mxu0 0
        %2579 = vmatprep.mubr.bf16.mxu0 %v2266
        %2580 = vmatmul.mubr.bf16.gmra.mrb[0].mxu0 %v2241
        %v2581 = vpop.f32.mrb[0].mxu0
        %v2582 = vadd.f32 0.0, %v2581
        %v2583 = vpop.f32.mrb[0].mxu0
        %v2584 = vadd.f32 0.0, %v2583
        %v2585 = vpop.f32.mrb[0].mxu0
        %v2586 = vadd.f32 0.0, %v2585
        %v2587 = vpop.f32.mrb[0].mxu0
        %v2588 = vadd.f32 0.0, %v2587
        %2589 = vmatprep.mubr.bf16.mxu0 %v2269
        %2590 = vmatmul.mubr.bf16.gmra.mrb[0].mxu0 %v2243
        %v2591 = vpop.f32.mrb[0].mxu0
        %v2592 = vadd.f32 0.0, %v2591
        %v2593 = vpop.f32.mrb[0].mxu0
        %v2594 = vadd.f32 0.0, %v2593
        %v2595 = vpop.f32.mrb[0].mxu0
        %v2596 = vadd.f32 0.0, %v2595
        %v2597 = vpop.f32.mrb[0].mxu0
        %v2598 = vadd.f32 0.0, %v2597
        %2599 = vmatprep.mubr.bf16.mxu0 %v2272
        %2600 = vmatmul.mubr.bf16.gmra.mrb[0].mxu0 %v2245
        %v2601 = vpop.f32.mrb[0].mxu0
        %v2602 = vadd.f32 0.0, %v2601
        %v2603 = vpop.f32.mrb[0].mxu0
        %v2604 = vadd.f32 0.0, %v2603
        %v2605 = vpop.f32.mrb[0].mxu0
        %v2606 = vadd.f32 0.0, %v2605
        %v2607 = vpop.f32.mrb[0].mxu0
        %v2608 = vadd.f32 0.0, %v2607
        %2609 = vmatprep.mubr.bf16.mxu0 %v2275
        %2610 = vmatmul.mubr.bf16.gmra.mrb[0].mxu0 %v2247
        %v2611 = vpop.f32.mrb[0].mxu0
        %v2612 = vadd.f32 0.0, %v2611
        %v2613 = vpop.f32.mrb[0].mxu0
        %v2614 = vadd.f32 0.0, %v2613
        %v2615 = vpop.f32.mrb[0].mxu0
        %v2616 = vadd.f32 0.0, %v2615
        %v2617 = vpop.f32.mrb[0].mxu0
        %v2618 = vadd.f32 0.0, %v2617
        %2619 = vmatprep.mubr.bf16.mxu0 %v2278
        %2620 = vmatmul.mubr.bf16.gmra.mrb[0].mxu0 %v2249
        %v2621 = vpop.f32.mrb[0].mxu0
        %v2622 = vadd.f32 0.0, %v2621
        %v2623 = vpop.f32.mrb[0].mxu0
        %v2624 = vadd.f32 0.0, %v2623
        %v2625 = vpop.f32.mrb[0].mxu0
        %v2626 = vadd.f32 0.0, %v2625
        %v2627 = vpop.f32.mrb[0].mxu0
        %v2628 = vadd.f32 0.0, %v2627
        %2629 = vmatprep.mubr.bf16.mxu0 %v2281
        %2630 = vmatmul.mubr.bf16.gmra.mrb[0].mxu0 %v2251
        %v2631 = vpop.f32.mrb[0].mxu0
        %v2632 = vadd.f32 0.0, %v2631
        %v2633 = vpop.f32.mrb[0].mxu0
        %v2634 = vadd.f32 0.0, %v2633
        %v2635 = vpop.f32.mrb[0].mxu0
        %v2636 = vadd.f32 0.0, %v2635
        %v2637 = vpop.f32.mrb[0].mxu0
        %v2638 = vadd.f32 0.0, %v2637
        %2639 = vmatprep.mubr.bf16.mxu0 %v2284
        %2640 = vmatmul.mubr.bf16.gmra.mrb[0].mxu0 %v2253
        %v2641 = vpop.f32.mrb[0].mxu0
        %v2642 = vadd.f32 0.0, %v2641
        %v2643 = vpop.f32.mrb[0].mxu0
        %v2644 = vadd.f32 0.0, %v2643
        %v2645 = vpop.f32.mrb[0].mxu0
        %v2646 = vadd.f32 0.0, %v2645
        %v2647 = vpop.f32.mrb[0].mxu0
        %v2648 = vadd.f32 0.0, %v2647
        %2649 = vmatprep.mubr.bf16.mxu0 %v2287
        %2650 = vmatmul.mubr.bf16.gmra.mrb[0].mxu0 %v2255
        %v2651 = vpop.f32.mrb[0].mxu0
        %v2652 = vadd.f32 0.0, %v2651
        %v2653 = vpop.f32.mrb[0].mxu0
        %v2654 = vadd.f32 0.0, %v2653
        %v2655 = vpop.f32.mrb[0].mxu0
        %v2656 = vadd.f32 0.0, %v2655
        %v2657 = vpop.f32.mrb[0].mxu0
        %v2658 = vadd.f32 0.0, %v2657
        %2659 = vdwg.mxu0
        %2660 = vmatprep.subr.bf16.mxu0 0
        %2661 = vmatpush1.bf16.msra.mxu0 %v1318
        %2662 = vmatprep.subr.bf16.mxu0 0
        %2663 = vmatpush1.bf16.msra.mxu0 %v1321
        %2664 = vmatprep.subr.bf16.mxu0 0
        %2665 = vmatpush1.bf16.msra.mxu0 %v1324
        %2666 = vmatprep.subr.bf16.mxu0 0
        %2667 = vmatpush1.bf16.msra.mxu0 %v1327
        %2668 = vmatprep.subr.bf16.mxu0 0
        %2669 = vmatpush1.bf16.msra.mxu0 %v1330
        %2670 = vmatprep.subr.bf16.mxu0 0
        %2671 = vmatpush1.bf16.msra.mxu0 %v1333
        %2672 = vmatprep.subr.bf16.mxu0 0
        %2673 = vmatpush1.bf16.msra.mxu0 %v1336
        %2674 = vmatprep.subr.bf16.mxu0 0
        %2675 = vmatpush1.bf16.msra.mxu0 %v1339
        %2676 = vmatprep.subr.bf16.mxu0 0
        %2677 = vmatpush1.bf16.msra.mxu0 %v1342
        %2678 = vmatprep.subr.bf16.mxu0 0
        %2679 = vmatpush1.bf16.msra.mxu0 %v1345
        %2680 = vmatprep.subr.bf16.mxu0 0
        %2681 = vmatpush1.bf16.msra.mxu0 %v1348
        %2682 = vmatprep.subr.bf16.mxu0 0
        %2683 = vmatpush1.bf16.msra.mxu0 %v1351
        %2684 = vmatprep.subr.bf16.mxu0 0
        %2685 = vmatpush1.bf16.msra.mxu0 %v1398
        %2686 = vmatprep.subr.bf16.mxu0 0
        %2687 = vmatpush1.bf16.msra.mxu0 0
        %2688 = vmatprep.subr.bf16.mxu0 0
        %2689 = vmatpush1.bf16.msra.mxu0 0
        %2690 = vmatprep.subr.bf16.mxu0 0
        %2691 = vmatpush1.bf16.msra.mxu0 0
        %2692 = vmatprep.mubr.bf16.mxu0 %v2266
        %2693 = vmatmul.mubr.bf16.gmra.mrb[0].mxu0 %v2241
        %v2694 = vpop.f32.mrb[0].mxu0
        %v2695 = vadd.f32 0.0, %v2694
        %v2696 = vpop.f32.mrb[0].mxu0
        %v2697 = vpop.f32.mrb[0].mxu0
        %v2698 = vadd.f32 0.0, %v2697
        %v2699 = vpop.f32.mrb[0].mxu0
        %2700 = vmatprep.mubr.bf16.mxu0 %v2269
        %2701 = vmatmul.mubr.bf16.gmra.mrb[0].mxu0 %v2243
        %v2702 = vpop.f32.mrb[0].mxu0
        %v2703 = vadd.f32 0.0, %v2702
        %v2704 = vpop.f32.mrb[0].mxu0
        %v2705 = vpop.f32.mrb[0].mxu0
        %v2706 = vadd.f32 0.0, %v2705
        %v2707 = vpop.f32.mrb[0].mxu0
        %2708 = vmatprep.mubr.bf16.mxu0 %v2272
        %2709 = vmatmul.mubr.bf16.gmra.mrb[0].mxu0 %v2245
        %v2710 = vpop.f32.mrb[0].mxu0
        %v2711 = vadd.f32 0.0, %v2710
        %v2712 = vpop.f32.mrb[0].mxu0
        %v2713 = vpop.f32.mrb[0].mxu0
        %v2714 = vadd.f32 0.0, %v2713
        %v2715 = vpop.f32.mrb[0].mxu0
        %2716 = vmatprep.mubr.bf16.mxu0 %v2275
        %2717 = vmatmul.mubr.bf16.gmra.mrb[0].mxu0 %v2247
        %v2718 = vpop.f32.mrb[0].mxu0
        %v2719 = vadd.f32 0.0, %v2718
        %v2720 = vpop.f32.mrb[0].mxu0
        %v2721 = vpop.f32.mrb[0].mxu0
        %v2722 = vadd.f32 0.0, %v2721
        %v2723 = vpop.f32.mrb[0].mxu0
        %2724 = vmatprep.mubr.bf16.mxu0 %v2278
        %2725 = vmatmul.mubr.bf16.gmra.mrb[0].mxu0 %v2249
        %v2726 = vpop.f32.mrb[0].mxu0
        %v2727 = vadd.f32 0.0, %v2726
        %v2728 = vpop.f32.mrb[0].mxu0
        %v2729 = vpop.f32.mrb[0].mxu0
        %v2730 = vadd.f32 0.0, %v2729
        %v2731 = vpop.f32.mrb[0].mxu0
        %2732 = vmatprep.mubr.bf16.mxu0 %v2281
        %2733 = vmatmul.mubr.bf16.gmra.mrb[0].mxu0 %v2251
        %v2734 = vpop.f32.mrb[0].mxu0
        %v2735 = vadd.f32 0.0, %v2734
        %v2736 = vpop.f32.mrb[0].mxu0
        %v2737 = vpop.f32.mrb[0].mxu0
        %v2738 = vadd.f32 0.0, %v2737
        %v2739 = vpop.f32.mrb[0].mxu0
        %2740 = vmatprep.mubr.bf16.mxu0 %v2284
        %2741 = vmatmul.mubr.bf16.gmra.mrb[0].mxu0 %v2253
        %v2742 = vpop.f32.mrb[0].mxu0
        %v2743 = vadd.f32 0.0, %v2742
        %v2744 = vpop.f32.mrb[0].mxu0
        %v2745 = vpop.f32.mrb[0].mxu0
        %v2746 = vadd.f32 0.0, %v2745
        %v2747 = vpop.f32.mrb[0].mxu0
        %2748 = vmatprep.mubr.bf16.mxu0 %v2287
        %2749 = vmatmul.mubr.bf16.gmra.mrb[0].mxu0 %v2255
        %v2750 = vpop.f32.mrb[0].mxu0
        %v2751 = vadd.f32 0.0, %v2750
        %v2752 = vpop.f32.mrb[0].mxu0
        %v2753 = vpop.f32.mrb[0].mxu0
        %v2754 = vadd.f32 0.0, %v2753
        %v2755 = vpop.f32.mrb[0].mxu0
        %2756 = vdwg.mxu0
        %v2757 = vmax.f32 %v2499, %v2582
        %v2758 = vmax.f32 %v2500, %v2584
        %v2759 = vmax.f32 %v2501, %v2695
        %v2760 = vmax.f32 %v2502, %v2586
        %v2761 = vmax.f32 %v2503, %v2588
        %v2762 = vmax.f32 %v2504, %v2698
        %v2763 = vmax.f32 %v2505, %v2592
        %v2764 = vmax.f32 %v2506, %v2594
        %v2765 = vmax.f32 %v2507, %v2703
        %v2766 = vmax.f32 %v2508, %v2596
        %v2767 = vmax.f32 %v2509, %v2598
        %v2768 = vmax.f32 %v2510, %v2706
        %v2769 = vmax.f32 %v2511, %v2602
        %v2770 = vmax.f32 %v2512, %v2604
        %v2771 = vmax.f32 %v2513, %v2711
        %v2772 = vmax.f32 %v2514, %v2606
        %v2773 = vmax.f32 %v2515, %v2608
        %v2774 = vmax.f32 %v2516, %v2714
        %v2775 = vmax.f32 %v2517, %v2612
        %v2776 = vmax.f32 %v2518, %v2614
        %v2777 = vmax.f32 %v2519, %v2719
        %v2778 = vmax.f32 %v2520, %v2616
        %v2779 = vmax.f32 %v2521, %v2618
        %v2780 = vmax.f32 %v2522, %v2722
        %v2781 = vmax.f32 %v2523, %v2622
        %v2782 = vmax.f32 %v2524, %v2624
        %v2783 = vmax.f32 %v2525, %v2727
        %v2784 = vmax.f32 %v2526, %v2626
        %v2785 = vmax.f32 %v2527, %v2628
        %v2786 = vmax.f32 %v2528, %v2730
        %v2787 = vmax.f32 %v2529, %v2632
        %v2788 = vmax.f32 %v2530, %v2634
        %v2789 = vmax.f32 %v2531, %v2735
        %v2790 = vmax.f32 %v2532, %v2636
        %v2791 = vmax.f32 %v2533, %v2638
        %v2792 = vmax.f32 %v2534, %v2738
        %v2793 = vmax.f32 %v2535, %v2642
        %v2794 = vmax.f32 %v2536, %v2644
        %v2795 = vmax.f32 %v2537, %v2743
        %v2796 = vmax.f32 %v2538, %v2646
        %v2797 = vmax.f32 %v2539, %v2648
        %v2798 = vmax.f32 %v2540, %v2746
        %v2799 = vmax.f32 %v2541, %v2652
        %v2800 = vmax.f32 %v2542, %v2654
        %v2801 = vmax.f32 %v2543, %v2751
        %v2802 = vmax.f32 %v2544, %v2656
        %v2803 = vmax.f32 %v2545, %v2658
        %v2804 = vmax.f32 %v2546, %v2754
        %2805 = vmatprep.subr.bf16.mxu0 %v1835
        %2806 = vmatpush1.bf16.msra.mxu0 %v1834
        %2807 = vmatprep.subr.bf16.mxu0 %v1838
        %2808 = vmatpush1.bf16.msra.mxu0 %v1837
        %2809 = vmatprep.subr.bf16.mxu0 %v1841
        %2810 = vmatpush1.bf16.msra.mxu0 %v1840
        %2811 = vmatprep.subr.bf16.mxu0 %v1844
        %2812 = vmatpush1.bf16.msra.mxu0 %v1843
        %2813 = vmatprep.subr.bf16.mxu0 %v1847
        %2814 = vmatpush1.bf16.msra.mxu0 %v1846
        %2815 = vmatprep.subr.bf16.mxu0 %v1850
        %2816 = vmatpush1.bf16.msra.mxu0 %v1849
        %2817 = vmatprep.subr.bf16.mxu0 %v1853
        %2818 = vmatpush1.bf16.msra.mxu0 %v1852
        %2819 = vmatprep.subr.bf16.mxu0 %v1856
        %2820 = vmatpush1.bf16.msra.mxu0 %v1855
        %2821 = vmatprep.subr.bf16.mxu0 %v1859
        %2822 = vmatpush1.bf16.msra.mxu0 %v1858
        %2823 = vmatprep.subr.bf16.mxu0 %v1862
        %2824 = vmatpush1.bf16.msra.mxu0 %v1861
        %2825 = vmatprep.subr.bf16.mxu0 %v1865
        %2826 = vmatpush1.bf16.msra.mxu0 %v1864
        %2827 = vmatprep.subr.bf16.mxu0 %v1868
        %2828 = vmatpush1.bf16.msra.mxu0 %v1867
        %2829 = vmatprep.subr.bf16.mxu0 %v1913
        %2830 = vmatpush1.bf16.msra.mxu0 %v1910
        %2831 = vmatprep.subr.bf16.mxu0 0
        %2832 = vmatpush1.bf16.msra.mxu0 0
        %2833 = vmatprep.subr.bf16.mxu0 0
        %2834 = vmatpush1.bf16.msra.mxu0 0
        %2835 = vmatprep.subr.bf16.mxu0 0
        %2836 = vmatpush1.bf16.msra.mxu0 0
        %2837 = vmatprep.mubr.bf16.mxu0 %v2266
        %2838 = vmatmul.mubr.bf16.gmra.mrb[0].mxu0 %v2241
        %v2839 = vpop.f32.mrb[0].mxu0
        %v2840 = vadd.f32 0.0, %v2839
        %v2841 = vpop.f32.mrb[0].mxu0
        %v2842 = vadd.f32 0.0, %v2841
        %v2843 = vpop.f32.mrb[0].mxu0
        %v2844 = vadd.f32 0.0, %v2843
        %v2845 = vpop.f32.mrb[0].mxu0
        %v2846 = vadd.f32 0.0, %v2845
        %2847 = vmatprep.mubr.bf16.mxu0 %v2269
        %2848 = vmatmul.mubr.bf16.gmra.mrb[0].mxu0 %v2243
        %v2849 = vpop.f32.mrb[0].mxu0
        %v2850 = vadd.f32 0.0, %v2849
        %v2851 = vpop.f32.mrb[0].mxu0
        %v2852 = vadd.f32 0.0, %v2851
        %v2853 = vpop.f32.mrb[0].mxu0
        %v2854 = vadd.f32 0.0, %v2853
        %v2855 = vpop.f32.mrb[0].mxu0
        %v2856 = vadd.f32 0.0, %v2855
        %2857 = vmatprep.mubr.bf16.mxu0 %v2272
        %2858 = vmatmul.mubr.bf16.gmra.mrb[0].mxu0 %v2245
        %v2859 = vpop.f32.mrb[0].mxu0
        %v2860 = vadd.f32 0.0, %v2859
        %v2861 = vpop.f32.mrb[0].mxu0
        %v2862 = vadd.f32 0.0, %v2861
        %v2863 = vpop.f32.mrb[0].mxu0
        %v2864 = vadd.f32 0.0, %v2863
        %v2865 = vpop.f32.mrb[0].mxu0
        %v2866 = vadd.f32 0.0, %v2865
        %2867 = vmatprep.mubr.bf16.mxu0 %v2275
        %2868 = vmatmul.mubr.bf16.gmra.mrb[0].mxu0 %v2247
        %v2869 = vpop.f32.mrb[0].mxu0
        %v2870 = vadd.f32 0.0, %v2869
        %v2871 = vpop.f32.mrb[0].mxu0
        %v2872 = vadd.f32 0.0, %v2871
        %v2873 = vpop.f32.mrb[0].mxu0
        %v2874 = vadd.f32 0.0, %v2873
        %v2875 = vpop.f32.mrb[0].mxu0
        %v2876 = vadd.f32 0.0, %v2875
        %2877 = vmatprep.mubr.bf16.mxu0 %v2278
        %2878 = vmatmul.mubr.bf16.gmra.mrb[0].mxu0 %v2249
        %v2879 = vpop.f32.mrb[0].mxu0
        %v2880 = vadd.f32 0.0, %v2879
        %v2881 = vpop.f32.mrb[0].mxu0
        %v2882 = vadd.f32 0.0, %v2881
        %v2883 = vpop.f32.mrb[0].mxu0
        %v2884 = vadd.f32 0.0, %v2883
        %v2885 = vpop.f32.mrb[0].mxu0
        %v2886 = vadd.f32 0.0, %v2885
        %2887 = vmatprep.mubr.bf16.mxu0 %v2281
        %2888 = vmatmul.mubr.bf16.gmra.mrb[0].mxu0 %v2251
        %v2889 = vpop.f32.mrb[0].mxu0
        %v2890 = vadd.f32 0.0, %v2889
        %v2891 = vpop.f32.mrb[0].mxu0
        %v2892 = vadd.f32 0.0, %v2891
        %v2893 = vpop.f32.mrb[0].mxu0
        %v2894 = vadd.f32 0.0, %v2893
        %v2895 = vpop.f32.mrb[0].mxu0
        %v2896 = vadd.f32 0.0, %v2895
        %2897 = vmatprep.mubr.bf16.mxu0 %v2284
        %2898 = vmatmul.mubr.bf16.gmra.mrb[0].mxu0 %v2253
        %v2899 = vpop.f32.mrb[0].mxu0
        %v2900 = vadd.f32 0.0, %v2899
        %v2901 = vpop.f32.mrb[0].mxu0
        %v2902 = vadd.f32 0.0, %v2901
        %v2903 = vpop.f32.mrb[0].mxu0
        %v2904 = vadd.f32 0.0, %v2903
        %v2905 = vpop.f32.mrb[0].mxu0
        %v2906 = vadd.f32 0.0, %v2905
        %2907 = vmatprep.mubr.bf16.mxu0 %v2287
        %2908 = vmatmul.mubr.bf16.gmra.mrb[0].mxu0 %v2255
        %v2909 = vpop.f32.mrb[0].mxu0
        %v2910 = vadd.f32 0.0, %v2909
        %v2911 = vpop.f32.mrb[0].mxu0
        %v2912 = vadd.f32 0.0, %v2911
        %v2913 = vpop.f32.mrb[0].mxu0
        %v2914 = vadd.f32 0.0, %v2913
        %v2915 = vpop.f32.mrb[0].mxu0
        %v2916 = vadd.f32 0.0, %v2915
        %2917 = vdwg.mxu0
        %2918 = vmatprep.subr.bf16.mxu0 0
        %2919 = vmatpush1.bf16.msra.mxu0 %v1836
        %2920 = vmatprep.subr.bf16.mxu0 0
        %2921 = vmatpush1.bf16.msra.mxu0 %v1839
        %2922 = vmatprep.subr.bf16.mxu0 0
        %2923 = vmatpush1.bf16.msra.mxu0 %v1842
        %2924 = vmatprep.subr.bf16.mxu0 0
        %2925 = vmatpush1.bf16.msra.mxu0 %v1845
        %2926 = vmatprep.subr.bf16.mxu0 0
        %2927 = vmatpush1.bf16.msra.mxu0 %v1848
        %2928 = vmatprep.subr.bf16.mxu0 0
        %2929 = vmatpush1.bf16.msra.mxu0 %v1851
        %2930 = vmatprep.subr.bf16.mxu0 0
        %2931 = vmatpush1.bf16.msra.mxu0 %v1854
        %2932 = vmatprep.subr.bf16.mxu0 0
        %2933 = vmatpush1.bf16.msra.mxu0 %v1857
        %2934 = vmatprep.subr.bf16.mxu0 0
        %2935 = vmatpush1.bf16.msra.mxu0 %v1860
        %2936 = vmatprep.subr.bf16.mxu0 0
        %2937 = vmatpush1.bf16.msra.mxu0 %v1863
        %2938 = vmatprep.subr.bf16.mxu0 0
        %2939 = vmatpush1.bf16.msra.mxu0 %v1866
        %2940 = vmatprep.subr.bf16.mxu0 0
        %2941 = vmatpush1.bf16.msra.mxu0 %v1869
        %2942 = vmatprep.subr.bf16.mxu0 0
        %2943 = vmatpush1.bf16.msra.mxu0 %v1916
        %2944 = vmatprep.subr.bf16.mxu0 0
        %2945 = vmatpush1.bf16.msra.mxu0 0
        %2946 = vmatprep.subr.bf16.mxu0 0
        %2947 = vmatpush1.bf16.msra.mxu0 0
        %2948 = vmatprep.subr.bf16.mxu0 0
        %2949 = vmatpush1.bf16.msra.mxu0 0
        %2950 = vmatprep.mubr.bf16.mxu0 %v2266
        %2951 = vmatmul.mubr.bf16.gmra.mrb[0].mxu0 %v2241
        %v2952 = vpop.f32.mrb[0].mxu0
        %v2953 = vadd.f32 0.0, %v2952
        %v2954 = vpop.f32.mrb[0].mxu0
        %v2955 = vpop.f32.mrb[0].mxu0
        %v2956 = vadd.f32 0.0, %v2955
        %v2957 = vpop.f32.mrb[0].mxu0
        %2958 = vmatprep.mubr.bf16.mxu0 %v2269
        %2959 = vmatmul.mubr.bf16.gmra.mrb[0].mxu0 %v2243
        %v2960 = vpop.f32.mrb[0].mxu0
        %v2961 = vadd.f32 0.0, %v2960
        %v2962 = vpop.f32.mrb[0].mxu0
        %v2963 = vpop.f32.mrb[0].mxu0
        %v2964 = vadd.f32 0.0, %v2963
        %v2965 = vpop.f32.mrb[0].mxu0
        %2966 = vmatprep.mubr.bf16.mxu0 %v2272
        %2967 = vmatmul.mubr.bf16.gmra.mrb[0].mxu0 %v2245
        %v2968 = vpop.f32.mrb[0].mxu0
        %v2969 = vadd.f32 0.0, %v2968
        %v2970 = vpop.f32.mrb[0].mxu0
        %v2971 = vpop.f32.mrb[0].mxu0
        %v2972 = vadd.f32 0.0, %v2971
        %v2973 = vpop.f32.mrb[0].mxu0
        %2974 = vmatprep.mubr.bf16.mxu0 %v2275
        %2975 = vmatmul.mubr.bf16.gmra.mrb[0].mxu0 %v2247
        %v2976 = vpop.f32.mrb[0].mxu0
        %v2977 = vadd.f32 0.0, %v2976
        %v2978 = vpop.f32.mrb[0].mxu0
        %v2979 = vpop.f32.mrb[0].mxu0
        %v2980 = vadd.f32 0.0, %v2979
        %v2981 = vpop.f32.mrb[0].mxu0
        %2982 = vmatprep.mubr.bf16.mxu0 %v2278
        %2983 = vmatmul.mubr.bf16.gmra.mrb[0].mxu0 %v2249
        %v2984 = vpop.f32.mrb[0].mxu0
        %v2985 = vadd.f32 0.0, %v2984
        %v2986 = vpop.f32.mrb[0].mxu0
        %v2987 = vpop.f32.mrb[0].mxu0
        %v2988 = vadd.f32 0.0, %v2987
        %v2989 = vpop.f32.mrb[0].mxu0
        %2990 = vmatprep.mubr.bf16.mxu0 %v2281
        %2991 = vmatmul.mubr.bf16.gmra.mrb[0].mxu0 %v2251
        %v2992 = vpop.f32.mrb[0].mxu0
        %v2993 = vadd.f32 0.0, %v2992
        %v2994 = vpop.f32.mrb[0].mxu0
        %v2995 = vpop.f32.mrb[0].mxu0
        %v2996 = vadd.f32 0.0, %v2995
        %v2997 = vpop.f32.mrb[0].mxu0
        %2998 = vmatprep.mubr.bf16.mxu0 %v2284
        %2999 = vmatmul.mubr.bf16.gmra.mrb[0].mxu0 %v2253
        %v3000 = vpop.f32.mrb[0].mxu0
        %v3001 = vadd.f32 0.0, %v3000
        %v3002 = vpop.f32.mrb[0].mxu0
        %v3003 = vpop.f32.mrb[0].mxu0
        %v3004 = vadd.f32 0.0, %v3003
        %v3005 = vpop.f32.mrb[0].mxu0
        %3006 = vmatprep.mubr.bf16.mxu0 %v2287
        %3007 = vmatmul.mubr.bf16.gmra.mrb[0].mxu0 %v2255
        %v3008 = vpop.f32.mrb[0].mxu0
        %v3009 = vadd.f32 0.0, %v3008
        %v3010 = vpop.f32.mrb[0].mxu0
        %v3011 = vpop.f32.mrb[0].mxu0
        %v3012 = vadd.f32 0.0, %v3011
        %v3013 = vpop.f32.mrb[0].mxu0
        %3014 = vdwg.mxu0
        %v3015 = vmax.f32 %v2757, %v2840
        %v3016 = vmax.f32 %v2758, %v2842
        %v3017 = vmax.f32 %v2759, %v2953
        %v3018 = vmax.f32 %v2760, %v2844
        %v3019 = vmax.f32 %v2761, %v2846
        %v3020 = vmax.f32 %v2762, %v2956
        %v3021 = vmax.f32 %v2763, %v2850
        %v3022 = vmax.f32 %v2764, %v2852
        %v3023 = vmax.f32 %v2765, %v2961
        %v3024 = vmax.f32 %v2766, %v2854
        %v3025 = vmax.f32 %v2767, %v2856
        %v3026 = vmax.f32 %v2768, %v2964
        %v3027 = vmax.f32 %v2769, %v2860
        %v3028 = vmax.f32 %v2770, %v2862
        %v3029 = vmax.f32 %v2771, %v2969
        %v3030 = vmax.f32 %v2772, %v2864
        %v3031 = vmax.f32 %v2773, %v2866
        %v3032 = vmax.f32 %v2774, %v2972
        %v3033 = vmax.f32 %v2775, %v2870
        %v3034 = vmax.f32 %v2776, %v2872
        %v3035 = vmax.f32 %v2777, %v2977
        %v3036 = vmax.f32 %v2778, %v2874
        %v3037 = vmax.f32 %v2779, %v2876
        %v3038 = vmax.f32 %v2780, %v2980
        %v3039 = vmax.f32 %v2781, %v2880
        %v3040 = vmax.f32 %v2782, %v2882
        %v3041 = vmax.f32 %v2783, %v2985
        %v3042 = vmax.f32 %v2784, %v2884
        %v3043 = vmax.f32 %v2785, %v2886
        %v3044 = vmax.f32 %v2786, %v2988
        %v3045 = vmax.f32 %v2787, %v2890
        %v3046 = vmax.f32 %v2788, %v2892
        %v3047 = vmax.f32 %v2789, %v2993
        %v3048 = vmax.f32 %v2790, %v2894
        %v3049 = vmax.f32 %v2791, %v2896
        %v3050 = vmax.f32 %v2792, %v2996
        %v3051 = vmax.f32 %v2793, %v2900
        %v3052 = vmax.f32 %v2794, %v2902
        %v3053 = vmax.f32 %v2795, %v3001
        %v3054 = vmax.f32 %v2796, %v2904
        %v3055 = vmax.f32 %v2797, %v2906
        %v3056 = vmax.f32 %v2798, %v3004
        %v3057 = vmax.f32 %v2799, %v2910
        %v3058 = vmax.f32 %v2800, %v2912
        %v3059 = vmax.f32 %v2801, %v3009
        %v3060 = vmax.f32 %v2802, %v2914
        %v3061 = vmax.f32 %v2803, %v2916
        %v3062 = vmax.f32 %v2804, %v3012
        %s3063 = scalar_lea.vmem %s522, 256 [#allocation2]
        %v3064 = vld [vmem:[%s3063] sm:$0xff]
        %v3065 = vld [vmem:[%s3063 + $0x8] sm:$0xff]
        %v3066 = vld [vmem:[%s3063 + $0x10] sm:$0xff]
        %v3067 = vld [vmem:[%s3063 + $0x18] sm:$0xff]
        %v3068 = vld [vmem:[%s3063 + $0x20] sm:$0xff]
        %v3069 = vld [vmem:[%s3063 + $0x28] sm:$0xff]
        %v3070 = vld [vmem:[%s3063 + $0x30] sm:$0xff]
        %v3071 = vld [vmem:[%s3063 + $0x38] sm:$0xff]
        %v3072 = vld [vmem:[%s3063 + $0x40] sm:$0xff]
        %v3073 = vld [vmem:[%s3063 + $0x48] sm:$0xff]
        %v3074 = vld [vmem:[%s3063 + $0x50] sm:$0xff]
        %v3075 = vld [vmem:[%s3063 + $0x58] sm:$0xff]
        %v3076 = vld [vmem:[%s3063 + $0x60] sm:$0xff]
        %v3077 = vld [vmem:[%s3063 + $0x68] sm:$0xff]
        %v3078 = vld [vmem:[%s3063 + $0x70] sm:$0xff]
        %v3079 = vld [vmem:[%s3063 + $0x78] sm:$0xff]
        %v3096 = vunpack.c.l.b16 %v3064
        %v3097 = vunpack.c.h.b16 %v3064
        %v3098 = vunpack.c.l.b16 %v3065
        %v3099 = vunpack.c.h.b16 %v3065
        %v3100 = vunpack.c.l.b16 %v3066
        %v3101 = vunpack.c.h.b16 %v3066
        %v3102 = vunpack.c.l.b16 %v3067
        %v3103 = vunpack.c.h.b16 %v3067
        %v3104 = vunpack.c.l.b16 %v3068
        %v3105 = vunpack.c.h.b16 %v3068
        %v3106 = vunpack.c.l.b16 %v3069
        %v3107 = vunpack.c.h.b16 %v3069
        %v3108 = vunpack.c.l.b16 %v3070
        %v3109 = vunpack.c.h.b16 %v3070
        %v3110 = vunpack.c.l.b16 %v3071
        %v3111 = vunpack.c.h.b16 %v3071
        %v3112 = vunpack.c.l.b16 %v3072
        %v3113 = vunpack.c.h.b16 %v3072
        %v3114 = vunpack.c.l.b16 %v3073
        %v3115 = vunpack.c.h.b16 %v3073
        %v3116 = vunpack.c.l.b16 %v3074
        %v3117 = vunpack.c.h.b16 %v3074
        %v3118 = vunpack.c.l.b16 %v3075
        %v3119 = vunpack.c.h.b16 %v3075
        %v3120 = vunpack.c.l.b16 %v3076
        %v3121 = vunpack.c.h.b16 %v3076
        %v3122 = vunpack.c.l.b16 %v3077
        %v3123 = vunpack.c.h.b16 %v3077
        %v3124 = vunpack.c.l.b16 %v3078
        %v3125 = vunpack.c.h.b16 %v3078
        %v3126 = vunpack.c.l.b16 %v3079
        %v3127 = vunpack.c.h.b16 %v3079
        %v3128 = vpack.c.b16 %v3098, %v3096
        %v3129 = vpack.c.b16 %v3099, %v3097
        %v3130 = vpack.c.b16 %v3102, %v3100
        %v3131 = vpack.c.b16 %v3103, %v3101
        %v3132 = vpack.c.b16 %v3106, %v3104
        %v3133 = vpack.c.b16 %v3107, %v3105
        %v3134 = vpack.c.b16 %v3110, %v3108
        %v3135 = vpack.c.b16 %v3111, %v3109
        %v3136 = vpack.c.b16 %v3114, %v3112
        %v3137 = vpack.c.b16 %v3115, %v3113
        %v3138 = vpack.c.b16 %v3118, %v3116
        %v3139 = vpack.c.b16 %v3119, %v3117
        %v3140 = vpack.c.b16 %v3122, %v3120
        %v3141 = vpack.c.b16 %v3123, %v3121
        %v3142 = vpack.c.b16 %v3126, %v3124
        %v3143 = vpack.c.b16 %v3127, %v3125
        %v3153 = vsel %vm895, %v3129, 0
        %v3156 = vsel %vm895, %v3131, 0
        %v3159 = vsel %vm895, %v3133, 0
        %v3162 = vsel %vm895, %v3135, 0
        %v3165 = vsel %vm895, %v3137, 0
        %v3168 = vsel %vm895, %v3139, 0
        %v3171 = vsel %vm895, %v3141, 0
        %v3174 = vsel %vm895, %v3143, 0
        %3176 = vmatprep.subr.bf16.mxu0 %v821
        %3177 = vmatpush1.bf16.msra.mxu0 %v820
        %3178 = vmatprep.subr.bf16.mxu0 %v824
        %3179 = vmatpush1.bf16.msra.mxu0 %v823
        %3180 = vmatprep.subr.bf16.mxu0 %v827
        %3181 = vmatpush1.bf16.msra.mxu0 %v826
        %3182 = vmatprep.subr.bf16.mxu0 %v830
        %3183 = vmatpush1.bf16.msra.mxu0 %v829
        %3184 = vmatprep.subr.bf16.mxu0 %v833
        %3185 = vmatpush1.bf16.msra.mxu0 %v832
        %3186 = vmatprep.subr.bf16.mxu0 %v836
        %3187 = vmatpush1.bf16.msra.mxu0 %v835
        %3188 = vmatprep.subr.bf16.mxu0 %v839
        %3189 = vmatpush1.bf16.msra.mxu0 %v838
        %3190 = vmatprep.subr.bf16.mxu0 %v842
        %3191 = vmatpush1.bf16.msra.mxu0 %v841
        %3192 = vmatprep.subr.bf16.mxu0 %v845
        %3193 = vmatpush1.bf16.msra.mxu0 %v844
        %3194 = vmatprep.subr.bf16.mxu0 %v848
        %3195 = vmatpush1.bf16.msra.mxu0 %v847
        %3196 = vmatprep.subr.bf16.mxu0 %v851
        %3197 = vmatpush1.bf16.msra.mxu0 %v850
        %3198 = vmatprep.subr.bf16.mxu0 %v854
        %3199 = vmatpush1.bf16.msra.mxu0 %v853
        %3200 = vmatprep.subr.bf16.mxu0 %v925
        %3201 = vmatpush1.bf16.msra.mxu0 %v922
        %3202 = vmatprep.subr.bf16.mxu0 0
        %3203 = vmatpush1.bf16.msra.mxu0 0
        %3204 = vmatprep.subr.bf16.mxu0 0
        %3205 = vmatpush1.bf16.msra.mxu0 0
        %3206 = vmatprep.subr.bf16.mxu0 0
        %3207 = vmatpush1.bf16.msra.mxu0 0
        %3208 = vmatprep.mubr.bf16.mxu0 %v3153
        %3209 = vmatmul.mubr.bf16.gmra.mrb[0].mxu0 %v3128
        %v3210 = vpop.f32.mrb[0].mxu0
        %v3211 = vadd.f32 0.0, %v3210
        %v3212 = vpop.f32.mrb[0].mxu0
        %v3213 = vadd.f32 0.0, %v3212
        %v3214 = vpop.f32.mrb[0].mxu0
        %v3215 = vadd.f32 0.0, %v3214
        %v3216 = vpop.f32.mrb[0].mxu0
        %v3217 = vadd.f32 0.0, %v3216
        %3218 = vmatprep.mubr.bf16.mxu0 %v3156
        %3219 = vmatmul.mubr.bf16.gmra.mrb[0].mxu0 %v3130
        %v3220 = vpop.f32.mrb[0].mxu0
        %v3221 = vadd.f32 0.0, %v3220
        %v3222 = vpop.f32.mrb[0].mxu0
        %v3223 = vadd.f32 0.0, %v3222
        %v3224 = vpop.f32.mrb[0].mxu0
        %v3225 = vadd.f32 0.0, %v3224
        %v3226 = vpop.f32.mrb[0].mxu0
        %v3227 = vadd.f32 0.0, %v3226
        %3228 = vmatprep.mubr.bf16.mxu0 %v3159
        %3229 = vmatmul.mubr.bf16.gmra.mrb[0].mxu0 %v3132
        %v3230 = vpop.f32.mrb[0].mxu0
        %v3231 = vadd.f32 0.0, %v3230
        %v3232 = vpop.f32.mrb[0].mxu0
        %v3233 = vadd.f32 0.0, %v3232
        %v3234 = vpop.f32.mrb[0].mxu0
        %v3235 = vadd.f32 0.0, %v3234
        %v3236 = vpop.f32.mrb[0].mxu0
        %v3237 = vadd.f32 0.0, %v3236
        %3238 = vmatprep.mubr.bf16.mxu0 %v3162
        %3239 = vmatmul.mubr.bf16.gmra.mrb[0].mxu0 %v3134
        %v3240 = vpop.f32.mrb[0].mxu0
        %v3241 = vadd.f32 0.0, %v3240
        %v3242 = vpop.f32.mrb[0].mxu0
        %v3243 = vadd.f32 0.0, %v3242
        %v3244 = vpop.f32.mrb[0].mxu0
        %v3245 = vadd.f32 0.0, %v3244
        %v3246 = vpop.f32.mrb[0].mxu0
        %v3247 = vadd.f32 0.0, %v3246
        %3248 = vmatprep.mubr.bf16.mxu0 %v3165
        %3249 = vmatmul.mubr.bf16.gmra.mrb[0].mxu0 %v3136
        %v3250 = vpop.f32.mrb[0].mxu0
        %v3251 = vadd.f32 0.0, %v3250
        %v3252 = vpop.f32.mrb[0].mxu0
        %v3253 = vadd.f32 0.0, %v3252
        %v3254 = vpop.f32.mrb[0].mxu0
        %v3255 = vadd.f32 0.0, %v3254
        %v3256 = vpop.f32.mrb[0].mxu0
        %v3257 = vadd.f32 0.0, %v3256
        %3258 = vmatprep.mubr.bf16.mxu0 %v3168
        %3259 = vmatmul.mubr.bf16.gmra.mrb[0].mxu0 %v3138
        %v3260 = vpop.f32.mrb[0].mxu0
        %v3261 = vadd.f32 0.0, %v3260
        %v3262 = vpop.f32.mrb[0].mxu0
        %v3263 = vadd.f32 0.0, %v3262
        %v3264 = vpop.f32.mrb[0].mxu0
        %v3265 = vadd.f32 0.0, %v3264
        %v3266 = vpop.f32.mrb[0].mxu0
        %v3267 = vadd.f32 0.0, %v3266
        %3268 = vmatprep.mubr.bf16.mxu0 %v3171
        %3269 = vmatmul.mubr.bf16.gmra.mrb[0].mxu0 %v3140
        %v3270 = vpop.f32.mrb[0].mxu0
        %v3271 = vadd.f32 0.0, %v3270
        %v3272 = vpop.f32.mrb[0].mxu0
        %v3273 = vadd.f32 0.0, %v3272
        %v3274 = vpop.f32.mrb[0].mxu0
        %v3275 = vadd.f32 0.0, %v3274
        %v3276 = vpop.f32.mrb[0].mxu0
        %v3277 = vadd.f32 0.0, %v3276
        %3278 = vmatprep.mubr.bf16.mxu0 %v3174
        %3279 = vmatmul.mubr.bf16.gmra.mrb[0].mxu0 %v3142
        %v3280 = vpop.f32.mrb[0].mxu0
        %v3281 = vadd.f32 0.0, %v3280
        %v3282 = vpop.f32.mrb[0].mxu0
        %v3283 = vadd.f32 0.0, %v3282
        %v3284 = vpop.f32.mrb[0].mxu0
        %v3285 = vadd.f32 0.0, %v3284
        %v3286 = vpop.f32.mrb[0].mxu0
        %v3287 = vadd.f32 0.0, %v3286
        %3288 = vdwg.mxu0
        %3289 = vmatprep.subr.bf16.mxu0 0
        %3290 = vmatpush1.bf16.msra.mxu0 %v822
        %3291 = vmatprep.subr.bf16.mxu0 0
        %3292 = vmatpush1.bf16.msra.mxu0 %v825
        %3293 = vmatprep.subr.bf16.mxu0 0
        %3294 = vmatpush1.bf16.msra.mxu0 %v828
        %3295 = vmatprep.subr.bf16.mxu0 0
        %3296 = vmatpush1.bf16.msra.mxu0 %v831
        %3297 = vmatprep.subr.bf16.mxu0 0
        %3298 = vmatpush1.bf16.msra.mxu0 %v834
        %3299 = vmatprep.subr.bf16.mxu0 0
        %3300 = vmatpush1.bf16.msra.mxu0 %v837
        %3301 = vmatprep.subr.bf16.mxu0 0
        %3302 = vmatpush1.bf16.msra.mxu0 %v840
        %3303 = vmatprep.subr.bf16.mxu0 0
        %3304 = vmatpush1.bf16.msra.mxu0 %v843
        %3305 = vmatprep.subr.bf16.mxu0 0
        %3306 = vmatpush1.bf16.msra.mxu0 %v846
        %3307 = vmatprep.subr.bf16.mxu0 0
        %3308 = vmatpush1.bf16.msra.mxu0 %v849
        %3309 = vmatprep.subr.bf16.mxu0 0
        %3310 = vmatpush1.bf16.msra.mxu0 %v852
        %3311 = vmatprep.subr.bf16.mxu0 0
        %3312 = vmatpush1.bf16.msra.mxu0 %v855
        %3313 = vmatprep.subr.bf16.mxu0 0
        %3314 = vmatpush1.bf16.msra.mxu0 %v928
        %3315 = vmatprep.subr.bf16.mxu0 0
        %3316 = vmatpush1.bf16.msra.mxu0 0
        %3317 = vmatprep.subr.bf16.mxu0 0
        %3318 = vmatpush1.bf16.msra.mxu0 0
        %3319 = vmatprep.subr.bf16.mxu0 0
        %3320 = vmatpush1.bf16.msra.mxu0 0
        %3321 = vmatprep.mubr.bf16.mxu0 %v3153
        %3322 = vmatmul.mubr.bf16.gmra.mrb[0].mxu0 %v3128
        %v3323 = vpop.f32.mrb[0].mxu0
        %v3324 = vadd.f32 0.0, %v3323
        %v3325 = vpop.f32.mrb[0].mxu0
        %v3326 = vpop.f32.mrb[0].mxu0
        %v3327 = vadd.f32 0.0, %v3326
        %v3328 = vpop.f32.mrb[0].mxu0
        %3329 = vmatprep.mubr.bf16.mxu0 %v3156
        %3330 = vmatmul.mubr.bf16.gmra.mrb[0].mxu0 %v3130
        %v3331 = vpop.f32.mrb[0].mxu0
        %v3332 = vadd.f32 0.0, %v3331
        %v3333 = vpop.f32.mrb[0].mxu0
        %v3334 = vpop.f32.mrb[0].mxu0
        %v3335 = vadd.f32 0.0, %v3334
        %v3336 = vpop.f32.mrb[0].mxu0
        %3337 = vmatprep.mubr.bf16.mxu0 %v3159
        %3338 = vmatmul.mubr.bf16.gmra.mrb[0].mxu0 %v3132
        %v3339 = vpop.f32.mrb[0].mxu0
        %v3340 = vadd.f32 0.0, %v3339
        %v3341 = vpop.f32.mrb[0].mxu0
        %v3342 = vpop.f32.mrb[0].mxu0
        %v3343 = vadd.f32 0.0, %v3342
        %v3344 = vpop.f32.mrb[0].mxu0
        %3345 = vmatprep.mubr.bf16.mxu0 %v3162
        %3346 = vmatmul.mubr.bf16.gmra.mrb[0].mxu0 %v3134
        %v3347 = vpop.f32.mrb[0].mxu0
        %v3348 = vadd.f32 0.0, %v3347
        %v3349 = vpop.f32.mrb[0].mxu0
        %v3350 = vpop.f32.mrb[0].mxu0
        %v3351 = vadd.f32 0.0, %v3350
        %v3352 = vpop.f32.mrb[0].mxu0
        %3353 = vmatprep.mubr.bf16.mxu0 %v3165
        %3354 = vmatmul.mubr.bf16.gmra.mrb[0].mxu0 %v3136
        %v3355 = vpop.f32.mrb[0].mxu0
        %v3356 = vadd.f32 0.0, %v3355
        %v3357 = vpop.f32.mrb[0].mxu0
        %v3358 = vpop.f32.mrb[0].mxu0
        %v3359 = vadd.f32 0.0, %v3358
        %v3360 = vpop.f32.mrb[0].mxu0
        %3361 = vmatprep.mubr.bf16.mxu0 %v3168
        %3362 = vmatmul.mubr.bf16.gmra.mrb[0].mxu0 %v3138
        %v3363 = vpop.f32.mrb[0].mxu0
        %v3364 = vadd.f32 0.0, %v3363
        %v3365 = vpop.f32.mrb[0].mxu0
        %v3366 = vpop.f32.mrb[0].mxu0
        %v3367 = vadd.f32 0.0, %v3366
        %v3368 = vpop.f32.mrb[0].mxu0
        %3369 = vmatprep.mubr.bf16.mxu0 %v3171
        %3370 = vmatmul.mubr.bf16.gmra.mrb[0].mxu0 %v3140
        %v3371 = vpop.f32.mrb[0].mxu0
        %v3372 = vadd.f32 0.0, %v3371
        %v3373 = vpop.f32.mrb[0].mxu0
        %v3374 = vpop.f32.mrb[0].mxu0
        %v3375 = vadd.f32 0.0, %v3374
        %v3376 = vpop.f32.mrb[0].mxu0
        %3377 = vmatprep.mubr.bf16.mxu0 %v3174
        %3378 = vmatmul.mubr.bf16.gmra.mrb[0].mxu0 %v3142
        %v3379 = vpop.f32.mrb[0].mxu0
        %v3380 = vadd.f32 0.0, %v3379
        %v3381 = vpop.f32.mrb[0].mxu0
        %v3382 = vpop.f32.mrb[0].mxu0
        %v3383 = vadd.f32 0.0, %v3382
        %v3384 = vpop.f32.mrb[0].mxu0
        %3385 = vdwg.mxu0
        %v3386 = vmax.f32 %v3015, %v3211
        %v3387 = vmax.f32 %v3016, %v3213
        %v3388 = vmax.f32 %v3017, %v3324
        %v3389 = vmax.f32 %v3018, %v3215
        %v3390 = vmax.f32 %v3019, %v3217
        %v3391 = vmax.f32 %v3020, %v3327
        %v3392 = vmax.f32 %v3021, %v3221
        %v3393 = vmax.f32 %v3022, %v3223
        %v3394 = vmax.f32 %v3023, %v3332
        %v3395 = vmax.f32 %v3024, %v3225
        %v3396 = vmax.f32 %v3025, %v3227
        %v3397 = vmax.f32 %v3026, %v3335
        %v3398 = vmax.f32 %v3027, %v3231
        %v3399 = vmax.f32 %v3028, %v3233
        %v3400 = vmax.f32 %v3029, %v3340
        %v3401 = vmax.f32 %v3030, %v3235
        %v3402 = vmax.f32 %v3031, %v3237
        %v3403 = vmax.f32 %v3032, %v3343
        %v3404 = vmax.f32 %v3033, %v3241
        %v3405 = vmax.f32 %v3034, %v3243
        %v3406 = vmax.f32 %v3035, %v3348
        %v3407 = vmax.f32 %v3036, %v3245
        %v3408 = vmax.f32 %v3037, %v3247
        %v3409 = vmax.f32 %v3038, %v3351
        %v3410 = vmax.f32 %v3039, %v3251
        %v3411 = vmax.f32 %v3040, %v3253
        %v3412 = vmax.f32 %v3041, %v3356
        %v3413 = vmax.f32 %v3042, %v3255
        %v3414 = vmax.f32 %v3043, %v3257
        %v3415 = vmax.f32 %v3044, %v3359
        %v3416 = vmax.f32 %v3045, %v3261
        %v3417 = vmax.f32 %v3046, %v3263
        %v3418 = vmax.f32 %v3047, %v3364
        %v3419 = vmax.f32 %v3048, %v3265
        %v3420 = vmax.f32 %v3049, %v3267
        %v3421 = vmax.f32 %v3050, %v3367
        %v3422 = vmax.f32 %v3051, %v3271
        %v3423 = vmax.f32 %v3052, %v3273
        %v3424 = vmax.f32 %v3053, %v3372
        %v3425 = vmax.f32 %v3054, %v3275
        %v3426 = vmax.f32 %v3055, %v3277
        %v3427 = vmax.f32 %v3056, %v3375
        %v3428 = vmax.f32 %v3057, %v3281
        %v3429 = vmax.f32 %v3058, %v3283
        %v3430 = vmax.f32 %v3059, %v3380
        %v3431 = vmax.f32 %v3060, %v3285
        %v3432 = vmax.f32 %v3061, %v3287
        %v3433 = vmax.f32 %v3062, %v3383
        %3434 = vmatprep.subr.bf16.mxu0 %v1317
        %3435 = vmatpush1.bf16.msra.mxu0 %v1316
        %3436 = vmatprep.subr.bf16.mxu0 %v1320
        %3437 = vmatpush1.bf16.msra.mxu0 %v1319
        %3438 = vmatprep.subr.bf16.mxu0 %v1323
        %3439 = vmatpush1.bf16.msra.mxu0 %v1322
        %3440 = vmatprep.subr.bf16.mxu0 %v1326
        %3441 = vmatpush1.bf16.msra.mxu0 %v1325
        %3442 = vmatprep.subr.bf16.mxu0 %v1329
        %3443 = vmatpush1.bf16.msra.mxu0 %v1328
        %3444 = vmatprep.subr.bf16.mxu0 %v1332
        %3445 = vmatpush1.bf16.msra.mxu0 %v1331
        %3446 = vmatprep.subr.bf16.mxu0 %v1335
        %3447 = vmatpush1.bf16.msra.mxu0 %v1334
        %3448 = vmatprep.subr.bf16.mxu0 %v1338
        %3449 = vmatpush1.bf16.msra.mxu0 %v1337
        %3450 = vmatprep.subr.bf16.mxu0 %v1341
        %3451 = vmatpush1.bf16.msra.mxu0 %v1340
        %3452 = vmatprep.subr.bf16.mxu0 %v1344
        %3453 = vmatpush1.bf16.msra.mxu0 %v1343
        %3454 = vmatprep.subr.bf16.mxu0 %v1347
        %3455 = vmatpush1.bf16.msra.mxu0 %v1346
        %3456 = vmatprep.subr.bf16.mxu0 %v1350
        %3457 = vmatpush1.bf16.msra.mxu0 %v1349
        %3458 = vmatprep.subr.bf16.mxu0 %v1395
        %3459 = vmatpush1.bf16.msra.mxu0 %v1392
        %3460 = vmatprep.subr.bf16.mxu0 0
        %3461 = vmatpush1.bf16.msra.mxu0 0
        %3462 = vmatprep.subr.bf16.mxu0 0
        %3463 = vmatpush1.bf16.msra.mxu0 0
        %3464 = vmatprep.subr.bf16.mxu0 0
        %3465 = vmatpush1.bf16.msra.mxu0 0
        %3466 = vmatprep.mubr.bf16.mxu0 %v3153
        %3467 = vmatmul.mubr.bf16.gmra.mrb[0].mxu0 %v3128
        %v3468 = vpop.f32.mrb[0].mxu0
        %v3469 = vadd.f32 0.0, %v3468
        %v3470 = vpop.f32.mrb[0].mxu0
        %v3471 = vadd.f32 0.0, %v3470
        %v3472 = vpop.f32.mrb[0].mxu0
        %v3473 = vadd.f32 0.0, %v3472
        %v3474 = vpop.f32.mrb[0].mxu0
        %v3475 = vadd.f32 0.0, %v3474
        %3476 = vmatprep.mubr.bf16.mxu0 %v3156
        %3477 = vmatmul.mubr.bf16.gmra.mrb[0].mxu0 %v3130
        %v3478 = vpop.f32.mrb[0].mxu0
        %v3479 = vadd.f32 0.0, %v3478
        %v3480 = vpop.f32.mrb[0].mxu0
        %v3481 = vadd.f32 0.0, %v3480
        %v3482 = vpop.f32.mrb[0].mxu0
        %v3483 = vadd.f32 0.0, %v3482
        %v3484 = vpop.f32.mrb[0].mxu0
        %v3485 = vadd.f32 0.0, %v3484
        %3486 = vmatprep.mubr.bf16.mxu0 %v3159
        %3487 = vmatmul.mubr.bf16.gmra.mrb[0].mxu0 %v3132
        %v3488 = vpop.f32.mrb[0].mxu0
        %v3489 = vadd.f32 0.0, %v3488
        %v3490 = vpop.f32.mrb[0].mxu0
        %v3491 = vadd.f32 0.0, %v3490
        %v3492 = vpop.f32.mrb[0].mxu0
        %v3493 = vadd.f32 0.0, %v3492
        %v3494 = vpop.f32.mrb[0].mxu0
        %v3495 = vadd.f32 0.0, %v3494
        %3496 = vmatprep.mubr.bf16.mxu0 %v3162
        %3497 = vmatmul.mubr.bf16.gmra.mrb[0].mxu0 %v3134
        %v3498 = vpop.f32.mrb[0].mxu0
        %v3499 = vadd.f32 0.0, %v3498
        %v3500 = vpop.f32.mrb[0].mxu0
        %v3501 = vadd.f32 0.0, %v3500
        %v3502 = vpop.f32.mrb[0].mxu0
        %v3503 = vadd.f32 0.0, %v3502
        %v3504 = vpop.f32.mrb[0].mxu0
        %v3505 = vadd.f32 0.0, %v3504
        %3506 = vmatprep.mubr.bf16.mxu0 %v3165
        %3507 = vmatmul.mubr.bf16.gmra.mrb[0].mxu0 %v3136
        %v3508 = vpop.f32.mrb[0].mxu0
        %v3509 = vadd.f32 0.0, %v3508
        %v3510 = vpop.f32.mrb[0].mxu0
        %v3511 = vadd.f32 0.0, %v3510
        %v3512 = vpop.f32.mrb[0].mxu0
        %v3513 = vadd.f32 0.0, %v3512
        %v3514 = vpop.f32.mrb[0].mxu0
        %v3515 = vadd.f32 0.0, %v3514
        %3516 = vmatprep.mubr.bf16.mxu0 %v3168
        %3517 = vmatmul.mubr.bf16.gmra.mrb[0].mxu0 %v3138
        %v3518 = vpop.f32.mrb[0].mxu0
        %v3519 = vadd.f32 0.0, %v3518
        %v3520 = vpop.f32.mrb[0].mxu0
        %v3521 = vadd.f32 0.0, %v3520
        %v3522 = vpop.f32.mrb[0].mxu0
        %v3523 = vadd.f32 0.0, %v3522
        %v3524 = vpop.f32.mrb[0].mxu0
        %v3525 = vadd.f32 0.0, %v3524
        %3526 = vmatprep.mubr.bf16.mxu0 %v3171
        %3527 = vmatmul.mubr.bf16.gmra.mrb[0].mxu0 %v3140
        %v3528 = vpop.f32.mrb[0].mxu0
        %v3529 = vadd.f32 0.0, %v3528
        %v3530 = vpop.f32.mrb[0].mxu0
        %v3531 = vadd.f32 0.0, %v3530
        %v3532 = vpop.f32.mrb[0].mxu0
        %v3533 = vadd.f32 0.0, %v3532
        %v3534 = vpop.f32.mrb[0].mxu0
        %v3535 = vadd.f32 0.0, %v3534
        %3536 = vmatprep.mubr.bf16.mxu0 %v3174
        %3537 = vmatmul.mubr.bf16.gmra.mrb[0].mxu0 %v3142
        %v3538 = vpop.f32.mrb[0].mxu0
        %v3539 = vadd.f32 0.0, %v3538
        %v3540 = vpop.f32.mrb[0].mxu0
        %v3541 = vadd.f32 0.0, %v3540
        %v3542 = vpop.f32.mrb[0].mxu0
        %v3543 = vadd.f32 0.0, %v3542
        %v3544 = vpop.f32.mrb[0].mxu0
        %v3545 = vadd.f32 0.0, %v3544
        %3546 = vdwg.mxu0
        %3547 = vmatprep.subr.bf16.mxu0 0
        %3548 = vmatpush1.bf16.msra.mxu0 %v1318
        %3549 = vmatprep.subr.bf16.mxu0 0
        %3550 = vmatpush1.bf16.msra.mxu0 %v1321
        %3551 = vmatprep.subr.bf16.mxu0 0
        %3552 = vmatpush1.bf16.msra.mxu0 %v1324
        %3553 = vmatprep.subr.bf16.mxu0 0
        %3554 = vmatpush1.bf16.msra.mxu0 %v1327
        %3555 = vmatprep.subr.bf16.mxu0 0
        %3556 = vmatpush1.bf16.msra.mxu0 %v1330
        %3557 = vmatprep.subr.bf16.mxu0 0
        %3558 = vmatpush1.bf16.msra.mxu0 %v1333
        %3559 = vmatprep.subr.bf16.mxu0 0
        %3560 = vmatpush1.bf16.msra.mxu0 %v1336
        %3561 = vmatprep.subr.bf16.mxu0 0
        %3562 = vmatpush1.bf16.msra.mxu0 %v1339
        %3563 = vmatprep.subr.bf16.mxu0 0
        %3564 = vmatpush1.bf16.msra.mxu0 %v1342
        %3565 = vmatprep.subr.bf16.mxu0 0
        %3566 = vmatpush1.bf16.msra.mxu0 %v1345
        %3567 = vmatprep.subr.bf16.mxu0 0
        %3568 = vmatpush1.bf16.msra.mxu0 %v1348
        %3569 = vmatprep.subr.bf16.mxu0 0
        %3570 = vmatpush1.bf16.msra.mxu0 %v1351
        %3571 = vmatprep.subr.bf16.mxu0 0
        %3572 = vmatpush1.bf16.msra.mxu0 %v1398
        %3573 = vmatprep.subr.bf16.mxu0 0
        %3574 = vmatpush1.bf16.msra.mxu0 0
        %3575 = vmatprep.subr.bf16.mxu0 0
        %3576 = vmatpush1.bf16.msra.mxu0 0
        %3577 = vmatprep.subr.bf16.mxu0 0
        %3578 = vmatpush1.bf16.msra.mxu0 0
        %3579 = vmatprep.mubr.bf16.mxu0 %v3153
        %3580 = vmatmul.mubr.bf16.gmra.mrb[0].mxu0 %v3128
        %v3581 = vpop.f32.mrb[0].mxu0
        %v3582 = vadd.f32 0.0, %v3581
        %v3583 = vpop.f32.mrb[0].mxu0
        %v3584 = vpop.f32.mrb[0].mxu0
        %v3585 = vadd.f32 0.0, %v3584
        %v3586 = vpop.f32.mrb[0].mxu0
        %3587 = vmatprep.mubr.bf16.mxu0 %v3156
        %3588 = vmatmul.mubr.bf16.gmra.mrb[0].mxu0 %v3130
        %v3589 = vpop.f32.mrb[0].mxu0
        %v3590 = vadd.f32 0.0, %v3589
        %v3591 = vpop.f32.mrb[0].mxu0
        %v3592 = vpop.f32.mrb[0].mxu0
        %v3593 = vadd.f32 0.0, %v3592
        %v3594 = vpop.f32.mrb[0].mxu0
        %3595 = vmatprep.mubr.bf16.mxu0 %v3159
        %3596 = vmatmul.mubr.bf16.gmra.mrb[0].mxu0 %v3132
        %v3597 = vpop.f32.mrb[0].mxu0
        %v3598 = vadd.f32 0.0, %v3597
        %v3599 = vpop.f32.mrb[0].mxu0
        %v3600 = vpop.f32.mrb[0].mxu0
        %v3601 = vadd.f32 0.0, %v3600
        %v3602 = vpop.f32.mrb[0].mxu0
        %3603 = vmatprep.mubr.bf16.mxu0 %v3162
        %3604 = vmatmul.mubr.bf16.gmra.mrb[0].mxu0 %v3134
        %v3605 = vpop.f32.mrb[0].mxu0
        %v3606 = vadd.f32 0.0, %v3605
        %v3607 = vpop.f32.mrb[0].mxu0
        %v3608 = vpop.f32.mrb[0].mxu0
        %v3609 = vadd.f32 0.0, %v3608
        %v3610 = vpop.f32.mrb[0].mxu0
        %3611 = vmatprep.mubr.bf16.mxu0 %v3165
        %3612 = vmatmul.mubr.bf16.gmra.mrb[0].mxu0 %v3136
        %v3613 = vpop.f32.mrb[0].mxu0
        %v3614 = vadd.f32 0.0, %v3613
        %v3615 = vpop.f32.mrb[0].mxu0
        %v3616 = vpop.f32.mrb[0].mxu0
        %v3617 = vadd.f32 0.0, %v3616
        %v3618 = vpop.f32.mrb[0].mxu0
        %3619 = vmatprep.mubr.bf16.mxu0 %v3168
        %3620 = vmatmul.mubr.bf16.gmra.mrb[0].mxu0 %v3138
        %v3621 = vpop.f32.mrb[0].mxu0
        %v3622 = vadd.f32 0.0, %v3621
        %v3623 = vpop.f32.mrb[0].mxu0
        %v3624 = vpop.f32.mrb[0].mxu0
        %v3625 = vadd.f32 0.0, %v3624
        %v3626 = vpop.f32.mrb[0].mxu0
        %3627 = vmatprep.mubr.bf16.mxu0 %v3171
        %3628 = vmatmul.mubr.bf16.gmra.mrb[0].mxu0 %v3140
        %v3629 = vpop.f32.mrb[0].mxu0
        %v3630 = vadd.f32 0.0, %v3629
        %v3631 = vpop.f32.mrb[0].mxu0
        %v3632 = vpop.f32.mrb[0].mxu0
        %v3633 = vadd.f32 0.0, %v3632
        %v3634 = vpop.f32.mrb[0].mxu0
        %3635 = vmatprep.mubr.bf16.mxu0 %v3174
        %3636 = vmatmul.mubr.bf16.gmra.mrb[0].mxu0 %v3142
        %v3637 = vpop.f32.mrb[0].mxu0
        %v3638 = vadd.f32 0.0, %v3637
        %v3639 = vpop.f32.mrb[0].mxu0
        %v3640 = vpop.f32.mrb[0].mxu0
        %v3641 = vadd.f32 0.0, %v3640
        %v3642 = vpop.f32.mrb[0].mxu0
        %3643 = vdwg.mxu0
        %v3644 = vmax.f32 %v3386, %v3469
        %v3645 = vmax.f32 %v3387, %v3471
        %v3646 = vmax.f32 %v3388, %v3582
        %v3647 = vmax.f32 %v3389, %v3473
        %v3648 = vmax.f32 %v3390, %v3475
        %v3649 = vmax.f32 %v3391, %v3585
        %v3650 = vmax.f32 %v3392, %v3479
        %v3651 = vmax.f32 %v3393, %v3481
        %v3652 = vmax.f32 %v3394, %v3590
        %v3653 = vmax.f32 %v3395, %v3483
        %v3654 = vmax.f32 %v3396, %v3485
        %v3655 = vmax.f32 %v3397, %v3593
        %v3656 = vmax.f32 %v3398, %v3489
        %v3657 = vmax.f32 %v3399, %v3491
        %v3658 = vmax.f32 %v3400, %v3598
        %v3659 = vmax.f32 %v3401, %v3493
        %v3660 = vmax.f32 %v3402, %v3495
        %v3661 = vmax.f32 %v3403, %v3601
        %v3662 = vmax.f32 %v3404, %v3499
        %v3663 = vmax.f32 %v3405, %v3501
        %v3664 = vmax.f32 %v3406, %v3606
        %v3665 = vmax.f32 %v3407, %v3503
        %v3666 = vmax.f32 %v3408, %v3505
        %v3667 = vmax.f32 %v3409, %v3609
        %v3668 = vmax.f32 %v3410, %v3509
        %v3669 = vmax.f32 %v3411, %v3511
        %v3670 = vmax.f32 %v3412, %v3614
        %v3671 = vmax.f32 %v3413, %v3513
        %v3672 = vmax.f32 %v3414, %v3515
        %v3673 = vmax.f32 %v3415, %v3617
        %v3674 = vmax.f32 %v3416, %v3519
        %v3675 = vmax.f32 %v3417, %v3521
        %v3676 = vmax.f32 %v3418, %v3622
        %v3677 = vmax.f32 %v3419, %v3523
        %v3678 = vmax.f32 %v3420, %v3525
        %v3679 = vmax.f32 %v3421, %v3625
        %v3680 = vmax.f32 %v3422, %v3529
        %v3681 = vmax.f32 %v3423, %v3531
        %v3682 = vmax.f32 %v3424, %v3630
        %v3683 = vmax.f32 %v3425, %v3533
        %v3684 = vmax.f32 %v3426, %v3535
        %v3685 = vmax.f32 %v3427, %v3633
        %v3686 = vmax.f32 %v3428, %v3539
        %v3687 = vmax.f32 %v3429, %v3541
        %v3688 = vmax.f32 %v3430, %v3638
        %v3689 = vmax.f32 %v3431, %v3543
        %v3690 = vmax.f32 %v3432, %v3545
        %v3691 = vmax.f32 %v3433, %v3641
        %3692 = vmatprep.subr.bf16.mxu0 %v1835
        %3693 = vmatpush1.bf16.msra.mxu0 %v1834
        %3694 = vmatprep.subr.bf16.mxu0 %v1838
        %3695 = vmatpush1.bf16.msra.mxu0 %v1837
        %3696 = vmatprep.subr.bf16.mxu0 %v1841
        %3697 = vmatpush1.bf16.msra.mxu0 %v1840
        %3698 = vmatprep.subr.bf16.mxu0 %v1844
        %3699 = vmatpush1.bf16.msra.mxu0 %v1843
        %3700 = vmatprep.subr.bf16.mxu0 %v1847
        %3701 = vmatpush1.bf16.msra.mxu0 %v1846
        %3702 = vmatprep.subr.bf16.mxu0 %v1850
        %3703 = vmatpush1.bf16.msra.mxu0 %v1849
        %3704 = vmatprep.subr.bf16.mxu0 %v1853
        %3705 = vmatpush1.bf16.msra.mxu0 %v1852
        %3706 = vmatprep.subr.bf16.mxu0 %v1856
        %3707 = vmatpush1.bf16.msra.mxu0 %v1855
        %3708 = vmatprep.subr.bf16.mxu0 %v1859
        %3709 = vmatpush1.bf16.msra.mxu0 %v1858
        %3710 = vmatprep.subr.bf16.mxu0 %v1862
        %3711 = vmatpush1.bf16.msra.mxu0 %v1861
        %3712 = vmatprep.subr.bf16.mxu0 %v1865
        %3713 = vmatpush1.bf16.msra.mxu0 %v1864
        %3714 = vmatprep.subr.bf16.mxu0 %v1868
        %3715 = vmatpush1.bf16.msra.mxu0 %v1867
        %3716 = vmatprep.subr.bf16.mxu0 %v1913
        %3717 = vmatpush1.bf16.msra.mxu0 %v1910
        %3718 = vmatprep.subr.bf16.mxu0 0
        %3719 = vmatpush1.bf16.msra.mxu0 0
        %3720 = vmatprep.subr.bf16.mxu0 0
        %3721 = vmatpush1.bf16.msra.mxu0 0
        %3722 = vmatprep.subr.bf16.mxu0 0
        %3723 = vmatpush1.bf16.msra.mxu0 0
        %3724 = vmatprep.mubr.bf16.mxu0 %v3153
        %3725 = vmatmul.mubr.bf16.gmra.mrb[0].mxu0 %v3128
        %v3726 = vpop.f32.mrb[0].mxu0
        %v3727 = vadd.f32 0.0, %v3726
        %v3728 = vpop.f32.mrb[0].mxu0
        %v3729 = vadd.f32 0.0, %v3728
        %v3730 = vpop.f32.mrb[0].mxu0
        %v3731 = vadd.f32 0.0, %v3730
        %v3732 = vpop.f32.mrb[0].mxu0
        %v3733 = vadd.f32 0.0, %v3732
        %3734 = vmatprep.mubr.bf16.mxu0 %v3156
        %3735 = vmatmul.mubr.bf16.gmra.mrb[0].mxu0 %v3130
        %v3736 = vpop.f32.mrb[0].mxu0
        %v3737 = vadd.f32 0.0, %v3736
        %v3738 = vpop.f32.mrb[0].mxu0
        %v3739 = vadd.f32 0.0, %v3738
        %v3740 = vpop.f32.mrb[0].mxu0
        %v3741 = vadd.f32 0.0, %v3740
        %v3742 = vpop.f32.mrb[0].mxu0
        %v3743 = vadd.f32 0.0, %v3742
        %3744 = vmatprep.mubr.bf16.mxu0 %v3159
        %3745 = vmatmul.mubr.bf16.gmra.mrb[0].mxu0 %v3132
        %v3746 = vpop.f32.mrb[0].mxu0
        %v3747 = vadd.f32 0.0, %v3746
        %v3748 = vpop.f32.mrb[0].mxu0
        %v3749 = vadd.f32 0.0, %v3748
        %v3750 = vpop.f32.mrb[0].mxu0
        %v3751 = vadd.f32 0.0, %v3750
        %v3752 = vpop.f32.mrb[0].mxu0
        %v3753 = vadd.f32 0.0, %v3752
        %3754 = vmatprep.mubr.bf16.mxu0 %v3162
        %3755 = vmatmul.mubr.bf16.gmra.mrb[0].mxu0 %v3134
        %v3756 = vpop.f32.mrb[0].mxu0
        %v3757 = vadd.f32 0.0, %v3756
        %v3758 = vpop.f32.mrb[0].mxu0
        %v3759 = vadd.f32 0.0, %v3758
        %v3760 = vpop.f32.mrb[0].mxu0
        %v3761 = vadd.f32 0.0, %v3760
        %v3762 = vpop.f32.mrb[0].mxu0
        %v3763 = vadd.f32 0.0, %v3762
        %3764 = vmatprep.mubr.bf16.mxu0 %v3165
        %3765 = vmatmul.mubr.bf16.gmra.mrb[0].mxu0 %v3136
        %v3766 = vpop.f32.mrb[0].mxu0
        %v3767 = vadd.f32 0.0, %v3766
        %v3768 = vpop.f32.mrb[0].mxu0
        %v3769 = vadd.f32 0.0, %v3768
        %v3770 = vpop.f32.mrb[0].mxu0
        %v3771 = vadd.f32 0.0, %v3770
        %v3772 = vpop.f32.mrb[0].mxu0
        %v3773 = vadd.f32 0.0, %v3772
        %3774 = vmatprep.mubr.bf16.mxu0 %v3168
        %3775 = vmatmul.mubr.bf16.gmra.mrb[0].mxu0 %v3138
        %v3776 = vpop.f32.mrb[0].mxu0
        %v3777 = vadd.f32 0.0, %v3776
        %v3778 = vpop.f32.mrb[0].mxu0
        %v3779 = vadd.f32 0.0, %v3778
        %v3780 = vpop.f32.mrb[0].mxu0
        %v3781 = vadd.f32 0.0, %v3780
        %v3782 = vpop.f32.mrb[0].mxu0
        %v3783 = vadd.f32 0.0, %v3782
        %3784 = vmatprep.mubr.bf16.mxu0 %v3171
        %3785 = vmatmul.mubr.bf16.gmra.mrb[0].mxu0 %v3140
        %v3786 = vpop.f32.mrb[0].mxu0
        %v3787 = vadd.f32 0.0, %v3786
        %v3788 = vpop.f32.mrb[0].mxu0
        %v3789 = vadd.f32 0.0, %v3788
        %v3790 = vpop.f32.mrb[0].mxu0
        %v3791 = vadd.f32 0.0, %v3790
        %v3792 = vpop.f32.mrb[0].mxu0
        %v3793 = vadd.f32 0.0, %v3792
        %3794 = vmatprep.mubr.bf16.mxu0 %v3174
        %3795 = vmatmul.mubr.bf16.gmra.mrb[0].mxu0 %v3142
        %v3796 = vpop.f32.mrb[0].mxu0
        %v3797 = vadd.f32 0.0, %v3796
        %v3798 = vpop.f32.mrb[0].mxu0
        %v3799 = vadd.f32 0.0, %v3798
        %v3800 = vpop.f32.mrb[0].mxu0
        %v3801 = vadd.f32 0.0, %v3800
        %v3802 = vpop.f32.mrb[0].mxu0
        %v3803 = vadd.f32 0.0, %v3802
        %3804 = vdwg.mxu0
        %3805 = vmatprep.subr.bf16.mxu0 0
        %3806 = vmatpush1.bf16.msra.mxu0 %v1836
        %3807 = vmatprep.subr.bf16.mxu0 0
        %3808 = vmatpush1.bf16.msra.mxu0 %v1839
        %3809 = vmatprep.subr.bf16.mxu0 0
        %3810 = vmatpush1.bf16.msra.mxu0 %v1842
        %3811 = vmatprep.subr.bf16.mxu0 0
        %3812 = vmatpush1.bf16.msra.mxu0 %v1845
        %3813 = vmatprep.subr.bf16.mxu0 0
        %3814 = vmatpush1.bf16.msra.mxu0 %v1848
        %3815 = vmatprep.subr.bf16.mxu0 0
        %3816 = vmatpush1.bf16.msra.mxu0 %v1851
        %3817 = vmatprep.subr.bf16.mxu0 0
        %3818 = vmatpush1.bf16.msra.mxu0 %v1854
        %3819 = vmatprep.subr.bf16.mxu0 0
        %3820 = vmatpush1.bf16.msra.mxu0 %v1857
        %3821 = vmatprep.subr.bf16.mxu0 0
        %3822 = vmatpush1.bf16.msra.mxu0 %v1860
        %3823 = vmatprep.subr.bf16.mxu0 0
        %3824 = vmatpush1.bf16.msra.mxu0 %v1863
        %3825 = vmatprep.subr.bf16.mxu0 0
        %3826 = vmatpush1.bf16.msra.mxu0 %v1866
        %3827 = vmatprep.subr.bf16.mxu0 0
        %3828 = vmatpush1.bf16.msra.mxu0 %v1869
        %3829 = vmatprep.subr.bf16.mxu0 0
        %3830 = vmatpush1.bf16.msra.mxu0 %v1916
        %3831 = vmatprep.subr.bf16.mxu0 0
        %3832 = vmatpush1.bf16.msra.mxu0 0
        %3833 = vmatprep.subr.bf16.mxu0 0
        %3834 = vmatpush1.bf16.msra.mxu0 0
        %3835 = vmatprep.subr.bf16.mxu0 0
        %3836 = vmatpush1.bf16.msra.mxu0 0
        %3837 = vmatprep.mubr.bf16.mxu0 %v3153
        %3838 = vmatmul.mubr.bf16.gmra.mrb[0].mxu0 %v3128
        %v3839 = vpop.f32.mrb[0].mxu0
        %v3840 = vadd.f32 0.0, %v3839
        %v3841 = vpop.f32.mrb[0].mxu0
        %v3842 = vpop.f32.mrb[0].mxu0
        %v3843 = vadd.f32 0.0, %v3842
        %v3844 = vpop.f32.mrb[0].mxu0
        %3845 = vmatprep.mubr.bf16.mxu0 %v3156
        %3846 = vmatmul.mubr.bf16.gmra.mrb[0].mxu0 %v3130
        %v3847 = vpop.f32.mrb[0].mxu0
        %v3848 = vadd.f32 0.0, %v3847
        %v3849 = vpop.f32.mrb[0].mxu0
        %v3850 = vpop.f32.mrb[0].mxu0
        %v3851 = vadd.f32 0.0, %v3850
        %v3852 = vpop.f32.mrb[0].mxu0
        %3853 = vmatprep.mubr.bf16.mxu0 %v3159
        %3854 = vmatmul.mubr.bf16.gmra.mrb[0].mxu0 %v3132
        %v3855 = vpop.f32.mrb[0].mxu0
        %v3856 = vadd.f32 0.0, %v3855
        %v3857 = vpop.f32.mrb[0].mxu0
        %v3858 = vpop.f32.mrb[0].mxu0
        %v3859 = vadd.f32 0.0, %v3858
        %v3860 = vpop.f32.mrb[0].mxu0
        %3861 = vmatprep.mubr.bf16.mxu0 %v3162
        %3862 = vmatmul.mubr.bf16.gmra.mrb[0].mxu0 %v3134
        %v3863 = vpop.f32.mrb[0].mxu0
        %v3864 = vadd.f32 0.0, %v3863
        %v3865 = vpop.f32.mrb[0].mxu0
        %v3866 = vpop.f32.mrb[0].mxu0
        %v3867 = vadd.f32 0.0, %v3866
        %v3868 = vpop.f32.mrb[0].mxu0
        %3869 = vmatprep.mubr.bf16.mxu0 %v3165
        %3870 = vmatmul.mubr.bf16.gmra.mrb[0].mxu0 %v3136
        %v3871 = vpop.f32.mrb[0].mxu0
        %v3872 = vadd.f32 0.0, %v3871
        %v3873 = vpop.f32.mrb[0].mxu0
        %v3874 = vpop.f32.mrb[0].mxu0
        %v3875 = vadd.f32 0.0, %v3874
        %v3876 = vpop.f32.mrb[0].mxu0
        %3877 = vmatprep.mubr.bf16.mxu0 %v3168
        %3878 = vmatmul.mubr.bf16.gmra.mrb[0].mxu0 %v3138
        %v3879 = vpop.f32.mrb[0].mxu0
        %v3880 = vadd.f32 0.0, %v3879
        %v3881 = vpop.f32.mrb[0].mxu0
        %v3882 = vpop.f32.mrb[0].mxu0
        %v3883 = vadd.f32 0.0, %v3882
        %v3884 = vpop.f32.mrb[0].mxu0
        %3885 = vmatprep.mubr.bf16.mxu0 %v3171
        %3886 = vmatmul.mubr.bf16.gmra.mrb[0].mxu0 %v3140
        %v3887 = vpop.f32.mrb[0].mxu0
        %v3888 = vadd.f32 0.0, %v3887
        %v3889 = vpop.f32.mrb[0].mxu0
        %v3890 = vpop.f32.mrb[0].mxu0
        %v3891 = vadd.f32 0.0, %v3890
        %v3892 = vpop.f32.mrb[0].mxu0
        %3893 = vmatprep.mubr.bf16.mxu0 %v3174
        %3894 = vmatmul.mubr.bf16.gmra.mrb[0].mxu0 %v3142
        %v3895 = vpop.f32.mrb[0].mxu0
        %v3896 = vadd.f32 0.0, %v3895
        %v3897 = vpop.f32.mrb[0].mxu0
        %v3898 = vpop.f32.mrb[0].mxu0
        %v3899 = vadd.f32 0.0, %v3898
        %v3900 = vpop.f32.mrb[0].mxu0
        %3901 = vdwg.mxu0
        %v3902 = vmax.f32 %v3644, %v3727
        %v3903 = vmax.f32 %v3645, %v3729
        %v3904 = vmax.f32 %v3646, %v3840
        %v3905 = vmax.f32 %v3647, %v3731
        %v3906 = vmax.f32 %v3648, %v3733
        %v3907 = vmax.f32 %v3649, %v3843
        %v3908 = vmax.f32 %v3650, %v3737
        %v3909 = vmax.f32 %v3651, %v3739
        %v3910 = vmax.f32 %v3652, %v3848
        %v3911 = vmax.f32 %v3653, %v3741
        %v3912 = vmax.f32 %v3654, %v3743
        %v3913 = vmax.f32 %v3655, %v3851
        %v3914 = vmax.f32 %v3656, %v3747
        %v3915 = vmax.f32 %v3657, %v3749
        %v3916 = vmax.f32 %v3658, %v3856
        %v3917 = vmax.f32 %v3659, %v3751
        %v3918 = vmax.f32 %v3660, %v3753
        %v3919 = vmax.f32 %v3661, %v3859
        %v3920 = vmax.f32 %v3662, %v3757
        %v3921 = vmax.f32 %v3663, %v3759
        %v3922 = vmax.f32 %v3664, %v3864
        %v3923 = vmax.f32 %v3665, %v3761
        %v3924 = vmax.f32 %v3666, %v3763
        %v3925 = vmax.f32 %v3667, %v3867
        %v3926 = vmax.f32 %v3668, %v3767
        %v3927 = vmax.f32 %v3669, %v3769
        %v3928 = vmax.f32 %v3670, %v3872
        %v3929 = vmax.f32 %v3671, %v3771
        %v3930 = vmax.f32 %v3672, %v3773
        %v3931 = vmax.f32 %v3673, %v3875
        %v3932 = vmax.f32 %v3674, %v3777
        %v3933 = vmax.f32 %v3675, %v3779
        %v3934 = vmax.f32 %v3676, %v3880
        %v3935 = vmax.f32 %v3677, %v3781
        %v3936 = vmax.f32 %v3678, %v3783
        %v3937 = vmax.f32 %v3679, %v3883
        %v3938 = vmax.f32 %v3680, %v3787
        %v3939 = vmax.f32 %v3681, %v3789
        %v3940 = vmax.f32 %v3682, %v3888
        %v3941 = vmax.f32 %v3683, %v3791
        %v3942 = vmax.f32 %v3684, %v3793
        %v3943 = vmax.f32 %v3685, %v3891
        %v3944 = vmax.f32 %v3686, %v3797
        %v3945 = vmax.f32 %v3687, %v3799
        %v3946 = vmax.f32 %v3688, %v3896
        %v3947 = vmax.f32 %v3689, %v3801
        %v3948 = vmax.f32 %v3690, %v3803
        %v3949 = vmax.f32 %v3691, %v3899
        %v3950 = vld [vmem:[%s5] sm:$0x7]
        %v3952 = vlaneseq
        %v3953 = vshrl.u32 %v3952, 7
        %v3954 = vsub.s32 0, %v3953
        %v3955 = vrot.slane %v3950, %v3954
        %v3956 = vlaneseq
        %v3957 = vshrl.u32 %v3956, 7
        %v3958 = vsub.s32 1, %v3957
        %v3959 = vrot.slane %v3950, %v3958
        %v3960 = vlaneseq
        %v3961 = vshrl.u32 %v3960, 7
        %v3962 = vsub.s32 2, %v3961
        %v3963 = vrot.slane %v3950, %v3962
        %v3967 = vadd.f32 %v3902, %v3955
        %v3968 = vadd.f32 %v3903, %v3959
        %v3969 = vadd.f32 %v3904, %v3963
        %v3970 = vadd.f32 %v3905, %v3955
        %v3971 = vadd.f32 %v3906, %v3959
        %v3972 = vadd.f32 %v3907, %v3963
        %v3973 = vadd.f32 %v3908, %v3955
        %v3974 = vadd.f32 %v3909, %v3959
        %v3975 = vadd.f32 %v3910, %v3963
        %v3976 = vadd.f32 %v3911, %v3955
        %v3977 = vadd.f32 %v3912, %v3959
        %v3978 = vadd.f32 %v3913, %v3963
        %v3979 = vadd.f32 %v3914, %v3955
        %v3980 = vadd.f32 %v3915, %v3959
        %v3981 = vadd.f32 %v3916, %v3963
        %v3982 = vadd.f32 %v3917, %v3955
        %v3983 = vadd.f32 %v3918, %v3959
        %v3984 = vadd.f32 %v3919, %v3963
        %v3985 = vadd.f32 %v3920, %v3955
        %v3986 = vadd.f32 %v3921, %v3959
        %v3987 = vadd.f32 %v3922, %v3963
        %v3988 = vadd.f32 %v3923, %v3955
        %v3989 = vadd.f32 %v3924, %v3959
        %v3990 = vadd.f32 %v3925, %v3963
        %v3991 = vadd.f32 %v3926, %v3955
        %v3992 = vadd.f32 %v3927, %v3959
        %v3993 = vadd.f32 %v3928, %v3963
        %v3994 = vadd.f32 %v3929, %v3955
        %v3995 = vadd.f32 %v3930, %v3959
        %v3996 = vadd.f32 %v3931, %v3963
        %v3997 = vadd.f32 %v3932, %v3955
        %v3998 = vadd.f32 %v3933, %v3959
        %v3999 = vadd.f32 %v3934, %v3963
        %v4000 = vadd.f32 %v3935, %v3955
        %v4001 = vadd.f32 %v3936, %v3959
        %v4002 = vadd.f32 %v3937, %v3963
        %v4003 = vadd.f32 %v3938, %v3955
        %v4004 = vadd.f32 %v3939, %v3959
        %v4005 = vadd.f32 %v3940, %v3963
        %v4006 = vadd.f32 %v3941, %v3955
        %v4007 = vadd.f32 %v3942, %v3959
        %v4008 = vadd.f32 %v3943, %v3963
        %v4009 = vadd.f32 %v3944, %v3955
        %v4010 = vadd.f32 %v3945, %v3959
        %v4011 = vadd.f32 %v3946, %v3963
        %v4012 = vadd.f32 %v3947, %v3955
        %v4013 = vadd.f32 %v3948, %v3959
        %v4014 = vadd.f32 %v3949, %v3963
        %v4015 = vmax.f32 %v3967, 0.0
        %v4016 = vmax.f32 %v3968, 0.0
        %v4017 = vmax.f32 %v3969, 0.0
        %v4018 = vmax.f32 %v3970, 0.0
        %v4019 = vmax.f32 %v3971, 0.0
        %v4020 = vmax.f32 %v3972, 0.0
        %v4021 = vmax.f32 %v3973, 0.0
        %v4022 = vmax.f32 %v3974, 0.0
        %v4023 = vmax.f32 %v3975, 0.0
        %v4024 = vmax.f32 %v3976, 0.0
        %v4025 = vmax.f32 %v3977, 0.0
        %v4026 = vmax.f32 %v3978, 0.0
        %v4027 = vmax.f32 %v3979, 0.0
        %v4028 = vmax.f32 %v3980, 0.0
        %v4029 = vmax.f32 %v3981, 0.0
        %v4030 = vmax.f32 %v3982, 0.0
        %v4031 = vmax.f32 %v3983, 0.0
        %v4032 = vmax.f32 %v3984, 0.0
        %v4033 = vmax.f32 %v3985, 0.0
        %v4034 = vmax.f32 %v3986, 0.0
        %v4035 = vmax.f32 %v3987, 0.0
        %v4036 = vmax.f32 %v3988, 0.0
        %v4037 = vmax.f32 %v3989, 0.0
        %v4038 = vmax.f32 %v3990, 0.0
        %v4039 = vmax.f32 %v3991, 0.0
        %v4040 = vmax.f32 %v3992, 0.0
        %v4041 = vmax.f32 %v3993, 0.0
        %v4042 = vmax.f32 %v3994, 0.0
        %v4043 = vmax.f32 %v3995, 0.0
        %v4044 = vmax.f32 %v3996, 0.0
        %v4045 = vmax.f32 %v3997, 0.0
        %v4046 = vmax.f32 %v3998, 0.0
        %v4047 = vmax.f32 %v3999, 0.0
        %v4048 = vmax.f32 %v4000, 0.0
        %v4049 = vmax.f32 %v4001, 0.0
        %v4050 = vmax.f32 %v4002, 0.0
        %v4051 = vmax.f32 %v4003, 0.0
        %v4052 = vmax.f32 %v4004, 0.0
        %v4053 = vmax.f32 %v4005, 0.0
        %v4054 = vmax.f32 %v4006, 0.0
        %v4055 = vmax.f32 %v4007, 0.0
        %v4056 = vmax.f32 %v4008, 0.0
        %v4057 = vmax.f32 %v4009, 0.0
        %v4058 = vmax.f32 %v4010, 0.0
        %v4059 = vmax.f32 %v4011, 0.0
        %v4060 = vmax.f32 %v4012, 0.0
        %v4061 = vmax.f32 %v4013, 0.0
        %v4062 = vmax.f32 %v4014, 0.0
        %v4063 = vpack.c.bf16 %v4021, %v4015
        %v4064 = vpack.c.bf16 %v4022, %v4016
        %v4065 = vpack.c.bf16 %v4023, %v4017
        %v4066 = vpack.c.bf16 %v4033, %v4027
        %v4067 = vpack.c.bf16 %v4034, %v4028
        %v4068 = vpack.c.bf16 %v4035, %v4029
        %v4069 = vpack.c.bf16 %v4045, %v4039
        %v4070 = vpack.c.bf16 %v4046, %v4040
        %v4071 = vpack.c.bf16 %v4047, %v4041
        %v4072 = vpack.c.bf16 %v4057, %v4051
        %v4073 = vpack.c.bf16 %v4058, %v4052
        %v4074 = vpack.c.bf16 %v4059, %v4053
        %v4075 = vld [vmem:[%s2] sm:$0xff]
        %v4076 = vld [vmem:[%s2 + $0x8] sm:$0xff]
        %v4077 = vld [vmem:[%s2 + $0x10] sm:$0xff]
        %v4078 = vld [vmem:[%s2 + $0x18] sm:$0xff]
        %v4079 = vld [vmem:[%s2 + $0x20] sm:$0xff]
        %v4080 = vld [vmem:[%s2 + $0x28] sm:$0xff]
        %v4081 = vld [vmem:[%s2 + $0x30] sm:$0xff]
        %v4082 = vld [vmem:[%s2 + $0x38] sm:$0xff]
        %v4083 = vld [vmem:[%s2 + $0x40] sm:$0xff]
        %v4084 = vld [vmem:[%s2 + $0x48] sm:$0xff]
        %v4085 = vld [vmem:[%s2 + $0x50] sm:$0xff]
        %v4086 = vld [vmem:[%s2 + $0x58] sm:$0xff]
        %v4087 = vld [vmem:[%s2 + $0x60] sm:$0xff]
        %v4088 = vld [vmem:[%s2 + $0x68] sm:$0xff]
        %v4089 = vld [vmem:[%s2 + $0x70] sm:$0xff]
        %v4090 = vld [vmem:[%s2 + $0x78] sm:$0xff]
        %v4091 = vld [vmem:[%s2 + $0x80] sm:$0xff]
        %v4092 = vld [vmem:[%s2 + $0x88] sm:$0xff]
        %v4093 = vld [vmem:[%s2 + $0x90] sm:$0xff]
        %v4094 = vld [vmem:[%s2 + $0x98] sm:$0xff]
        %v4095 = vld [vmem:[%s2 + $0xa0] sm:$0xff]
        %v4096 = vld [vmem:[%s2 + $0xa8] sm:$0xff]
        %v4097 = vld [vmem:[%s2 + $0xb0] sm:$0xff]
        %v4098 = vld [vmem:[%s2 + $0xb8] sm:$0xff]
        %v4099 = vld [vmem:[%s2 + $0xc0] sm:$0xff]
        %v4100 = vld [vmem:[%s2 + $0xc8] sm:$0xff]
        %v4101 = vld [vmem:[%s2 + $0xd0] sm:$0xff]
        %v4102 = vld [vmem:[%s2 + $0xd8] sm:$0xff]
        %v4103 = vld [vmem:[%s2 + $0xe0] sm:$0xff]
        %v4104 = vld [vmem:[%s2 + $0xe8] sm:$0xff]
        %v4105 = vld [vmem:[%s2 + $0xf0] sm:$0xff]
        %v4106 = vld [vmem:[%s2 + $0xf8] sm:$0xff]
        %v4107 = vld [vmem:[%s2 + $0x100] sm:$0xff]
        %v4108 = vld [vmem:[%s2 + $0x108] sm:$0xff]
        %v4109 = vld [vmem:[%s2 + $0x110] sm:$0xff]
        %v4110 = vld [vmem:[%s2 + $0x118] sm:$0xff]
        %v4111 = vld [vmem:[%s2 + $0x120] sm:$0xff]
        %v4112 = vld [vmem:[%s2 + $0x128] sm:$0xff]
        %v4113 = vld [vmem:[%s2 + $0x130] sm:$0xff]
        %v4114 = vld [vmem:[%s2 + $0x138] sm:$0xff]
        %v4115 = vld [vmem:[%s2 + $0x140] sm:$0xff]
        %v4116 = vld [vmem:[%s2 + $0x148] sm:$0xff]
        %v4117 = vld [vmem:[%s2 + $0x150] sm:$0xff]
        %v4118 = vld [vmem:[%s2 + $0x158] sm:$0xff]
        %v4119 = vld [vmem:[%s2 + $0x160] sm:$0xff]
        %v4120 = vld [vmem:[%s2 + $0x168] sm:$0xff]
        %v4121 = vld [vmem:[%s2 + $0x170] sm:$0xff]
        %v4122 = vld [vmem:[%s2 + $0x178] sm:$0xff]
        %s4123 = scalar_lea.vmem %s2, 384
        %v4124 = vld [vmem:[%s4123] sm:$0xff]
        %v4125 = vld [vmem:[%s4123 + $0x8] sm:$0xff]
        %v4126 = vld [vmem:[%s4123 + $0x10] sm:$0xff]
        %v4127 = vld [vmem:[%s4123 + $0x18] sm:$0xff]
        %v4128 = vld [vmem:[%s4123 + $0x20] sm:$0xff]
        %v4129 = vld [vmem:[%s4123 + $0x28] sm:$0xff]
        %v4130 = vld [vmem:[%s4123 + $0x30] sm:$0xff]
        %v4131 = vld [vmem:[%s4123 + $0x38] sm:$0xff]
        %v4132 = vld [vmem:[%s4123 + $0x40] sm:$0xff]
        %v4133 = vld [vmem:[%s4123 + $0x48] sm:$0xff]
        %v4134 = vld [vmem:[%s4123 + $0x50] sm:$0xff]
        %v4135 = vld [vmem:[%s4123 + $0x58] sm:$0xff]
        %v4136 = vld [vmem:[%s4123 + $0x60] sm:$0xff]
        %v4137 = vld [vmem:[%s4123 + $0x68] sm:$0xff]
        %v4138 = vld [vmem:[%s4123 + $0x70] sm:$0xff]
        %v4139 = vld [vmem:[%s4123 + $0x78] sm:$0xff]
        %v4140 = vld [vmem:[%s4123 + $0x80] sm:$0xff]
        %v4141 = vld [vmem:[%s4123 + $0x88] sm:$0xff]
        %v4142 = vld [vmem:[%s4123 + $0x90] sm:$0xff]
        %v4143 = vld [vmem:[%s4123 + $0x98] sm:$0xff]
        %v4144 = vld [vmem:[%s4123 + $0xa0] sm:$0xff]
        %v4145 = vld [vmem:[%s4123 + $0xa8] sm:$0xff]
        %v4146 = vld [vmem:[%s4123 + $0xb0] sm:$0xff]
        %v4147 = vld [vmem:[%s4123 + $0xb8] sm:$0xff]
        %v4148 = vld [vmem:[%s4123 + $0xc0] sm:$0xff]
        %v4149 = vld [vmem:[%s4123 + $0xc8] sm:$0xff]
        %v4150 = vld [vmem:[%s4123 + $0xd0] sm:$0xff]
        %v4151 = vld [vmem:[%s4123 + $0xd8] sm:$0xff]
        %v4152 = vld [vmem:[%s4123 + $0xe0] sm:$0xff]
        %v4153 = vld [vmem:[%s4123 + $0xe8] sm:$0xff]
        %v4154 = vld [vmem:[%s4123 + $0xf0] sm:$0xff]
        %v4155 = vld [vmem:[%s4123 + $0xf8] sm:$0xff]
        %v4156 = vld [vmem:[%s4123 + $0x100] sm:$0xff]
        %v4157 = vld [vmem:[%s4123 + $0x108] sm:$0xff]
        %v4158 = vld [vmem:[%s4123 + $0x110] sm:$0xff]
        %v4159 = vld [vmem:[%s4123 + $0x118] sm:$0xff]
        %v4160 = vld [vmem:[%s4123 + $0x120] sm:$0xff]
        %v4161 = vld [vmem:[%s4123 + $0x128] sm:$0xff]
        %v4162 = vld [vmem:[%s4123 + $0x130] sm:$0xff]
        %v4163 = vld [vmem:[%s4123 + $0x138] sm:$0xff]
        %v4164 = vld [vmem:[%s4123 + $0x140] sm:$0xff]
        %v4165 = vld [vmem:[%s4123 + $0x148] sm:$0xff]
        %v4166 = vld [vmem:[%s4123 + $0x150] sm:$0xff]
        %v4167 = vld [vmem:[%s4123 + $0x158] sm:$0xff]
        %v4168 = vld [vmem:[%s4123 + $0x160] sm:$0xff]
        %v4169 = vld [vmem:[%s4123 + $0x168] sm:$0xff]
        %v4170 = vld [vmem:[%s4123 + $0x170] sm:$0xff]
        %v4171 = vld [vmem:[%s4123 + $0x178] sm:$0xff]
        %vm4220 = vcmask 1046528
        %v4221 = vrot.slane %v4015, 1
        %v4222 = vrot.slane %v4018, 1
        %v4223 = vsel %vm4220, %v4221, %v4222
        %v4224 = vrot.slane %v4016, 1
        %v4225 = vrot.slane %v4019, 1
        %v4226 = vsel %vm4220, %v4224, %v4225
        %v4227 = vrot.slane %v4017, 1
        %v4228 = vrot.slane %v4020, 1
        %v4229 = vsel %vm4220, %v4227, %v4228
        %v4230 = vrot.slane %v4021, 1
        %v4231 = vrot.slane %v4024, 1
        %v4232 = vsel %vm4220, %v4230, %v4231
        %v4233 = vrot.slane %v4022, 1
        %v4234 = vrot.slane %v4025, 1
        %v4235 = vsel %vm4220, %v4233, %v4234
        %v4236 = vrot.slane %v4023, 1
        %v4237 = vrot.slane %v4026, 1
        %v4238 = vsel %vm4220, %v4236, %v4237
        %v4239 = vrot.slane %v4027, 1
        %v4240 = vrot.slane %v4030, 1
        %v4241 = vsel %vm4220, %v4239, %v4240
        %v4242 = vrot.slane %v4028, 1
        %v4243 = vrot.slane %v4031, 1
        %v4244 = vsel %vm4220, %v4242, %v4243
        %v4245 = vrot.slane %v4029, 1
        %v4246 = vrot.slane %v4032, 1
        %v4247 = vsel %vm4220, %v4245, %v4246
        %v4248 = vrot.slane %v4033, 1
        %v4249 = vrot.slane %v4036, 1
        %v4250 = vsel %vm4220, %v4248, %v4249
        %v4251 = vrot.slane %v4034, 1
        %v4252 = vrot.slane %v4037, 1
        %v4253 = vsel %vm4220, %v4251, %v4252
        %v4254 = vrot.slane %v4035, 1
        %v4255 = vrot.slane %v4038, 1
        %v4256 = vsel %vm4220, %v4254, %v4255
        %v4257 = vrot.slane %v4039, 1
        %v4258 = vrot.slane %v4042, 1
        %v4259 = vsel %vm4220, %v4257, %v4258
        %v4260 = vrot.slane %v4040, 1
        %v4261 = vrot.slane %v4043, 1
        %v4262 = vsel %vm4220, %v4260, %v4261
        %v4263 = vrot.slane %v4041, 1
        %v4264 = vrot.slane %v4044, 1
        %v4265 = vsel %vm4220, %v4263, %v4264
        %v4266 = vrot.slane %v4045, 1
        %v4267 = vrot.slane %v4048, 1
        %v4268 = vsel %vm4220, %v4266, %v4267
        %v4269 = vrot.slane %v4046, 1
        %v4270 = vrot.slane %v4049, 1
        %v4271 = vsel %vm4220, %v4269, %v4270
        %v4272 = vrot.slane %v4047, 1
        %v4273 = vrot.slane %v4050, 1
        %v4274 = vsel %vm4220, %v4272, %v4273
        %v4275 = vrot.slane %v4051, 1
        %v4276 = vrot.slane %v4054, 1
        %v4277 = vsel %vm4220, %v4275, %v4276
        %v4278 = vrot.slane %v4052, 1
        %v4279 = vrot.slane %v4055, 1
        %v4280 = vsel %vm4220, %v4278, %v4279
        %v4281 = vrot.slane %v4053, 1
        %v4282 = vrot.slane %v4056, 1
        %v4283 = vsel %vm4220, %v4281, %v4282
        %v4284 = vrot.slane %v4057, 1
        %v4285 = vrot.slane %v4060, 1
        %v4286 = vsel %vm4220, %v4284, %v4285
        %v4287 = vrot.slane %v4058, 1
        %v4288 = vrot.slane %v4061, 1
        %v4289 = vsel %vm4220, %v4287, %v4288
        %v4290 = vrot.slane %v4059, 1
        %v4291 = vrot.slane %v4062, 1
        %v4292 = vsel %vm4220, %v4290, %v4291
        %v4317 = vpack.c.bf16 %v4232, %v4223
        %v4318 = vpack.c.bf16 %v4235, %v4226
        %v4319 = vpack.c.bf16 %v4238, %v4229
        %v4320 = vpack.c.bf16 %v4250, %v4241
        %v4321 = vpack.c.bf16 %v4253, %v4244
        %v4322 = vpack.c.bf16 %v4256, %v4247
        %v4323 = vpack.c.bf16 %v4268, %v4259
        %v4324 = vpack.c.bf16 %v4271, %v4262
        %v4325 = vpack.c.bf16 %v4274, %v4265
        %v4326 = vpack.c.bf16 %v4286, %v4277
        %v4327 = vpack.c.bf16 %v4289, %v4280
        %v4328 = vpack.c.bf16 %v4292, %v4283
        %s4329 = scalar_lea.vmem %s2, 768
        %v4330 = vld [vmem:[%s4329] sm:$0xff]
        %v4331 = vld [vmem:[%s4329 + $0x8] sm:$0xff]
        %v4332 = vld [vmem:[%s4329 + $0x10] sm:$0xff]
        %v4333 = vld [vmem:[%s4329 + $0x18] sm:$0xff]
        %v4334 = vld [vmem:[%s4329 + $0x20] sm:$0xff]
        %v4335 = vld [vmem:[%s4329 + $0x28] sm:$0xff]
        %v4336 = vld [vmem:[%s4329 + $0x30] sm:$0xff]
        %v4337 = vld [vmem:[%s4329 + $0x38] sm:$0xff]
        %v4338 = vld [vmem:[%s4329 + $0x40] sm:$0xff]
        %v4339 = vld [vmem:[%s4329 + $0x48] sm:$0xff]
        %v4340 = vld [vmem:[%s4329 + $0x50] sm:$0xff]
        %v4341 = vld [vmem:[%s4329 + $0x58] sm:$0xff]
        %v4342 = vld [vmem:[%s4329 + $0x60] sm:$0xff]
        %v4343 = vld [vmem:[%s4329 + $0x68] sm:$0xff]
        %v4344 = vld [vmem:[%s4329 + $0x70] sm:$0xff]
        %v4345 = vld [vmem:[%s4329 + $0x78] sm:$0xff]
        %v4346 = vld [vmem:[%s4329 + $0x80] sm:$0xff]
        %v4347 = vld [vmem:[%s4329 + $0x88] sm:$0xff]
        %v4348 = vld [vmem:[%s4329 + $0x90] sm:$0xff]
        %v4349 = vld [vmem:[%s4329 + $0x98] sm:$0xff]
        %v4350 = vld [vmem:[%s4329 + $0xa0] sm:$0xff]
        %v4351 = vld [vmem:[%s4329 + $0xa8] sm:$0xff]
        %v4352 = vld [vmem:[%s4329 + $0xb0] sm:$0xff]
        %v4353 = vld [vmem:[%s4329 + $0xb8] sm:$0xff]
        %v4354 = vld [vmem:[%s4329 + $0xc0] sm:$0xff]
        %v4355 = vld [vmem:[%s4329 + $0xc8] sm:$0xff]
        %v4356 = vld [vmem:[%s4329 + $0xd0] sm:$0xff]
        %v4357 = vld [vmem:[%s4329 + $0xd8] sm:$0xff]
        %v4358 = vld [vmem:[%s4329 + $0xe0] sm:$0xff]
        %v4359 = vld [vmem:[%s4329 + $0xe8] sm:$0xff]
        %v4360 = vld [vmem:[%s4329 + $0xf0] sm:$0xff]
        %v4361 = vld [vmem:[%s4329 + $0xf8] sm:$0xff]
        %v4362 = vld [vmem:[%s4329 + $0x100] sm:$0xff]
        %v4363 = vld [vmem:[%s4329 + $0x108] sm:$0xff]
        %v4364 = vld [vmem:[%s4329 + $0x110] sm:$0xff]
        %v4365 = vld [vmem:[%s4329 + $0x118] sm:$0xff]
        %v4366 = vld [vmem:[%s4329 + $0x120] sm:$0xff]
        %v4367 = vld [vmem:[%s4329 + $0x128] sm:$0xff]
        %v4368 = vld [vmem:[%s4329 + $0x130] sm:$0xff]
        %v4369 = vld [vmem:[%s4329 + $0x138] sm:$0xff]
        %v4370 = vld [vmem:[%s4329 + $0x140] sm:$0xff]
        %v4371 = vld [vmem:[%s4329 + $0x148] sm:$0xff]
        %v4372 = vld [vmem:[%s4329 + $0x150] sm:$0xff]
        %v4373 = vld [vmem:[%s4329 + $0x158] sm:$0xff]
        %v4374 = vld [vmem:[%s4329 + $0x160] sm:$0xff]
        %v4375 = vld [vmem:[%s4329 + $0x168] sm:$0xff]
        %v4376 = vld [vmem:[%s4329 + $0x170] sm:$0xff]
        %v4377 = vld [vmem:[%s4329 + $0x178] sm:$0xff]
        %v4426 = vunpack.c.l.b16 %v4330
        %v4427 = vunpack.c.h.b16 %v4330
        %v4428 = vunpack.c.l.b16 %v4331
        %v4429 = vunpack.c.h.b16 %v4331
        %v4430 = vunpack.c.l.b16 %v4332
        %v4431 = vunpack.c.h.b16 %v4332
        %v4432 = vunpack.c.l.b16 %v4333
        %v4433 = vunpack.c.h.b16 %v4333
        %v4434 = vunpack.c.l.b16 %v4334
        %v4435 = vunpack.c.h.b16 %v4334
        %v4436 = vunpack.c.l.b16 %v4335
        %v4437 = vunpack.c.h.b16 %v4335
        %v4438 = vunpack.c.l.b16 %v4336
        %v4439 = vunpack.c.h.b16 %v4336
        %v4440 = vunpack.c.l.b16 %v4337
        %v4441 = vunpack.c.h.b16 %v4337
        %v4442 = vunpack.c.l.b16 %v4338
        %v4443 = vunpack.c.h.b16 %v4338
        %v4444 = vunpack.c.l.b16 %v4339
        %v4445 = vunpack.c.h.b16 %v4339
        %v4446 = vunpack.c.l.b16 %v4340
        %v4447 = vunpack.c.h.b16 %v4340
        %v4448 = vunpack.c.l.b16 %v4341
        %v4449 = vunpack.c.h.b16 %v4341
        %v4450 = vunpack.c.l.b16 %v4342
        %v4451 = vunpack.c.h.b16 %v4342
        %v4452 = vunpack.c.l.b16 %v4343
        %v4453 = vunpack.c.h.b16 %v4343
        %v4454 = vunpack.c.l.b16 %v4344
        %v4455 = vunpack.c.h.b16 %v4344
        %v4456 = vunpack.c.l.b16 %v4345
        %v4457 = vunpack.c.h.b16 %v4345
        %v4458 = vunpack.c.l.b16 %v4346
        %v4459 = vunpack.c.h.b16 %v4346
        %v4460 = vunpack.c.l.b16 %v4347
        %v4461 = vunpack.c.h.b16 %v4347
        %v4462 = vunpack.c.l.b16 %v4348
        %v4463 = vunpack.c.h.b16 %v4348
        %v4464 = vunpack.c.l.b16 %v4349
        %v4465 = vunpack.c.h.b16 %v4349
        %v4466 = vunpack.c.l.b16 %v4350
        %v4467 = vunpack.c.h.b16 %v4350
        %v4468 = vunpack.c.l.b16 %v4351
        %v4469 = vunpack.c.h.b16 %v4351
        %v4470 = vunpack.c.l.b16 %v4352
        %v4471 = vunpack.c.h.b16 %v4352
        %v4472 = vunpack.c.l.b16 %v4353
        %v4473 = vunpack.c.h.b16 %v4353
        %v4474 = vunpack.c.l.b16 %v4354
        %v4475 = vunpack.c.h.b16 %v4354
        %v4476 = vunpack.c.l.b16 %v4355
        %v4477 = vunpack.c.h.b16 %v4355
        %v4478 = vunpack.c.l.b16 %v4356
        %v4479 = vunpack.c.h.b16 %v4356
        %v4480 = vunpack.c.l.b16 %v4357
        %v4481 = vunpack.c.h.b16 %v4357
        %v4482 = vunpack.c.l.b16 %v4358
        %v4483 = vunpack.c.h.b16 %v4358
        %v4484 = vunpack.c.l.b16 %v4359
        %v4485 = vunpack.c.h.b16 %v4359
        %v4486 = vunpack.c.l.b16 %v4360
        %v4487 = vunpack.c.h.b16 %v4360
        %v4488 = vunpack.c.l.b16 %v4361
        %v4489 = vunpack.c.h.b16 %v4361
        %v4490 = vunpack.c.l.b16 %v4362
        %v4491 = vunpack.c.h.b16 %v4362
        %v4492 = vunpack.c.l.b16 %v4363
        %v4493 = vunpack.c.h.b16 %v4363
        %v4494 = vunpack.c.l.b16 %v4364
        %v4495 = vunpack.c.h.b16 %v4364
        %v4496 = vunpack.c.l.b16 %v4365
        %v4497 = vunpack.c.h.b16 %v4365
        %v4498 = vunpack.c.l.b16 %v4366
        %v4499 = vunpack.c.h.b16 %v4366
        %v4500 = vunpack.c.l.b16 %v4367
        %v4501 = vunpack.c.h.b16 %v4367
        %v4502 = vunpack.c.l.b16 %v4368
        %v4503 = vunpack.c.h.b16 %v4368
        %v4504 = vunpack.c.l.b16 %v4369
        %v4505 = vunpack.c.h.b16 %v4369
        %v4506 = vunpack.c.l.b16 %v4370
        %v4507 = vunpack.c.h.b16 %v4370
        %v4508 = vunpack.c.l.b16 %v4371
        %v4509 = vunpack.c.h.b16 %v4371
        %v4510 = vunpack.c.l.b16 %v4372
        %v4511 = vunpack.c.h.b16 %v4372
        %v4512 = vunpack.c.l.b16 %v4373
        %v4513 = vunpack.c.h.b16 %v4373
        %v4514 = vunpack.c.l.b16 %v4374
        %v4515 = vunpack.c.h.b16 %v4374
        %v4516 = vunpack.c.l.b16 %v4375
        %v4517 = vunpack.c.h.b16 %v4375
        %v4518 = vunpack.c.l.b16 %v4376
        %v4519 = vunpack.c.h.b16 %v4376
        %v4520 = vunpack.c.l.b16 %v4377
        %v4521 = vunpack.c.h.b16 %v4377
        %v4522 = vpack.c.b16 %v4428, %v4426
        %v4523 = vpack.c.b16 %v4429, %v4427
        %v4524 = vpack.c.b16 %v4432, %v4430
        %v4525 = vpack.c.b16 %v4433, %v4431
        %v4526 = vpack.c.b16 %v4436, %v4434
        %v4527 = vpack.c.b16 %v4437, %v4435
        %v4528 = vpack.c.b16 %v4440, %v4438
        %v4529 = vpack.c.b16 %v4441, %v4439
        %v4530 = vpack.c.b16 %v4444, %v4442
        %v4531 = vpack.c.b16 %v4445, %v4443
        %v4532 = vpack.c.b16 %v4448, %v4446
        %v4533 = vpack.c.b16 %v4449, %v4447
        %v4534 = vpack.c.b16 %v4452, %v4450
        %v4535 = vpack.c.b16 %v4453, %v4451
        %v4536 = vpack.c.b16 %v4456, %v4454
        %v4537 = vpack.c.b16 %v4457, %v4455
        %v4538 = vpack.c.b16 %v4460, %v4458
        %v4539 = vpack.c.b16 %v4461, %v4459
        %v4540 = vpack.c.b16 %v4464, %v4462
        %v4541 = vpack.c.b16 %v4465, %v4463
        %v4542 = vpack.c.b16 %v4468, %v4466
        %v4543 = vpack.c.b16 %v4469, %v4467
        %v4544 = vpack.c.b16 %v4472, %v4470
        %v4545 = vpack.c.b16 %v4473, %v4471
        %v4546 = vpack.c.b16 %v4476, %v4474
        %v4547 = vpack.c.b16 %v4477, %v4475
        %v4548 = vpack.c.b16 %v4480, %v4478
        %v4549 = vpack.c.b16 %v4481, %v4479
        %v4550 = vpack.c.b16 %v4484, %v4482
        %v4551 = vpack.c.b16 %v4485, %v4483
        %v4552 = vpack.c.b16 %v4488, %v4486
        %v4553 = vpack.c.b16 %v4489, %v4487
        %v4554 = vpack.c.b16 %v4492, %v4490
        %v4555 = vpack.c.b16 %v4493, %v4491
        %v4556 = vpack.c.b16 %v4496, %v4494
        %v4557 = vpack.c.b16 %v4497, %v4495
        %v4558 = vpack.c.b16 %v4500, %v4498
        %v4559 = vpack.c.b16 %v4501, %v4499
        %v4560 = vpack.c.b16 %v4504, %v4502
        %v4561 = vpack.c.b16 %v4505, %v4503
        %v4562 = vpack.c.b16 %v4508, %v4506
        %v4563 = vpack.c.b16 %v4509, %v4507
        %v4564 = vpack.c.b16 %v4512, %v4510
        %v4565 = vpack.c.b16 %v4513, %v4511
        %v4566 = vpack.c.b16 %v4516, %v4514
        %v4567 = vpack.c.b16 %v4517, %v4515
        %v4568 = vpack.c.b16 %v4520, %v4518
        %v4569 = vpack.c.b16 %v4521, %v4519
        %4618 = vmatprep.subr.bf16.mxu0 %v4523
        %4619 = vmatpush1.bf16.msra.mxu0 %v4522
        %4620 = vmatprep.subr.bf16.mxu0 %v4525
        %4621 = vmatpush1.bf16.msra.mxu0 %v4524
        %4622 = vmatprep.subr.bf16.mxu0 %v4527
        %4623 = vmatpush1.bf16.msra.mxu0 %v4526
        %4624 = vmatprep.subr.bf16.mxu0 %v4529
        %4625 = vmatpush1.bf16.msra.mxu0 %v4528
        %4626 = vmatprep.subr.bf16.mxu0 %v4531
        %4627 = vmatpush1.bf16.msra.mxu0 %v4530
        %4628 = vmatprep.subr.bf16.mxu0 %v4533
        %4629 = vmatpush1.bf16.msra.mxu0 %v4532
        %4630 = vmatprep.subr.bf16.mxu0 %v4535
        %4631 = vmatpush1.bf16.msra.mxu0 %v4534
        %4632 = vmatprep.subr.bf16.mxu0 %v4537
        %4633 = vmatpush1.bf16.msra.mxu0 %v4536
        %4634 = vmatprep.subr.bf16.mxu0 %v4539
        %4635 = vmatpush1.bf16.msra.mxu0 %v4538
        %4636 = vmatprep.subr.bf16.mxu0 %v4541
        %4637 = vmatpush1.bf16.msra.mxu0 %v4540
        %4638 = vmatprep.subr.bf16.mxu0 %v4543
        %4639 = vmatpush1.bf16.msra.mxu0 %v4542
        %4640 = vmatprep.subr.bf16.mxu0 %v4545
        %4641 = vmatpush1.bf16.msra.mxu0 %v4544
        %4642 = vmatprep.subr.bf16.mxu0 %v4547
        %4643 = vmatpush1.bf16.msra.mxu0 %v4546
        %4644 = vmatprep.subr.bf16.mxu0 %v4549
        %4645 = vmatpush1.bf16.msra.mxu0 %v4548
        %4646 = vmatprep.subr.bf16.mxu0 %v4551
        %4647 = vmatpush1.bf16.msra.mxu0 %v4550
        %4648 = vmatprep.subr.bf16.mxu0 %v4553
        %4649 = vmatpush1.bf16.msra.mxu0 %v4552
        %4650 = vmatprep.mubr.bf16.mxu0 %v4318
        %4651 = vmatmul.mubr.bf16.gmra.mrb[0].mxu0 %v4317
        %v4652 = vpop.f32.mrb[0].mxu0
        %v4653 = vadd.f32 0.0, %v4652
        %v4654 = vpop.f32.mrb[0].mxu0
        %v4655 = vadd.f32 0.0, %v4654
        %v4656 = vpop.f32.mrb[0].mxu0
        %v4657 = vadd.f32 0.0, %v4656
        %v4658 = vpop.f32.mrb[0].mxu0
        %v4659 = vadd.f32 0.0, %v4658
        %4660 = vmatprep.mubr.bf16.mxu0 %v4321
        %4661 = vmatmul.mubr.bf16.gmra.mrb[0].mxu0 %v4320
        %v4662 = vpop.f32.mrb[0].mxu0
        %v4663 = vadd.f32 0.0, %v4662
        %v4664 = vpop.f32.mrb[0].mxu0
        %v4665 = vadd.f32 0.0, %v4664
        %v4666 = vpop.f32.mrb[0].mxu0
        %v4667 = vadd.f32 0.0, %v4666
        %v4668 = vpop.f32.mrb[0].mxu0
        %v4669 = vadd.f32 0.0, %v4668
        %4670 = vmatprep.mubr.bf16.mxu0 %v4324
        %4671 = vmatmul.mubr.bf16.gmra.mrb[0].mxu0 %v4323
        %v4672 = vpop.f32.mrb[0].mxu0
        %v4673 = vadd.f32 0.0, %v4672
        %v4674 = vpop.f32.mrb[0].mxu0
        %v4675 = vadd.f32 0.0, %v4674
        %v4676 = vpop.f32.mrb[0].mxu0
        %v4677 = vadd.f32 0.0, %v4676
        %v4678 = vpop.f32.mrb[0].mxu0
        %v4679 = vadd.f32 0.0, %v4678
        %4680 = vmatprep.mubr.bf16.mxu0 %v4327
        %4681 = vmatmul.mubr.bf16.gmra.mrb[0].mxu0 %v4326
        %v4682 = vpop.f32.mrb[0].mxu0
        %v4683 = vadd.f32 0.0, %v4682
        %v4684 = vpop.f32.mrb[0].mxu0
        %v4685 = vadd.f32 0.0, %v4684
        %v4686 = vpop.f32.mrb[0].mxu0
        %v4687 = vadd.f32 0.0, %v4686
        %v4688 = vpop.f32.mrb[0].mxu0
        %v4689 = vadd.f32 0.0, %v4688
        %4690 = vdwg.mxu0
        %4691 = vmatprep.subr.bf16.mxu0 %v4555
        %4692 = vmatpush1.bf16.msra.mxu0 %v4554
        %4693 = vmatprep.subr.bf16.mxu0 %v4557
        %4694 = vmatpush1.bf16.msra.mxu0 %v4556
        %4695 = vmatprep.subr.bf16.mxu0 %v4559
        %4696 = vmatpush1.bf16.msra.mxu0 %v4558
        %4697 = vmatprep.subr.bf16.mxu0 %v4561
        %4698 = vmatpush1.bf16.msra.mxu0 %v4560
        %4699 = vmatprep.subr.bf16.mxu0 %v4563
        %4700 = vmatpush1.bf16.msra.mxu0 %v4562
        %4701 = vmatprep.subr.bf16.mxu0 %v4565
        %4702 = vmatpush1.bf16.msra.mxu0 %v4564
        %4703 = vmatprep.subr.bf16.mxu0 %v4567
        %4704 = vmatpush1.bf16.msra.mxu0 %v4566
        %4705 = vmatprep.subr.bf16.mxu0 %v4569
        %4706 = vmatpush1.bf16.msra.mxu0 %v4568
        %4707 = vmatprep.subr.bf16.mxu0 0
        %4708 = vmatpush1.bf16.msra.mxu0 0
        %4709 = vmatprep.subr.bf16.mxu0 0
        %4710 = vmatpush1.bf16.msra.mxu0 0
        %4711 = vmatprep.subr.bf16.mxu0 0
        %4712 = vmatpush1.bf16.msra.mxu0 0
        %4713 = vmatprep.subr.bf16.mxu0 0
        %4714 = vmatpush1.bf16.msra.mxu0 0
        %4715 = vmatprep.subr.bf16.mxu0 0
        %4716 = vmatpush1.bf16.msra.mxu0 0
        %4717 = vmatprep.subr.bf16.mxu0 0
        %4718 = vmatpush1.bf16.msra.mxu0 0
        %4719 = vmatprep.subr.bf16.mxu0 0
        %4720 = vmatpush1.bf16.msra.mxu0 0
        %4721 = vmatprep.subr.bf16.mxu0 0
        %4722 = vmatpush1.bf16.msra.mxu0 0
        %4723 = vmatprep.mubr.bf16.mxu0 0
        %4724 = vmatmul.mubr.bf16.gmra.mrb[0].mxu0 %v4319
        %v4725 = vpop.f32.mrb[0].mxu0
        %v4726 = vadd.f32 %v4653, %v4725
        %v4727 = vpop.f32.mrb[0].mxu0
        %v4728 = vadd.f32 %v4655, %v4727
        %v4729 = vpop.f32.mrb[0].mxu0
        %v4730 = vadd.f32 %v4657, %v4729
        %v4731 = vpop.f32.mrb[0].mxu0
        %v4732 = vadd.f32 %v4659, %v4731
        %4733 = vmatprep.mubr.bf16.mxu0 0
        %4734 = vmatmul.mubr.bf16.gmra.mrb[0].mxu0 %v4322
        %v4735 = vpop.f32.mrb[0].mxu0
        %v4736 = vadd.f32 %v4663, %v4735
        %v4737 = vpop.f32.mrb[0].mxu0
        %v4738 = vadd.f32 %v4665, %v4737
        %v4739 = vpop.f32.mrb[0].mxu0
        %v4740 = vadd.f32 %v4667, %v4739
        %v4741 = vpop.f32.mrb[0].mxu0
        %v4742 = vadd.f32 %v4669, %v4741
        %4743 = vmatprep.mubr.bf16.mxu0 0
        %4744 = vmatmul.mubr.bf16.gmra.mrb[0].mxu0 %v4325
        %v4745 = vpop.f32.mrb[0].mxu0
        %v4746 = vadd.f32 %v4673, %v4745
        %v4747 = vpop.f32.mrb[0].mxu0
        %v4748 = vadd.f32 %v4675, %v4747
        %v4749 = vpop.f32.mrb[0].mxu0
        %v4750 = vadd.f32 %v4677, %v4749
        %v4751 = vpop.f32.mrb[0].mxu0
        %v4752 = vadd.f32 %v4679, %v4751
        %4753 = vmatprep.mubr.bf16.mxu0 0
        %4754 = vmatmul.mubr.bf16.gmra.mrb[0].mxu0 %v4328
        %v4755 = vpop.f32.mrb[0].mxu0
        %v4756 = vadd.f32 %v4683, %v4755
        %v4757 = vpop.f32.mrb[0].mxu0
        %v4758 = vadd.f32 %v4685, %v4757
        %v4759 = vpop.f32.mrb[0].mxu0
        %v4760 = vadd.f32 %v4687, %v4759
        %v4761 = vpop.f32.mrb[0].mxu0
        %v4762 = vadd.f32 %v4689, %v4761
        %4763 = vdwg.mxu0
        %s4764 = scalar_lea.vmem %s2, 1152
        %v4765 = vld [vmem:[%s4764] sm:$0xff]
        %v4766 = vld [vmem:[%s4764 + $0x8] sm:$0xff]
        %v4767 = vld [vmem:[%s4764 + $0x10] sm:$0xff]
        %v4768 = vld [vmem:[%s4764 + $0x18] sm:$0xff]
        %v4769 = vld [vmem:[%s4764 + $0x20] sm:$0xff]
        %v4770 = vld [vmem:[%s4764 + $0x28] sm:$0xff]
        %v4771 = vld [vmem:[%s4764 + $0x30] sm:$0xff]
        %v4772 = vld [vmem:[%s4764 + $0x38] sm:$0xff]
        %v4773 = vld [vmem:[%s4764 + $0x40] sm:$0xff]
        %v4774 = vld [vmem:[%s4764 + $0x48] sm:$0xff]
        %v4775 = vld [vmem:[%s4764 + $0x50] sm:$0xff]
        %v4776 = vld [vmem:[%s4764 + $0x58] sm:$0xff]
        %v4777 = vld [vmem:[%s4764 + $0x60] sm:$0xff]
        %v4778 = vld [vmem:[%s4764 + $0x68] sm:$0xff]
        %v4779 = vld [vmem:[%s4764 + $0x70] sm:$0xff]
        %v4780 = vld [vmem:[%s4764 + $0x78] sm:$0xff]
        %v4781 = vld [vmem:[%s4764 + $0x80] sm:$0xff]
        %v4782 = vld [vmem:[%s4764 + $0x88] sm:$0xff]
        %v4783 = vld [vmem:[%s4764 + $0x90] sm:$0xff]
        %v4784 = vld [vmem:[%s4764 + $0x98] sm:$0xff]
        %v4785 = vld [vmem:[%s4764 + $0xa0] sm:$0xff]
        %v4786 = vld [vmem:[%s4764 + $0xa8] sm:$0xff]
        %v4787 = vld [vmem:[%s4764 + $0xb0] sm:$0xff]
        %v4788 = vld [vmem:[%s4764 + $0xb8] sm:$0xff]
        %v4789 = vld [vmem:[%s4764 + $0xc0] sm:$0xff]
        %v4790 = vld [vmem:[%s4764 + $0xc8] sm:$0xff]
        %v4791 = vld [vmem:[%s4764 + $0xd0] sm:$0xff]
        %v4792 = vld [vmem:[%s4764 + $0xd8] sm:$0xff]
        %v4793 = vld [vmem:[%s4764 + $0xe0] sm:$0xff]
        %v4794 = vld [vmem:[%s4764 + $0xe8] sm:$0xff]
        %v4795 = vld [vmem:[%s4764 + $0xf0] sm:$0xff]
        %v4796 = vld [vmem:[%s4764 + $0xf8] sm:$0xff]
        %v4797 = vld [vmem:[%s4764 + $0x100] sm:$0xff]
        %v4798 = vld [vmem:[%s4764 + $0x108] sm:$0xff]
        %v4799 = vld [vmem:[%s4764 + $0x110] sm:$0xff]
        %v4800 = vld [vmem:[%s4764 + $0x118] sm:$0xff]
        %v4801 = vld [vmem:[%s4764 + $0x120] sm:$0xff]
        %v4802 = vld [vmem:[%s4764 + $0x128] sm:$0xff]
        %v4803 = vld [vmem:[%s4764 + $0x130] sm:$0xff]
        %v4804 = vld [vmem:[%s4764 + $0x138] sm:$0xff]
        %v4805 = vld [vmem:[%s4764 + $0x140] sm:$0xff]
        %v4806 = vld [vmem:[%s4764 + $0x148] sm:$0xff]
        %v4807 = vld [vmem:[%s4764 + $0x150] sm:$0xff]
        %v4808 = vld [vmem:[%s4764 + $0x158] sm:$0xff]
        %v4809 = vld [vmem:[%s4764 + $0x160] sm:$0xff]
        %v4810 = vld [vmem:[%s4764 + $0x168] sm:$0xff]
        %v4811 = vld [vmem:[%s4764 + $0x170] sm:$0xff]
        %v4812 = vld [vmem:[%s4764 + $0x178] sm:$0xff]
        %v4861 = vunpack.c.l.b16 %v4765
        %v4862 = vunpack.c.h.b16 %v4765
        %v4863 = vunpack.c.l.b16 %v4766
        %v4864 = vunpack.c.h.b16 %v4766
        %v4865 = vunpack.c.l.b16 %v4767
        %v4866 = vunpack.c.h.b16 %v4767
        %v4867 = vunpack.c.l.b16 %v4768
        %v4868 = vunpack.c.h.b16 %v4768
        %v4869 = vunpack.c.l.b16 %v4769
        %v4870 = vunpack.c.h.b16 %v4769
        %v4871 = vunpack.c.l.b16 %v4770
        %v4872 = vunpack.c.h.b16 %v4770
        %v4873 = vunpack.c.l.b16 %v4771
        %v4874 = vunpack.c.h.b16 %v4771
        %v4875 = vunpack.c.l.b16 %v4772
        %v4876 = vunpack.c.h.b16 %v4772
        %v4877 = vunpack.c.l.b16 %v4773
        %v4878 = vunpack.c.h.b16 %v4773
        %v4879 = vunpack.c.l.b16 %v4774
        %v4880 = vunpack.c.h.b16 %v4774
        %v4881 = vunpack.c.l.b16 %v4775
        %v4882 = vunpack.c.h.b16 %v4775
        %v4883 = vunpack.c.l.b16 %v4776
        %v4884 = vunpack.c.h.b16 %v4776
        %v4885 = vunpack.c.l.b16 %v4777
        %v4886 = vunpack.c.h.b16 %v4777
        %v4887 = vunpack.c.l.b16 %v4778
        %v4888 = vunpack.c.h.b16 %v4778
        %v4889 = vunpack.c.l.b16 %v4779
        %v4890 = vunpack.c.h.b16 %v4779
        %v4891 = vunpack.c.l.b16 %v4780
        %v4892 = vunpack.c.h.b16 %v4780
        %v4893 = vunpack.c.l.b16 %v4781
        %v4894 = vunpack.c.h.b16 %v4781
        %v4895 = vunpack.c.l.b16 %v4782
        %v4896 = vunpack.c.h.b16 %v4782
        %v4897 = vunpack.c.l.b16 %v4783
        %v4898 = vunpack.c.h.b16 %v4783
        %v4899 = vunpack.c.l.b16 %v4784
        %v4900 = vunpack.c.h.b16 %v4784
        %v4901 = vunpack.c.l.b16 %v4785
        %v4902 = vunpack.c.h.b16 %v4785
        %v4903 = vunpack.c.l.b16 %v4786
        %v4904 = vunpack.c.h.b16 %v4786
        %v4905 = vunpack.c.l.b16 %v4787
        %v4906 = vunpack.c.h.b16 %v4787
        %v4907 = vunpack.c.l.b16 %v4788
        %v4908 = vunpack.c.h.b16 %v4788
        %v4909 = vunpack.c.l.b16 %v4789
        %v4910 = vunpack.c.h.b16 %v4789
        %v4911 = vunpack.c.l.b16 %v4790
        %v4912 = vunpack.c.h.b16 %v4790
        %v4913 = vunpack.c.l.b16 %v4791
        %v4914 = vunpack.c.h.b16 %v4791
        %v4915 = vunpack.c.l.b16 %v4792
        %v4916 = vunpack.c.h.b16 %v4792
        %v4917 = vunpack.c.l.b16 %v4793
        %v4918 = vunpack.c.h.b16 %v4793
        %v4919 = vunpack.c.l.b16 %v4794
        %v4920 = vunpack.c.h.b16 %v4794
        %v4921 = vunpack.c.l.b16 %v4795
        %v4922 = vunpack.c.h.b16 %v4795
        %v4923 = vunpack.c.l.b16 %v4796
        %v4924 = vunpack.c.h.b16 %v4796
        %v4925 = vunpack.c.l.b16 %v4797
        %v4926 = vunpack.c.h.b16 %v4797
        %v4927 = vunpack.c.l.b16 %v4798
        %v4928 = vunpack.c.h.b16 %v4798
        %v4929 = vunpack.c.l.b16 %v4799
        %v4930 = vunpack.c.h.b16 %v4799
        %v4931 = vunpack.c.l.b16 %v4800
        %v4932 = vunpack.c.h.b16 %v4800
        %v4933 = vunpack.c.l.b16 %v4801
        %v4934 = vunpack.c.h.b16 %v4801
        %v4935 = vunpack.c.l.b16 %v4802
        %v4936 = vunpack.c.h.b16 %v4802
        %v4937 = vunpack.c.l.b16 %v4803
        %v4938 = vunpack.c.h.b16 %v4803
        %v4939 = vunpack.c.l.b16 %v4804
        %v4940 = vunpack.c.h.b16 %v4804
        %v4941 = vunpack.c.l.b16 %v4805
        %v4942 = vunpack.c.h.b16 %v4805
        %v4943 = vunpack.c.l.b16 %v4806
        %v4944 = vunpack.c.h.b16 %v4806
        %v4945 = vunpack.c.l.b16 %v4807
        %v4946 = vunpack.c.h.b16 %v4807
        %v4947 = vunpack.c.l.b16 %v4808
        %v4948 = vunpack.c.h.b16 %v4808
        %v4949 = vunpack.c.l.b16 %v4809
        %v4950 = vunpack.c.h.b16 %v4809
        %v4951 = vunpack.c.l.b16 %v4810
        %v4952 = vunpack.c.h.b16 %v4810
        %v4953 = vunpack.c.l.b16 %v4811
        %v4954 = vunpack.c.h.b16 %v4811
        %v4955 = vunpack.c.l.b16 %v4812
        %v4956 = vunpack.c.h.b16 %v4812
        %v4957 = vpack.c.b16 %v4863, %v4861
        %v4958 = vpack.c.b16 %v4864, %v4862
        %v4959 = vpack.c.b16 %v4867, %v4865
        %v4960 = vpack.c.b16 %v4868, %v4866
        %v4961 = vpack.c.b16 %v4871, %v4869
        %v4962 = vpack.c.b16 %v4872, %v4870
        %v4963 = vpack.c.b16 %v4875, %v4873
        %v4964 = vpack.c.b16 %v4876, %v4874
        %v4965 = vpack.c.b16 %v4879, %v4877
        %v4966 = vpack.c.b16 %v4880, %v4878
        %v4967 = vpack.c.b16 %v4883, %v4881
        %v4968 = vpack.c.b16 %v4884, %v4882
        %v4969 = vpack.c.b16 %v4887, %v4885
        %v4970 = vpack.c.b16 %v4888, %v4886
        %v4971 = vpack.c.b16 %v4891, %v4889
        %v4972 = vpack.c.b16 %v4892, %v4890
        %v4973 = vpack.c.b16 %v4895, %v4893
        %v4974 = vpack.c.b16 %v4896, %v4894
        %v4975 = vpack.c.b16 %v4899, %v4897
        %v4976 = vpack.c.b16 %v4900, %v4898
        %v4977 = vpack.c.b16 %v4903, %v4901
        %v4978 = vpack.c.b16 %v4904, %v4902
        %v4979 = vpack.c.b16 %v4907, %v4905
        %v4980 = vpack.c.b16 %v4908, %v4906
        %v4981 = vpack.c.b16 %v4911, %v4909
        %v4982 = vpack.c.b16 %v4912, %v4910
        %v4983 = vpack.c.b16 %v4915, %v4913
        %v4984 = vpack.c.b16 %v4916, %v4914
        %v4985 = vpack.c.b16 %v4919, %v4917
        %v4986 = vpack.c.b16 %v4920, %v4918
        %v4987 = vpack.c.b16 %v4923, %v4921
        %v4988 = vpack.c.b16 %v4924, %v4922
        %v4989 = vpack.c.b16 %v4927, %v4925
        %v4990 = vpack.c.b16 %v4928, %v4926
        %v4991 = vpack.c.b16 %v4931, %v4929
        %v4992 = vpack.c.b16 %v4932, %v4930
        %v4993 = vpack.c.b16 %v4935, %v4933
        %v4994 = vpack.c.b16 %v4936, %v4934
        %v4995 = vpack.c.b16 %v4939, %v4937
        %v4996 = vpack.c.b16 %v4940, %v4938
        %v4997 = vpack.c.b16 %v4943, %v4941
        %v4998 = vpack.c.b16 %v4944, %v4942
        %v4999 = vpack.c.b16 %v4947, %v4945
        %v5000 = vpack.c.b16 %v4948, %v4946
        %v5001 = vpack.c.b16 %v4951, %v4949
        %v5002 = vpack.c.b16 %v4952, %v4950
        %v5003 = vpack.c.b16 %v4955, %v4953
        %v5004 = vpack.c.b16 %v4956, %v4954
        %5053 = vmatprep.subr.bf16.mxu0 %v4958
        %5054 = vmatpush1.bf16.msra.mxu0 %v4957
        %5055 = vmatprep.subr.bf16.mxu0 %v4960
        %5056 = vmatpush1.bf16.msra.mxu0 %v4959
        %5057 = vmatprep.subr.bf16.mxu0 %v4962
        %5058 = vmatpush1.bf16.msra.mxu0 %v4961
        %5059 = vmatprep.subr.bf16.mxu0 %v4964
        %5060 = vmatpush1.bf16.msra.mxu0 %v4963
        %5061 = vmatprep.subr.bf16.mxu0 %v4966
        %5062 = vmatpush1.bf16.msra.mxu0 %v4965
        %5063 = vmatprep.subr.bf16.mxu0 %v4968
        %5064 = vmatpush1.bf16.msra.mxu0 %v4967
        %5065 = vmatprep.subr.bf16.mxu0 %v4970
        %5066 = vmatpush1.bf16.msra.mxu0 %v4969
        %5067 = vmatprep.subr.bf16.mxu0 %v4972
        %5068 = vmatpush1.bf16.msra.mxu0 %v4971
        %5069 = vmatprep.subr.bf16.mxu0 %v4974
        %5070 = vmatpush1.bf16.msra.mxu0 %v4973
        %5071 = vmatprep.subr.bf16.mxu0 %v4976
        %5072 = vmatpush1.bf16.msra.mxu0 %v4975
        %5073 = vmatprep.subr.bf16.mxu0 %v4978
        %5074 = vmatpush1.bf16.msra.mxu0 %v4977
        %5075 = vmatprep.subr.bf16.mxu0 %v4980
        %5076 = vmatpush1.bf16.msra.mxu0 %v4979
        %5077 = vmatprep.subr.bf16.mxu0 %v4982
        %5078 = vmatpush1.bf16.msra.mxu0 %v4981
        %5079 = vmatprep.subr.bf16.mxu0 %v4984
        %5080 = vmatpush1.bf16.msra.mxu0 %v4983
        %5081 = vmatprep.subr.bf16.mxu0 %v4986
        %5082 = vmatpush1.bf16.msra.mxu0 %v4985
        %5083 = vmatprep.subr.bf16.mxu0 %v4988
        %5084 = vmatpush1.bf16.msra.mxu0 %v4987
        %5085 = vmatprep.mubr.bf16.mxu0 %v4318
        %5086 = vmatmul.mubr.bf16.gmra.mrb[0].mxu0 %v4317
        %v5087 = vpop.f32.mrb[0].mxu0
        %v5088 = vadd.f32 0.0, %v5087
        %v5089 = vpop.f32.mrb[0].mxu0
        %v5090 = vadd.f32 0.0, %v5089
        %v5091 = vpop.f32.mrb[0].mxu0
        %v5092 = vadd.f32 0.0, %v5091
        %v5093 = vpop.f32.mrb[0].mxu0
        %v5094 = vadd.f32 0.0, %v5093
        %5095 = vmatprep.mubr.bf16.mxu0 %v4321
        %5096 = vmatmul.mubr.bf16.gmra.mrb[0].mxu0 %v4320
        %v5097 = vpop.f32.mrb[0].mxu0
        %v5098 = vadd.f32 0.0, %v5097
        %v5099 = vpop.f32.mrb[0].mxu0
        %v5100 = vadd.f32 0.0, %v5099
        %v5101 = vpop.f32.mrb[0].mxu0
        %v5102 = vadd.f32 0.0, %v5101
        %v5103 = vpop.f32.mrb[0].mxu0
        %v5104 = vadd.f32 0.0, %v5103
        %5105 = vmatprep.mubr.bf16.mxu0 %v4324
        %5106 = vmatmul.mubr.bf16.gmra.mrb[0].mxu0 %v4323
        %v5107 = vpop.f32.mrb[0].mxu0
        %v5108 = vadd.f32 0.0, %v5107
        %v5109 = vpop.f32.mrb[0].mxu0
        %v5110 = vadd.f32 0.0, %v5109
        %v5111 = vpop.f32.mrb[0].mxu0
        %v5112 = vadd.f32 0.0, %v5111
        %v5113 = vpop.f32.mrb[0].mxu0
        %v5114 = vadd.f32 0.0, %v5113
        %5115 = vmatprep.mubr.bf16.mxu0 %v4327
        %5116 = vmatmul.mubr.bf16.gmra.mrb[0].mxu0 %v4326
        %v5117 = vpop.f32.mrb[0].mxu0
        %v5118 = vadd.f32 0.0, %v5117
        %v5119 = vpop.f32.mrb[0].mxu0
        %v5120 = vadd.f32 0.0, %v5119
        %v5121 = vpop.f32.mrb[0].mxu0
        %v5122 = vadd.f32 0.0, %v5121
        %v5123 = vpop.f32.mrb[0].mxu0
        %v5124 = vadd.f32 0.0, %v5123
        %5125 = vdwg.mxu0
        %5126 = vmatprep.subr.bf16.mxu0 %v4990
        %5127 = vmatpush1.bf16.msra.mxu0 %v4989
        %5128 = vmatprep.subr.bf16.mxu0 %v4992
        %5129 = vmatpush1.bf16.msra.mxu0 %v4991
        %5130 = vmatprep.subr.bf16.mxu0 %v4994
        %5131 = vmatpush1.bf16.msra.mxu0 %v4993
        %5132 = vmatprep.subr.bf16.mxu0 %v4996
        %5133 = vmatpush1.bf16.msra.mxu0 %v4995
        %5134 = vmatprep.subr.bf16.mxu0 %v4998
        %5135 = vmatpush1.bf16.msra.mxu0 %v4997
        %5136 = vmatprep.subr.bf16.mxu0 %v5000
        %5137 = vmatpush1.bf16.msra.mxu0 %v4999
        %5138 = vmatprep.subr.bf16.mxu0 %v5002
        %5139 = vmatpush1.bf16.msra.mxu0 %v5001
        %5140 = vmatprep.subr.bf16.mxu0 %v5004
        %5141 = vmatpush1.bf16.msra.mxu0 %v5003
        %5142 = vmatprep.subr.bf16.mxu0 0
        %5143 = vmatpush1.bf16.msra.mxu0 0
        %5144 = vmatprep.subr.bf16.mxu0 0
        %5145 = vmatpush1.bf16.msra.mxu0 0
        %5146 = vmatprep.subr.bf16.mxu0 0
        %5147 = vmatpush1.bf16.msra.mxu0 0
        %5148 = vmatprep.subr.bf16.mxu0 0
        %5149 = vmatpush1.bf16.msra.mxu0 0
        %5150 = vmatprep.subr.bf16.mxu0 0
        %5151 = vmatpush1.bf16.msra.mxu0 0
        %5152 = vmatprep.subr.bf16.mxu0 0
        %5153 = vmatpush1.bf16.msra.mxu0 0
        %5154 = vmatprep.subr.bf16.mxu0 0
        %5155 = vmatpush1.bf16.msra.mxu0 0
        %5156 = vmatprep.subr.bf16.mxu0 0
        %5157 = vmatpush1.bf16.msra.mxu0 0
        %5158 = vmatprep.mubr.bf16.mxu0 0
        %5159 = vmatmul.mubr.bf16.gmra.mrb[0].mxu0 %v4319
        %v5160 = vpop.f32.mrb[0].mxu0
        %v5161 = vadd.f32 %v5088, %v5160
        %v5162 = vpop.f32.mrb[0].mxu0
        %v5163 = vadd.f32 %v5090, %v5162
        %v5164 = vpop.f32.mrb[0].mxu0
        %v5165 = vadd.f32 %v5092, %v5164
        %v5166 = vpop.f32.mrb[0].mxu0
        %v5167 = vadd.f32 %v5094, %v5166
        %5168 = vmatprep.mubr.bf16.mxu0 0
        %5169 = vmatmul.mubr.bf16.gmra.mrb[0].mxu0 %v4322
        %v5170 = vpop.f32.mrb[0].mxu0
        %v5171 = vadd.f32 %v5098, %v5170
        %v5172 = vpop.f32.mrb[0].mxu0
        %v5173 = vadd.f32 %v5100, %v5172
        %v5174 = vpop.f32.mrb[0].mxu0
        %v5175 = vadd.f32 %v5102, %v5174
        %v5176 = vpop.f32.mrb[0].mxu0
        %v5177 = vadd.f32 %v5104, %v5176
        %5178 = vmatprep.mubr.bf16.mxu0 0
        %5179 = vmatmul.mubr.bf16.gmra.mrb[0].mxu0 %v4325
        %v5180 = vpop.f32.mrb[0].mxu0
        %v5181 = vadd.f32 %v5108, %v5180
        %v5182 = vpop.f32.mrb[0].mxu0
        %v5183 = vadd.f32 %v5110, %v5182
        %v5184 = vpop.f32.mrb[0].mxu0
        %v5185 = vadd.f32 %v5112, %v5184
        %v5186 = vpop.f32.mrb[0].mxu0
        %v5187 = vadd.f32 %v5114, %v5186
        %5188 = vmatprep.mubr.bf16.mxu0 0
        %5189 = vmatmul.mubr.bf16.gmra.mrb[0].mxu0 %v4328
        %v5190 = vpop.f32.mrb[0].mxu0
        %v5191 = vadd.f32 %v5118, %v5190
        %v5192 = vpop.f32.mrb[0].mxu0
        %v5193 = vadd.f32 %v5120, %v5192
        %v5194 = vpop.f32.mrb[0].mxu0
        %v5195 = vadd.f32 %v5122, %v5194
        %v5196 = vpop.f32.mrb[0].mxu0
        %v5197 = vadd.f32 %v5124, %v5196
        %5198 = vdwg.mxu0
        %v5247 = vunpack.c.l.b16 %v4075
        %v5248 = vunpack.c.h.b16 %v4075
        %v5249 = vunpack.c.l.b16 %v4076
        %v5250 = vunpack.c.h.b16 %v4076
        %v5251 = vunpack.c.l.b16 %v4077
        %v5252 = vunpack.c.h.b16 %v4077
        %v5253 = vunpack.c.l.b16 %v4078
        %v5254 = vunpack.c.h.b16 %v4078
        %v5255 = vunpack.c.l.b16 %v4079
        %v5256 = vunpack.c.h.b16 %v4079
        %v5257 = vunpack.c.l.b16 %v4080
        %v5258 = vunpack.c.h.b16 %v4080
        %v5259 = vunpack.c.l.b16 %v4081
        %v5260 = vunpack.c.h.b16 %v4081
        %v5261 = vunpack.c.l.b16 %v4082
        %v5262 = vunpack.c.h.b16 %v4082
        %v5263 = vunpack.c.l.b16 %v4083
        %v5264 = vunpack.c.h.b16 %v4083
        %v5265 = vunpack.c.l.b16 %v4084
        %v5266 = vunpack.c.h.b16 %v4084
        %v5267 = vunpack.c.l.b16 %v4085
        %v5268 = vunpack.c.h.b16 %v4085
        %v5269 = vunpack.c.l.b16 %v4086
        %v5270 = vunpack.c.h.b16 %v4086
        %v5271 = vunpack.c.l.b16 %v4087
        %v5272 = vunpack.c.h.b16 %v4087
        %v5273 = vunpack.c.l.b16 %v4088
        %v5274 = vunpack.c.h.b16 %v4088
        %v5275 = vunpack.c.l.b16 %v4089
        %v5276 = vunpack.c.h.b16 %v4089
        %v5277 = vunpack.c.l.b16 %v4090
        %v5278 = vunpack.c.h.b16 %v4090
        %v5279 = vunpack.c.l.b16 %v4091
        %v5280 = vunpack.c.h.b16 %v4091
        %v5281 = vunpack.c.l.b16 %v4092
        %v5282 = vunpack.c.h.b16 %v4092
        %v5283 = vunpack.c.l.b16 %v4093
        %v5284 = vunpack.c.h.b16 %v4093
        %v5285 = vunpack.c.l.b16 %v4094
        %v5286 = vunpack.c.h.b16 %v4094
        %v5287 = vunpack.c.l.b16 %v4095
        %v5288 = vunpack.c.h.b16 %v4095
        %v5289 = vunpack.c.l.b16 %v4096
        %v5290 = vunpack.c.h.b16 %v4096
        %v5291 = vunpack.c.l.b16 %v4097
        %v5292 = vunpack.c.h.b16 %v4097
        %v5293 = vunpack.c.l.b16 %v4098
        %v5294 = vunpack.c.h.b16 %v4098
        %v5295 = vunpack.c.l.b16 %v4099
        %v5296 = vunpack.c.h.b16 %v4099
        %v5297 = vunpack.c.l.b16 %v4100
        %v5298 = vunpack.c.h.b16 %v4100
        %v5299 = vunpack.c.l.b16 %v4101
        %v5300 = vunpack.c.h.b16 %v4101
        %v5301 = vunpack.c.l.b16 %v4102
        %v5302 = vunpack.c.h.b16 %v4102
        %v5303 = vunpack.c.l.b16 %v4103
        %v5304 = vunpack.c.h.b16 %v4103
        %v5305 = vunpack.c.l.b16 %v4104
        %v5306 = vunpack.c.h.b16 %v4104
        %v5307 = vunpack.c.l.b16 %v4105
        %v5308 = vunpack.c.h.b16 %v4105
        %v5309 = vunpack.c.l.b16 %v4106
        %v5310 = vunpack.c.h.b16 %v4106
        %v5311 = vunpack.c.l.b16 %v4107
        %v5312 = vunpack.c.h.b16 %v4107
        %v5313 = vunpack.c.l.b16 %v4108
        %v5314 = vunpack.c.h.b16 %v4108
        %v5315 = vunpack.c.l.b16 %v4109
        %v5316 = vunpack.c.h.b16 %v4109
        %v5317 = vunpack.c.l.b16 %v4110
        %v5318 = vunpack.c.h.b16 %v4110
        %v5319 = vunpack.c.l.b16 %v4111
        %v5320 = vunpack.c.h.b16 %v4111
        %v5321 = vunpack.c.l.b16 %v4112
        %v5322 = vunpack.c.h.b16 %v4112
        %v5323 = vunpack.c.l.b16 %v4113
        %v5324 = vunpack.c.h.b16 %v4113
        %v5325 = vunpack.c.l.b16 %v4114
        %v5326 = vunpack.c.h.b16 %v4114
        %v5327 = vunpack.c.l.b16 %v4115
        %v5328 = vunpack.c.h.b16 %v4115
        %v5329 = vunpack.c.l.b16 %v4116
        %v5330 = vunpack.c.h.b16 %v4116
        %v5331 = vunpack.c.l.b16 %v4117
        %v5332 = vunpack.c.h.b16 %v4117
        %v5333 = vunpack.c.l.b16 %v4118
        %v5334 = vunpack.c.h.b16 %v4118
        %v5335 = vunpack.c.l.b16 %v4119
        %v5336 = vunpack.c.h.b16 %v4119
        %v5337 = vunpack.c.l.b16 %v4120
        %v5338 = vunpack.c.h.b16 %v4120
        %v5339 = vunpack.c.l.b16 %v4121
        %v5340 = vunpack.c.h.b16 %v4121
        %v5341 = vunpack.c.l.b16 %v4122
        %v5342 = vunpack.c.h.b16 %v4122
        %v5343 = vpack.c.b16 %v5249, %v5247
        %v5344 = vpack.c.b16 %v5250, %v5248
        %v5345 = vpack.c.b16 %v5253, %v5251
        %v5346 = vpack.c.b16 %v5254, %v5252
        %v5347 = vpack.c.b16 %v5257, %v5255
        %v5348 = vpack.c.b16 %v5258, %v5256
        %v5349 = vpack.c.b16 %v5261, %v5259
        %v5350 = vpack.c.b16 %v5262, %v5260
        %v5351 = vpack.c.b16 %v5265, %v5263
        %v5352 = vpack.c.b16 %v5266, %v5264
        %v5353 = vpack.c.b16 %v5269, %v5267
        %v5354 = vpack.c.b16 %v5270, %v5268
        %v5355 = vpack.c.b16 %v5273, %v5271
        %v5356 = vpack.c.b16 %v5274, %v5272
        %v5357 = vpack.c.b16 %v5277, %v5275
        %v5358 = vpack.c.b16 %v5278, %v5276
        %v5359 = vpack.c.b16 %v5281, %v5279
        %v5360 = vpack.c.b16 %v5282, %v5280
        %v5361 = vpack.c.b16 %v5285, %v5283
        %v5362 = vpack.c.b16 %v5286, %v5284
        %v5363 = vpack.c.b16 %v5289, %v5287
        %v5364 = vpack.c.b16 %v5290, %v5288
        %v5365 = vpack.c.b16 %v5293, %v5291
        %v5366 = vpack.c.b16 %v5294, %v5292
        %v5367 = vpack.c.b16 %v5297, %v5295
        %v5368 = vpack.c.b16 %v5298, %v5296
        %v5369 = vpack.c.b16 %v5301, %v5299
        %v5370 = vpack.c.b16 %v5302, %v5300
        %v5371 = vpack.c.b16 %v5305, %v5303
        %v5372 = vpack.c.b16 %v5306, %v5304
        %v5373 = vpack.c.b16 %v5309, %v5307
        %v5374 = vpack.c.b16 %v5310, %v5308
        %v5375 = vpack.c.b16 %v5313, %v5311
        %v5376 = vpack.c.b16 %v5314, %v5312
        %v5377 = vpack.c.b16 %v5317, %v5315
        %v5378 = vpack.c.b16 %v5318, %v5316
        %v5379 = vpack.c.b16 %v5321, %v5319
        %v5380 = vpack.c.b16 %v5322, %v5320
        %v5381 = vpack.c.b16 %v5325, %v5323
        %v5382 = vpack.c.b16 %v5326, %v5324
        %v5383 = vpack.c.b16 %v5329, %v5327
        %v5384 = vpack.c.b16 %v5330, %v5328
        %v5385 = vpack.c.b16 %v5333, %v5331
        %v5386 = vpack.c.b16 %v5334, %v5332
        %v5387 = vpack.c.b16 %v5337, %v5335
        %v5388 = vpack.c.b16 %v5338, %v5336
        %v5389 = vpack.c.b16 %v5341, %v5339
        %v5390 = vpack.c.b16 %v5342, %v5340
        %5439 = vmatprep.subr.bf16.mxu0 %v5344
        %5440 = vmatpush1.bf16.msra.mxu0 %v5343
        %5441 = vmatprep.subr.bf16.mxu0 %v5346
        %5442 = vmatpush1.bf16.msra.mxu0 %v5345
        %5443 = vmatprep.subr.bf16.mxu0 %v5348
        %5444 = vmatpush1.bf16.msra.mxu0 %v5347
        %5445 = vmatprep.subr.bf16.mxu0 %v5350
        %5446 = vmatpush1.bf16.msra.mxu0 %v5349
        %5447 = vmatprep.subr.bf16.mxu0 %v5352
        %5448 = vmatpush1.bf16.msra.mxu0 %v5351
        %5449 = vmatprep.subr.bf16.mxu0 %v5354
        %5450 = vmatpush1.bf16.msra.mxu0 %v5353
        %5451 = vmatprep.subr.bf16.mxu0 %v5356
        %5452 = vmatpush1.bf16.msra.mxu0 %v5355
        %5453 = vmatprep.subr.bf16.mxu0 %v5358
        %5454 = vmatpush1.bf16.msra.mxu0 %v5357
        %5455 = vmatprep.subr.bf16.mxu0 %v5360
        %5456 = vmatpush1.bf16.msra.mxu0 %v5359
        %5457 = vmatprep.subr.bf16.mxu0 %v5362
        %5458 = vmatpush1.bf16.msra.mxu0 %v5361
        %5459 = vmatprep.subr.bf16.mxu0 %v5364
        %5460 = vmatpush1.bf16.msra.mxu0 %v5363
        %5461 = vmatprep.subr.bf16.mxu0 %v5366
        %5462 = vmatpush1.bf16.msra.mxu0 %v5365
        %5463 = vmatprep.subr.bf16.mxu0 %v5368
        %5464 = vmatpush1.bf16.msra.mxu0 %v5367
        %5465 = vmatprep.subr.bf16.mxu0 %v5370
        %5466 = vmatpush1.bf16.msra.mxu0 %v5369
        %5467 = vmatprep.subr.bf16.mxu0 %v5372
        %5468 = vmatpush1.bf16.msra.mxu0 %v5371
        %5469 = vmatprep.subr.bf16.mxu0 %v5374
        %5470 = vmatpush1.bf16.msra.mxu0 %v5373
        %5471 = vmatprep.mubr.bf16.mxu0 %v4064
        %5472 = vmatmul.mubr.bf16.gmra.mrb[0].mxu0 %v4063
        %v5473 = vpop.f32.mrb[0].mxu0
        %v5474 = vadd.f32 %v4726, %v5473
        %v5475 = vpop.f32.mrb[0].mxu0
        %v5476 = vadd.f32 %v4728, %v5475
        %v5477 = vpop.f32.mrb[0].mxu0
        %v5478 = vadd.f32 %v4730, %v5477
        %v5479 = vpop.f32.mrb[0].mxu0
        %v5480 = vadd.f32 %v4732, %v5479
        %5481 = vmatprep.mubr.bf16.mxu0 %v4067
        %5482 = vmatmul.mubr.bf16.gmra.mrb[0].mxu0 %v4066
        %v5483 = vpop.f32.mrb[0].mxu0
        %v5484 = vadd.f32 %v4736, %v5483
        %v5485 = vpop.f32.mrb[0].mxu0
        %v5486 = vadd.f32 %v4738, %v5485
        %v5487 = vpop.f32.mrb[0].mxu0
        %v5488 = vadd.f32 %v4740, %v5487
        %v5489 = vpop.f32.mrb[0].mxu0
        %v5490 = vadd.f32 %v4742, %v5489
        %5491 = vmatprep.mubr.bf16.mxu0 %v4070
        %5492 = vmatmul.mubr.bf16.gmra.mrb[0].mxu0 %v4069
        %v5493 = vpop.f32.mrb[0].mxu0
        %v5494 = vadd.f32 %v4746, %v5493
        %v5495 = vpop.f32.mrb[0].mxu0
        %v5496 = vadd.f32 %v4748, %v5495
        %v5497 = vpop.f32.mrb[0].mxu0
        %v5498 = vadd.f32 %v4750, %v5497
        %v5499 = vpop.f32.mrb[0].mxu0
        %v5500 = vadd.f32 %v4752, %v5499
        %5501 = vmatprep.mubr.bf16.mxu0 %v4073
        %5502 = vmatmul.mubr.bf16.gmra.mrb[0].mxu0 %v4072
        %v5503 = vpop.f32.mrb[0].mxu0
        %v5504 = vadd.f32 %v4756, %v5503
        %v5505 = vpop.f32.mrb[0].mxu0
        %v5506 = vadd.f32 %v4758, %v5505
        %v5507 = vpop.f32.mrb[0].mxu0
        %v5508 = vadd.f32 %v4760, %v5507
        %v5509 = vpop.f32.mrb[0].mxu0
        %v5510 = vadd.f32 %v4762, %v5509
        %5511 = vdwg.mxu0
        %5512 = vmatprep.subr.bf16.mxu0 %v5376
        %5513 = vmatpush1.bf16.msra.mxu0 %v5375
        %5514 = vmatprep.subr.bf16.mxu0 %v5378
        %5515 = vmatpush1.bf16.msra.mxu0 %v5377
        %5516 = vmatprep.subr.bf16.mxu0 %v5380
        %5517 = vmatpush1.bf16.msra.mxu0 %v5379
        %5518 = vmatprep.subr.bf16.mxu0 %v5382
        %5519 = vmatpush1.bf16.msra.mxu0 %v5381
        %5520 = vmatprep.subr.bf16.mxu0 %v5384
        %5521 = vmatpush1.bf16.msra.mxu0 %v5383
        %5522 = vmatprep.subr.bf16.mxu0 %v5386
        %5523 = vmatpush1.bf16.msra.mxu0 %v5385
        %5524 = vmatprep.subr.bf16.mxu0 %v5388
        %5525 = vmatpush1.bf16.msra.mxu0 %v5387
        %5526 = vmatprep.subr.bf16.mxu0 %v5390
        %5527 = vmatpush1.bf16.msra.mxu0 %v5389
        %5528 = vmatprep.subr.bf16.mxu0 0
        %5529 = vmatpush1.bf16.msra.mxu0 0
        %5530 = vmatprep.subr.bf16.mxu0 0
        %5531 = vmatpush1.bf16.msra.mxu0 0
        %5532 = vmatprep.subr.bf16.mxu0 0
        %5533 = vmatpush1.bf16.msra.mxu0 0
        %5534 = vmatprep.subr.bf16.mxu0 0
        %5535 = vmatpush1.bf16.msra.mxu0 0
        %5536 = vmatprep.subr.bf16.mxu0 0
        %5537 = vmatpush1.bf16.msra.mxu0 0
        %5538 = vmatprep.subr.bf16.mxu0 0
        %5539 = vmatpush1.bf16.msra.mxu0 0
        %5540 = vmatprep.subr.bf16.mxu0 0
        %5541 = vmatpush1.bf16.msra.mxu0 0
        %5542 = vmatprep.subr.bf16.mxu0 0
        %5543 = vmatpush1.bf16.msra.mxu0 0
        %5544 = vmatprep.mubr.bf16.mxu0 0
        %5545 = vmatmul.mubr.bf16.gmra.mrb[0].mxu0 %v4065
        %v5546 = vpop.f32.mrb[0].mxu0
        %v5547 = vadd.f32 %v5474, %v5546
        %v5548 = vpop.f32.mrb[0].mxu0
        %v5549 = vadd.f32 %v5476, %v5548
        %v5550 = vpop.f32.mrb[0].mxu0
        %v5551 = vadd.f32 %v5478, %v5550
        %v5552 = vpop.f32.mrb[0].mxu0
        %v5553 = vadd.f32 %v5480, %v5552
        %5554 = vmatprep.mubr.bf16.mxu0 0
        %5555 = vmatmul.mubr.bf16.gmra.mrb[0].mxu0 %v4068
        %v5556 = vpop.f32.mrb[0].mxu0
        %v5557 = vadd.f32 %v5484, %v5556
        %v5558 = vpop.f32.mrb[0].mxu0
        %v5559 = vadd.f32 %v5486, %v5558
        %v5560 = vpop.f32.mrb[0].mxu0
        %v5561 = vadd.f32 %v5488, %v5560
        %v5562 = vpop.f32.mrb[0].mxu0
        %v5563 = vadd.f32 %v5490, %v5562
        %5564 = vmatprep.mubr.bf16.mxu0 0
        %5565 = vmatmul.mubr.bf16.gmra.mrb[0].mxu0 %v4071
        %v5566 = vpop.f32.mrb[0].mxu0
        %v5567 = vadd.f32 %v5494, %v5566
        %v5568 = vpop.f32.mrb[0].mxu0
        %v5569 = vadd.f32 %v5496, %v5568
        %v5570 = vpop.f32.mrb[0].mxu0
        %v5571 = vadd.f32 %v5498, %v5570
        %v5572 = vpop.f32.mrb[0].mxu0
        %v5573 = vadd.f32 %v5500, %v5572
        %5574 = vmatprep.mubr.bf16.mxu0 0
        %5575 = vmatmul.mubr.bf16.gmra.mrb[0].mxu0 %v4074
        %v5576 = vpop.f32.mrb[0].mxu0
        %v5577 = vadd.f32 %v5504, %v5576
        %v5578 = vpop.f32.mrb[0].mxu0
        %v5579 = vadd.f32 %v5506, %v5578
        %v5580 = vpop.f32.mrb[0].mxu0
        %v5581 = vadd.f32 %v5508, %v5580
        %v5582 = vpop.f32.mrb[0].mxu0
        %v5583 = vadd.f32 %v5510, %v5582
        %5584 = vdwg.mxu0
        %v5633 = vunpack.c.l.b16 %v4124
        %v5634 = vunpack.c.h.b16 %v4124
        %v5635 = vunpack.c.l.b16 %v4125
        %v5636 = vunpack.c.h.b16 %v4125
        %v5637 = vunpack.c.l.b16 %v4126
        %v5638 = vunpack.c.h.b16 %v4126
        %v5639 = vunpack.c.l.b16 %v4127
        %v5640 = vunpack.c.h.b16 %v4127
        %v5641 = vunpack.c.l.b16 %v4128
        %v5642 = vunpack.c.h.b16 %v4128
        %v5643 = vunpack.c.l.b16 %v4129
        %v5644 = vunpack.c.h.b16 %v4129
        %v5645 = vunpack.c.l.b16 %v4130
        %v5646 = vunpack.c.h.b16 %v4130
        %v5647 = vunpack.c.l.b16 %v4131
        %v5648 = vunpack.c.h.b16 %v4131
        %v5649 = vunpack.c.l.b16 %v4132
        %v5650 = vunpack.c.h.b16 %v4132
        %v5651 = vunpack.c.l.b16 %v4133
        %v5652 = vunpack.c.h.b16 %v4133
        %v5653 = vunpack.c.l.b16 %v4134
        %v5654 = vunpack.c.h.b16 %v4134
        %v5655 = vunpack.c.l.b16 %v4135
        %v5656 = vunpack.c.h.b16 %v4135
        %v5657 = vunpack.c.l.b16 %v4136
        %v5658 = vunpack.c.h.b16 %v4136
        %v5659 = vunpack.c.l.b16 %v4137
        %v5660 = vunpack.c.h.b16 %v4137
        %v5661 = vunpack.c.l.b16 %v4138
        %v5662 = vunpack.c.h.b16 %v4138
        %v5663 = vunpack.c.l.b16 %v4139
        %v5664 = vunpack.c.h.b16 %v4139
        %v5665 = vunpack.c.l.b16 %v4140
        %v5666 = vunpack.c.h.b16 %v4140
        %v5667 = vunpack.c.l.b16 %v4141
        %v5668 = vunpack.c.h.b16 %v4141
        %v5669 = vunpack.c.l.b16 %v4142
        %v5670 = vunpack.c.h.b16 %v4142
        %v5671 = vunpack.c.l.b16 %v4143
        %v5672 = vunpack.c.h.b16 %v4143
        %v5673 = vunpack.c.l.b16 %v4144
        %v5674 = vunpack.c.h.b16 %v4144
        %v5675 = vunpack.c.l.b16 %v4145
        %v5676 = vunpack.c.h.b16 %v4145
        %v5677 = vunpack.c.l.b16 %v4146
        %v5678 = vunpack.c.h.b16 %v4146
        %v5679 = vunpack.c.l.b16 %v4147
        %v5680 = vunpack.c.h.b16 %v4147
        %v5681 = vunpack.c.l.b16 %v4148
        %v5682 = vunpack.c.h.b16 %v4148
        %v5683 = vunpack.c.l.b16 %v4149
        %v5684 = vunpack.c.h.b16 %v4149
        %v5685 = vunpack.c.l.b16 %v4150
        %v5686 = vunpack.c.h.b16 %v4150
        %v5687 = vunpack.c.l.b16 %v4151
        %v5688 = vunpack.c.h.b16 %v4151
        %v5689 = vunpack.c.l.b16 %v4152
        %v5690 = vunpack.c.h.b16 %v4152
        %v5691 = vunpack.c.l.b16 %v4153
        %v5692 = vunpack.c.h.b16 %v4153
        %v5693 = vunpack.c.l.b16 %v4154
        %v5694 = vunpack.c.h.b16 %v4154
        %v5695 = vunpack.c.l.b16 %v4155
        %v5696 = vunpack.c.h.b16 %v4155
        %v5697 = vunpack.c.l.b16 %v4156
        %v5698 = vunpack.c.h.b16 %v4156
        %v5699 = vunpack.c.l.b16 %v4157
        %v5700 = vunpack.c.h.b16 %v4157
        %v5701 = vunpack.c.l.b16 %v4158
        %v5702 = vunpack.c.h.b16 %v4158
        %v5703 = vunpack.c.l.b16 %v4159
        %v5704 = vunpack.c.h.b16 %v4159
        %v5705 = vunpack.c.l.b16 %v4160
        %v5706 = vunpack.c.h.b16 %v4160
        %v5707 = vunpack.c.l.b16 %v4161
        %v5708 = vunpack.c.h.b16 %v4161
        %v5709 = vunpack.c.l.b16 %v4162
        %v5710 = vunpack.c.h.b16 %v4162
        %v5711 = vunpack.c.l.b16 %v4163
        %v5712 = vunpack.c.h.b16 %v4163
        %v5713 = vunpack.c.l.b16 %v4164
        %v5714 = vunpack.c.h.b16 %v4164
        %v5715 = vunpack.c.l.b16 %v4165
        %v5716 = vunpack.c.h.b16 %v4165
        %v5717 = vunpack.c.l.b16 %v4166
        %v5718 = vunpack.c.h.b16 %v4166
        %v5719 = vunpack.c.l.b16 %v4167
        %v5720 = vunpack.c.h.b16 %v4167
        %v5721 = vunpack.c.l.b16 %v4168
        %v5722 = vunpack.c.h.b16 %v4168
        %v5723 = vunpack.c.l.b16 %v4169
        %v5724 = vunpack.c.h.b16 %v4169
        %v5725 = vunpack.c.l.b16 %v4170
        %v5726 = vunpack.c.h.b16 %v4170
        %v5727 = vunpack.c.l.b16 %v4171
        %v5728 = vunpack.c.h.b16 %v4171
        %v5729 = vpack.c.b16 %v5635, %v5633
        %v5730 = vpack.c.b16 %v5636, %v5634
        %v5731 = vpack.c.b16 %v5639, %v5637
        %v5732 = vpack.c.b16 %v5640, %v5638
        %v5733 = vpack.c.b16 %v5643, %v5641
        %v5734 = vpack.c.b16 %v5644, %v5642
        %v5735 = vpack.c.b16 %v5647, %v5645
        %v5736 = vpack.c.b16 %v5648, %v5646
        %v5737 = vpack.c.b16 %v5651, %v5649
        %v5738 = vpack.c.b16 %v5652, %v5650
        %v5739 = vpack.c.b16 %v5655, %v5653
        %v5740 = vpack.c.b16 %v5656, %v5654
        %v5741 = vpack.c.b16 %v5659, %v5657
        %v5742 = vpack.c.b16 %v5660, %v5658
        %v5743 = vpack.c.b16 %v5663, %v5661
        %v5744 = vpack.c.b16 %v5664, %v5662
        %v5745 = vpack.c.b16 %v5667, %v5665
        %v5746 = vpack.c.b16 %v5668, %v5666
        %v5747 = vpack.c.b16 %v5671, %v5669
        %v5748 = vpack.c.b16 %v5672, %v5670
        %v5749 = vpack.c.b16 %v5675, %v5673
        %v5750 = vpack.c.b16 %v5676, %v5674
        %v5751 = vpack.c.b16 %v5679, %v5677
        %v5752 = vpack.c.b16 %v5680, %v5678
        %v5753 = vpack.c.b16 %v5683, %v5681
        %v5754 = vpack.c.b16 %v5684, %v5682
        %v5755 = vpack.c.b16 %v5687, %v5685
        %v5756 = vpack.c.b16 %v5688, %v5686
        %v5757 = vpack.c.b16 %v5691, %v5689
        %v5758 = vpack.c.b16 %v5692, %v5690
        %v5759 = vpack.c.b16 %v5695, %v5693
        %v5760 = vpack.c.b16 %v5696, %v5694
        %v5761 = vpack.c.b16 %v5699, %v5697
        %v5762 = vpack.c.b16 %v5700, %v5698
        %v5763 = vpack.c.b16 %v5703, %v5701
        %v5764 = vpack.c.b16 %v5704, %v5702
        %v5765 = vpack.c.b16 %v5707, %v5705
        %v5766 = vpack.c.b16 %v5708, %v5706
        %v5767 = vpack.c.b16 %v5711, %v5709
        %v5768 = vpack.c.b16 %v5712, %v5710
        %v5769 = vpack.c.b16 %v5715, %v5713
        %v5770 = vpack.c.b16 %v5716, %v5714
        %v5771 = vpack.c.b16 %v5719, %v5717
        %v5772 = vpack.c.b16 %v5720, %v5718
        %v5773 = vpack.c.b16 %v5723, %v5721
        %v5774 = vpack.c.b16 %v5724, %v5722
        %v5775 = vpack.c.b16 %v5727, %v5725
        %v5776 = vpack.c.b16 %v5728, %v5726
        %5825 = vmatprep.subr.bf16.mxu0 %v5730
        %5826 = vmatpush1.bf16.msra.mxu0 %v5729
        %5827 = vmatprep.subr.bf16.mxu0 %v5732
        %5828 = vmatpush1.bf16.msra.mxu0 %v5731
        %5829 = vmatprep.subr.bf16.mxu0 %v5734
        %5830 = vmatpush1.bf16.msra.mxu0 %v5733
        %5831 = vmatprep.subr.bf16.mxu0 %v5736
        %5832 = vmatpush1.bf16.msra.mxu0 %v5735
        %5833 = vmatprep.subr.bf16.mxu0 %v5738
        %5834 = vmatpush1.bf16.msra.mxu0 %v5737
        %5835 = vmatprep.subr.bf16.mxu0 %v5740
        %5836 = vmatpush1.bf16.msra.mxu0 %v5739
        %5837 = vmatprep.subr.bf16.mxu0 %v5742
        %5838 = vmatpush1.bf16.msra.mxu0 %v5741
        %5839 = vmatprep.subr.bf16.mxu0 %v5744
        %5840 = vmatpush1.bf16.msra.mxu0 %v5743
        %5841 = vmatprep.subr.bf16.mxu0 %v5746
        %5842 = vmatpush1.bf16.msra.mxu0 %v5745
        %5843 = vmatprep.subr.bf16.mxu0 %v5748
        %5844 = vmatpush1.bf16.msra.mxu0 %v5747
        %5845 = vmatprep.subr.bf16.mxu0 %v5750
        %5846 = vmatpush1.bf16.msra.mxu0 %v5749
        %5847 = vmatprep.subr.bf16.mxu0 %v5752
        %5848 = vmatpush1.bf16.msra.mxu0 %v5751
        %5849 = vmatprep.subr.bf16.mxu0 %v5754
        %5850 = vmatpush1.bf16.msra.mxu0 %v5753
        %5851 = vmatprep.subr.bf16.mxu0 %v5756
        %5852 = vmatpush1.bf16.msra.mxu0 %v5755
        %5853 = vmatprep.subr.bf16.mxu0 %v5758
        %5854 = vmatpush1.bf16.msra.mxu0 %v5757
        %5855 = vmatprep.subr.bf16.mxu0 %v5760
        %5856 = vmatpush1.bf16.msra.mxu0 %v5759
        %5857 = vmatprep.mubr.bf16.mxu0 %v4064
        %5858 = vmatmul.mubr.bf16.gmra.mrb[0].mxu0 %v4063
        %v5859 = vpop.f32.mrb[0].mxu0
        %v5860 = vadd.f32 %v5161, %v5859
        %v5861 = vpop.f32.mrb[0].mxu0
        %v5862 = vadd.f32 %v5163, %v5861
        %v5863 = vpop.f32.mrb[0].mxu0
        %v5864 = vadd.f32 %v5165, %v5863
        %v5865 = vpop.f32.mrb[0].mxu0
        %v5866 = vadd.f32 %v5167, %v5865
        %5867 = vmatprep.mubr.bf16.mxu0 %v4067
        %5868 = vmatmul.mubr.bf16.gmra.mrb[0].mxu0 %v4066
        %v5869 = vpop.f32.mrb[0].mxu0
        %v5870 = vadd.f32 %v5171, %v5869
        %v5871 = vpop.f32.mrb[0].mxu0
        %v5872 = vadd.f32 %v5173, %v5871
        %v5873 = vpop.f32.mrb[0].mxu0
        %v5874 = vadd.f32 %v5175, %v5873
        %v5875 = vpop.f32.mrb[0].mxu0
        %v5876 = vadd.f32 %v5177, %v5875
        %5877 = vmatprep.mubr.bf16.mxu0 %v4070
        %5878 = vmatmul.mubr.bf16.gmra.mrb[0].mxu0 %v4069
        %v5879 = vpop.f32.mrb[0].mxu0
        %v5880 = vadd.f32 %v5181, %v5879
        %v5881 = vpop.f32.mrb[0].mxu0
        %v5882 = vadd.f32 %v5183, %v5881
        %v5883 = vpop.f32.mrb[0].mxu0
        %v5884 = vadd.f32 %v5185, %v5883
        %v5885 = vpop.f32.mrb[0].mxu0
        %v5886 = vadd.f32 %v5187, %v5885
        %5887 = vmatprep.mubr.bf16.mxu0 %v4073
        %5888 = vmatmul.mubr.bf16.gmra.mrb[0].mxu0 %v4072
        %v5889 = vpop.f32.mrb[0].mxu0
        %v5890 = vadd.f32 %v5191, %v5889
        %v5891 = vpop.f32.mrb[0].mxu0
        %v5892 = vadd.f32 %v5193, %v5891
        %v5893 = vpop.f32.mrb[0].mxu0
        %v5894 = vadd.f32 %v5195, %v5893
        %v5895 = vpop.f32.mrb[0].mxu0
        %v5896 = vadd.f32 %v5197, %v5895
        %5897 = vdwg.mxu0
        %5898 = vmatprep.subr.bf16.mxu0 %v5762
        %5899 = vmatpush1.bf16.msra.mxu0 %v5761
        %5900 = vmatprep.subr.bf16.mxu0 %v5764
        %5901 = vmatpush1.bf16.msra.mxu0 %v5763
        %5902 = vmatprep.subr.bf16.mxu0 %v5766
        %5903 = vmatpush1.bf16.msra.mxu0 %v5765
        %5904 = vmatprep.subr.bf16.mxu0 %v5768
        %5905 = vmatpush1.bf16.msra.mxu0 %v5767
        %5906 = vmatprep.subr.bf16.mxu0 %v5770
        %5907 = vmatpush1.bf16.msra.mxu0 %v5769
        %5908 = vmatprep.subr.bf16.mxu0 %v5772
        %5909 = vmatpush1.bf16.msra.mxu0 %v5771
        %5910 = vmatprep.subr.bf16.mxu0 %v5774
        %5911 = vmatpush1.bf16.msra.mxu0 %v5773
        %5912 = vmatprep.subr.bf16.mxu0 %v5776
        %5913 = vmatpush1.bf16.msra.mxu0 %v5775
        %5914 = vmatprep.subr.bf16.mxu0 0
        %5915 = vmatpush1.bf16.msra.mxu0 0
        %5916 = vmatprep.subr.bf16.mxu0 0
        %5917 = vmatpush1.bf16.msra.mxu0 0
        %5918 = vmatprep.subr.bf16.mxu0 0
        %5919 = vmatpush1.bf16.msra.mxu0 0
        %5920 = vmatprep.subr.bf16.mxu0 0
        %5921 = vmatpush1.bf16.msra.mxu0 0
        %5922 = vmatprep.subr.bf16.mxu0 0
        %5923 = vmatpush1.bf16.msra.mxu0 0
        %5924 = vmatprep.subr.bf16.mxu0 0
        %5925 = vmatpush1.bf16.msra.mxu0 0
        %5926 = vmatprep.subr.bf16.mxu0 0
        %5927 = vmatpush1.bf16.msra.mxu0 0
        %5928 = vmatprep.subr.bf16.mxu0 0
        %5929 = vmatpush1.bf16.msra.mxu0 0
        %5930 = vmatprep.mubr.bf16.mxu0 0
        %5931 = vmatmul.mubr.bf16.gmra.mrb[0].mxu0 %v4065
        %v5932 = vpop.f32.mrb[0].mxu0
        %v5933 = vadd.f32 %v5860, %v5932
        %v5934 = vpop.f32.mrb[0].mxu0
        %v5935 = vadd.f32 %v5862, %v5934
        %v5936 = vpop.f32.mrb[0].mxu0
        %v5937 = vadd.f32 %v5864, %v5936
        %v5938 = vpop.f32.mrb[0].mxu0
        %v5939 = vadd.f32 %v5866, %v5938
        %5940 = vmatprep.mubr.bf16.mxu0 0
        %5941 = vmatmul.mubr.bf16.gmra.mrb[0].mxu0 %v4068
        %v5942 = vpop.f32.mrb[0].mxu0
        %v5943 = vadd.f32 %v5870, %v5942
        %v5944 = vpop.f32.mrb[0].mxu0
        %v5945 = vadd.f32 %v5872, %v5944
        %v5946 = vpop.f32.mrb[0].mxu0
        %v5947 = vadd.f32 %v5874, %v5946
        %v5948 = vpop.f32.mrb[0].mxu0
        %v5949 = vadd.f32 %v5876, %v5948
        %5950 = vmatprep.mubr.bf16.mxu0 0
        %5951 = vmatmul.mubr.bf16.gmra.mrb[0].mxu0 %v4071
        %v5952 = vpop.f32.mrb[0].mxu0
        %v5953 = vadd.f32 %v5880, %v5952
        %v5954 = vpop.f32.mrb[0].mxu0
        %v5955 = vadd.f32 %v5882, %v5954
        %v5956 = vpop.f32.mrb[0].mxu0
        %v5957 = vadd.f32 %v5884, %v5956
        %v5958 = vpop.f32.mrb[0].mxu0
        %v5959 = vadd.f32 %v5886, %v5958
        %5960 = vmatprep.mubr.bf16.mxu0 0
        %5961 = vmatmul.mubr.bf16.gmra.mrb[0].mxu0 %v4074
        %v5962 = vpop.f32.mrb[0].mxu0
        %v5963 = vadd.f32 %v5890, %v5962
        %v5964 = vpop.f32.mrb[0].mxu0
        %v5965 = vadd.f32 %v5892, %v5964
        %v5966 = vpop.f32.mrb[0].mxu0
        %v5967 = vadd.f32 %v5894, %v5966
        %v5968 = vpop.f32.mrb[0].mxu0
        %v5969 = vadd.f32 %v5896, %v5968
        %5970 = vdwg.mxu0
        %vm5971 = vcmask 1045504
        %v5972 = vrot.slane %v4015, 2
        %v5973 = vrot.slane %v4018, 2
        %v5974 = vsel %vm5971, %v5972, %v5973
        %v5975 = vrot.slane %v4016, 2
        %v5976 = vrot.slane %v4019, 2
        %v5977 = vsel %vm5971, %v5975, %v5976
        %v5978 = vrot.slane %v4017, 2
        %v5979 = vrot.slane %v4020, 2
        %v5980 = vsel %vm5971, %v5978, %v5979
        %v5981 = vrot.slane %v4021, 2
        %v5982 = vrot.slane %v4024, 2
        %v5983 = vsel %vm5971, %v5981, %v5982
        %v5984 = vrot.slane %v4022, 2
        %v5985 = vrot.slane %v4025, 2
        %v5986 = vsel %vm5971, %v5984, %v5985
        %v5987 = vrot.slane %v4023, 2
        %v5988 = vrot.slane %v4026, 2
        %v5989 = vsel %vm5971, %v5987, %v5988
        %v5990 = vrot.slane %v4027, 2
        %v5991 = vrot.slane %v4030, 2
        %v5992 = vsel %vm5971, %v5990, %v5991
        %v5993 = vrot.slane %v4028, 2
        %v5994 = vrot.slane %v4031, 2
        %v5995 = vsel %vm5971, %v5993, %v5994
        %v5996 = vrot.slane %v4029, 2
        %v5997 = vrot.slane %v4032, 2
        %v5998 = vsel %vm5971, %v5996, %v5997
        %v5999 = vrot.slane %v4033, 2
        %v6000 = vrot.slane %v4036, 2
        %v6001 = vsel %vm5971, %v5999, %v6000
        %v6002 = vrot.slane %v4034, 2
        %v6003 = vrot.slane %v4037, 2
        %v6004 = vsel %vm5971, %v6002, %v6003
        %v6005 = vrot.slane %v4035, 2
        %v6006 = vrot.slane %v4038, 2
        %v6007 = vsel %vm5971, %v6005, %v6006
        %v6008 = vrot.slane %v4039, 2
        %v6009 = vrot.slane %v4042, 2
        %v6010 = vsel %vm5971, %v6008, %v6009
        %v6011 = vrot.slane %v4040, 2
        %v6012 = vrot.slane %v4043, 2
        %v6013 = vsel %vm5971, %v6011, %v6012
        %v6014 = vrot.slane %v4041, 2
        %v6015 = vrot.slane %v4044, 2
        %v6016 = vsel %vm5971, %v6014, %v6015
        %v6017 = vrot.slane %v4045, 2
        %v6018 = vrot.slane %v4048, 2
        %v6019 = vsel %vm5971, %v6017, %v6018
        %v6020 = vrot.slane %v4046, 2
        %v6021 = vrot.slane %v4049, 2
        %v6022 = vsel %vm5971, %v6020, %v6021
        %v6023 = vrot.slane %v4047, 2
        %v6024 = vrot.slane %v4050, 2
        %v6025 = vsel %vm5971, %v6023, %v6024
        %v6026 = vrot.slane %v4051, 2
        %v6027 = vrot.slane %v4054, 2
        %v6028 = vsel %vm5971, %v6026, %v6027
        %v6029 = vrot.slane %v4052, 2
        %v6030 = vrot.slane %v4055, 2
        %v6031 = vsel %vm5971, %v6029, %v6030
        %v6032 = vrot.slane %v4053, 2
        %v6033 = vrot.slane %v4056, 2
        %v6034 = vsel %vm5971, %v6032, %v6033
        %v6035 = vrot.slane %v4057, 2
        %v6036 = vrot.slane %v4060, 2
        %v6037 = vsel %vm5971, %v6035, %v6036
        %v6038 = vrot.slane %v4058, 2
        %v6039 = vrot.slane %v4061, 2
        %v6040 = vsel %vm5971, %v6038, %v6039
        %v6041 = vrot.slane %v4059, 2
        %v6042 = vrot.slane %v4062, 2
        %v6043 = vsel %vm5971, %v6041, %v6042
        %v6068 = vpack.c.bf16 %v5983, %v5974
        %v6069 = vpack.c.bf16 %v5986, %v5977
        %v6070 = vpack.c.bf16 %v5989, %v5980
        %v6071 = vpack.c.bf16 %v6001, %v5992
        %v6072 = vpack.c.bf16 %v6004, %v5995
        %v6073 = vpack.c.bf16 %v6007, %v5998
        %v6074 = vpack.c.bf16 %v6019, %v6010
        %v6075 = vpack.c.bf16 %v6022, %v6013
        %v6076 = vpack.c.bf16 %v6025, %v6016
        %v6077 = vpack.c.bf16 %v6037, %v6028
        %v6078 = vpack.c.bf16 %v6040, %v6031
        %v6079 = vpack.c.bf16 %v6043, %v6034
        %s6080 = scalar_lea.vmem %s2, 1536
        %v6081 = vld [vmem:[%s6080] sm:$0xff]
        %v6082 = vld [vmem:[%s6080 + $0x8] sm:$0xff]
        %v6083 = vld [vmem:[%s6080 + $0x10] sm:$0xff]
        %v6084 = vld [vmem:[%s6080 + $0x18] sm:$0xff]
        %v6085 = vld [vmem:[%s6080 + $0x20] sm:$0xff]
        %v6086 = vld [vmem:[%s6080 + $0x28] sm:$0xff]
        %v6087 = vld [vmem:[%s6080 + $0x30] sm:$0xff]
        %v6088 = vld [vmem:[%s6080 + $0x38] sm:$0xff]
        %v6089 = vld [vmem:[%s6080 + $0x40] sm:$0xff]
        %v6090 = vld [vmem:[%s6080 + $0x48] sm:$0xff]
        %v6091 = vld [vmem:[%s6080 + $0x50] sm:$0xff]
        %v6092 = vld [vmem:[%s6080 + $0x58] sm:$0xff]
        %v6093 = vld [vmem:[%s6080 + $0x60] sm:$0xff]
        %v6094 = vld [vmem:[%s6080 + $0x68] sm:$0xff]
        %v6095 = vld [vmem:[%s6080 + $0x70] sm:$0xff]
        %v6096 = vld [vmem:[%s6080 + $0x78] sm:$0xff]
        %v6097 = vld [vmem:[%s6080 + $0x80] sm:$0xff]
        %v6098 = vld [vmem:[%s6080 + $0x88] sm:$0xff]
        %v6099 = vld [vmem:[%s6080 + $0x90] sm:$0xff]
        %v6100 = vld [vmem:[%s6080 + $0x98] sm:$0xff]
        %v6101 = vld [vmem:[%s6080 + $0xa0] sm:$0xff]
        %v6102 = vld [vmem:[%s6080 + $0xa8] sm:$0xff]
        %v6103 = vld [vmem:[%s6080 + $0xb0] sm:$0xff]
        %v6104 = vld [vmem:[%s6080 + $0xb8] sm:$0xff]
        %v6105 = vld [vmem:[%s6080 + $0xc0] sm:$0xff]
        %v6106 = vld [vmem:[%s6080 + $0xc8] sm:$0xff]
        %v6107 = vld [vmem:[%s6080 + $0xd0] sm:$0xff]
        %v6108 = vld [vmem:[%s6080 + $0xd8] sm:$0xff]
        %v6109 = vld [vmem:[%s6080 + $0xe0] sm:$0xff]
        %v6110 = vld [vmem:[%s6080 + $0xe8] sm:$0xff]
        %v6111 = vld [vmem:[%s6080 + $0xf0] sm:$0xff]
        %v6112 = vld [vmem:[%s6080 + $0xf8] sm:$0xff]
        %v6113 = vld [vmem:[%s6080 + $0x100] sm:$0xff]
        %v6114 = vld [vmem:[%s6080 + $0x108] sm:$0xff]
        %v6115 = vld [vmem:[%s6080 + $0x110] sm:$0xff]
        %v6116 = vld [vmem:[%s6080 + $0x118] sm:$0xff]
        %v6117 = vld [vmem:[%s6080 + $0x120] sm:$0xff]
        %v6118 = vld [vmem:[%s6080 + $0x128] sm:$0xff]
        %v6119 = vld [vmem:[%s6080 + $0x130] sm:$0xff]
        %v6120 = vld [vmem:[%s6080 + $0x138] sm:$0xff]
        %v6121 = vld [vmem:[%s6080 + $0x140] sm:$0xff]
        %v6122 = vld [vmem:[%s6080 + $0x148] sm:$0xff]
        %v6123 = vld [vmem:[%s6080 + $0x150] sm:$0xff]
        %v6124 = vld [vmem:[%s6080 + $0x158] sm:$0xff]
        %v6125 = vld [vmem:[%s6080 + $0x160] sm:$0xff]
        %v6126 = vld [vmem:[%s6080 + $0x168] sm:$0xff]
        %v6127 = vld [vmem:[%s6080 + $0x170] sm:$0xff]
        %v6128 = vld [vmem:[%s6080 + $0x178] sm:$0xff]
        %v6177 = vunpack.c.l.b16 %v6081
        %v6178 = vunpack.c.h.b16 %v6081
        %v6179 = vunpack.c.l.b16 %v6082
        %v6180 = vunpack.c.h.b16 %v6082
        %v6181 = vunpack.c.l.b16 %v6083
        %v6182 = vunpack.c.h.b16 %v6083
        %v6183 = vunpack.c.l.b16 %v6084
        %v6184 = vunpack.c.h.b16 %v6084
        %v6185 = vunpack.c.l.b16 %v6085
        %v6186 = vunpack.c.h.b16 %v6085
        %v6187 = vunpack.c.l.b16 %v6086
        %v6188 = vunpack.c.h.b16 %v6086
        %v6189 = vunpack.c.l.b16 %v6087
        %v6190 = vunpack.c.h.b16 %v6087
        %v6191 = vunpack.c.l.b16 %v6088
        %v6192 = vunpack.c.h.b16 %v6088
        %v6193 = vunpack.c.l.b16 %v6089
        %v6194 = vunpack.c.h.b16 %v6089
        %v6195 = vunpack.c.l.b16 %v6090
        %v6196 = vunpack.c.h.b16 %v6090
        %v6197 = vunpack.c.l.b16 %v6091
        %v6198 = vunpack.c.h.b16 %v6091
        %v6199 = vunpack.c.l.b16 %v6092
        %v6200 = vunpack.c.h.b16 %v6092
        %v6201 = vunpack.c.l.b16 %v6093
        %v6202 = vunpack.c.h.b16 %v6093
        %v6203 = vunpack.c.l.b16 %v6094
        %v6204 = vunpack.c.h.b16 %v6094
        %v6205 = vunpack.c.l.b16 %v6095
        %v6206 = vunpack.c.h.b16 %v6095
        %v6207 = vunpack.c.l.b16 %v6096
        %v6208 = vunpack.c.h.b16 %v6096
        %v6209 = vunpack.c.l.b16 %v6097
        %v6210 = vunpack.c.h.b16 %v6097
        %v6211 = vunpack.c.l.b16 %v6098
        %v6212 = vunpack.c.h.b16 %v6098
        %v6213 = vunpack.c.l.b16 %v6099
        %v6214 = vunpack.c.h.b16 %v6099
        %v6215 = vunpack.c.l.b16 %v6100
        %v6216 = vunpack.c.h.b16 %v6100
        %v6217 = vunpack.c.l.b16 %v6101
        %v6218 = vunpack.c.h.b16 %v6101
        %v6219 = vunpack.c.l.b16 %v6102
        %v6220 = vunpack.c.h.b16 %v6102
        %v6221 = vunpack.c.l.b16 %v6103
        %v6222 = vunpack.c.h.b16 %v6103
        %v6223 = vunpack.c.l.b16 %v6104
        %v6224 = vunpack.c.h.b16 %v6104
        %v6225 = vunpack.c.l.b16 %v6105
        %v6226 = vunpack.c.h.b16 %v6105
        %v6227 = vunpack.c.l.b16 %v6106
        %v6228 = vunpack.c.h.b16 %v6106
        %v6229 = vunpack.c.l.b16 %v6107
        %v6230 = vunpack.c.h.b16 %v6107
        %v6231 = vunpack.c.l.b16 %v6108
        %v6232 = vunpack.c.h.b16 %v6108
        %v6233 = vunpack.c.l.b16 %v6109
        %v6234 = vunpack.c.h.b16 %v6109
        %v6235 = vunpack.c.l.b16 %v6110
        %v6236 = vunpack.c.h.b16 %v6110
        %v6237 = vunpack.c.l.b16 %v6111
        %v6238 = vunpack.c.h.b16 %v6111
        %v6239 = vunpack.c.l.b16 %v6112
        %v6240 = vunpack.c.h.b16 %v6112
        %v6241 = vunpack.c.l.b16 %v6113
        %v6242 = vunpack.c.h.b16 %v6113
        %v6243 = vunpack.c.l.b16 %v6114
        %v6244 = vunpack.c.h.b16 %v6114
        %v6245 = vunpack.c.l.b16 %v6115
        %v6246 = vunpack.c.h.b16 %v6115
        %v6247 = vunpack.c.l.b16 %v6116
        %v6248 = vunpack.c.h.b16 %v6116
        %v6249 = vunpack.c.l.b16 %v6117
        %v6250 = vunpack.c.h.b16 %v6117
        %v6251 = vunpack.c.l.b16 %v6118
        %v6252 = vunpack.c.h.b16 %v6118
        %v6253 = vunpack.c.l.b16 %v6119
        %v6254 = vunpack.c.h.b16 %v6119
        %v6255 = vunpack.c.l.b16 %v6120
        %v6256 = vunpack.c.h.b16 %v6120
        %v6257 = vunpack.c.l.b16 %v6121
        %v6258 = vunpack.c.h.b16 %v6121
        %v6259 = vunpack.c.l.b16 %v6122
        %v6260 = vunpack.c.h.b16 %v6122
        %v6261 = vunpack.c.l.b16 %v6123
        %v6262 = vunpack.c.h.b16 %v6123
        %v6263 = vunpack.c.l.b16 %v6124
        %v6264 = vunpack.c.h.b16 %v6124
        %v6265 = vunpack.c.l.b16 %v6125
        %v6266 = vunpack.c.h.b16 %v6125
        %v6267 = vunpack.c.l.b16 %v6126
        %v6268 = vunpack.c.h.b16 %v6126
        %v6269 = vunpack.c.l.b16 %v6127
        %v6270 = vunpack.c.h.b16 %v6127
        %v6271 = vunpack.c.l.b16 %v6128
        %v6272 = vunpack.c.h.b16 %v6128
        %v6273 = vpack.c.b16 %v6179, %v6177
        %v6274 = vpack.c.b16 %v6180, %v6178
        %v6275 = vpack.c.b16 %v6183, %v6181
        %v6276 = vpack.c.b16 %v6184, %v6182
        %v6277 = vpack.c.b16 %v6187, %v6185
        %v6278 = vpack.c.b16 %v6188, %v6186
        %v6279 = vpack.c.b16 %v6191, %v6189
        %v6280 = vpack.c.b16 %v6192, %v6190
        %v6281 = vpack.c.b16 %v6195, %v6193
        %v6282 = vpack.c.b16 %v6196, %v6194
        %v6283 = vpack.c.b16 %v6199, %v6197
        %v6284 = vpack.c.b16 %v6200, %v6198
        %v6285 = vpack.c.b16 %v6203, %v6201
        %v6286 = vpack.c.b16 %v6204, %v6202
        %v6287 = vpack.c.b16 %v6207, %v6205
        %v6288 = vpack.c.b16 %v6208, %v6206
        %v6289 = vpack.c.b16 %v6211, %v6209
        %v6290 = vpack.c.b16 %v6212, %v6210
        %v6291 = vpack.c.b16 %v6215, %v6213
        %v6292 = vpack.c.b16 %v6216, %v6214
        %v6293 = vpack.c.b16 %v6219, %v6217
        %v6294 = vpack.c.b16 %v6220, %v6218
        %v6295 = vpack.c.b16 %v6223, %v6221
        %v6296 = vpack.c.b16 %v6224, %v6222
        %v6297 = vpack.c.b16 %v6227, %v6225
        %v6298 = vpack.c.b16 %v6228, %v6226
        %v6299 = vpack.c.b16 %v6231, %v6229
        %v6300 = vpack.c.b16 %v6232, %v6230
        %v6301 = vpack.c.b16 %v6235, %v6233
        %v6302 = vpack.c.b16 %v6236, %v6234
        %v6303 = vpack.c.b16 %v6239, %v6237
        %v6304 = vpack.c.b16 %v6240, %v6238
        %v6305 = vpack.c.b16 %v6243, %v6241
        %v6306 = vpack.c.b16 %v6244, %v6242
        %v6307 = vpack.c.b16 %v6247, %v6245
        %v6308 = vpack.c.b16 %v6248, %v6246
        %v6309 = vpack.c.b16 %v6251, %v6249
        %v6310 = vpack.c.b16 %v6252, %v6250
        %v6311 = vpack.c.b16 %v6255, %v6253
        %v6312 = vpack.c.b16 %v6256, %v6254
        %v6313 = vpack.c.b16 %v6259, %v6257
        %v6314 = vpack.c.b16 %v6260, %v6258
        %v6315 = vpack.c.b16 %v6263, %v6261
        %v6316 = vpack.c.b16 %v6264, %v6262
        %v6317 = vpack.c.b16 %v6267, %v6265
        %v6318 = vpack.c.b16 %v6268, %v6266
        %v6319 = vpack.c.b16 %v6271, %v6269
        %v6320 = vpack.c.b16 %v6272, %v6270
        %6369 = vmatprep.subr.bf16.mxu0 %v6274
        %6370 = vmatpush1.bf16.msra.mxu0 %v6273
        %6371 = vmatprep.subr.bf16.mxu0 %v6276
        %6372 = vmatpush1.bf16.msra.mxu0 %v6275
        %6373 = vmatprep.subr.bf16.mxu0 %v6278
        %6374 = vmatpush1.bf16.msra.mxu0 %v6277
        %6375 = vmatprep.subr.bf16.mxu0 %v6280
        %6376 = vmatpush1.bf16.msra.mxu0 %v6279
        %6377 = vmatprep.subr.bf16.mxu0 %v6282
        %6378 = vmatpush1.bf16.msra.mxu0 %v6281
        %6379 = vmatprep.subr.bf16.mxu0 %v6284
        %6380 = vmatpush1.bf16.msra.mxu0 %v6283
        %6381 = vmatprep.subr.bf16.mxu0 %v6286
        %6382 = vmatpush1.bf16.msra.mxu0 %v6285
        %6383 = vmatprep.subr.bf16.mxu0 %v6288
        %6384 = vmatpush1.bf16.msra.mxu0 %v6287
        %6385 = vmatprep.subr.bf16.mxu0 %v6290
        %6386 = vmatpush1.bf16.msra.mxu0 %v6289
        %6387 = vmatprep.subr.bf16.mxu0 %v6292
        %6388 = vmatpush1.bf16.msra.mxu0 %v6291
        %6389 = vmatprep.subr.bf16.mxu0 %v6294
        %6390 = vmatpush1.bf16.msra.mxu0 %v6293
        %6391 = vmatprep.subr.bf16.mxu0 %v6296
        %6392 = vmatpush1.bf16.msra.mxu0 %v6295
        %6393 = vmatprep.subr.bf16.mxu0 %v6298
        %6394 = vmatpush1.bf16.msra.mxu0 %v6297
        %6395 = vmatprep.subr.bf16.mxu0 %v6300
        %6396 = vmatpush1.bf16.msra.mxu0 %v6299
        %6397 = vmatprep.subr.bf16.mxu0 %v6302
        %6398 = vmatpush1.bf16.msra.mxu0 %v6301
        %6399 = vmatprep.subr.bf16.mxu0 %v6304
        %6400 = vmatpush1.bf16.msra.mxu0 %v6303
        %6401 = vmatprep.mubr.bf16.mxu0 %v6069
        %6402 = vmatmul.mubr.bf16.gmra.mrb[0].mxu0 %v6068
        %v6403 = vpop.f32.mrb[0].mxu0
        %v6404 = vadd.f32 0.0, %v6403
        %v6405 = vpop.f32.mrb[0].mxu0
        %v6406 = vadd.f32 0.0, %v6405
        %v6407 = vpop.f32.mrb[0].mxu0
        %v6408 = vadd.f32 0.0, %v6407
        %v6409 = vpop.f32.mrb[0].mxu0
        %v6410 = vadd.f32 0.0, %v6409
        %6411 = vmatprep.mubr.bf16.mxu0 %v6072
        %6412 = vmatmul.mubr.bf16.gmra.mrb[0].mxu0 %v6071
        %v6413 = vpop.f32.mrb[0].mxu0
        %v6414 = vadd.f32 0.0, %v6413
        %v6415 = vpop.f32.mrb[0].mxu0
        %v6416 = vadd.f32 0.0, %v6415
        %v6417 = vpop.f32.mrb[0].mxu0
        %v6418 = vadd.f32 0.0, %v6417
        %v6419 = vpop.f32.mrb[0].mxu0
        %v6420 = vadd.f32 0.0, %v6419
        %6421 = vmatprep.mubr.bf16.mxu0 %v6075
        %6422 = vmatmul.mubr.bf16.gmra.mrb[0].mxu0 %v6074
        %v6423 = vpop.f32.mrb[0].mxu0
        %v6424 = vadd.f32 0.0, %v6423
        %v6425 = vpop.f32.mrb[0].mxu0
        %v6426 = vadd.f32 0.0, %v6425
        %v6427 = vpop.f32.mrb[0].mxu0
        %v6428 = vadd.f32 0.0, %v6427
        %v6429 = vpop.f32.mrb[0].mxu0
        %v6430 = vadd.f32 0.0, %v6429
        %6431 = vmatprep.mubr.bf16.mxu0 %v6078
        %6432 = vmatmul.mubr.bf16.gmra.mrb[0].mxu0 %v6077
        %v6433 = vpop.f32.mrb[0].mxu0
        %v6434 = vadd.f32 0.0, %v6433
        %v6435 = vpop.f32.mrb[0].mxu0
        %v6436 = vadd.f32 0.0, %v6435
        %v6437 = vpop.f32.mrb[0].mxu0
        %v6438 = vadd.f32 0.0, %v6437
        %v6439 = vpop.f32.mrb[0].mxu0
        %v6440 = vadd.f32 0.0, %v6439
        %6441 = vdwg.mxu0
        %6442 = vmatprep.subr.bf16.mxu0 %v6306
        %6443 = vmatpush1.bf16.msra.mxu0 %v6305
        %6444 = vmatprep.subr.bf16.mxu0 %v6308
        %6445 = vmatpush1.bf16.msra.mxu0 %v6307
        %6446 = vmatprep.subr.bf16.mxu0 %v6310
        %6447 = vmatpush1.bf16.msra.mxu0 %v6309
        %6448 = vmatprep.subr.bf16.mxu0 %v6312
        %6449 = vmatpush1.bf16.msra.mxu0 %v6311
        %6450 = vmatprep.subr.bf16.mxu0 %v6314
        %6451 = vmatpush1.bf16.msra.mxu0 %v6313
        %6452 = vmatprep.subr.bf16.mxu0 %v6316
        %6453 = vmatpush1.bf16.msra.mxu0 %v6315
        %6454 = vmatprep.subr.bf16.mxu0 %v6318
        %6455 = vmatpush1.bf16.msra.mxu0 %v6317
        %6456 = vmatprep.subr.bf16.mxu0 %v6320
        %6457 = vmatpush1.bf16.msra.mxu0 %v6319
        %6458 = vmatprep.subr.bf16.mxu0 0
        %6459 = vmatpush1.bf16.msra.mxu0 0
        %6460 = vmatprep.subr.bf16.mxu0 0
        %6461 = vmatpush1.bf16.msra.mxu0 0
        %6462 = vmatprep.subr.bf16.mxu0 0
        %6463 = vmatpush1.bf16.msra.mxu0 0
        %6464 = vmatprep.subr.bf16.mxu0 0
        %6465 = vmatpush1.bf16.msra.mxu0 0
        %6466 = vmatprep.subr.bf16.mxu0 0
        %6467 = vmatpush1.bf16.msra.mxu0 0
        %6468 = vmatprep.subr.bf16.mxu0 0
        %6469 = vmatpush1.bf16.msra.mxu0 0
        %6470 = vmatprep.subr.bf16.mxu0 0
        %6471 = vmatpush1.bf16.msra.mxu0 0
        %6472 = vmatprep.subr.bf16.mxu0 0
        %6473 = vmatpush1.bf16.msra.mxu0 0
        %6474 = vmatprep.mubr.bf16.mxu0 0
        %6475 = vmatmul.mubr.bf16.gmra.mrb[0].mxu0 %v6070
        %v6476 = vpop.f32.mrb[0].mxu0
        %v6477 = vadd.f32 %v6404, %v6476
        %v6478 = vpop.f32.mrb[0].mxu0
        %v6479 = vadd.f32 %v6406, %v6478
        %v6480 = vpop.f32.mrb[0].mxu0
        %v6481 = vadd.f32 %v6408, %v6480
        %v6482 = vpop.f32.mrb[0].mxu0
        %v6483 = vadd.f32 %v6410, %v6482
        %6484 = vmatprep.mubr.bf16.mxu0 0
        %6485 = vmatmul.mubr.bf16.gmra.mrb[0].mxu0 %v6073
        %v6486 = vpop.f32.mrb[0].mxu0
        %v6487 = vadd.f32 %v6414, %v6486
        %v6488 = vpop.f32.mrb[0].mxu0
        %v6489 = vadd.f32 %v6416, %v6488
        %v6490 = vpop.f32.mrb[0].mxu0
        %v6491 = vadd.f32 %v6418, %v6490
        %v6492 = vpop.f32.mrb[0].mxu0
        %v6493 = vadd.f32 %v6420, %v6492
        %6494 = vmatprep.mubr.bf16.mxu0 0
        %6495 = vmatmul.mubr.bf16.gmra.mrb[0].mxu0 %v6076
        %v6496 = vpop.f32.mrb[0].mxu0
        %v6497 = vadd.f32 %v6424, %v6496
        %v6498 = vpop.f32.mrb[0].mxu0
        %v6499 = vadd.f32 %v6426, %v6498
        %v6500 = vpop.f32.mrb[0].mxu0
        %v6501 = vadd.f32 %v6428, %v6500
        %v6502 = vpop.f32.mrb[0].mxu0
        %v6503 = vadd.f32 %v6430, %v6502
        %6504 = vmatprep.mubr.bf16.mxu0 0
        %6505 = vmatmul.mubr.bf16.gmra.mrb[0].mxu0 %v6079
        %v6506 = vpop.f32.mrb[0].mxu0
        %v6507 = vadd.f32 %v6434, %v6506
        %v6508 = vpop.f32.mrb[0].mxu0
        %v6509 = vadd.f32 %v6436, %v6508
        %v6510 = vpop.f32.mrb[0].mxu0
        %v6511 = vadd.f32 %v6438, %v6510
        %v6512 = vpop.f32.mrb[0].mxu0
        %v6513 = vadd.f32 %v6440, %v6512
        %6514 = vdwg.mxu0
        %s6515 = scalar_lea.vmem %s2, 1920
        %v6516 = vld [vmem:[%s6515] sm:$0xff]
        %v6517 = vld [vmem:[%s6515 + $0x8] sm:$0xff]
        %v6518 = vld [vmem:[%s6515 + $0x10] sm:$0xff]
        %v6519 = vld [vmem:[%s6515 + $0x18] sm:$0xff]
        %v6520 = vld [vmem:[%s6515 + $0x20] sm:$0xff]
        %v6521 = vld [vmem:[%s6515 + $0x28] sm:$0xff]
        %v6522 = vld [vmem:[%s6515 + $0x30] sm:$0xff]
        %v6523 = vld [vmem:[%s6515 + $0x38] sm:$0xff]
        %v6524 = vld [vmem:[%s6515 + $0x40] sm:$0xff]
        %v6525 = vld [vmem:[%s6515 + $0x48] sm:$0xff]
        %v6526 = vld [vmem:[%s6515 + $0x50] sm:$0xff]
        %v6527 = vld [vmem:[%s6515 + $0x58] sm:$0xff]
        %v6528 = vld [vmem:[%s6515 + $0x60] sm:$0xff]
        %v6529 = vld [vmem:[%s6515 + $0x68] sm:$0xff]
        %v6530 = vld [vmem:[%s6515 + $0x70] sm:$0xff]
        %v6531 = vld [vmem:[%s6515 + $0x78] sm:$0xff]
        %v6532 = vld [vmem:[%s6515 + $0x80] sm:$0xff]
        %v6533 = vld [vmem:[%s6515 + $0x88] sm:$0xff]
        %v6534 = vld [vmem:[%s6515 + $0x90] sm:$0xff]
        %v6535 = vld [vmem:[%s6515 + $0x98] sm:$0xff]
        %v6536 = vld [vmem:[%s6515 + $0xa0] sm:$0xff]
        %v6537 = vld [vmem:[%s6515 + $0xa8] sm:$0xff]
        %v6538 = vld [vmem:[%s6515 + $0xb0] sm:$0xff]
        %v6539 = vld [vmem:[%s6515 + $0xb8] sm:$0xff]
        %v6540 = vld [vmem:[%s6515 + $0xc0] sm:$0xff]
        %v6541 = vld [vmem:[%s6515 + $0xc8] sm:$0xff]
        %v6542 = vld [vmem:[%s6515 + $0xd0] sm:$0xff]
        %v6543 = vld [vmem:[%s6515 + $0xd8] sm:$0xff]
        %v6544 = vld [vmem:[%s6515 + $0xe0] sm:$0xff]
        %v6545 = vld [vmem:[%s6515 + $0xe8] sm:$0xff]
        %v6546 = vld [vmem:[%s6515 + $0xf0] sm:$0xff]
        %v6547 = vld [vmem:[%s6515 + $0xf8] sm:$0xff]
        %v6548 = vld [vmem:[%s6515 + $0x100] sm:$0xff]
        %v6549 = vld [vmem:[%s6515 + $0x108] sm:$0xff]
        %v6550 = vld [vmem:[%s6515 + $0x110] sm:$0xff]
        %v6551 = vld [vmem:[%s6515 + $0x118] sm:$0xff]
        %v6552 = vld [vmem:[%s6515 + $0x120] sm:$0xff]
        %v6553 = vld [vmem:[%s6515 + $0x128] sm:$0xff]
        %v6554 = vld [vmem:[%s6515 + $0x130] sm:$0xff]
        %v6555 = vld [vmem:[%s6515 + $0x138] sm:$0xff]
        %v6556 = vld [vmem:[%s6515 + $0x140] sm:$0xff]
        %v6557 = vld [vmem:[%s6515 + $0x148] sm:$0xff]
        %v6558 = vld [vmem:[%s6515 + $0x150] sm:$0xff]
        %v6559 = vld [vmem:[%s6515 + $0x158] sm:$0xff]
        %v6560 = vld [vmem:[%s6515 + $0x160] sm:$0xff]
        %v6561 = vld [vmem:[%s6515 + $0x168] sm:$0xff]
        %v6562 = vld [vmem:[%s6515 + $0x170] sm:$0xff]
        %v6563 = vld [vmem:[%s6515 + $0x178] sm:$0xff]
        %v6612 = vunpack.c.l.b16 %v6516
        %v6613 = vunpack.c.h.b16 %v6516
        %v6614 = vunpack.c.l.b16 %v6517
        %v6615 = vunpack.c.h.b16 %v6517
        %v6616 = vunpack.c.l.b16 %v6518
        %v6617 = vunpack.c.h.b16 %v6518
        %v6618 = vunpack.c.l.b16 %v6519
        %v6619 = vunpack.c.h.b16 %v6519
        %v6620 = vunpack.c.l.b16 %v6520
        %v6621 = vunpack.c.h.b16 %v6520
        %v6622 = vunpack.c.l.b16 %v6521
        %v6623 = vunpack.c.h.b16 %v6521
        %v6624 = vunpack.c.l.b16 %v6522
        %v6625 = vunpack.c.h.b16 %v6522
        %v6626 = vunpack.c.l.b16 %v6523
        %v6627 = vunpack.c.h.b16 %v6523
        %v6628 = vunpack.c.l.b16 %v6524
        %v6629 = vunpack.c.h.b16 %v6524
        %v6630 = vunpack.c.l.b16 %v6525
        %v6631 = vunpack.c.h.b16 %v6525
        %v6632 = vunpack.c.l.b16 %v6526
        %v6633 = vunpack.c.h.b16 %v6526
        %v6634 = vunpack.c.l.b16 %v6527
        %v6635 = vunpack.c.h.b16 %v6527
        %v6636 = vunpack.c.l.b16 %v6528
        %v6637 = vunpack.c.h.b16 %v6528
        %v6638 = vunpack.c.l.b16 %v6529
        %v6639 = vunpack.c.h.b16 %v6529
        %v6640 = vunpack.c.l.b16 %v6530
        %v6641 = vunpack.c.h.b16 %v6530
        %v6642 = vunpack.c.l.b16 %v6531
        %v6643 = vunpack.c.h.b16 %v6531
        %v6644 = vunpack.c.l.b16 %v6532
        %v6645 = vunpack.c.h.b16 %v6532
        %v6646 = vunpack.c.l.b16 %v6533
        %v6647 = vunpack.c.h.b16 %v6533
        %v6648 = vunpack.c.l.b16 %v6534
        %v6649 = vunpack.c.h.b16 %v6534
        %v6650 = vunpack.c.l.b16 %v6535
        %v6651 = vunpack.c.h.b16 %v6535
        %v6652 = vunpack.c.l.b16 %v6536
        %v6653 = vunpack.c.h.b16 %v6536
        %v6654 = vunpack.c.l.b16 %v6537
        %v6655 = vunpack.c.h.b16 %v6537
        %v6656 = vunpack.c.l.b16 %v6538
        %v6657 = vunpack.c.h.b16 %v6538
        %v6658 = vunpack.c.l.b16 %v6539
        %v6659 = vunpack.c.h.b16 %v6539
        %v6660 = vunpack.c.l.b16 %v6540
        %v6661 = vunpack.c.h.b16 %v6540
        %v6662 = vunpack.c.l.b16 %v6541
        %v6663 = vunpack.c.h.b16 %v6541
        %v6664 = vunpack.c.l.b16 %v6542
        %v6665 = vunpack.c.h.b16 %v6542
        %v6666 = vunpack.c.l.b16 %v6543
        %v6667 = vunpack.c.h.b16 %v6543
        %v6668 = vunpack.c.l.b16 %v6544
        %v6669 = vunpack.c.h.b16 %v6544
        %v6670 = vunpack.c.l.b16 %v6545
        %v6671 = vunpack.c.h.b16 %v6545
        %v6672 = vunpack.c.l.b16 %v6546
        %v6673 = vunpack.c.h.b16 %v6546
        %v6674 = vunpack.c.l.b16 %v6547
        %v6675 = vunpack.c.h.b16 %v6547
        %v6676 = vunpack.c.l.b16 %v6548
        %v6677 = vunpack.c.h.b16 %v6548
        %v6678 = vunpack.c.l.b16 %v6549
        %v6679 = vunpack.c.h.b16 %v6549
        %v6680 = vunpack.c.l.b16 %v6550
        %v6681 = vunpack.c.h.b16 %v6550
        %v6682 = vunpack.c.l.b16 %v6551
        %v6683 = vunpack.c.h.b16 %v6551
        %v6684 = vunpack.c.l.b16 %v6552
        %v6685 = vunpack.c.h.b16 %v6552
        %v6686 = vunpack.c.l.b16 %v6553
        %v6687 = vunpack.c.h.b16 %v6553
        %v6688 = vunpack.c.l.b16 %v6554
        %v6689 = vunpack.c.h.b16 %v6554
        %v6690 = vunpack.c.l.b16 %v6555
        %v6691 = vunpack.c.h.b16 %v6555
        %v6692 = vunpack.c.l.b16 %v6556
        %v6693 = vunpack.c.h.b16 %v6556
        %v6694 = vunpack.c.l.b16 %v6557
        %v6695 = vunpack.c.h.b16 %v6557
        %v6696 = vunpack.c.l.b16 %v6558
        %v6697 = vunpack.c.h.b16 %v6558
        %v6698 = vunpack.c.l.b16 %v6559
        %v6699 = vunpack.c.h.b16 %v6559
        %v6700 = vunpack.c.l.b16 %v6560
        %v6701 = vunpack.c.h.b16 %v6560
        %v6702 = vunpack.c.l.b16 %v6561
        %v6703 = vunpack.c.h.b16 %v6561
        %v6704 = vunpack.c.l.b16 %v6562
        %v6705 = vunpack.c.h.b16 %v6562
        %v6706 = vunpack.c.l.b16 %v6563
        %v6707 = vunpack.c.h.b16 %v6563
        %v6708 = vpack.c.b16 %v6614, %v6612
        %v6709 = vpack.c.b16 %v6615, %v6613
        %v6710 = vpack.c.b16 %v6618, %v6616
        %v6711 = vpack.c.b16 %v6619, %v6617
        %v6712 = vpack.c.b16 %v6622, %v6620
        %v6713 = vpack.c.b16 %v6623, %v6621
        %v6714 = vpack.c.b16 %v6626, %v6624
        %v6715 = vpack.c.b16 %v6627, %v6625
        %v6716 = vpack.c.b16 %v6630, %v6628
        %v6717 = vpack.c.b16 %v6631, %v6629
        %v6718 = vpack.c.b16 %v6634, %v6632
        %v6719 = vpack.c.b16 %v6635, %v6633
        %v6720 = vpack.c.b16 %v6638, %v6636
        %v6721 = vpack.c.b16 %v6639, %v6637
        %v6722 = vpack.c.b16 %v6642, %v6640
        %v6723 = vpack.c.b16 %v6643, %v6641
        %v6724 = vpack.c.b16 %v6646, %v6644
        %v6725 = vpack.c.b16 %v6647, %v6645
        %v6726 = vpack.c.b16 %v6650, %v6648
        %v6727 = vpack.c.b16 %v6651, %v6649
        %v6728 = vpack.c.b16 %v6654, %v6652
        %v6729 = vpack.c.b16 %v6655, %v6653
        %v6730 = vpack.c.b16 %v6658, %v6656
        %v6731 = vpack.c.b16 %v6659, %v6657
        %v6732 = vpack.c.b16 %v6662, %v6660
        %v6733 = vpack.c.b16 %v6663, %v6661
        %v6734 = vpack.c.b16 %v6666, %v6664
        %v6735 = vpack.c.b16 %v6667, %v6665
        %v6736 = vpack.c.b16 %v6670, %v6668
        %v6737 = vpack.c.b16 %v6671, %v6669
        %v6738 = vpack.c.b16 %v6674, %v6672
        %v6739 = vpack.c.b16 %v6675, %v6673
        %v6740 = vpack.c.b16 %v6678, %v6676
        %v6741 = vpack.c.b16 %v6679, %v6677
        %v6742 = vpack.c.b16 %v6682, %v6680
        %v6743 = vpack.c.b16 %v6683, %v6681
        %v6744 = vpack.c.b16 %v6686, %v6684
        %v6745 = vpack.c.b16 %v6687, %v6685
        %v6746 = vpack.c.b16 %v6690, %v6688
        %v6747 = vpack.c.b16 %v6691, %v6689
        %v6748 = vpack.c.b16 %v6694, %v6692
        %v6749 = vpack.c.b16 %v6695, %v6693
        %v6750 = vpack.c.b16 %v6698, %v6696
        %v6751 = vpack.c.b16 %v6699, %v6697
        %v6752 = vpack.c.b16 %v6702, %v6700
        %v6753 = vpack.c.b16 %v6703, %v6701
        %v6754 = vpack.c.b16 %v6706, %v6704
        %v6755 = vpack.c.b16 %v6707, %v6705
        %6804 = vmatprep.subr.bf16.mxu0 %v6709
        %6805 = vmatpush1.bf16.msra.mxu0 %v6708
        %6806 = vmatprep.subr.bf16.mxu0 %v6711
        %6807 = vmatpush1.bf16.msra.mxu0 %v6710
        %6808 = vmatprep.subr.bf16.mxu0 %v6713
        %6809 = vmatpush1.bf16.msra.mxu0 %v6712
        %6810 = vmatprep.subr.bf16.mxu0 %v6715
        %6811 = vmatpush1.bf16.msra.mxu0 %v6714
        %6812 = vmatprep.subr.bf16.mxu0 %v6717
        %6813 = vmatpush1.bf16.msra.mxu0 %v6716
        %6814 = vmatprep.subr.bf16.mxu0 %v6719
        %6815 = vmatpush1.bf16.msra.mxu0 %v6718
        %6816 = vmatprep.subr.bf16.mxu0 %v6721
        %6817 = vmatpush1.bf16.msra.mxu0 %v6720
        %6818 = vmatprep.subr.bf16.mxu0 %v6723
        %6819 = vmatpush1.bf16.msra.mxu0 %v6722
        %6820 = vmatprep.subr.bf16.mxu0 %v6725
        %6821 = vmatpush1.bf16.msra.mxu0 %v6724
        %6822 = vmatprep.subr.bf16.mxu0 %v6727
        %6823 = vmatpush1.bf16.msra.mxu0 %v6726
        %6824 = vmatprep.subr.bf16.mxu0 %v6729
        %6825 = vmatpush1.bf16.msra.mxu0 %v6728
        %6826 = vmatprep.subr.bf16.mxu0 %v6731
        %6827 = vmatpush1.bf16.msra.mxu0 %v6730
        %6828 = vmatprep.subr.bf16.mxu0 %v6733
        %6829 = vmatpush1.bf16.msra.mxu0 %v6732
        %6830 = vmatprep.subr.bf16.mxu0 %v6735
        %6831 = vmatpush1.bf16.msra.mxu0 %v6734
        %6832 = vmatprep.subr.bf16.mxu0 %v6737
        %6833 = vmatpush1.bf16.msra.mxu0 %v6736
        %6834 = vmatprep.subr.bf16.mxu0 %v6739
        %6835 = vmatpush1.bf16.msra.mxu0 %v6738
        %6836 = vmatprep.mubr.bf16.mxu0 %v6069
        %6837 = vmatmul.mubr.bf16.gmra.mrb[0].mxu0 %v6068
        %v6838 = vpop.f32.mrb[0].mxu0
        %v6839 = vadd.f32 0.0, %v6838
        %v6840 = vpop.f32.mrb[0].mxu0
        %v6841 = vadd.f32 0.0, %v6840
        %v6842 = vpop.f32.mrb[0].mxu0
        %v6843 = vadd.f32 0.0, %v6842
        %v6844 = vpop.f32.mrb[0].mxu0
        %v6845 = vadd.f32 0.0, %v6844
        %6846 = vmatprep.mubr.bf16.mxu0 %v6072
        %6847 = vmatmul.mubr.bf16.gmra.mrb[0].mxu0 %v6071
        %v6848 = vpop.f32.mrb[0].mxu0
        %v6849 = vadd.f32 0.0, %v6848
        %v6850 = vpop.f32.mrb[0].mxu0
        %v6851 = vadd.f32 0.0, %v6850
        %v6852 = vpop.f32.mrb[0].mxu0
        %v6853 = vadd.f32 0.0, %v6852
        %v6854 = vpop.f32.mrb[0].mxu0
        %v6855 = vadd.f32 0.0, %v6854
        %6856 = vmatprep.mubr.bf16.mxu0 %v6075
        %6857 = vmatmul.mubr.bf16.gmra.mrb[0].mxu0 %v6074
        %v6858 = vpop.f32.mrb[0].mxu0
        %v6859 = vadd.f32 0.0, %v6858
        %v6860 = vpop.f32.mrb[0].mxu0
        %v6861 = vadd.f32 0.0, %v6860
        %v6862 = vpop.f32.mrb[0].mxu0
        %v6863 = vadd.f32 0.0, %v6862
        %v6864 = vpop.f32.mrb[0].mxu0
        %v6865 = vadd.f32 0.0, %v6864
        %6866 = vmatprep.mubr.bf16.mxu0 %v6078
        %6867 = vmatmul.mubr.bf16.gmra.mrb[0].mxu0 %v6077
        %v6868 = vpop.f32.mrb[0].mxu0
        %v6869 = vadd.f32 0.0, %v6868
        %v6870 = vpop.f32.mrb[0].mxu0
        %v6871 = vadd.f32 0.0, %v6870
        %v6872 = vpop.f32.mrb[0].mxu0
        %v6873 = vadd.f32 0.0, %v6872
        %v6874 = vpop.f32.mrb[0].mxu0
        %v6875 = vadd.f32 0.0, %v6874
        %6876 = vdwg.mxu0
        %6877 = vmatprep.subr.bf16.mxu0 %v6741
        %6878 = vmatpush1.bf16.msra.mxu0 %v6740
        %6879 = vmatprep.subr.bf16.mxu0 %v6743
        %6880 = vmatpush1.bf16.msra.mxu0 %v6742
        %6881 = vmatprep.subr.bf16.mxu0 %v6745
        %6882 = vmatpush1.bf16.msra.mxu0 %v6744
        %6883 = vmatprep.subr.bf16.mxu0 %v6747
        %6884 = vmatpush1.bf16.msra.mxu0 %v6746
        %6885 = vmatprep.subr.bf16.mxu0 %v6749
        %6886 = vmatpush1.bf16.msra.mxu0 %v6748
        %6887 = vmatprep.subr.bf16.mxu0 %v6751
        %6888 = vmatpush1.bf16.msra.mxu0 %v6750
        %6889 = vmatprep.subr.bf16.mxu0 %v6753
        %6890 = vmatpush1.bf16.msra.mxu0 %v6752
        %6891 = vmatprep.subr.bf16.mxu0 %v6755
        %6892 = vmatpush1.bf16.msra.mxu0 %v6754
        %6893 = vmatprep.subr.bf16.mxu0 0
        %6894 = vmatpush1.bf16.msra.mxu0 0
        %6895 = vmatprep.subr.bf16.mxu0 0
        %6896 = vmatpush1.bf16.msra.mxu0 0
        %6897 = vmatprep.subr.bf16.mxu0 0
        %6898 = vmatpush1.bf16.msra.mxu0 0
        %6899 = vmatprep.subr.bf16.mxu0 0
        %6900 = vmatpush1.bf16.msra.mxu0 0
        %6901 = vmatprep.subr.bf16.mxu0 0
        %6902 = vmatpush1.bf16.msra.mxu0 0
        %6903 = vmatprep.subr.bf16.mxu0 0
        %6904 = vmatpush1.bf16.msra.mxu0 0
        %6905 = vmatprep.subr.bf16.mxu0 0
        %6906 = vmatpush1.bf16.msra.mxu0 0
        %6907 = vmatprep.subr.bf16.mxu0 0
        %6908 = vmatpush1.bf16.msra.mxu0 0
        %6909 = vmatprep.mubr.bf16.mxu0 0
        %6910 = vmatmul.mubr.bf16.gmra.mrb[0].mxu0 %v6070
        %v6911 = vpop.f32.mrb[0].mxu0
        %v6912 = vadd.f32 %v6839, %v6911
        %v6913 = vpop.f32.mrb[0].mxu0
        %v6914 = vadd.f32 %v6841, %v6913
        %v6915 = vpop.f32.mrb[0].mxu0
        %v6916 = vadd.f32 %v6843, %v6915
        %v6917 = vpop.f32.mrb[0].mxu0
        %v6918 = vadd.f32 %v6845, %v6917
        %6919 = vmatprep.mubr.bf16.mxu0 0
        %6920 = vmatmul.mubr.bf16.gmra.mrb[0].mxu0 %v6073
        %v6921 = vpop.f32.mrb[0].mxu0
        %v6922 = vadd.f32 %v6849, %v6921
        %v6923 = vpop.f32.mrb[0].mxu0
        %v6924 = vadd.f32 %v6851, %v6923
        %v6925 = vpop.f32.mrb[0].mxu0
        %v6926 = vadd.f32 %v6853, %v6925
        %v6927 = vpop.f32.mrb[0].mxu0
        %v6928 = vadd.f32 %v6855, %v6927
        %6929 = vmatprep.mubr.bf16.mxu0 0
        %6930 = vmatmul.mubr.bf16.gmra.mrb[0].mxu0 %v6076
        %v6931 = vpop.f32.mrb[0].mxu0
        %v6932 = vadd.f32 %v6859, %v6931
        %v6933 = vpop.f32.mrb[0].mxu0
        %v6934 = vadd.f32 %v6861, %v6933
        %v6935 = vpop.f32.mrb[0].mxu0
        %v6936 = vadd.f32 %v6863, %v6935
        %v6937 = vpop.f32.mrb[0].mxu0
        %v6938 = vadd.f32 %v6865, %v6937
        %6939 = vmatprep.mubr.bf16.mxu0 0
        %6940 = vmatmul.mubr.bf16.gmra.mrb[0].mxu0 %v6079
        %v6941 = vpop.f32.mrb[0].mxu0
        %v6942 = vadd.f32 %v6869, %v6941
        %v6943 = vpop.f32.mrb[0].mxu0
        %v6944 = vadd.f32 %v6871, %v6943
        %v6945 = vpop.f32.mrb[0].mxu0
        %v6946 = vadd.f32 %v6873, %v6945
        %v6947 = vpop.f32.mrb[0].mxu0
        %v6948 = vadd.f32 %v6875, %v6947
        %6949 = vdwg.mxu0
        %v6950 = vadd.f32 %v5547, %v6477
        %v6951 = vadd.f32 %v5549, %v6479
        %v6952 = vadd.f32 %v5551, %v6481
        %v6953 = vadd.f32 %v5553, %v6483
        %v6954 = vadd.f32 %v5557, %v6487
        %v6955 = vadd.f32 %v5559, %v6489
        %v6956 = vadd.f32 %v5561, %v6491
        %v6957 = vadd.f32 %v5563, %v6493
        %v6958 = vadd.f32 %v5567, %v6497
        %v6959 = vadd.f32 %v5569, %v6499
        %v6960 = vadd.f32 %v5571, %v6501
        %v6961 = vadd.f32 %v5573, %v6503
        %v6962 = vadd.f32 %v5577, %v6507
        %v6963 = vadd.f32 %v5579, %v6509
        %v6964 = vadd.f32 %v5581, %v6511
        %v6965 = vadd.f32 %v5583, %v6513
        %v6966 = vadd.f32 %v5933, %v6912
        %v6967 = vadd.f32 %v5935, %v6914
        %v6968 = vadd.f32 %v5937, %v6916
        %v6969 = vadd.f32 %v5939, %v6918
        %v6970 = vadd.f32 %v5943, %v6922
        %v6971 = vadd.f32 %v5945, %v6924
        %v6972 = vadd.f32 %v5947, %v6926
        %v6973 = vadd.f32 %v5949, %v6928
        %v6974 = vadd.f32 %v5953, %v6932
        %v6975 = vadd.f32 %v5955, %v6934
        %v6976 = vadd.f32 %v5957, %v6936
        %v6977 = vadd.f32 %v5959, %v6938
        %v6978 = vadd.f32 %v5963, %v6942
        %v6979 = vadd.f32 %v5965, %v6944
        %v6980 = vadd.f32 %v5967, %v6946
        %v6981 = vadd.f32 %v5969, %v6948
        %vm6982 = vcmask 1044480
        %v6983 = vrot.slane %v4015, 3
        %v6984 = vrot.slane %v4018, 3
        %v6985 = vsel %vm6982, %v6983, %v6984
        %v6986 = vrot.slane %v4016, 3
        %v6987 = vrot.slane %v4019, 3
        %v6988 = vsel %vm6982, %v6986, %v6987
        %v6989 = vrot.slane %v4017, 3
        %v6990 = vrot.slane %v4020, 3
        %v6991 = vsel %vm6982, %v6989, %v6990
        %v6992 = vrot.slane %v4021, 3
        %v6993 = vrot.slane %v4024, 3
        %v6994 = vsel %vm6982, %v6992, %v6993
        %v6995 = vrot.slane %v4022, 3
        %v6996 = vrot.slane %v4025, 3
        %v6997 = vsel %vm6982, %v6995, %v6996
        %v6998 = vrot.slane %v4023, 3
        %v6999 = vrot.slane %v4026, 3
        %v7000 = vsel %vm6982, %v6998, %v6999
        %v7001 = vrot.slane %v4027, 3
        %v7002 = vrot.slane %v4030, 3
        %v7003 = vsel %vm6982, %v7001, %v7002
        %v7004 = vrot.slane %v4028, 3
        %v7005 = vrot.slane %v4031, 3
        %v7006 = vsel %vm6982, %v7004, %v7005
        %v7007 = vrot.slane %v4029, 3
        %v7008 = vrot.slane %v4032, 3
        %v7009 = vsel %vm6982, %v7007, %v7008
        %v7010 = vrot.slane %v4033, 3
        %v7011 = vrot.slane %v4036, 3
        %v7012 = vsel %vm6982, %v7010, %v7011
        %v7013 = vrot.slane %v4034, 3
        %v7014 = vrot.slane %v4037, 3
        %v7015 = vsel %vm6982, %v7013, %v7014
        %v7016 = vrot.slane %v4035, 3
        %v7017 = vrot.slane %v4038, 3
        %v7018 = vsel %vm6982, %v7016, %v7017
        %v7019 = vrot.slane %v4039, 3
        %v7020 = vrot.slane %v4042, 3
        %v7021 = vsel %vm6982, %v7019, %v7020
        %v7022 = vrot.slane %v4040, 3
        %v7023 = vrot.slane %v4043, 3
        %v7024 = vsel %vm6982, %v7022, %v7023
        %v7025 = vrot.slane %v4041, 3
        %v7026 = vrot.slane %v4044, 3
        %v7027 = vsel %vm6982, %v7025, %v7026
        %v7028 = vrot.slane %v4045, 3
        %v7029 = vrot.slane %v4048, 3
        %v7030 = vsel %vm6982, %v7028, %v7029
        %v7031 = vrot.slane %v4046, 3
        %v7032 = vrot.slane %v4049, 3
        %v7033 = vsel %vm6982, %v7031, %v7032
        %v7034 = vrot.slane %v4047, 3
        %v7035 = vrot.slane %v4050, 3
        %v7036 = vsel %vm6982, %v7034, %v7035
        %v7037 = vrot.slane %v4051, 3
        %v7038 = vrot.slane %v4054, 3
        %v7039 = vsel %vm6982, %v7037, %v7038
        %v7040 = vrot.slane %v4052, 3
        %v7041 = vrot.slane %v4055, 3
        %v7042 = vsel %vm6982, %v7040, %v7041
        %v7043 = vrot.slane %v4053, 3
        %v7044 = vrot.slane %v4056, 3
        %v7045 = vsel %vm6982, %v7043, %v7044
        %v7046 = vrot.slane %v4057, 3
        %v7047 = vrot.slane %v4060, 3
        %v7048 = vsel %vm6982, %v7046, %v7047
        %v7049 = vrot.slane %v4058, 3
        %v7050 = vrot.slane %v4061, 3
        %v7051 = vsel %vm6982, %v7049, %v7050
        %v7052 = vrot.slane %v4059, 3
        %v7053 = vrot.slane %v4062, 3
        %v7054 = vsel %vm6982, %v7052, %v7053
        %v7079 = vpack.c.bf16 %v6994, %v6985
        %v7080 = vpack.c.bf16 %v6997, %v6988
        %v7081 = vpack.c.bf16 %v7000, %v6991
        %v7082 = vpack.c.bf16 %v7012, %v7003
        %v7083 = vpack.c.bf16 %v7015, %v7006
        %v7084 = vpack.c.bf16 %v7018, %v7009
        %v7085 = vpack.c.bf16 %v7030, %v7021
        %v7086 = vpack.c.bf16 %v7033, %v7024
        %v7087 = vpack.c.bf16 %v7036, %v7027
        %v7088 = vpack.c.bf16 %v7048, %v7039
        %v7089 = vpack.c.bf16 %v7051, %v7042
        %v7090 = vpack.c.bf16 %v7054, %v7045
        %s7091 = scalar_lea.vmem %s2, 2304
        %v7092 = vld [vmem:[%s7091] sm:$0xff]
        %v7093 = vld [vmem:[%s7091 + $0x8] sm:$0xff]
        %v7094 = vld [vmem:[%s7091 + $0x10] sm:$0xff]
        %v7095 = vld [vmem:[%s7091 + $0x18] sm:$0xff]
        %v7096 = vld [vmem:[%s7091 + $0x20] sm:$0xff]
        %v7097 = vld [vmem:[%s7091 + $0x28] sm:$0xff]
        %v7098 = vld [vmem:[%s7091 + $0x30] sm:$0xff]
        %v7099 = vld [vmem:[%s7091 + $0x38] sm:$0xff]
        %v7100 = vld [vmem:[%s7091 + $0x40] sm:$0xff]
        %v7101 = vld [vmem:[%s7091 + $0x48] sm:$0xff]
        %v7102 = vld [vmem:[%s7091 + $0x50] sm:$0xff]
        %v7103 = vld [vmem:[%s7091 + $0x58] sm:$0xff]
        %v7104 = vld [vmem:[%s7091 + $0x60] sm:$0xff]
        %v7105 = vld [vmem:[%s7091 + $0x68] sm:$0xff]
        %v7106 = vld [vmem:[%s7091 + $0x70] sm:$0xff]
        %v7107 = vld [vmem:[%s7091 + $0x78] sm:$0xff]
        %v7108 = vld [vmem:[%s7091 + $0x80] sm:$0xff]
        %v7109 = vld [vmem:[%s7091 + $0x88] sm:$0xff]
        %v7110 = vld [vmem:[%s7091 + $0x90] sm:$0xff]
        %v7111 = vld [vmem:[%s7091 + $0x98] sm:$0xff]
        %v7112 = vld [vmem:[%s7091 + $0xa0] sm:$0xff]
        %v7113 = vld [vmem:[%s7091 + $0xa8] sm:$0xff]
        %v7114 = vld [vmem:[%s7091 + $0xb0] sm:$0xff]
        %v7115 = vld [vmem:[%s7091 + $0xb8] sm:$0xff]
        %v7116 = vld [vmem:[%s7091 + $0xc0] sm:$0xff]
        %v7117 = vld [vmem:[%s7091 + $0xc8] sm:$0xff]
        %v7118 = vld [vmem:[%s7091 + $0xd0] sm:$0xff]
        %v7119 = vld [vmem:[%s7091 + $0xd8] sm:$0xff]
        %v7120 = vld [vmem:[%s7091 + $0xe0] sm:$0xff]
        %v7121 = vld [vmem:[%s7091 + $0xe8] sm:$0xff]
        %v7122 = vld [vmem:[%s7091 + $0xf0] sm:$0xff]
        %v7123 = vld [vmem:[%s7091 + $0xf8] sm:$0xff]
        %v7124 = vld [vmem:[%s7091 + $0x100] sm:$0xff]
        %v7125 = vld [vmem:[%s7091 + $0x108] sm:$0xff]
        %v7126 = vld [vmem:[%s7091 + $0x110] sm:$0xff]
        %v7127 = vld [vmem:[%s7091 + $0x118] sm:$0xff]
        %v7128 = vld [vmem:[%s7091 + $0x120] sm:$0xff]
        %v7129 = vld [vmem:[%s7091 + $0x128] sm:$0xff]
        %v7130 = vld [vmem:[%s7091 + $0x130] sm:$0xff]
        %v7131 = vld [vmem:[%s7091 + $0x138] sm:$0xff]
        %v7132 = vld [vmem:[%s7091 + $0x140] sm:$0xff]
        %v7133 = vld [vmem:[%s7091 + $0x148] sm:$0xff]
        %v7134 = vld [vmem:[%s7091 + $0x150] sm:$0xff]
        %v7135 = vld [vmem:[%s7091 + $0x158] sm:$0xff]
        %v7136 = vld [vmem:[%s7091 + $0x160] sm:$0xff]
        %v7137 = vld [vmem:[%s7091 + $0x168] sm:$0xff]
        %v7138 = vld [vmem:[%s7091 + $0x170] sm:$0xff]
        %v7139 = vld [vmem:[%s7091 + $0x178] sm:$0xff]
        %v7188 = vunpack.c.l.b16 %v7092
        %v7189 = vunpack.c.h.b16 %v7092
        %v7190 = vunpack.c.l.b16 %v7093
        %v7191 = vunpack.c.h.b16 %v7093
        %v7192 = vunpack.c.l.b16 %v7094
        %v7193 = vunpack.c.h.b16 %v7094
        %v7194 = vunpack.c.l.b16 %v7095
        %v7195 = vunpack.c.h.b16 %v7095
        %v7196 = vunpack.c.l.b16 %v7096
        %v7197 = vunpack.c.h.b16 %v7096
        %v7198 = vunpack.c.l.b16 %v7097
        %v7199 = vunpack.c.h.b16 %v7097
        %v7200 = vunpack.c.l.b16 %v7098
        %v7201 = vunpack.c.h.b16 %v7098
        %v7202 = vunpack.c.l.b16 %v7099
        %v7203 = vunpack.c.h.b16 %v7099
        %v7204 = vunpack.c.l.b16 %v7100
        %v7205 = vunpack.c.h.b16 %v7100
        %v7206 = vunpack.c.l.b16 %v7101
        %v7207 = vunpack.c.h.b16 %v7101
        %v7208 = vunpack.c.l.b16 %v7102
        %v7209 = vunpack.c.h.b16 %v7102
        %v7210 = vunpack.c.l.b16 %v7103
        %v7211 = vunpack.c.h.b16 %v7103
        %v7212 = vunpack.c.l.b16 %v7104
        %v7213 = vunpack.c.h.b16 %v7104
        %v7214 = vunpack.c.l.b16 %v7105
        %v7215 = vunpack.c.h.b16 %v7105
        %v7216 = vunpack.c.l.b16 %v7106
        %v7217 = vunpack.c.h.b16 %v7106
        %v7218 = vunpack.c.l.b16 %v7107
        %v7219 = vunpack.c.h.b16 %v7107
        %v7220 = vunpack.c.l.b16 %v7108
        %v7221 = vunpack.c.h.b16 %v7108
        %v7222 = vunpack.c.l.b16 %v7109
        %v7223 = vunpack.c.h.b16 %v7109
        %v7224 = vunpack.c.l.b16 %v7110
        %v7225 = vunpack.c.h.b16 %v7110
        %v7226 = vunpack.c.l.b16 %v7111
        %v7227 = vunpack.c.h.b16 %v7111
        %v7228 = vunpack.c.l.b16 %v7112
        %v7229 = vunpack.c.h.b16 %v7112
        %v7230 = vunpack.c.l.b16 %v7113
        %v7231 = vunpack.c.h.b16 %v7113
        %v7232 = vunpack.c.l.b16 %v7114
        %v7233 = vunpack.c.h.b16 %v7114
        %v7234 = vunpack.c.l.b16 %v7115
        %v7235 = vunpack.c.h.b16 %v7115
        %v7236 = vunpack.c.l.b16 %v7116
        %v7237 = vunpack.c.h.b16 %v7116
        %v7238 = vunpack.c.l.b16 %v7117
        %v7239 = vunpack.c.h.b16 %v7117
        %v7240 = vunpack.c.l.b16 %v7118
        %v7241 = vunpack.c.h.b16 %v7118
        %v7242 = vunpack.c.l.b16 %v7119
        %v7243 = vunpack.c.h.b16 %v7119
        %v7244 = vunpack.c.l.b16 %v7120
        %v7245 = vunpack.c.h.b16 %v7120
        %v7246 = vunpack.c.l.b16 %v7121
        %v7247 = vunpack.c.h.b16 %v7121
        %v7248 = vunpack.c.l.b16 %v7122
        %v7249 = vunpack.c.h.b16 %v7122
        %v7250 = vunpack.c.l.b16 %v7123
        %v7251 = vunpack.c.h.b16 %v7123
        %v7252 = vunpack.c.l.b16 %v7124
        %v7253 = vunpack.c.h.b16 %v7124
        %v7254 = vunpack.c.l.b16 %v7125
        %v7255 = vunpack.c.h.b16 %v7125
        %v7256 = vunpack.c.l.b16 %v7126
        %v7257 = vunpack.c.h.b16 %v7126
        %v7258 = vunpack.c.l.b16 %v7127
        %v7259 = vunpack.c.h.b16 %v7127
        %v7260 = vunpack.c.l.b16 %v7128
        %v7261 = vunpack.c.h.b16 %v7128
        %v7262 = vunpack.c.l.b16 %v7129
        %v7263 = vunpack.c.h.b16 %v7129
        %v7264 = vunpack.c.l.b16 %v7130
        %v7265 = vunpack.c.h.b16 %v7130
        %v7266 = vunpack.c.l.b16 %v7131
        %v7267 = vunpack.c.h.b16 %v7131
        %v7268 = vunpack.c.l.b16 %v7132
        %v7269 = vunpack.c.h.b16 %v7132
        %v7270 = vunpack.c.l.b16 %v7133
        %v7271 = vunpack.c.h.b16 %v7133
        %v7272 = vunpack.c.l.b16 %v7134
        %v7273 = vunpack.c.h.b16 %v7134
        %v7274 = vunpack.c.l.b16 %v7135
        %v7275 = vunpack.c.h.b16 %v7135
        %v7276 = vunpack.c.l.b16 %v7136
        %v7277 = vunpack.c.h.b16 %v7136
        %v7278 = vunpack.c.l.b16 %v7137
        %v7279 = vunpack.c.h.b16 %v7137
        %v7280 = vunpack.c.l.b16 %v7138
        %v7281 = vunpack.c.h.b16 %v7138
        %v7282 = vunpack.c.l.b16 %v7139
        %v7283 = vunpack.c.h.b16 %v7139
        %v7284 = vpack.c.b16 %v7190, %v7188
        %v7285 = vpack.c.b16 %v7191, %v7189
        %v7286 = vpack.c.b16 %v7194, %v7192
        %v7287 = vpack.c.b16 %v7195, %v7193
        %v7288 = vpack.c.b16 %v7198, %v7196
        %v7289 = vpack.c.b16 %v7199, %v7197
        %v7290 = vpack.c.b16 %v7202, %v7200
        %v7291 = vpack.c.b16 %v7203, %v7201
        %v7292 = vpack.c.b16 %v7206, %v7204
        %v7293 = vpack.c.b16 %v7207, %v7205
        %v7294 = vpack.c.b16 %v7210, %v7208
        %v7295 = vpack.c.b16 %v7211, %v7209
        %v7296 = vpack.c.b16 %v7214, %v7212
        %v7297 = vpack.c.b16 %v7215, %v7213
        %v7298 = vpack.c.b16 %v7218, %v7216
        %v7299 = vpack.c.b16 %v7219, %v7217
        %v7300 = vpack.c.b16 %v7222, %v7220
        %v7301 = vpack.c.b16 %v7223, %v7221
        %v7302 = vpack.c.b16 %v7226, %v7224
        %v7303 = vpack.c.b16 %v7227, %v7225
        %v7304 = vpack.c.b16 %v7230, %v7228
        %v7305 = vpack.c.b16 %v7231, %v7229
        %v7306 = vpack.c.b16 %v7234, %v7232
        %v7307 = vpack.c.b16 %v7235, %v7233
        %v7308 = vpack.c.b16 %v7238, %v7236
        %v7309 = vpack.c.b16 %v7239, %v7237
        %v7310 = vpack.c.b16 %v7242, %v7240
        %v7311 = vpack.c.b16 %v7243, %v7241
        %v7312 = vpack.c.b16 %v7246, %v7244
        %v7313 = vpack.c.b16 %v7247, %v7245
        %v7314 = vpack.c.b16 %v7250, %v7248
        %v7315 = vpack.c.b16 %v7251, %v7249
        %v7316 = vpack.c.b16 %v7254, %v7252
        %v7317 = vpack.c.b16 %v7255, %v7253
        %v7318 = vpack.c.b16 %v7258, %v7256
        %v7319 = vpack.c.b16 %v7259, %v7257
        %v7320 = vpack.c.b16 %v7262, %v7260
        %v7321 = vpack.c.b16 %v7263, %v7261
        %v7322 = vpack.c.b16 %v7266, %v7264
        %v7323 = vpack.c.b16 %v7267, %v7265
        %v7324 = vpack.c.b16 %v7270, %v7268
        %v7325 = vpack.c.b16 %v7271, %v7269
        %v7326 = vpack.c.b16 %v7274, %v7272
        %v7327 = vpack.c.b16 %v7275, %v7273
        %v7328 = vpack.c.b16 %v7278, %v7276
        %v7329 = vpack.c.b16 %v7279, %v7277
        %v7330 = vpack.c.b16 %v7282, %v7280
        %v7331 = vpack.c.b16 %v7283, %v7281
        %7380 = vmatprep.subr.bf16.mxu0 %v7285
        %7381 = vmatpush1.bf16.msra.mxu0 %v7284
        %7382 = vmatprep.subr.bf16.mxu0 %v7287
        %7383 = vmatpush1.bf16.msra.mxu0 %v7286
        %7384 = vmatprep.subr.bf16.mxu0 %v7289
        %7385 = vmatpush1.bf16.msra.mxu0 %v7288
        %7386 = vmatprep.subr.bf16.mxu0 %v7291
        %7387 = vmatpush1.bf16.msra.mxu0 %v7290
        %7388 = vmatprep.subr.bf16.mxu0 %v7293
        %7389 = vmatpush1.bf16.msra.mxu0 %v7292
        %7390 = vmatprep.subr.bf16.mxu0 %v7295
        %7391 = vmatpush1.bf16.msra.mxu0 %v7294
        %7392 = vmatprep.subr.bf16.mxu0 %v7297
        %7393 = vmatpush1.bf16.msra.mxu0 %v7296
        %7394 = vmatprep.subr.bf16.mxu0 %v7299
        %7395 = vmatpush1.bf16.msra.mxu0 %v7298
        %7396 = vmatprep.subr.bf16.mxu0 %v7301
        %7397 = vmatpush1.bf16.msra.mxu0 %v7300
        %7398 = vmatprep.subr.bf16.mxu0 %v7303
        %7399 = vmatpush1.bf16.msra.mxu0 %v7302
        %7400 = vmatprep.subr.bf16.mxu0 %v7305
        %7401 = vmatpush1.bf16.msra.mxu0 %v7304
        %7402 = vmatprep.subr.bf16.mxu0 %v7307
        %7403 = vmatpush1.bf16.msra.mxu0 %v7306
        %7404 = vmatprep.subr.bf16.mxu0 %v7309
        %7405 = vmatpush1.bf16.msra.mxu0 %v7308
        %7406 = vmatprep.subr.bf16.mxu0 %v7311
        %7407 = vmatpush1.bf16.msra.mxu0 %v7310
        %7408 = vmatprep.subr.bf16.mxu0 %v7313
        %7409 = vmatpush1.bf16.msra.mxu0 %v7312
        %7410 = vmatprep.subr.bf16.mxu0 %v7315
        %7411 = vmatpush1.bf16.msra.mxu0 %v7314
        %7412 = vmatprep.mubr.bf16.mxu0 %v7080
        %7413 = vmatmul.mubr.bf16.gmra.mrb[0].mxu0 %v7079
        %v7414 = vpop.f32.mrb[0].mxu0
        %v7415 = vadd.f32 0.0, %v7414
        %v7416 = vpop.f32.mrb[0].mxu0
        %v7417 = vadd.f32 0.0, %v7416
        %v7418 = vpop.f32.mrb[0].mxu0
        %v7419 = vadd.f32 0.0, %v7418
        %v7420 = vpop.f32.mrb[0].mxu0
        %v7421 = vadd.f32 0.0, %v7420
        %7422 = vmatprep.mubr.bf16.mxu0 %v7083
        %7423 = vmatmul.mubr.bf16.gmra.mrb[0].mxu0 %v7082
        %v7424 = vpop.f32.mrb[0].mxu0
        %v7425 = vadd.f32 0.0, %v7424
        %v7426 = vpop.f32.mrb[0].mxu0
        %v7427 = vadd.f32 0.0, %v7426
        %v7428 = vpop.f32.mrb[0].mxu0
        %v7429 = vadd.f32 0.0, %v7428
        %v7430 = vpop.f32.mrb[0].mxu0
        %v7431 = vadd.f32 0.0, %v7430
        %7432 = vmatprep.mubr.bf16.mxu0 %v7086
        %7433 = vmatmul.mubr.bf16.gmra.mrb[0].mxu0 %v7085
        %v7434 = vpop.f32.mrb[0].mxu0
        %v7435 = vadd.f32 0.0, %v7434
        %v7436 = vpop.f32.mrb[0].mxu0
        %v7437 = vadd.f32 0.0, %v7436
        %v7438 = vpop.f32.mrb[0].mxu0
        %v7439 = vadd.f32 0.0, %v7438
        %v7440 = vpop.f32.mrb[0].mxu0
        %v7441 = vadd.f32 0.0, %v7440
        %7442 = vmatprep.mubr.bf16.mxu0 %v7089
        %7443 = vmatmul.mubr.bf16.gmra.mrb[0].mxu0 %v7088
        %v7444 = vpop.f32.mrb[0].mxu0
        %v7445 = vadd.f32 0.0, %v7444
        %v7446 = vpop.f32.mrb[0].mxu0
        %v7447 = vadd.f32 0.0, %v7446
        %v7448 = vpop.f32.mrb[0].mxu0
        %v7449 = vadd.f32 0.0, %v7448
        %v7450 = vpop.f32.mrb[0].mxu0
        %v7451 = vadd.f32 0.0, %v7450
        %7452 = vdwg.mxu0
        %7453 = vmatprep.subr.bf16.mxu0 %v7317
        %7454 = vmatpush1.bf16.msra.mxu0 %v7316
        %7455 = vmatprep.subr.bf16.mxu0 %v7319
        %7456 = vmatpush1.bf16.msra.mxu0 %v7318
        %7457 = vmatprep.subr.bf16.mxu0 %v7321
        %7458 = vmatpush1.bf16.msra.mxu0 %v7320
        %7459 = vmatprep.subr.bf16.mxu0 %v7323
        %7460 = vmatpush1.bf16.msra.mxu0 %v7322
        %7461 = vmatprep.subr.bf16.mxu0 %v7325
        %7462 = vmatpush1.bf16.msra.mxu0 %v7324
        %7463 = vmatprep.subr.bf16.mxu0 %v7327
        %7464 = vmatpush1.bf16.msra.mxu0 %v7326
        %7465 = vmatprep.subr.bf16.mxu0 %v7329
        %7466 = vmatpush1.bf16.msra.mxu0 %v7328
        %7467 = vmatprep.subr.bf16.mxu0 %v7331
        %7468 = vmatpush1.bf16.msra.mxu0 %v7330
        %7469 = vmatprep.subr.bf16.mxu0 0
        %7470 = vmatpush1.bf16.msra.mxu0 0
        %7471 = vmatprep.subr.bf16.mxu0 0
        %7472 = vmatpush1.bf16.msra.mxu0 0
        %7473 = vmatprep.subr.bf16.mxu0 0
        %7474 = vmatpush1.bf16.msra.mxu0 0
        %7475 = vmatprep.subr.bf16.mxu0 0
        %7476 = vmatpush1.bf16.msra.mxu0 0
        %7477 = vmatprep.subr.bf16.mxu0 0
        %7478 = vmatpush1.bf16.msra.mxu0 0
        %7479 = vmatprep.subr.bf16.mxu0 0
        %7480 = vmatpush1.bf16.msra.mxu0 0
        %7481 = vmatprep.subr.bf16.mxu0 0
        %7482 = vmatpush1.bf16.msra.mxu0 0
        %7483 = vmatprep.subr.bf16.mxu0 0
        %7484 = vmatpush1.bf16.msra.mxu0 0
        %7485 = vmatprep.mubr.bf16.mxu0 0
        %7486 = vmatmul.mubr.bf16.gmra.mrb[0].mxu0 %v7081
        %v7487 = vpop.f32.mrb[0].mxu0
        %v7488 = vadd.f32 %v7415, %v7487
        %v7489 = vpop.f32.mrb[0].mxu0
        %v7490 = vadd.f32 %v7417, %v7489
        %v7491 = vpop.f32.mrb[0].mxu0
        %v7492 = vadd.f32 %v7419, %v7491
        %v7493 = vpop.f32.mrb[0].mxu0
        %v7494 = vadd.f32 %v7421, %v7493
        %7495 = vmatprep.mubr.bf16.mxu0 0
        %7496 = vmatmul.mubr.bf16.gmra.mrb[0].mxu0 %v7084
        %v7497 = vpop.f32.mrb[0].mxu0
        %v7498 = vadd.f32 %v7425, %v7497
        %v7499 = vpop.f32.mrb[0].mxu0
        %v7500 = vadd.f32 %v7427, %v7499
        %v7501 = vpop.f32.mrb[0].mxu0
        %v7502 = vadd.f32 %v7429, %v7501
        %v7503 = vpop.f32.mrb[0].mxu0
        %v7504 = vadd.f32 %v7431, %v7503
        %7505 = vmatprep.mubr.bf16.mxu0 0
        %7506 = vmatmul.mubr.bf16.gmra.mrb[0].mxu0 %v7087
        %v7507 = vpop.f32.mrb[0].mxu0
        %v7508 = vadd.f32 %v7435, %v7507
        %v7509 = vpop.f32.mrb[0].mxu0
        %v7510 = vadd.f32 %v7437, %v7509
        %v7511 = vpop.f32.mrb[0].mxu0
        %v7512 = vadd.f32 %v7439, %v7511
        %v7513 = vpop.f32.mrb[0].mxu0
        %v7514 = vadd.f32 %v7441, %v7513
        %7515 = vmatprep.mubr.bf16.mxu0 0
        %7516 = vmatmul.mubr.bf16.gmra.mrb[0].mxu0 %v7090
        %v7517 = vpop.f32.mrb[0].mxu0
        %v7518 = vadd.f32 %v7445, %v7517
        %v7519 = vpop.f32.mrb[0].mxu0
        %v7520 = vadd.f32 %v7447, %v7519
        %v7521 = vpop.f32.mrb[0].mxu0
        %v7522 = vadd.f32 %v7449, %v7521
        %v7523 = vpop.f32.mrb[0].mxu0
        %v7524 = vadd.f32 %v7451, %v7523
        %7525 = vdwg.mxu0
        %s7526 = scalar_lea.vmem %s2, 2688
        %v7527 = vld [vmem:[%s7526] sm:$0xff]
        %v7528 = vld [vmem:[%s7526 + $0x8] sm:$0xff]
        %v7529 = vld [vmem:[%s7526 + $0x10] sm:$0xff]
        %v7530 = vld [vmem:[%s7526 + $0x18] sm:$0xff]
        %v7531 = vld [vmem:[%s7526 + $0x20] sm:$0xff]
        %v7532 = vld [vmem:[%s7526 + $0x28] sm:$0xff]
        %v7533 = vld [vmem:[%s7526 + $0x30] sm:$0xff]
        %v7534 = vld [vmem:[%s7526 + $0x38] sm:$0xff]
        %v7535 = vld [vmem:[%s7526 + $0x40] sm:$0xff]
        %v7536 = vld [vmem:[%s7526 + $0x48] sm:$0xff]
        %v7537 = vld [vmem:[%s7526 + $0x50] sm:$0xff]
        %v7538 = vld [vmem:[%s7526 + $0x58] sm:$0xff]
        %v7539 = vld [vmem:[%s7526 + $0x60] sm:$0xff]
        %v7540 = vld [vmem:[%s7526 + $0x68] sm:$0xff]
        %v7541 = vld [vmem:[%s7526 + $0x70] sm:$0xff]
        %v7542 = vld [vmem:[%s7526 + $0x78] sm:$0xff]
        %v7543 = vld [vmem:[%s7526 + $0x80] sm:$0xff]
        %v7544 = vld [vmem:[%s7526 + $0x88] sm:$0xff]
        %v7545 = vld [vmem:[%s7526 + $0x90] sm:$0xff]
        %v7546 = vld [vmem:[%s7526 + $0x98] sm:$0xff]
        %v7547 = vld [vmem:[%s7526 + $0xa0] sm:$0xff]
        %v7548 = vld [vmem:[%s7526 + $0xa8] sm:$0xff]
        %v7549 = vld [vmem:[%s7526 + $0xb0] sm:$0xff]
        %v7550 = vld [vmem:[%s7526 + $0xb8] sm:$0xff]
        %v7551 = vld [vmem:[%s7526 + $0xc0] sm:$0xff]
        %v7552 = vld [vmem:[%s7526 + $0xc8] sm:$0xff]
        %v7553 = vld [vmem:[%s7526 + $0xd0] sm:$0xff]
        %v7554 = vld [vmem:[%s7526 + $0xd8] sm:$0xff]
        %v7555 = vld [vmem:[%s7526 + $0xe0] sm:$0xff]
        %v7556 = vld [vmem:[%s7526 + $0xe8] sm:$0xff]
        %v7557 = vld [vmem:[%s7526 + $0xf0] sm:$0xff]
        %v7558 = vld [vmem:[%s7526 + $0xf8] sm:$0xff]
        %v7559 = vld [vmem:[%s7526 + $0x100] sm:$0xff]
        %v7560 = vld [vmem:[%s7526 + $0x108] sm:$0xff]
        %v7561 = vld [vmem:[%s7526 + $0x110] sm:$0xff]
        %v7562 = vld [vmem:[%s7526 + $0x118] sm:$0xff]
        %v7563 = vld [vmem:[%s7526 + $0x120] sm:$0xff]
        %v7564 = vld [vmem:[%s7526 + $0x128] sm:$0xff]
        %v7565 = vld [vmem:[%s7526 + $0x130] sm:$0xff]
        %v7566 = vld [vmem:[%s7526 + $0x138] sm:$0xff]
        %v7567 = vld [vmem:[%s7526 + $0x140] sm:$0xff]
        %v7568 = vld [vmem:[%s7526 + $0x148] sm:$0xff]
        %v7569 = vld [vmem:[%s7526 + $0x150] sm:$0xff]
        %v7570 = vld [vmem:[%s7526 + $0x158] sm:$0xff]
        %v7571 = vld [vmem:[%s7526 + $0x160] sm:$0xff]
        %v7572 = vld [vmem:[%s7526 + $0x168] sm:$0xff]
        %v7573 = vld [vmem:[%s7526 + $0x170] sm:$0xff]
        %v7574 = vld [vmem:[%s7526 + $0x178] sm:$0xff]
        %v7623 = vunpack.c.l.b16 %v7527
        %v7624 = vunpack.c.h.b16 %v7527
        %v7625 = vunpack.c.l.b16 %v7528
        %v7626 = vunpack.c.h.b16 %v7528
        %v7627 = vunpack.c.l.b16 %v7529
        %v7628 = vunpack.c.h.b16 %v7529
        %v7629 = vunpack.c.l.b16 %v7530
        %v7630 = vunpack.c.h.b16 %v7530
        %v7631 = vunpack.c.l.b16 %v7531
        %v7632 = vunpack.c.h.b16 %v7531
        %v7633 = vunpack.c.l.b16 %v7532
        %v7634 = vunpack.c.h.b16 %v7532
        %v7635 = vunpack.c.l.b16 %v7533
        %v7636 = vunpack.c.h.b16 %v7533
        %v7637 = vunpack.c.l.b16 %v7534
        %v7638 = vunpack.c.h.b16 %v7534
        %v7639 = vunpack.c.l.b16 %v7535
        %v7640 = vunpack.c.h.b16 %v7535
        %v7641 = vunpack.c.l.b16 %v7536
        %v7642 = vunpack.c.h.b16 %v7536
        %v7643 = vunpack.c.l.b16 %v7537
        %v7644 = vunpack.c.h.b16 %v7537
        %v7645 = vunpack.c.l.b16 %v7538
        %v7646 = vunpack.c.h.b16 %v7538
        %v7647 = vunpack.c.l.b16 %v7539
        %v7648 = vunpack.c.h.b16 %v7539
        %v7649 = vunpack.c.l.b16 %v7540
        %v7650 = vunpack.c.h.b16 %v7540
        %v7651 = vunpack.c.l.b16 %v7541
        %v7652 = vunpack.c.h.b16 %v7541
        %v7653 = vunpack.c.l.b16 %v7542
        %v7654 = vunpack.c.h.b16 %v7542
        %v7655 = vunpack.c.l.b16 %v7543
        %v7656 = vunpack.c.h.b16 %v7543
        %v7657 = vunpack.c.l.b16 %v7544
        %v7658 = vunpack.c.h.b16 %v7544
        %v7659 = vunpack.c.l.b16 %v7545
        %v7660 = vunpack.c.h.b16 %v7545
        %v7661 = vunpack.c.l.b16 %v7546
        %v7662 = vunpack.c.h.b16 %v7546
        %v7663 = vunpack.c.l.b16 %v7547
        %v7664 = vunpack.c.h.b16 %v7547
        %v7665 = vunpack.c.l.b16 %v7548
        %v7666 = vunpack.c.h.b16 %v7548
        %v7667 = vunpack.c.l.b16 %v7549
        %v7668 = vunpack.c.h.b16 %v7549
        %v7669 = vunpack.c.l.b16 %v7550
        %v7670 = vunpack.c.h.b16 %v7550
        %v7671 = vunpack.c.l.b16 %v7551
        %v7672 = vunpack.c.h.b16 %v7551
        %v7673 = vunpack.c.l.b16 %v7552
        %v7674 = vunpack.c.h.b16 %v7552
        %v7675 = vunpack.c.l.b16 %v7553
        %v7676 = vunpack.c.h.b16 %v7553
        %v7677 = vunpack.c.l.b16 %v7554
        %v7678 = vunpack.c.h.b16 %v7554
        %v7679 = vunpack.c.l.b16 %v7555
        %v7680 = vunpack.c.h.b16 %v7555
        %v7681 = vunpack.c.l.b16 %v7556
        %v7682 = vunpack.c.h.b16 %v7556
        %v7683 = vunpack.c.l.b16 %v7557
        %v7684 = vunpack.c.h.b16 %v7557
        %v7685 = vunpack.c.l.b16 %v7558
        %v7686 = vunpack.c.h.b16 %v7558
        %v7687 = vunpack.c.l.b16 %v7559
        %v7688 = vunpack.c.h.b16 %v7559
        %v7689 = vunpack.c.l.b16 %v7560
        %v7690 = vunpack.c.h.b16 %v7560
        %v7691 = vunpack.c.l.b16 %v7561
        %v7692 = vunpack.c.h.b16 %v7561
        %v7693 = vunpack.c.l.b16 %v7562
        %v7694 = vunpack.c.h.b16 %v7562
        %v7695 = vunpack.c.l.b16 %v7563
        %v7696 = vunpack.c.h.b16 %v7563
        %v7697 = vunpack.c.l.b16 %v7564
        %v7698 = vunpack.c.h.b16 %v7564
        %v7699 = vunpack.c.l.b16 %v7565
        %v7700 = vunpack.c.h.b16 %v7565
        %v7701 = vunpack.c.l.b16 %v7566
        %v7702 = vunpack.c.h.b16 %v7566
        %v7703 = vunpack.c.l.b16 %v7567
        %v7704 = vunpack.c.h.b16 %v7567
        %v7705 = vunpack.c.l.b16 %v7568
        %v7706 = vunpack.c.h.b16 %v7568
        %v7707 = vunpack.c.l.b16 %v7569
        %v7708 = vunpack.c.h.b16 %v7569
        %v7709 = vunpack.c.l.b16 %v7570
        %v7710 = vunpack.c.h.b16 %v7570
        %v7711 = vunpack.c.l.b16 %v7571
        %v7712 = vunpack.c.h.b16 %v7571
        %v7713 = vunpack.c.l.b16 %v7572
        %v7714 = vunpack.c.h.b16 %v7572
        %v7715 = vunpack.c.l.b16 %v7573
        %v7716 = vunpack.c.h.b16 %v7573
        %v7717 = vunpack.c.l.b16 %v7574
        %v7718 = vunpack.c.h.b16 %v7574
        %v7719 = vpack.c.b16 %v7625, %v7623
        %v7720 = vpack.c.b16 %v7626, %v7624
        %v7721 = vpack.c.b16 %v7629, %v7627
        %v7722 = vpack.c.b16 %v7630, %v7628
        %v7723 = vpack.c.b16 %v7633, %v7631
        %v7724 = vpack.c.b16 %v7634, %v7632
        %v7725 = vpack.c.b16 %v7637, %v7635
        %v7726 = vpack.c.b16 %v7638, %v7636
        %v7727 = vpack.c.b16 %v7641, %v7639
        %v7728 = vpack.c.b16 %v7642, %v7640
        %v7729 = vpack.c.b16 %v7645, %v7643
        %v7730 = vpack.c.b16 %v7646, %v7644
        %v7731 = vpack.c.b16 %v7649, %v7647
        %v7732 = vpack.c.b16 %v7650, %v7648
        %v7733 = vpack.c.b16 %v7653, %v7651
        %v7734 = vpack.c.b16 %v7654, %v7652
        %v7735 = vpack.c.b16 %v7657, %v7655
        %v7736 = vpack.c.b16 %v7658, %v7656
        %v7737 = vpack.c.b16 %v7661, %v7659
        %v7738 = vpack.c.b16 %v7662, %v7660
        %v7739 = vpack.c.b16 %v7665, %v7663
        %v7740 = vpack.c.b16 %v7666, %v7664
        %v7741 = vpack.c.b16 %v7669, %v7667
        %v7742 = vpack.c.b16 %v7670, %v7668
        %v7743 = vpack.c.b16 %v7673, %v7671
        %v7744 = vpack.c.b16 %v7674, %v7672
        %v7745 = vpack.c.b16 %v7677, %v7675
        %v7746 = vpack.c.b16 %v7678, %v7676
        %v7747 = vpack.c.b16 %v7681, %v7679
        %v7748 = vpack.c.b16 %v7682, %v7680
        %v7749 = vpack.c.b16 %v7685, %v7683
        %v7750 = vpack.c.b16 %v7686, %v7684
        %v7751 = vpack.c.b16 %v7689, %v7687
        %v7752 = vpack.c.b16 %v7690, %v7688
        %v7753 = vpack.c.b16 %v7693, %v7691
        %v7754 = vpack.c.b16 %v7694, %v7692
        %v7755 = vpack.c.b16 %v7697, %v7695
        %v7756 = vpack.c.b16 %v7698, %v7696
        %v7757 = vpack.c.b16 %v7701, %v7699
        %v7758 = vpack.c.b16 %v7702, %v7700
        %v7759 = vpack.c.b16 %v7705, %v7703
        %v7760 = vpack.c.b16 %v7706, %v7704
        %v7761 = vpack.c.b16 %v7709, %v7707
        %v7762 = vpack.c.b16 %v7710, %v7708
        %v7763 = vpack.c.b16 %v7713, %v7711
        %v7764 = vpack.c.b16 %v7714, %v7712
        %v7765 = vpack.c.b16 %v7717, %v7715
        %v7766 = vpack.c.b16 %v7718, %v7716
        %7815 = vmatprep.subr.bf16.mxu0 %v7720
        %7816 = vmatpush1.bf16.msra.mxu0 %v7719
        %7817 = vmatprep.subr.bf16.mxu0 %v7722
        %7818 = vmatpush1.bf16.msra.mxu0 %v7721
        %7819 = vmatprep.subr.bf16.mxu0 %v7724
        %7820 = vmatpush1.bf16.msra.mxu0 %v7723
        %7821 = vmatprep.subr.bf16.mxu0 %v7726
        %7822 = vmatpush1.bf16.msra.mxu0 %v7725
        %7823 = vmatprep.subr.bf16.mxu0 %v7728
        %7824 = vmatpush1.bf16.msra.mxu0 %v7727
        %7825 = vmatprep.subr.bf16.mxu0 %v7730
        %7826 = vmatpush1.bf16.msra.mxu0 %v7729
        %7827 = vmatprep.subr.bf16.mxu0 %v7732
        %7828 = vmatpush1.bf16.msra.mxu0 %v7731
        %7829 = vmatprep.subr.bf16.mxu0 %v7734
        %7830 = vmatpush1.bf16.msra.mxu0 %v7733
        %7831 = vmatprep.subr.bf16.mxu0 %v7736
        %7832 = vmatpush1.bf16.msra.mxu0 %v7735
        %7833 = vmatprep.subr.bf16.mxu0 %v7738
        %7834 = vmatpush1.bf16.msra.mxu0 %v7737
        %7835 = vmatprep.subr.bf16.mxu0 %v7740
        %7836 = vmatpush1.bf16.msra.mxu0 %v7739
        %7837 = vmatprep.subr.bf16.mxu0 %v7742
        %7838 = vmatpush1.bf16.msra.mxu0 %v7741
        %7839 = vmatprep.subr.bf16.mxu0 %v7744
        %7840 = vmatpush1.bf16.msra.mxu0 %v7743
        %7841 = vmatprep.subr.bf16.mxu0 %v7746
        %7842 = vmatpush1.bf16.msra.mxu0 %v7745
        %7843 = vmatprep.subr.bf16.mxu0 %v7748
        %7844 = vmatpush1.bf16.msra.mxu0 %v7747
        %7845 = vmatprep.subr.bf16.mxu0 %v7750
        %7846 = vmatpush1.bf16.msra.mxu0 %v7749
        %7847 = vmatprep.mubr.bf16.mxu0 %v7080
        %7848 = vmatmul.mubr.bf16.gmra.mrb[0].mxu0 %v7079
        %v7849 = vpop.f32.mrb[0].mxu0
        %v7850 = vadd.f32 0.0, %v7849
        %v7851 = vpop.f32.mrb[0].mxu0
        %v7852 = vadd.f32 0.0, %v7851
        %v7853 = vpop.f32.mrb[0].mxu0
        %v7854 = vadd.f32 0.0, %v7853
        %v7855 = vpop.f32.mrb[0].mxu0
        %v7856 = vadd.f32 0.0, %v7855
        %7857 = vmatprep.mubr.bf16.mxu0 %v7083
        %7858 = vmatmul.mubr.bf16.gmra.mrb[0].mxu0 %v7082
        %v7859 = vpop.f32.mrb[0].mxu0
        %v7860 = vadd.f32 0.0, %v7859
        %v7861 = vpop.f32.mrb[0].mxu0
        %v7862 = vadd.f32 0.0, %v7861
        %v7863 = vpop.f32.mrb[0].mxu0
        %v7864 = vadd.f32 0.0, %v7863
        %v7865 = vpop.f32.mrb[0].mxu0
        %v7866 = vadd.f32 0.0, %v7865
        %7867 = vmatprep.mubr.bf16.mxu0 %v7086
        %7868 = vmatmul.mubr.bf16.gmra.mrb[0].mxu0 %v7085
        %v7869 = vpop.f32.mrb[0].mxu0
        %v7870 = vadd.f32 0.0, %v7869
        %v7871 = vpop.f32.mrb[0].mxu0
        %v7872 = vadd.f32 0.0, %v7871
        %v7873 = vpop.f32.mrb[0].mxu0
        %v7874 = vadd.f32 0.0, %v7873
        %v7875 = vpop.f32.mrb[0].mxu0
        %v7876 = vadd.f32 0.0, %v7875
        %7877 = vmatprep.mubr.bf16.mxu0 %v7089
        %7878 = vmatmul.mubr.bf16.gmra.mrb[0].mxu0 %v7088
        %v7879 = vpop.f32.mrb[0].mxu0
        %v7880 = vadd.f32 0.0, %v7879
        %v7881 = vpop.f32.mrb[0].mxu0
        %v7882 = vadd.f32 0.0, %v7881
        %v7883 = vpop.f32.mrb[0].mxu0
        %v7884 = vadd.f32 0.0, %v7883
        %v7885 = vpop.f32.mrb[0].mxu0
        %v7886 = vadd.f32 0.0, %v7885
        %7887 = vdwg.mxu0
        %7888 = vmatprep.subr.bf16.mxu0 %v7752
        %7889 = vmatpush1.bf16.msra.mxu0 %v7751
        %7890 = vmatprep.subr.bf16.mxu0 %v7754
        %7891 = vmatpush1.bf16.msra.mxu0 %v7753
        %7892 = vmatprep.subr.bf16.mxu0 %v7756
        %7893 = vmatpush1.bf16.msra.mxu0 %v7755
        %7894 = vmatprep.subr.bf16.mxu0 %v7758
        %7895 = vmatpush1.bf16.msra.mxu0 %v7757
        %7896 = vmatprep.subr.bf16.mxu0 %v7760
        %7897 = vmatpush1.bf16.msra.mxu0 %v7759
        %7898 = vmatprep.subr.bf16.mxu0 %v7762
        %7899 = vmatpush1.bf16.msra.mxu0 %v7761
        %7900 = vmatprep.subr.bf16.mxu0 %v7764
        %7901 = vmatpush1.bf16.msra.mxu0 %v7763
        %7902 = vmatprep.subr.bf16.mxu0 %v7766
        %7903 = vmatpush1.bf16.msra.mxu0 %v7765
        %7904 = vmatprep.subr.bf16.mxu0 0
        %7905 = vmatpush1.bf16.msra.mxu0 0
        %7906 = vmatprep.subr.bf16.mxu0 0
        %7907 = vmatpush1.bf16.msra.mxu0 0
        %7908 = vmatprep.subr.bf16.mxu0 0
        %7909 = vmatpush1.bf16.msra.mxu0 0
        %7910 = vmatprep.subr.bf16.mxu0 0
        %7911 = vmatpush1.bf16.msra.mxu0 0
        %7912 = vmatprep.subr.bf16.mxu0 0
        %7913 = vmatpush1.bf16.msra.mxu0 0
        %7914 = vmatprep.subr.bf16.mxu0 0
        %7915 = vmatpush1.bf16.msra.mxu0 0
        %7916 = vmatprep.subr.bf16.mxu0 0
        %7917 = vmatpush1.bf16.msra.mxu0 0
        %7918 = vmatprep.subr.bf16.mxu0 0
        %7919 = vmatpush1.bf16.msra.mxu0 0
        %7920 = vmatprep.mubr.bf16.mxu0 0
        %7921 = vmatmul.mubr.bf16.gmra.mrb[0].mxu0 %v7081
        %v7922 = vpop.f32.mrb[0].mxu0
        %v7923 = vadd.f32 %v7850, %v7922
        %v7924 = vpop.f32.mrb[0].mxu0
        %v7925 = vadd.f32 %v7852, %v7924
        %v7926 = vpop.f32.mrb[0].mxu0
        %v7927 = vadd.f32 %v7854, %v7926
        %v7928 = vpop.f32.mrb[0].mxu0
        %v7929 = vadd.f32 %v7856, %v7928
        %7930 = vmatprep.mubr.bf16.mxu0 0
        %7931 = vmatmul.mubr.bf16.gmra.mrb[0].mxu0 %v7084
        %v7932 = vpop.f32.mrb[0].mxu0
        %v7933 = vadd.f32 %v7860, %v7932
        %v7934 = vpop.f32.mrb[0].mxu0
        %v7935 = vadd.f32 %v7862, %v7934
        %v7936 = vpop.f32.mrb[0].mxu0
        %v7937 = vadd.f32 %v7864, %v7936
        %v7938 = vpop.f32.mrb[0].mxu0
        %v7939 = vadd.f32 %v7866, %v7938
        %7940 = vmatprep.mubr.bf16.mxu0 0
        %7941 = vmatmul.mubr.bf16.gmra.mrb[0].mxu0 %v7087
        %v7942 = vpop.f32.mrb[0].mxu0
        %v7943 = vadd.f32 %v7870, %v7942
        %v7944 = vpop.f32.mrb[0].mxu0
        %v7945 = vadd.f32 %v7872, %v7944
        %v7946 = vpop.f32.mrb[0].mxu0
        %v7947 = vadd.f32 %v7874, %v7946
        %v7948 = vpop.f32.mrb[0].mxu0
        %v7949 = vadd.f32 %v7876, %v7948
        %7950 = vmatprep.mubr.bf16.mxu0 0
        %7951 = vmatmul.mubr.bf16.gmra.mrb[0].mxu0 %v7090
        %v7952 = vpop.f32.mrb[0].mxu0
        %v7953 = vadd.f32 %v7880, %v7952
        %v7954 = vpop.f32.mrb[0].mxu0
        %v7955 = vadd.f32 %v7882, %v7954
        %v7956 = vpop.f32.mrb[0].mxu0
        %v7957 = vadd.f32 %v7884, %v7956
        %v7958 = vpop.f32.mrb[0].mxu0
        %v7959 = vadd.f32 %v7886, %v7958
        %7960 = vdwg.mxu0
        %v7961 = vadd.f32 %v6950, %v7488
        %v7962 = vadd.f32 %v6951, %v7490
        %v7963 = vadd.f32 %v6952, %v7492
        %v7964 = vadd.f32 %v6953, %v7494
        %v7965 = vadd.f32 %v6954, %v7498
        %v7966 = vadd.f32 %v6955, %v7500
        %v7967 = vadd.f32 %v6956, %v7502
        %v7968 = vadd.f32 %v6957, %v7504
        %v7969 = vadd.f32 %v6958, %v7508
        %v7970 = vadd.f32 %v6959, %v7510
        %v7971 = vadd.f32 %v6960, %v7512
        %v7972 = vadd.f32 %v6961, %v7514
        %v7973 = vadd.f32 %v6962, %v7518
        %v7974 = vadd.f32 %v6963, %v7520
        %v7975 = vadd.f32 %v6964, %v7522
        %v7976 = vadd.f32 %v6965, %v7524
        %v7977 = vadd.f32 %v6966, %v7923
        %v7978 = vadd.f32 %v6967, %v7925
        %v7979 = vadd.f32 %v6968, %v7927
        %v7980 = vadd.f32 %v6969, %v7929
        %v7981 = vadd.f32 %v6970, %v7933
        %v7982 = vadd.f32 %v6971, %v7935
        %v7983 = vadd.f32 %v6972, %v7937
        %v7984 = vadd.f32 %v6973, %v7939
        %v7985 = vadd.f32 %v6974, %v7943
        %v7986 = vadd.f32 %v6975, %v7945
        %v7987 = vadd.f32 %v6976, %v7947
        %v7988 = vadd.f32 %v6977, %v7949
        %v7989 = vadd.f32 %v6978, %v7953
        %v7990 = vadd.f32 %v6979, %v7955
        %v7991 = vadd.f32 %v6980, %v7957
        %v7992 = vadd.f32 %v6981, %v7959
        %v7993 = vrot.slane %v4015, 4
        %v7994 = vrot.slane %v4018, 4
        %v7995 = vsel %vm920, %v7993, %v7994
        %v7996 = vrot.slane %v4016, 4
        %v7997 = vrot.slane %v4019, 4
        %v7998 = vsel %vm920, %v7996, %v7997
        %v7999 = vrot.slane %v4017, 4
        %v8000 = vrot.slane %v4020, 4
        %v8001 = vsel %vm920, %v7999, %v8000
        %v8002 = vrot.slane %v4021, 4
        %v8003 = vrot.slane %v4024, 4
        %v8004 = vsel %vm920, %v8002, %v8003
        %v8005 = vrot.slane %v4022, 4
        %v8006 = vrot.slane %v4025, 4
        %v8007 = vsel %vm920, %v8005, %v8006
        %v8008 = vrot.slane %v4023, 4
        %v8009 = vrot.slane %v4026, 4
        %v8010 = vsel %vm920, %v8008, %v8009
        %v8011 = vrot.slane %v4027, 4
        %v8012 = vrot.slane %v4030, 4
        %v8013 = vsel %vm920, %v8011, %v8012
        %v8014 = vrot.slane %v4028, 4
        %v8015 = vrot.slane %v4031, 4
        %v8016 = vsel %vm920, %v8014, %v8015
        %v8017 = vrot.slane %v4029, 4
        %v8018 = vrot.slane %v4032, 4
        %v8019 = vsel %vm920, %v8017, %v8018
        %v8020 = vrot.slane %v4033, 4
        %v8021 = vrot.slane %v4036, 4
        %v8022 = vsel %vm920, %v8020, %v8021
        %v8023 = vrot.slane %v4034, 4
        %v8024 = vrot.slane %v4037, 4
        %v8025 = vsel %vm920, %v8023, %v8024
        %v8026 = vrot.slane %v4035, 4
        %v8027 = vrot.slane %v4038, 4
        %v8028 = vsel %vm920, %v8026, %v8027
        %v8029 = vrot.slane %v4039, 4
        %v8030 = vrot.slane %v4042, 4
        %v8031 = vsel %vm920, %v8029, %v8030
        %v8032 = vrot.slane %v4040, 4
        %v8033 = vrot.slane %v4043, 4
        %v8034 = vsel %vm920, %v8032, %v8033
        %v8035 = vrot.slane %v4041, 4
        %v8036 = vrot.slane %v4044, 4
        %v8037 = vsel %vm920, %v8035, %v8036
        %v8038 = vrot.slane %v4045, 4
        %v8039 = vrot.slane %v4048, 4
        %v8040 = vsel %vm920, %v8038, %v8039
        %v8041 = vrot.slane %v4046, 4
        %v8042 = vrot.slane %v4049, 4
        %v8043 = vsel %vm920, %v8041, %v8042
        %v8044 = vrot.slane %v4047, 4
        %v8045 = vrot.slane %v4050, 4
        %v8046 = vsel %vm920, %v8044, %v8045
        %v8047 = vrot.slane %v4051, 4
        %v8048 = vrot.slane %v4054, 4
        %v8049 = vsel %vm920, %v8047, %v8048
        %v8050 = vrot.slane %v4052, 4
        %v8051 = vrot.slane %v4055, 4
        %v8052 = vsel %vm920, %v8050, %v8051
        %v8053 = vrot.slane %v4053, 4
        %v8054 = vrot.slane %v4056, 4
        %v8055 = vsel %vm920, %v8053, %v8054
        %v8056 = vrot.slane %v4057, 4
        %v8057 = vrot.slane %v4060, 4
        %v8058 = vsel %vm920, %v8056, %v8057
        %v8059 = vrot.slane %v4058, 4
        %v8060 = vrot.slane %v4061, 4
        %v8061 = vsel %vm920, %v8059, %v8060
        %v8062 = vrot.slane %v4059, 4
        %v8063 = vrot.slane %v4062, 4
        %v8064 = vsel %vm920, %v8062, %v8063
        %v8089 = vpack.c.bf16 %v8004, %v7995
        %v8090 = vpack.c.bf16 %v8007, %v7998
        %v8091 = vpack.c.bf16 %v8010, %v8001
        %v8092 = vpack.c.bf16 %v8022, %v8013
        %v8093 = vpack.c.bf16 %v8025, %v8016
        %v8094 = vpack.c.bf16 %v8028, %v8019
        %v8095 = vpack.c.bf16 %v8040, %v8031
        %v8096 = vpack.c.bf16 %v8043, %v8034
        %v8097 = vpack.c.bf16 %v8046, %v8037
        %v8098 = vpack.c.bf16 %v8058, %v8049
        %v8099 = vpack.c.bf16 %v8061, %v8052
        %v8100 = vpack.c.bf16 %v8064, %v8055
        %s8101 = scalar_lea.vmem %s2, 3072
        %v8102 = vld [vmem:[%s8101] sm:$0xff]
        %v8103 = vld [vmem:[%s8101 + $0x8] sm:$0xff]
        %v8104 = vld [vmem:[%s8101 + $0x10] sm:$0xff]
        %v8105 = vld [vmem:[%s8101 + $0x18] sm:$0xff]
        %v8106 = vld [vmem:[%s8101 + $0x20] sm:$0xff]
        %v8107 = vld [vmem:[%s8101 + $0x28] sm:$0xff]
        %v8108 = vld [vmem:[%s8101 + $0x30] sm:$0xff]
        %v8109 = vld [vmem:[%s8101 + $0x38] sm:$0xff]
        %v8110 = vld [vmem:[%s8101 + $0x40] sm:$0xff]
        %v8111 = vld [vmem:[%s8101 + $0x48] sm:$0xff]
        %v8112 = vld [vmem:[%s8101 + $0x50] sm:$0xff]
        %v8113 = vld [vmem:[%s8101 + $0x58] sm:$0xff]
        %v8114 = vld [vmem:[%s8101 + $0x60] sm:$0xff]
        %v8115 = vld [vmem:[%s8101 + $0x68] sm:$0xff]
        %v8116 = vld [vmem:[%s8101 + $0x70] sm:$0xff]
        %v8117 = vld [vmem:[%s8101 + $0x78] sm:$0xff]
        %v8118 = vld [vmem:[%s8101 + $0x80] sm:$0xff]
        %v8119 = vld [vmem:[%s8101 + $0x88] sm:$0xff]
        %v8120 = vld [vmem:[%s8101 + $0x90] sm:$0xff]
        %v8121 = vld [vmem:[%s8101 + $0x98] sm:$0xff]
        %v8122 = vld [vmem:[%s8101 + $0xa0] sm:$0xff]
        %v8123 = vld [vmem:[%s8101 + $0xa8] sm:$0xff]
        %v8124 = vld [vmem:[%s8101 + $0xb0] sm:$0xff]
        %v8125 = vld [vmem:[%s8101 + $0xb8] sm:$0xff]
        %v8126 = vld [vmem:[%s8101 + $0xc0] sm:$0xff]
        %v8127 = vld [vmem:[%s8101 + $0xc8] sm:$0xff]
        %v8128 = vld [vmem:[%s8101 + $0xd0] sm:$0xff]
        %v8129 = vld [vmem:[%s8101 + $0xd8] sm:$0xff]
        %v8130 = vld [vmem:[%s8101 + $0xe0] sm:$0xff]
        %v8131 = vld [vmem:[%s8101 + $0xe8] sm:$0xff]
        %v8132 = vld [vmem:[%s8101 + $0xf0] sm:$0xff]
        %v8133 = vld [vmem:[%s8101 + $0xf8] sm:$0xff]
        %v8134 = vld [vmem:[%s8101 + $0x100] sm:$0xff]
        %v8135 = vld [vmem:[%s8101 + $0x108] sm:$0xff]
        %v8136 = vld [vmem:[%s8101 + $0x110] sm:$0xff]
        %v8137 = vld [vmem:[%s8101 + $0x118] sm:$0xff]
        %v8138 = vld [vmem:[%s8101 + $0x120] sm:$0xff]
        %v8139 = vld [vmem:[%s8101 + $0x128] sm:$0xff]
        %v8140 = vld [vmem:[%s8101 + $0x130] sm:$0xff]
        %v8141 = vld [vmem:[%s8101 + $0x138] sm:$0xff]
        %v8142 = vld [vmem:[%s8101 + $0x140] sm:$0xff]
        %v8143 = vld [vmem:[%s8101 + $0x148] sm:$0xff]
        %v8144 = vld [vmem:[%s8101 + $0x150] sm:$0xff]
        %v8145 = vld [vmem:[%s8101 + $0x158] sm:$0xff]
        %v8146 = vld [vmem:[%s8101 + $0x160] sm:$0xff]
        %v8147 = vld [vmem:[%s8101 + $0x168] sm:$0xff]
        %v8148 = vld [vmem:[%s8101 + $0x170] sm:$0xff]
        %v8149 = vld [vmem:[%s8101 + $0x178] sm:$0xff]
        %v8198 = vunpack.c.l.b16 %v8102
        %v8199 = vunpack.c.h.b16 %v8102
        %v8200 = vunpack.c.l.b16 %v8103
        %v8201 = vunpack.c.h.b16 %v8103
        %v8202 = vunpack.c.l.b16 %v8104
        %v8203 = vunpack.c.h.b16 %v8104
        %v8204 = vunpack.c.l.b16 %v8105
        %v8205 = vunpack.c.h.b16 %v8105
        %v8206 = vunpack.c.l.b16 %v8106
        %v8207 = vunpack.c.h.b16 %v8106
        %v8208 = vunpack.c.l.b16 %v8107
        %v8209 = vunpack.c.h.b16 %v8107
        %v8210 = vunpack.c.l.b16 %v8108
        %v8211 = vunpack.c.h.b16 %v8108
        %v8212 = vunpack.c.l.b16 %v8109
        %v8213 = vunpack.c.h.b16 %v8109
        %v8214 = vunpack.c.l.b16 %v8110
        %v8215 = vunpack.c.h.b16 %v8110
        %v8216 = vunpack.c.l.b16 %v8111
        %v8217 = vunpack.c.h.b16 %v8111
        %v8218 = vunpack.c.l.b16 %v8112
        %v8219 = vunpack.c.h.b16 %v8112
        %v8220 = vunpack.c.l.b16 %v8113
        %v8221 = vunpack.c.h.b16 %v8113
        %v8222 = vunpack.c.l.b16 %v8114
        %v8223 = vunpack.c.h.b16 %v8114
        %v8224 = vunpack.c.l.b16 %v8115
        %v8225 = vunpack.c.h.b16 %v8115
        %v8226 = vunpack.c.l.b16 %v8116
        %v8227 = vunpack.c.h.b16 %v8116
        %v8228 = vunpack.c.l.b16 %v8117
        %v8229 = vunpack.c.h.b16 %v8117
        %v8230 = vunpack.c.l.b16 %v8118
        %v8231 = vunpack.c.h.b16 %v8118
        %v8232 = vunpack.c.l.b16 %v8119
        %v8233 = vunpack.c.h.b16 %v8119
        %v8234 = vunpack.c.l.b16 %v8120
        %v8235 = vunpack.c.h.b16 %v8120
        %v8236 = vunpack.c.l.b16 %v8121
        %v8237 = vunpack.c.h.b16 %v8121
        %v8238 = vunpack.c.l.b16 %v8122
        %v8239 = vunpack.c.h.b16 %v8122
        %v8240 = vunpack.c.l.b16 %v8123
        %v8241 = vunpack.c.h.b16 %v8123
        %v8242 = vunpack.c.l.b16 %v8124
        %v8243 = vunpack.c.h.b16 %v8124
        %v8244 = vunpack.c.l.b16 %v8125
        %v8245 = vunpack.c.h.b16 %v8125
        %v8246 = vunpack.c.l.b16 %v8126
        %v8247 = vunpack.c.h.b16 %v8126
        %v8248 = vunpack.c.l.b16 %v8127
        %v8249 = vunpack.c.h.b16 %v8127
        %v8250 = vunpack.c.l.b16 %v8128
        %v8251 = vunpack.c.h.b16 %v8128
        %v8252 = vunpack.c.l.b16 %v8129
        %v8253 = vunpack.c.h.b16 %v8129
        %v8254 = vunpack.c.l.b16 %v8130
        %v8255 = vunpack.c.h.b16 %v8130
        %v8256 = vunpack.c.l.b16 %v8131
        %v8257 = vunpack.c.h.b16 %v8131
        %v8258 = vunpack.c.l.b16 %v8132
        %v8259 = vunpack.c.h.b16 %v8132
        %v8260 = vunpack.c.l.b16 %v8133
        %v8261 = vunpack.c.h.b16 %v8133
        %v8262 = vunpack.c.l.b16 %v8134
        %v8263 = vunpack.c.h.b16 %v8134
        %v8264 = vunpack.c.l.b16 %v8135
        %v8265 = vunpack.c.h.b16 %v8135
        %v8266 = vunpack.c.l.b16 %v8136
        %v8267 = vunpack.c.h.b16 %v8136
        %v8268 = vunpack.c.l.b16 %v8137
        %v8269 = vunpack.c.h.b16 %v8137
        %v8270 = vunpack.c.l.b16 %v8138
        %v8271 = vunpack.c.h.b16 %v8138
        %v8272 = vunpack.c.l.b16 %v8139
        %v8273 = vunpack.c.h.b16 %v8139
        %v8274 = vunpack.c.l.b16 %v8140
        %v8275 = vunpack.c.h.b16 %v8140
        %v8276 = vunpack.c.l.b16 %v8141
        %v8277 = vunpack.c.h.b16 %v8141
        %v8278 = vunpack.c.l.b16 %v8142
        %v8279 = vunpack.c.h.b16 %v8142
        %v8280 = vunpack.c.l.b16 %v8143
        %v8281 = vunpack.c.h.b16 %v8143
        %v8282 = vunpack.c.l.b16 %v8144
        %v8283 = vunpack.c.h.b16 %v8144
        %v8284 = vunpack.c.l.b16 %v8145
        %v8285 = vunpack.c.h.b16 %v8145
        %v8286 = vunpack.c.l.b16 %v8146
        %v8287 = vunpack.c.h.b16 %v8146
        %v8288 = vunpack.c.l.b16 %v8147
        %v8289 = vunpack.c.h.b16 %v8147
        %v8290 = vunpack.c.l.b16 %v8148
        %v8291 = vunpack.c.h.b16 %v8148
        %v8292 = vunpack.c.l.b16 %v8149
        %v8293 = vunpack.c.h.b16 %v8149
        %v8294 = vpack.c.b16 %v8200, %v8198
        %v8295 = vpack.c.b16 %v8201, %v8199
        %v8296 = vpack.c.b16 %v8204, %v8202
        %v8297 = vpack.c.b16 %v8205, %v8203
        %v8298 = vpack.c.b16 %v8208, %v8206
        %v8299 = vpack.c.b16 %v8209, %v8207
        %v8300 = vpack.c.b16 %v8212, %v8210
        %v8301 = vpack.c.b16 %v8213, %v8211
        %v8302 = vpack.c.b16 %v8216, %v8214
        %v8303 = vpack.c.b16 %v8217, %v8215
        %v8304 = vpack.c.b16 %v8220, %v8218
        %v8305 = vpack.c.b16 %v8221, %v8219
        %v8306 = vpack.c.b16 %v8224, %v8222
        %v8307 = vpack.c.b16 %v8225, %v8223
        %v8308 = vpack.c.b16 %v8228, %v8226
        %v8309 = vpack.c.b16 %v8229, %v8227
        %v8310 = vpack.c.b16 %v8232, %v8230
        %v8311 = vpack.c.b16 %v8233, %v8231
        %v8312 = vpack.c.b16 %v8236, %v8234
        %v8313 = vpack.c.b16 %v8237, %v8235
        %v8314 = vpack.c.b16 %v8240, %v8238
        %v8315 = vpack.c.b16 %v8241, %v8239
        %v8316 = vpack.c.b16 %v8244, %v8242
        %v8317 = vpack.c.b16 %v8245, %v8243
        %v8318 = vpack.c.b16 %v8248, %v8246
        %v8319 = vpack.c.b16 %v8249, %v8247
        %v8320 = vpack.c.b16 %v8252, %v8250
        %v8321 = vpack.c.b16 %v8253, %v8251
        %v8322 = vpack.c.b16 %v8256, %v8254
        %v8323 = vpack.c.b16 %v8257, %v8255
        %v8324 = vpack.c.b16 %v8260, %v8258
        %v8325 = vpack.c.b16 %v8261, %v8259
        %v8326 = vpack.c.b16 %v8264, %v8262
        %v8327 = vpack.c.b16 %v8265, %v8263
        %v8328 = vpack.c.b16 %v8268, %v8266
        %v8329 = vpack.c.b16 %v8269, %v8267
        %v8330 = vpack.c.b16 %v8272, %v8270
        %v8331 = vpack.c.b16 %v8273, %v8271
        %v8332 = vpack.c.b16 %v8276, %v8274
        %v8333 = vpack.c.b16 %v8277, %v8275
        %v8334 = vpack.c.b16 %v8280, %v8278
        %v8335 = vpack.c.b16 %v8281, %v8279
        %v8336 = vpack.c.b16 %v8284, %v8282
        %v8337 = vpack.c.b16 %v8285, %v8283
        %v8338 = vpack.c.b16 %v8288, %v8286
        %v8339 = vpack.c.b16 %v8289, %v8287
        %v8340 = vpack.c.b16 %v8292, %v8290
        %v8341 = vpack.c.b16 %v8293, %v8291
        %8390 = vmatprep.subr.bf16.mxu0 %v8295
        %8391 = vmatpush1.bf16.msra.mxu0 %v8294
        %8392 = vmatprep.subr.bf16.mxu0 %v8297
        %8393 = vmatpush1.bf16.msra.mxu0 %v8296
        %8394 = vmatprep.subr.bf16.mxu0 %v8299
        %8395 = vmatpush1.bf16.msra.mxu0 %v8298
        %8396 = vmatprep.subr.bf16.mxu0 %v8301
        %8397 = vmatpush1.bf16.msra.mxu0 %v8300
        %8398 = vmatprep.subr.bf16.mxu0 %v8303
        %8399 = vmatpush1.bf16.msra.mxu0 %v8302
        %8400 = vmatprep.subr.bf16.mxu0 %v8305
        %8401 = vmatpush1.bf16.msra.mxu0 %v8304
        %8402 = vmatprep.subr.bf16.mxu0 %v8307
        %8403 = vmatpush1.bf16.msra.mxu0 %v8306
        %8404 = vmatprep.subr.bf16.mxu0 %v8309
        %8405 = vmatpush1.bf16.msra.mxu0 %v8308
        %8406 = vmatprep.subr.bf16.mxu0 %v8311
        %8407 = vmatpush1.bf16.msra.mxu0 %v8310
        %8408 = vmatprep.subr.bf16.mxu0 %v8313
        %8409 = vmatpush1.bf16.msra.mxu0 %v8312
        %8410 = vmatprep.subr.bf16.mxu0 %v8315
        %8411 = vmatpush1.bf16.msra.mxu0 %v8314
        %8412 = vmatprep.subr.bf16.mxu0 %v8317
        %8413 = vmatpush1.bf16.msra.mxu0 %v8316
        %8414 = vmatprep.subr.bf16.mxu0 %v8319
        %8415 = vmatpush1.bf16.msra.mxu0 %v8318
        %8416 = vmatprep.subr.bf16.mxu0 %v8321
        %8417 = vmatpush1.bf16.msra.mxu0 %v8320
        %8418 = vmatprep.subr.bf16.mxu0 %v8323
        %8419 = vmatpush1.bf16.msra.mxu0 %v8322
        %8420 = vmatprep.subr.bf16.mxu0 %v8325
        %8421 = vmatpush1.bf16.msra.mxu0 %v8324
        %8422 = vmatprep.mubr.bf16.mxu0 %v8090
        %8423 = vmatmul.mubr.bf16.gmra.mrb[0].mxu0 %v8089
        %v8424 = vpop.f32.mrb[0].mxu0
        %v8425 = vadd.f32 0.0, %v8424
        %v8426 = vpop.f32.mrb[0].mxu0
        %v8427 = vadd.f32 0.0, %v8426
        %v8428 = vpop.f32.mrb[0].mxu0
        %v8429 = vadd.f32 0.0, %v8428
        %v8430 = vpop.f32.mrb[0].mxu0
        %v8431 = vadd.f32 0.0, %v8430
        %8432 = vmatprep.mubr.bf16.mxu0 %v8093
        %8433 = vmatmul.mubr.bf16.gmra.mrb[0].mxu0 %v8092
        %v8434 = vpop.f32.mrb[0].mxu0
        %v8435 = vadd.f32 0.0, %v8434
        %v8436 = vpop.f32.mrb[0].mxu0
        %v8437 = vadd.f32 0.0, %v8436
        %v8438 = vpop.f32.mrb[0].mxu0
        %v8439 = vadd.f32 0.0, %v8438
        %v8440 = vpop.f32.mrb[0].mxu0
        %v8441 = vadd.f32 0.0, %v8440
        %8442 = vmatprep.mubr.bf16.mxu0 %v8096
        %8443 = vmatmul.mubr.bf16.gmra.mrb[0].mxu0 %v8095
        %v8444 = vpop.f32.mrb[0].mxu0
        %v8445 = vadd.f32 0.0, %v8444
        %v8446 = vpop.f32.mrb[0].mxu0
        %v8447 = vadd.f32 0.0, %v8446
        %v8448 = vpop.f32.mrb[0].mxu0
        %v8449 = vadd.f32 0.0, %v8448
        %v8450 = vpop.f32.mrb[0].mxu0
        %v8451 = vadd.f32 0.0, %v8450
        %8452 = vmatprep.mubr.bf16.mxu0 %v8099
        %8453 = vmatmul.mubr.bf16.gmra.mrb[0].mxu0 %v8098
        %v8454 = vpop.f32.mrb[0].mxu0
        %v8455 = vadd.f32 0.0, %v8454
        %v8456 = vpop.f32.mrb[0].mxu0
        %v8457 = vadd.f32 0.0, %v8456
        %v8458 = vpop.f32.mrb[0].mxu0
        %v8459 = vadd.f32 0.0, %v8458
        %v8460 = vpop.f32.mrb[0].mxu0
        %v8461 = vadd.f32 0.0, %v8460
        %8462 = vdwg.mxu0
        %8463 = vmatprep.subr.bf16.mxu0 %v8327
        %8464 = vmatpush1.bf16.msra.mxu0 %v8326
        %8465 = vmatprep.subr.bf16.mxu0 %v8329
        %8466 = vmatpush1.bf16.msra.mxu0 %v8328
        %8467 = vmatprep.subr.bf16.mxu0 %v8331
        %8468 = vmatpush1.bf16.msra.mxu0 %v8330
        %8469 = vmatprep.subr.bf16.mxu0 %v8333
        %8470 = vmatpush1.bf16.msra.mxu0 %v8332
        %8471 = vmatprep.subr.bf16.mxu0 %v8335
        %8472 = vmatpush1.bf16.msra.mxu0 %v8334
        %8473 = vmatprep.subr.bf16.mxu0 %v8337
        %8474 = vmatpush1.bf16.msra.mxu0 %v8336
        %8475 = vmatprep.subr.bf16.mxu0 %v8339
        %8476 = vmatpush1.bf16.msra.mxu0 %v8338
        %8477 = vmatprep.subr.bf16.mxu0 %v8341
        %8478 = vmatpush1.bf16.msra.mxu0 %v8340
        %8479 = vmatprep.subr.bf16.mxu0 0
        %8480 = vmatpush1.bf16.msra.mxu0 0
        %8481 = vmatprep.subr.bf16.mxu0 0
        %8482 = vmatpush1.bf16.msra.mxu0 0
        %8483 = vmatprep.subr.bf16.mxu0 0
        %8484 = vmatpush1.bf16.msra.mxu0 0
        %8485 = vmatprep.subr.bf16.mxu0 0
        %8486 = vmatpush1.bf16.msra.mxu0 0
        %8487 = vmatprep.subr.bf16.mxu0 0
        %8488 = vmatpush1.bf16.msra.mxu0 0
        %8489 = vmatprep.subr.bf16.mxu0 0
        %8490 = vmatpush1.bf16.msra.mxu0 0
        %8491 = vmatprep.subr.bf16.mxu0 0
        %8492 = vmatpush1.bf16.msra.mxu0 0
        %8493 = vmatprep.subr.bf16.mxu0 0
        %8494 = vmatpush1.bf16.msra.mxu0 0
        %8495 = vmatprep.mubr.bf16.mxu0 0
        %8496 = vmatmul.mubr.bf16.gmra.mrb[0].mxu0 %v8091
        %v8497 = vpop.f32.mrb[0].mxu0
        %v8498 = vadd.f32 %v8425, %v8497
        %v8499 = vpop.f32.mrb[0].mxu0
        %v8500 = vadd.f32 %v8427, %v8499
        %v8501 = vpop.f32.mrb[0].mxu0
        %v8502 = vadd.f32 %v8429, %v8501
        %v8503 = vpop.f32.mrb[0].mxu0
        %v8504 = vadd.f32 %v8431, %v8503
        %8505 = vmatprep.mubr.bf16.mxu0 0
        %8506 = vmatmul.mubr.bf16.gmra.mrb[0].mxu0 %v8094
        %v8507 = vpop.f32.mrb[0].mxu0
        %v8508 = vadd.f32 %v8435, %v8507
        %v8509 = vpop.f32.mrb[0].mxu0
        %v8510 = vadd.f32 %v8437, %v8509
        %v8511 = vpop.f32.mrb[0].mxu0
        %v8512 = vadd.f32 %v8439, %v8511
        %v8513 = vpop.f32.mrb[0].mxu0
        %v8514 = vadd.f32 %v8441, %v8513
        %8515 = vmatprep.mubr.bf16.mxu0 0
        %8516 = vmatmul.mubr.bf16.gmra.mrb[0].mxu0 %v8097
        %v8517 = vpop.f32.mrb[0].mxu0
        %v8518 = vadd.f32 %v8445, %v8517
        %v8519 = vpop.f32.mrb[0].mxu0
        %v8520 = vadd.f32 %v8447, %v8519
        %v8521 = vpop.f32.mrb[0].mxu0
        %v8522 = vadd.f32 %v8449, %v8521
        %v8523 = vpop.f32.mrb[0].mxu0
        %v8524 = vadd.f32 %v8451, %v8523
        %8525 = vmatprep.mubr.bf16.mxu0 0
        %8526 = vmatmul.mubr.bf16.gmra.mrb[0].mxu0 %v8100
        %v8527 = vpop.f32.mrb[0].mxu0
        %v8528 = vadd.f32 %v8455, %v8527
        %v8529 = vpop.f32.mrb[0].mxu0
        %v8530 = vadd.f32 %v8457, %v8529
        %v8531 = vpop.f32.mrb[0].mxu0
        %v8532 = vadd.f32 %v8459, %v8531
        %v8533 = vpop.f32.mrb[0].mxu0
        %v8534 = vadd.f32 %v8461, %v8533
        %8535 = vdwg.mxu0
        %s8536 = scalar_lea.vmem %s2, 3456
        %v8537 = vld [vmem:[%s8536] sm:$0xff]
        %v8538 = vld [vmem:[%s8536 + $0x8] sm:$0xff]
        %v8539 = vld [vmem:[%s8536 + $0x10] sm:$0xff]
        %v8540 = vld [vmem:[%s8536 + $0x18] sm:$0xff]
        %v8541 = vld [vmem:[%s8536 + $0x20] sm:$0xff]
        %v8542 = vld [vmem:[%s8536 + $0x28] sm:$0xff]
        %v8543 = vld [vmem:[%s8536 + $0x30] sm:$0xff]
        %v8544 = vld [vmem:[%s8536 + $0x38] sm:$0xff]
        %v8545 = vld [vmem:[%s8536 + $0x40] sm:$0xff]
        %v8546 = vld [vmem:[%s8536 + $0x48] sm:$0xff]
        %v8547 = vld [vmem:[%s8536 + $0x50] sm:$0xff]
        %v8548 = vld [vmem:[%s8536 + $0x58] sm:$0xff]
        %v8549 = vld [vmem:[%s8536 + $0x60] sm:$0xff]
        %v8550 = vld [vmem:[%s8536 + $0x68] sm:$0xff]
        %v8551 = vld [vmem:[%s8536 + $0x70] sm:$0xff]
        %v8552 = vld [vmem:[%s8536 + $0x78] sm:$0xff]
        %v8553 = vld [vmem:[%s8536 + $0x80] sm:$0xff]
        %v8554 = vld [vmem:[%s8536 + $0x88] sm:$0xff]
        %v8555 = vld [vmem:[%s8536 + $0x90] sm:$0xff]
        %v8556 = vld [vmem:[%s8536 + $0x98] sm:$0xff]
        %v8557 = vld [vmem:[%s8536 + $0xa0] sm:$0xff]
        %v8558 = vld [vmem:[%s8536 + $0xa8] sm:$0xff]
        %v8559 = vld [vmem:[%s8536 + $0xb0] sm:$0xff]
        %v8560 = vld [vmem:[%s8536 + $0xb8] sm:$0xff]
        %v8561 = vld [vmem:[%s8536 + $0xc0] sm:$0xff]
        %v8562 = vld [vmem:[%s8536 + $0xc8] sm:$0xff]
        %v8563 = vld [vmem:[%s8536 + $0xd0] sm:$0xff]
        %v8564 = vld [vmem:[%s8536 + $0xd8] sm:$0xff]
        %v8565 = vld [vmem:[%s8536 + $0xe0] sm:$0xff]
        %v8566 = vld [vmem:[%s8536 + $0xe8] sm:$0xff]
        %v8567 = vld [vmem:[%s8536 + $0xf0] sm:$0xff]
        %v8568 = vld [vmem:[%s8536 + $0xf8] sm:$0xff]
        %v8569 = vld [vmem:[%s8536 + $0x100] sm:$0xff]
        %v8570 = vld [vmem:[%s8536 + $0x108] sm:$0xff]
        %v8571 = vld [vmem:[%s8536 + $0x110] sm:$0xff]
        %v8572 = vld [vmem:[%s8536 + $0x118] sm:$0xff]
        %v8573 = vld [vmem:[%s8536 + $0x120] sm:$0xff]
        %v8574 = vld [vmem:[%s8536 + $0x128] sm:$0xff]
        %v8575 = vld [vmem:[%s8536 + $0x130] sm:$0xff]
        %v8576 = vld [vmem:[%s8536 + $0x138] sm:$0xff]
        %v8577 = vld [vmem:[%s8536 + $0x140] sm:$0xff]
        %v8578 = vld [vmem:[%s8536 + $0x148] sm:$0xff]
        %v8579 = vld [vmem:[%s8536 + $0x150] sm:$0xff]
        %v8580 = vld [vmem:[%s8536 + $0x158] sm:$0xff]
        %v8581 = vld [vmem:[%s8536 + $0x160] sm:$0xff]
        %v8582 = vld [vmem:[%s8536 + $0x168] sm:$0xff]
        %v8583 = vld [vmem:[%s8536 + $0x170] sm:$0xff]
        %v8584 = vld [vmem:[%s8536 + $0x178] sm:$0xff]
        %v8633 = vunpack.c.l.b16 %v8537
        %v8634 = vunpack.c.h.b16 %v8537
        %v8635 = vunpack.c.l.b16 %v8538
        %v8636 = vunpack.c.h.b16 %v8538
        %v8637 = vunpack.c.l.b16 %v8539
        %v8638 = vunpack.c.h.b16 %v8539
        %v8639 = vunpack.c.l.b16 %v8540
        %v8640 = vunpack.c.h.b16 %v8540
        %v8641 = vunpack.c.l.b16 %v8541
        %v8642 = vunpack.c.h.b16 %v8541
        %v8643 = vunpack.c.l.b16 %v8542
        %v8644 = vunpack.c.h.b16 %v8542
        %v8645 = vunpack.c.l.b16 %v8543
        %v8646 = vunpack.c.h.b16 %v8543
        %v8647 = vunpack.c.l.b16 %v8544
        %v8648 = vunpack.c.h.b16 %v8544
        %v8649 = vunpack.c.l.b16 %v8545
        %v8650 = vunpack.c.h.b16 %v8545
        %v8651 = vunpack.c.l.b16 %v8546
        %v8652 = vunpack.c.h.b16 %v8546
        %v8653 = vunpack.c.l.b16 %v8547
        %v8654 = vunpack.c.h.b16 %v8547
        %v8655 = vunpack.c.l.b16 %v8548
        %v8656 = vunpack.c.h.b16 %v8548
        %v8657 = vunpack.c.l.b16 %v8549
        %v8658 = vunpack.c.h.b16 %v8549
        %v8659 = vunpack.c.l.b16 %v8550
        %v8660 = vunpack.c.h.b16 %v8550
        %v8661 = vunpack.c.l.b16 %v8551
        %v8662 = vunpack.c.h.b16 %v8551
        %v8663 = vunpack.c.l.b16 %v8552
        %v8664 = vunpack.c.h.b16 %v8552
        %v8665 = vunpack.c.l.b16 %v8553
        %v8666 = vunpack.c.h.b16 %v8553
        %v8667 = vunpack.c.l.b16 %v8554
        %v8668 = vunpack.c.h.b16 %v8554
        %v8669 = vunpack.c.l.b16 %v8555
        %v8670 = vunpack.c.h.b16 %v8555
        %v8671 = vunpack.c.l.b16 %v8556
        %v8672 = vunpack.c.h.b16 %v8556
        %v8673 = vunpack.c.l.b16 %v8557
        %v8674 = vunpack.c.h.b16 %v8557
        %v8675 = vunpack.c.l.b16 %v8558
        %v8676 = vunpack.c.h.b16 %v8558
        %v8677 = vunpack.c.l.b16 %v8559
        %v8678 = vunpack.c.h.b16 %v8559
        %v8679 = vunpack.c.l.b16 %v8560
        %v8680 = vunpack.c.h.b16 %v8560
        %v8681 = vunpack.c.l.b16 %v8561
        %v8682 = vunpack.c.h.b16 %v8561
        %v8683 = vunpack.c.l.b16 %v8562
        %v8684 = vunpack.c.h.b16 %v8562
        %v8685 = vunpack.c.l.b16 %v8563
        %v8686 = vunpack.c.h.b16 %v8563
        %v8687 = vunpack.c.l.b16 %v8564
        %v8688 = vunpack.c.h.b16 %v8564
        %v8689 = vunpack.c.l.b16 %v8565
        %v8690 = vunpack.c.h.b16 %v8565
        %v8691 = vunpack.c.l.b16 %v8566
        %v8692 = vunpack.c.h.b16 %v8566
        %v8693 = vunpack.c.l.b16 %v8567
        %v8694 = vunpack.c.h.b16 %v8567
        %v8695 = vunpack.c.l.b16 %v8568
        %v8696 = vunpack.c.h.b16 %v8568
        %v8697 = vunpack.c.l.b16 %v8569
        %v8698 = vunpack.c.h.b16 %v8569
        %v8699 = vunpack.c.l.b16 %v8570
        %v8700 = vunpack.c.h.b16 %v8570
        %v8701 = vunpack.c.l.b16 %v8571
        %v8702 = vunpack.c.h.b16 %v8571
        %v8703 = vunpack.c.l.b16 %v8572
        %v8704 = vunpack.c.h.b16 %v8572
        %v8705 = vunpack.c.l.b16 %v8573
        %v8706 = vunpack.c.h.b16 %v8573
        %v8707 = vunpack.c.l.b16 %v8574
        %v8708 = vunpack.c.h.b16 %v8574
        %v8709 = vunpack.c.l.b16 %v8575
        %v8710 = vunpack.c.h.b16 %v8575
        %v8711 = vunpack.c.l.b16 %v8576
        %v8712 = vunpack.c.h.b16 %v8576
        %v8713 = vunpack.c.l.b16 %v8577
        %v8714 = vunpack.c.h.b16 %v8577
        %v8715 = vunpack.c.l.b16 %v8578
        %v8716 = vunpack.c.h.b16 %v8578
        %v8717 = vunpack.c.l.b16 %v8579
        %v8718 = vunpack.c.h.b16 %v8579
        %v8719 = vunpack.c.l.b16 %v8580
        %v8720 = vunpack.c.h.b16 %v8580
        %v8721 = vunpack.c.l.b16 %v8581
        %v8722 = vunpack.c.h.b16 %v8581
        %v8723 = vunpack.c.l.b16 %v8582
        %v8724 = vunpack.c.h.b16 %v8582
        %v8725 = vunpack.c.l.b16 %v8583
        %v8726 = vunpack.c.h.b16 %v8583
        %v8727 = vunpack.c.l.b16 %v8584
        %v8728 = vunpack.c.h.b16 %v8584
        %v8729 = vpack.c.b16 %v8635, %v8633
        %v8730 = vpack.c.b16 %v8636, %v8634
        %v8731 = vpack.c.b16 %v8639, %v8637
        %v8732 = vpack.c.b16 %v8640, %v8638
        %v8733 = vpack.c.b16 %v8643, %v8641
        %v8734 = vpack.c.b16 %v8644, %v8642
        %v8735 = vpack.c.b16 %v8647, %v8645
        %v8736 = vpack.c.b16 %v8648, %v8646
        %v8737 = vpack.c.b16 %v8651, %v8649
        %v8738 = vpack.c.b16 %v8652, %v8650
        %v8739 = vpack.c.b16 %v8655, %v8653
        %v8740 = vpack.c.b16 %v8656, %v8654
        %v8741 = vpack.c.b16 %v8659, %v8657
        %v8742 = vpack.c.b16 %v8660, %v8658
        %v8743 = vpack.c.b16 %v8663, %v8661
        %v8744 = vpack.c.b16 %v8664, %v8662
        %v8745 = vpack.c.b16 %v8667, %v8665
        %v8746 = vpack.c.b16 %v8668, %v8666
        %v8747 = vpack.c.b16 %v8671, %v8669
        %v8748 = vpack.c.b16 %v8672, %v8670
        %v8749 = vpack.c.b16 %v8675, %v8673
        %v8750 = vpack.c.b16 %v8676, %v8674
        %v8751 = vpack.c.b16 %v8679, %v8677
        %v8752 = vpack.c.b16 %v8680, %v8678
        %v8753 = vpack.c.b16 %v8683, %v8681
        %v8754 = vpack.c.b16 %v8684, %v8682
        %v8755 = vpack.c.b16 %v8687, %v8685
        %v8756 = vpack.c.b16 %v8688, %v8686
        %v8757 = vpack.c.b16 %v8691, %v8689
        %v8758 = vpack.c.b16 %v8692, %v8690
        %v8759 = vpack.c.b16 %v8695, %v8693
        %v8760 = vpack.c.b16 %v8696, %v8694
        %v8761 = vpack.c.b16 %v8699, %v8697
        %v8762 = vpack.c.b16 %v8700, %v8698
        %v8763 = vpack.c.b16 %v8703, %v8701
        %v8764 = vpack.c.b16 %v8704, %v8702
        %v8765 = vpack.c.b16 %v8707, %v8705
        %v8766 = vpack.c.b16 %v8708, %v8706
        %v8767 = vpack.c.b16 %v8711, %v8709
        %v8768 = vpack.c.b16 %v8712, %v8710
        %v8769 = vpack.c.b16 %v8715, %v8713
        %v8770 = vpack.c.b16 %v8716, %v8714
        %v8771 = vpack.c.b16 %v8719, %v8717
        %v8772 = vpack.c.b16 %v8720, %v8718
        %v8773 = vpack.c.b16 %v8723, %v8721
        %v8774 = vpack.c.b16 %v8724, %v8722
        %v8775 = vpack.c.b16 %v8727, %v8725
        %v8776 = vpack.c.b16 %v8728, %v8726
        %8825 = vmatprep.subr.bf16.mxu0 %v8730
        %8826 = vmatpush1.bf16.msra.mxu0 %v8729
        %8827 = vmatprep.subr.bf16.mxu0 %v8732
        %8828 = vmatpush1.bf16.msra.mxu0 %v8731
        %8829 = vmatprep.subr.bf16.mxu0 %v8734
        %8830 = vmatpush1.bf16.msra.mxu0 %v8733
        %8831 = vmatprep.subr.bf16.mxu0 %v8736
        %8832 = vmatpush1.bf16.msra.mxu0 %v8735
        %8833 = vmatprep.subr.bf16.mxu0 %v8738
        %8834 = vmatpush1.bf16.msra.mxu0 %v8737
        %8835 = vmatprep.subr.bf16.mxu0 %v8740
        %8836 = vmatpush1.bf16.msra.mxu0 %v8739
        %8837 = vmatprep.subr.bf16.mxu0 %v8742
        %8838 = vmatpush1.bf16.msra.mxu0 %v8741
        %8839 = vmatprep.subr.bf16.mxu0 %v8744
        %8840 = vmatpush1.bf16.msra.mxu0 %v8743
        %8841 = vmatprep.subr.bf16.mxu0 %v8746
        %8842 = vmatpush1.bf16.msra.mxu0 %v8745
        %8843 = vmatprep.subr.bf16.mxu0 %v8748
        %8844 = vmatpush1.bf16.msra.mxu0 %v8747
        %8845 = vmatprep.subr.bf16.mxu0 %v8750
        %8846 = vmatpush1.bf16.msra.mxu0 %v8749
        %8847 = vmatprep.subr.bf16.mxu0 %v8752
        %8848 = vmatpush1.bf16.msra.mxu0 %v8751
        %8849 = vmatprep.subr.bf16.mxu0 %v8754
        %8850 = vmatpush1.bf16.msra.mxu0 %v8753
        %8851 = vmatprep.subr.bf16.mxu0 %v8756
        %8852 = vmatpush1.bf16.msra.mxu0 %v8755
        %8853 = vmatprep.subr.bf16.mxu0 %v8758
        %8854 = vmatpush1.bf16.msra.mxu0 %v8757
        %8855 = vmatprep.subr.bf16.mxu0 %v8760
        %8856 = vmatpush1.bf16.msra.mxu0 %v8759
        %8857 = vmatprep.mubr.bf16.mxu0 %v8090
        %8858 = vmatmul.mubr.bf16.gmra.mrb[0].mxu0 %v8089
        %v8859 = vpop.f32.mrb[0].mxu0
        %v8860 = vadd.f32 0.0, %v8859
        %v8861 = vpop.f32.mrb[0].mxu0
        %v8862 = vadd.f32 0.0, %v8861
        %v8863 = vpop.f32.mrb[0].mxu0
        %v8864 = vadd.f32 0.0, %v8863
        %v8865 = vpop.f32.mrb[0].mxu0
        %v8866 = vadd.f32 0.0, %v8865
        %8867 = vmatprep.mubr.bf16.mxu0 %v8093
        %8868 = vmatmul.mubr.bf16.gmra.mrb[0].mxu0 %v8092
        %v8869 = vpop.f32.mrb[0].mxu0
        %v8870 = vadd.f32 0.0, %v8869
        %v8871 = vpop.f32.mrb[0].mxu0
        %v8872 = vadd.f32 0.0, %v8871
        %v8873 = vpop.f32.mrb[0].mxu0
        %v8874 = vadd.f32 0.0, %v8873
        %v8875 = vpop.f32.mrb[0].mxu0
        %v8876 = vadd.f32 0.0, %v8875
        %8877 = vmatprep.mubr.bf16.mxu0 %v8096
        %8878 = vmatmul.mubr.bf16.gmra.mrb[0].mxu0 %v8095
        %v8879 = vpop.f32.mrb[0].mxu0
        %v8880 = vadd.f32 0.0, %v8879
        %v8881 = vpop.f32.mrb[0].mxu0
        %v8882 = vadd.f32 0.0, %v8881
        %v8883 = vpop.f32.mrb[0].mxu0
        %v8884 = vadd.f32 0.0, %v8883
        %v8885 = vpop.f32.mrb[0].mxu0
        %v8886 = vadd.f32 0.0, %v8885
        %8887 = vmatprep.mubr.bf16.mxu0 %v8099
        %8888 = vmatmul.mubr.bf16.gmra.mrb[0].mxu0 %v8098
        %v8889 = vpop.f32.mrb[0].mxu0
        %v8890 = vadd.f32 0.0, %v8889
        %v8891 = vpop.f32.mrb[0].mxu0
        %v8892 = vadd.f32 0.0, %v8891
        %v8893 = vpop.f32.mrb[0].mxu0
        %v8894 = vadd.f32 0.0, %v8893
        %v8895 = vpop.f32.mrb[0].mxu0
        %v8896 = vadd.f32 0.0, %v8895
        %8897 = vdwg.mxu0
        %8898 = vmatprep.subr.bf16.mxu0 %v8762
        %8899 = vmatpush1.bf16.msra.mxu0 %v8761
        %8900 = vmatprep.subr.bf16.mxu0 %v8764
        %8901 = vmatpush1.bf16.msra.mxu0 %v8763
        %8902 = vmatprep.subr.bf16.mxu0 %v8766
        %8903 = vmatpush1.bf16.msra.mxu0 %v8765
        %8904 = vmatprep.subr.bf16.mxu0 %v8768
        %8905 = vmatpush1.bf16.msra.mxu0 %v8767
        %8906 = vmatprep.subr.bf16.mxu0 %v8770
        %8907 = vmatpush1.bf16.msra.mxu0 %v8769
        %8908 = vmatprep.subr.bf16.mxu0 %v8772
        %8909 = vmatpush1.bf16.msra.mxu0 %v8771
        %8910 = vmatprep.subr.bf16.mxu0 %v8774
        %8911 = vmatpush1.bf16.msra.mxu0 %v8773
        %8912 = vmatprep.subr.bf16.mxu0 %v8776
        %8913 = vmatpush1.bf16.msra.mxu0 %v8775
        %8914 = vmatprep.subr.bf16.mxu0 0
        %8915 = vmatpush1.bf16.msra.mxu0 0
        %8916 = vmatprep.subr.bf16.mxu0 0
        %8917 = vmatpush1.bf16.msra.mxu0 0
        %8918 = vmatprep.subr.bf16.mxu0 0
        %8919 = vmatpush1.bf16.msra.mxu0 0
        %8920 = vmatprep.subr.bf16.mxu0 0
        %8921 = vmatpush1.bf16.msra.mxu0 0
        %8922 = vmatprep.subr.bf16.mxu0 0
        %8923 = vmatpush1.bf16.msra.mxu0 0
        %8924 = vmatprep.subr.bf16.mxu0 0
        %8925 = vmatpush1.bf16.msra.mxu0 0
        %8926 = vmatprep.subr.bf16.mxu0 0
        %8927 = vmatpush1.bf16.msra.mxu0 0
        %8928 = vmatprep.subr.bf16.mxu0 0
        %8929 = vmatpush1.bf16.msra.mxu0 0
        %8930 = vmatprep.mubr.bf16.mxu0 0
        %8931 = vmatmul.mubr.bf16.gmra.mrb[0].mxu0 %v8091
        %v8932 = vpop.f32.mrb[0].mxu0
        %v8933 = vadd.f32 %v8860, %v8932
        %v8934 = vpop.f32.mrb[0].mxu0
        %v8935 = vadd.f32 %v8862, %v8934
        %v8936 = vpop.f32.mrb[0].mxu0
        %v8937 = vadd.f32 %v8864, %v8936
        %v8938 = vpop.f32.mrb[0].mxu0
        %v8939 = vadd.f32 %v8866, %v8938
        %8940 = vmatprep.mubr.bf16.mxu0 0
        %8941 = vmatmul.mubr.bf16.gmra.mrb[0].mxu0 %v8094
        %v8942 = vpop.f32.mrb[0].mxu0
        %v8943 = vadd.f32 %v8870, %v8942
        %v8944 = vpop.f32.mrb[0].mxu0
        %v8945 = vadd.f32 %v8872, %v8944
        %v8946 = vpop.f32.mrb[0].mxu0
        %v8947 = vadd.f32 %v8874, %v8946
        %v8948 = vpop.f32.mrb[0].mxu0
        %v8949 = vadd.f32 %v8876, %v8948
        %8950 = vmatprep.mubr.bf16.mxu0 0
        %8951 = vmatmul.mubr.bf16.gmra.mrb[0].mxu0 %v8097
        %v8952 = vpop.f32.mrb[0].mxu0
        %v8953 = vadd.f32 %v8880, %v8952
        %v8954 = vpop.f32.mrb[0].mxu0
        %v8955 = vadd.f32 %v8882, %v8954
        %v8956 = vpop.f32.mrb[0].mxu0
        %v8957 = vadd.f32 %v8884, %v8956
        %v8958 = vpop.f32.mrb[0].mxu0
        %v8959 = vadd.f32 %v8886, %v8958
        %8960 = vmatprep.mubr.bf16.mxu0 0
        %8961 = vmatmul.mubr.bf16.gmra.mrb[0].mxu0 %v8100
        %v8962 = vpop.f32.mrb[0].mxu0
        %v8963 = vadd.f32 %v8890, %v8962
        %v8964 = vpop.f32.mrb[0].mxu0
        %v8965 = vadd.f32 %v8892, %v8964
        %v8966 = vpop.f32.mrb[0].mxu0
        %v8967 = vadd.f32 %v8894, %v8966
        %v8968 = vpop.f32.mrb[0].mxu0
        %v8969 = vadd.f32 %v8896, %v8968
        %8970 = vdwg.mxu0
        %v8971 = vadd.f32 %v7961, %v8498
        %v8972 = vadd.f32 %v7962, %v8500
        %v8973 = vadd.f32 %v7963, %v8502
        %v8974 = vadd.f32 %v7964, %v8504
        %v8975 = vadd.f32 %v7965, %v8508
        %v8976 = vadd.f32 %v7966, %v8510
        %v8977 = vadd.f32 %v7967, %v8512
        %v8978 = vadd.f32 %v7968, %v8514
        %v8979 = vadd.f32 %v7969, %v8518
        %v8980 = vadd.f32 %v7970, %v8520
        %v8981 = vadd.f32 %v7971, %v8522
        %v8982 = vadd.f32 %v7972, %v8524
        %v8983 = vadd.f32 %v7973, %v8528
        %v8984 = vadd.f32 %v7974, %v8530
        %v8985 = vadd.f32 %v7975, %v8532
        %v8986 = vadd.f32 %v7976, %v8534
        %v8987 = vadd.f32 %v7977, %v8933
        %v8988 = vadd.f32 %v7978, %v8935
        %v8989 = vadd.f32 %v7979, %v8937
        %v8990 = vadd.f32 %v7980, %v8939
        %v8991 = vadd.f32 %v7981, %v8943
        %v8992 = vadd.f32 %v7982, %v8945
        %v8993 = vadd.f32 %v7983, %v8947
        %v8994 = vadd.f32 %v7984, %v8949
        %v8995 = vadd.f32 %v7985, %v8953
        %v8996 = vadd.f32 %v7986, %v8955
        %v8997 = vadd.f32 %v7987, %v8957
        %v8998 = vadd.f32 %v7988, %v8959
        %v8999 = vadd.f32 %v7989, %v8963
        %v9000 = vadd.f32 %v7990, %v8965
        %v9001 = vadd.f32 %v7991, %v8967
        %v9002 = vadd.f32 %v7992, %v8969
        %v9003 = vmax.f32 %v8971, %v8987
        %v9004 = vmax.f32 %v8972, %v8988
        %v9005 = vmax.f32 %v8973, %v8989
        %v9006 = vmax.f32 %v8974, %v8990
        %v9007 = vmax.f32 %v8975, %v8991
        %v9008 = vmax.f32 %v8976, %v8992
        %v9009 = vmax.f32 %v8977, %v8993
        %v9010 = vmax.f32 %v8978, %v8994
        %v9011 = vmax.f32 %v8979, %v8995
        %v9012 = vmax.f32 %v8980, %v8996
        %v9013 = vmax.f32 %v8981, %v8997
        %v9014 = vmax.f32 %v8982, %v8998
        %v9015 = vmax.f32 %v8983, %v8999
        %v9016 = vmax.f32 %v8984, %v9000
        %v9017 = vmax.f32 %v8985, %v9001
        %v9018 = vmax.f32 %v8986, %v9002
        %v9019 = vld [vmem:[%s6] sm:$0x3]
        %v9021 = vlaneseq
        %v9022 = vshrl.u32 %v9021, 7
        %v9023 = vsub.s32 0, %v9022
        %v9024 = vrot.slane %v9019, %v9023
        %v9025 = vlaneseq
        %v9026 = vshrl.u32 %v9025, 7
        %v9027 = vsub.s32 1, %v9026
        %v9028 = vrot.slane %v9019, %v9027
        %v9031 = vadd.f32 %v9003, %v9024
        %v9032 = vadd.f32 %v9004, %v9028
        %v9033 = vadd.f32 %v9005, %v9024
        %v9034 = vadd.f32 %v9006, %v9028
        %v9035 = vadd.f32 %v9007, %v9024
        %v9036 = vadd.f32 %v9008, %v9028
        %v9037 = vadd.f32 %v9009, %v9024
        %v9038 = vadd.f32 %v9010, %v9028
        %v9039 = vadd.f32 %v9011, %v9024
        %v9040 = vadd.f32 %v9012, %v9028
        %v9041 = vadd.f32 %v9013, %v9024
        %v9042 = vadd.f32 %v9014, %v9028
        %v9043 = vadd.f32 %v9015, %v9024
        %v9044 = vadd.f32 %v9016, %v9028
        %v9045 = vadd.f32 %v9017, %v9024
        %v9046 = vadd.f32 %v9018, %v9028
        %v9047 = vmax.f32 %v9031, 0.0
        %v9048 = vmax.f32 %v9032, 0.0
        %v9049 = vmax.f32 %v9033, 0.0
        %v9050 = vmax.f32 %v9034, 0.0
        %v9051 = vmax.f32 %v9035, 0.0
        %v9052 = vmax.f32 %v9036, 0.0
        %v9053 = vmax.f32 %v9037, 0.0
        %v9054 = vmax.f32 %v9038, 0.0
        %v9055 = vmax.f32 %v9039, 0.0
        %v9056 = vmax.f32 %v9040, 0.0
        %v9057 = vmax.f32 %v9041, 0.0
        %v9058 = vmax.f32 %v9042, 0.0
        %v9059 = vmax.f32 %v9043, 0.0
        %v9060 = vmax.f32 %v9044, 0.0
        %v9061 = vmax.f32 %v9045, 0.0
        %v9062 = vmax.f32 %v9046, 0.0
        %v9079 = vrot.slane %v9047, 1
        %v9080 = vrot.slane %v9048, 1
        %v9081 = vrot.slane %v9049, 1
        %v9082 = vrot.slane %v9050, 1
        %v9083 = vrot.slane %v9051, 1
        %v9084 = vrot.slane %v9052, 1
        %v9085 = vrot.slane %v9053, 1
        %v9086 = vrot.slane %v9054, 1
        %v9087 = vrot.slane %v9055, 1
        %v9088 = vrot.slane %v9056, 1
        %v9089 = vrot.slane %v9057, 1
        %v9090 = vrot.slane %v9058, 1
        %v9091 = vrot.slane %v9059, 1
        %v9092 = vrot.slane %v9060, 1
        %v9093 = vrot.slane %v9061, 1
        %v9094 = vrot.slane %v9062, 1
        %v9111 = vmax.f32 %v9047, %v9079
        %v9112 = vmax.f32 %v9048, %v9080
        %v9113 = vmax.f32 %v9049, %v9081
        %v9114 = vmax.f32 %v9050, %v9082
        %v9115 = vmax.f32 %v9051, %v9083
        %v9116 = vmax.f32 %v9052, %v9084
        %v9117 = vmax.f32 %v9053, %v9085
        %v9118 = vmax.f32 %v9054, %v9086
        %v9119 = vmax.f32 %v9055, %v9087
        %v9120 = vmax.f32 %v9056, %v9088
        %v9121 = vmax.f32 %v9057, %v9089
        %v9122 = vmax.f32 %v9058, %v9090
        %v9123 = vmax.f32 %v9059, %v9091
        %v9124 = vmax.f32 %v9060, %v9092
        %v9125 = vmax.f32 %v9061, %v9093
        %v9126 = vmax.f32 %v9062, %v9094
        %v9143 = vrot.slane %v9113, 7
        %vm9144 = vcmask 1041409
        %v9145 = vsel %vm9144, %v9143, %v9111
        %v9146 = vrot.slane %v9115, 6
        %vm9147 = vcmask 1042434
        %v9148 = vsel %vm9147, %v9146, %v9145
        %v9149 = vrot.slane %v9117, 5
        %vm9150 = vcmask 1043459
        %v9151 = vsel %vm9150, %v9149, %v9148
        %v9152 = vrot.slane %v9119, 4
        %vm9153 = vcmask 1044484
        %v9154 = vsel %vm9153, %v9152, %v9151
        %v9155 = vrot.slane %v9121, 3
        %vm9156 = vcmask 1045509
        %v9157 = vsel %vm9156, %v9155, %v9154
        %v9158 = vrot.slane %v9123, 2
        %vm9159 = vcmask 1046534
        %v9160 = vsel %vm9159, %v9158, %v9157
        %v9161 = vrot.slane %v9125, 1
        %vm9162 = vcmask 1047559
        %v9163 = vsel %vm9162, %v9161, %v9160
        %v9164 = vrot.slane %v9114, 7
        %v9165 = vsel %vm9144, %v9164, %v9112
        %v9166 = vrot.slane %v9116, 6
        %v9167 = vsel %vm9147, %v9166, %v9165
        %v9168 = vrot.slane %v9118, 5
        %v9169 = vsel %vm9150, %v9168, %v9167
        %v9170 = vrot.slane %v9120, 4
        %v9171 = vsel %vm9153, %v9170, %v9169
        %v9172 = vrot.slane %v9122, 3
        %v9173 = vsel %vm9156, %v9172, %v9171
        %v9174 = vrot.slane %v9124, 2
        %v9175 = vsel %vm9159, %v9174, %v9173
        %v9176 = vrot.slane %v9126, 1
        %v9177 = vsel %vm9162, %v9176, %v9175
        %v9180 = vrot.slane %v9111, 2
        %v9181 = vrot.slane %v9113, 1
        %v9182 = vsel %vm9144, %v9181, %v9180
        %v9183 = vsel %vm9147, %v9115, %v9182
        %v9184 = vrot.slane %v9117, 7
        %v9185 = vsel %vm9150, %v9184, %v9183
        %v9186 = vrot.slane %v9119, 6
        %v9187 = vsel %vm9153, %v9186, %v9185
        %v9188 = vrot.slane %v9121, 5
        %v9189 = vsel %vm9156, %v9188, %v9187
        %v9190 = vrot.slane %v9123, 4
        %v9191 = vsel %vm9159, %v9190, %v9189
        %v9192 = vrot.slane %v9125, 3
        %v9193 = vsel %vm9162, %v9192, %v9191
        %v9194 = vrot.slane %v9112, 2
        %v9195 = vrot.slane %v9114, 1
        %v9196 = vsel %vm9144, %v9195, %v9194
        %v9197 = vsel %vm9147, %v9116, %v9196
        %v9198 = vrot.slane %v9118, 7
        %v9199 = vsel %vm9150, %v9198, %v9197
        %v9200 = vrot.slane %v9120, 6
        %v9201 = vsel %vm9153, %v9200, %v9199
        %v9202 = vrot.slane %v9122, 5
        %v9203 = vsel %vm9156, %v9202, %v9201
        %v9204 = vrot.slane %v9124, 4
        %v9205 = vsel %vm9159, %v9204, %v9203
        %v9206 = vrot.slane %v9126, 3
        %v9207 = vsel %vm9162, %v9206, %v9205
        %v9210 = vrot.slane %v9111, 4
        %v9211 = vrot.slane %v9113, 3
        %v9212 = vsel %vm9144, %v9211, %v9210
        %v9213 = vrot.slane %v9115, 2
        %v9214 = vsel %vm9147, %v9213, %v9212
        %v9215 = vrot.slane %v9117, 1
        %v9216 = vsel %vm9150, %v9215, %v9214
        %v9217 = vsel %vm9153, %v9119, %v9216
        %v9218 = vrot.slane %v9121, 7
        %v9219 = vsel %vm9156, %v9218, %v9217
        %v9220 = vrot.slane %v9123, 6
        %v9221 = vsel %vm9159, %v9220, %v9219
        %v9222 = vrot.slane %v9125, 5
        %v9223 = vsel %vm9162, %v9222, %v9221
        %v9224 = vrot.slane %v9112, 4
        %v9225 = vrot.slane %v9114, 3
        %v9226 = vsel %vm9144, %v9225, %v9224
        %v9227 = vrot.slane %v9116, 2
        %v9228 = vsel %vm9147, %v9227, %v9226
        %v9229 = vrot.slane %v9118, 1
        %v9230 = vsel %vm9150, %v9229, %v9228
        %v9231 = vsel %vm9153, %v9120, %v9230
        %v9232 = vrot.slane %v9122, 7
        %v9233 = vsel %vm9156, %v9232, %v9231
        %v9234 = vrot.slane %v9124, 6
        %v9235 = vsel %vm9159, %v9234, %v9233
        %v9236 = vrot.slane %v9126, 5
        %v9237 = vsel %vm9162, %v9236, %v9235
        %v9240 = vrot.slane %v9111, 6
        %v9241 = vrot.slane %v9113, 5
        %v9242 = vsel %vm9144, %v9241, %v9240
        %v9243 = vrot.slane %v9115, 4
        %v9244 = vsel %vm9147, %v9243, %v9242
        %v9245 = vrot.slane %v9117, 3
        %v9246 = vsel %vm9150, %v9245, %v9244
        %v9247 = vrot.slane %v9119, 2
        %v9248 = vsel %vm9153, %v9247, %v9246
        %v9249 = vrot.slane %v9121, 1
        %v9250 = vsel %vm9156, %v9249, %v9248
        %v9251 = vsel %vm9159, %v9123, %v9250
        %v9252 = vrot.slane %v9125, 7
        %v9253 = vsel %vm9162, %v9252, %v9251
        %v9254 = vrot.slane %v9112, 6
        %v9255 = vrot.slane %v9114, 5
        %v9256 = vsel %vm9144, %v9255, %v9254
        %v9257 = vrot.slane %v9116, 4
        %v9258 = vsel %vm9147, %v9257, %v9256
        %v9259 = vrot.slane %v9118, 3
        %v9260 = vsel %vm9150, %v9259, %v9258
        %v9261 = vrot.slane %v9120, 2
        %v9262 = vsel %vm9153, %v9261, %v9260
        %v9263 = vrot.slane %v9122, 1
        %v9264 = vsel %vm9156, %v9263, %v9262
        %v9265 = vsel %vm9159, %v9124, %v9264
        %v9266 = vrot.slane %v9126, 7
        %v9267 = vsel %vm9162, %v9266, %v9265
        %v9270 = vpack.c.bf16 %v9163, %v9163
        %v9271 = vpack.c.bf16 %v9177, %v9177
        %v9272 = vpack.c.bf16 %v9193, %v9193
        %v9273 = vpack.c.bf16 %v9207, %v9207
        %v9274 = vpack.c.bf16 %v9223, %v9223
        %v9275 = vpack.c.bf16 %v9237, %v9237
        %v9276 = vpack.c.bf16 %v9253, %v9253
        %v9277 = vpack.c.bf16 %v9267, %v9267
        %v9278 = vld [vmem:[%s3] sm:$0xf]
        %v9279 = vld [vmem:[%s3 + $0x4] sm:$0xf]
        %v9280 = vld [vmem:[%s3 + $0x8] sm:$0xf]
        %v9281 = vld [vmem:[%s3 + $0xc] sm:$0xf]
        %v9282 = vld [vmem:[%s3 + $0x10] sm:$0xf]
        %v9283 = vld [vmem:[%s3 + $0x14] sm:$0xf]
        %v9284 = vld [vmem:[%s3 + $0x18] sm:$0xf]
        %v9285 = vld [vmem:[%s3 + $0x1c] sm:$0xf]
        %v9286 = vld [vmem:[%s3 + $0x20] sm:$0xf]
        %v9287 = vld [vmem:[%s3 + $0x24] sm:$0xf]
        %v9288 = vld [vmem:[%s3 + $0x28] sm:$0xf]
        %v9289 = vld [vmem:[%s3 + $0x2c] sm:$0xf]
        %v9290 = vld [vmem:[%s3 + $0x30] sm:$0xf]
        %v9291 = vld [vmem:[%s3 + $0x34] sm:$0xf]
        %v9292 = vld [vmem:[%s3 + $0x38] sm:$0xf]
        %v9293 = vld [vmem:[%s3 + $0x3c] sm:$0xf]
        %v9294 = vld [vmem:[%s3 + $0x40] sm:$0xf]
        %v9295 = vld [vmem:[%s3 + $0x44] sm:$0xf]
        %v9296 = vld [vmem:[%s3 + $0x48] sm:$0xf]
        %v9297 = vld [vmem:[%s3 + $0x4c] sm:$0xf]
        %v9298 = vld [vmem:[%s3 + $0x50] sm:$0xf]
        %v9299 = vld [vmem:[%s3 + $0x54] sm:$0xf]
        %v9300 = vld [vmem:[%s3 + $0x58] sm:$0xf]
        %v9301 = vld [vmem:[%s3 + $0x5c] sm:$0xf]
        %v9302 = vld [vmem:[%s3 + $0x60] sm:$0xf]
        %v9303 = vld [vmem:[%s3 + $0x64] sm:$0xf]
        %v9304 = vld [vmem:[%s3 + $0x68] sm:$0xf]
        %v9305 = vld [vmem:[%s3 + $0x6c] sm:$0xf]
        %v9306 = vld [vmem:[%s3 + $0x70] sm:$0xf]
        %v9307 = vld [vmem:[%s3 + $0x74] sm:$0xf]
        %v9308 = vld [vmem:[%s3 + $0x78] sm:$0xf]
        %v9309 = vld [vmem:[%s3 + $0x7c] sm:$0xf]
        %v9310 = vld [vmem:[%s3 + $0x80] sm:$0xf]
        %v9311 = vld [vmem:[%s3 + $0x84] sm:$0xf]
        %v9312 = vld [vmem:[%s3 + $0x88] sm:$0xf]
        %v9313 = vld [vmem:[%s3 + $0x8c] sm:$0xf]
        %v9314 = vld [vmem:[%s3 + $0x90] sm:$0xf]
        %v9315 = vld [vmem:[%s3 + $0x94] sm:$0xf]
        %v9316 = vld [vmem:[%s3 + $0x98] sm:$0xf]
        %v9317 = vld [vmem:[%s3 + $0x9c] sm:$0xf]
        %v9318 = vld [vmem:[%s3 + $0xa0] sm:$0xf]
        %v9319 = vld [vmem:[%s3 + $0xa4] sm:$0xf]
        %v9320 = vld [vmem:[%s3 + $0xa8] sm:$0xf]
        %v9321 = vld [vmem:[%s3 + $0xac] sm:$0xf]
        %v9322 = vld [vmem:[%s3 + $0xb0] sm:$0xf]
        %v9323 = vld [vmem:[%s3 + $0xb4] sm:$0xf]
        %v9324 = vld [vmem:[%s3 + $0xb8] sm:$0xf]
        %v9325 = vld [vmem:[%s3 + $0xbc] sm:$0xf]
        %v9326 = vld [vmem:[%s3 + $0xc0] sm:$0xf]
        %v9327 = vld [vmem:[%s3 + $0xc4] sm:$0xf]
        %v9328 = vld [vmem:[%s3 + $0xc8] sm:$0xf]
        %v9329 = vld [vmem:[%s3 + $0xcc] sm:$0xf]
        %v9330 = vld [vmem:[%s3 + $0xd0] sm:$0xf]
        %v9331 = vld [vmem:[%s3 + $0xd4] sm:$0xf]
        %v9332 = vld [vmem:[%s3 + $0xd8] sm:$0xf]
        %v9333 = vld [vmem:[%s3 + $0xdc] sm:$0xf]
        %v9334 = vld [vmem:[%s3 + $0xe0] sm:$0xf]
        %v9335 = vld [vmem:[%s3 + $0xe4] sm:$0xf]
        %v9336 = vld [vmem:[%s3 + $0xe8] sm:$0xf]
        %v9337 = vld [vmem:[%s3 + $0xec] sm:$0xf]
        %v9338 = vld [vmem:[%s3 + $0xf0] sm:$0xf]
        %v9339 = vld [vmem:[%s3 + $0xf4] sm:$0xf]
        %v9340 = vld [vmem:[%s3 + $0xf8] sm:$0xf]
        %v9341 = vld [vmem:[%s3 + $0xfc] sm:$0xf]
        %v9342 = vld [vmem:[%s3 + $0x100] sm:$0xf]
        %v9343 = vld [vmem:[%s3 + $0x104] sm:$0xf]
        %v9344 = vld [vmem:[%s3 + $0x108] sm:$0xf]
        %v9345 = vld [vmem:[%s3 + $0x10c] sm:$0xf]
        %v9346 = vld [vmem:[%s3 + $0x110] sm:$0xf]
        %v9347 = vld [vmem:[%s3 + $0x114] sm:$0xf]
        %v9348 = vld [vmem:[%s3 + $0x118] sm:$0xf]
        %v9349 = vld [vmem:[%s3 + $0x11c] sm:$0xf]
        %v9350 = vld [vmem:[%s3 + $0x120] sm:$0xf]
        %v9351 = vld [vmem:[%s3 + $0x124] sm:$0xf]
        %v9352 = vld [vmem:[%s3 + $0x128] sm:$0xf]
        %v9353 = vld [vmem:[%s3 + $0x12c] sm:$0xf]
        %v9354 = vld [vmem:[%s3 + $0x130] sm:$0xf]
        %v9355 = vld [vmem:[%s3 + $0x134] sm:$0xf]
        %v9356 = vld [vmem:[%s3 + $0x138] sm:$0xf]
        %v9357 = vld [vmem:[%s3 + $0x13c] sm:$0xf]
        %v9358 = vld [vmem:[%s3 + $0x140] sm:$0xf]
        %v9359 = vld [vmem:[%s3 + $0x144] sm:$0xf]
        %v9360 = vld [vmem:[%s3 + $0x148] sm:$0xf]
        %v9361 = vld [vmem:[%s3 + $0x14c] sm:$0xf]
        %v9362 = vld [vmem:[%s3 + $0x150] sm:$0xf]
        %v9363 = vld [vmem:[%s3 + $0x154] sm:$0xf]
        %v9364 = vld [vmem:[%s3 + $0x158] sm:$0xf]
        %v9365 = vld [vmem:[%s3 + $0x15c] sm:$0xf]
        %v9366 = vld [vmem:[%s3 + $0x160] sm:$0xf]
        %v9367 = vld [vmem:[%s3 + $0x164] sm:$0xf]
        %v9368 = vld [vmem:[%s3 + $0x168] sm:$0xf]
        %v9369 = vld [vmem:[%s3 + $0x16c] sm:$0xf]
        %v9370 = vld [vmem:[%s3 + $0x170] sm:$0xf]
        %v9371 = vld [vmem:[%s3 + $0x174] sm:$0xf]
        %v9372 = vld [vmem:[%s3 + $0x178] sm:$0xf]
        %v9373 = vld [vmem:[%s3 + $0x17c] sm:$0xf]
        %v9374 = vld [vmem:[%s3 + $0x180] sm:$0xf]
        %v9375 = vld [vmem:[%s3 + $0x184] sm:$0xf]
        %v9376 = vld [vmem:[%s3 + $0x188] sm:$0xf]
        %v9377 = vld [vmem:[%s3 + $0x18c] sm:$0xf]
        %v9378 = vld [vmem:[%s3 + $0x190] sm:$0xf]
        %v9379 = vld [vmem:[%s3 + $0x194] sm:$0xf]
        %v9380 = vld [vmem:[%s3 + $0x198] sm:$0xf]
        %v9381 = vld [vmem:[%s3 + $0x19c] sm:$0xf]
        %v9382 = vld [vmem:[%s3 + $0x1a0] sm:$0xf]
        %v9383 = vld [vmem:[%s3 + $0x1a4] sm:$0xf]
        %v9384 = vld [vmem:[%s3 + $0x1a8] sm:$0xf]
        %v9385 = vld [vmem:[%s3 + $0x1ac] sm:$0xf]
        %v9386 = vld [vmem:[%s3 + $0x1b0] sm:$0xf]
        %v9387 = vld [vmem:[%s3 + $0x1b4] sm:$0xf]
        %v9388 = vld [vmem:[%s3 + $0x1b8] sm:$0xf]
        %v9389 = vld [vmem:[%s3 + $0x1bc] sm:$0xf]
        %v9390 = vld [vmem:[%s3 + $0x1c0] sm:$0xf]
        %v9391 = vld [vmem:[%s3 + $0x1c4] sm:$0xf]
        %v9392 = vld [vmem:[%s3 + $0x1c8] sm:$0xf]
        %v9393 = vld [vmem:[%s3 + $0x1cc] sm:$0xf]
        %v9394 = vld [vmem:[%s3 + $0x1d0] sm:$0xf]
        %v9395 = vld [vmem:[%s3 + $0x1d4] sm:$0xf]
        %v9396 = vld [vmem:[%s3 + $0x1d8] sm:$0xf]
        %v9397 = vld [vmem:[%s3 + $0x1dc] sm:$0xf]
        %v9398 = vld [vmem:[%s3 + $0x1e0] sm:$0xf]
        %v9399 = vld [vmem:[%s3 + $0x1e4] sm:$0xf]
        %v9400 = vld [vmem:[%s3 + $0x1e8] sm:$0xf]
        %v9401 = vld [vmem:[%s3 + $0x1ec] sm:$0xf]
        %v9402 = vld [vmem:[%s3 + $0x1f0] sm:$0xf]
        %v9403 = vld [vmem:[%s3 + $0x1f4] sm:$0xf]
        %v9404 = vld [vmem:[%s3 + $0x1f8] sm:$0xf]
        %v9405 = vld [vmem:[%s3 + $0x1fc] sm:$0xf]
        %v9406 = vld [vmem:[%s7] sm:$0x1]
        %v9408 = vlaneseq
        %v9409 = vshrl.u32 %v9408, 7
        %v9410 = vsub.s32 0, %v9409
        %v9411 = vrot.slane %v9406, %v9410
        %v9541 = vunpack.c.l.b16 %v9278
        %v9542 = vunpack.c.l.b16 %v9279
        %v9543 = vunpack.c.l.b16 %v9280
        %v9544 = vunpack.c.l.b16 %v9281
        %v9545 = vunpack.c.l.b16 %v9282
        %v9546 = vunpack.c.l.b16 %v9283
        %v9547 = vunpack.c.l.b16 %v9284
        %v9548 = vunpack.c.l.b16 %v9285
        %v9549 = vunpack.c.l.b16 %v9286
        %v9550 = vunpack.c.l.b16 %v9287
        %v9551 = vunpack.c.l.b16 %v9288
        %v9552 = vunpack.c.l.b16 %v9289
        %v9553 = vunpack.c.l.b16 %v9290
        %v9554 = vunpack.c.l.b16 %v9291
        %v9555 = vunpack.c.l.b16 %v9292
        %v9556 = vunpack.c.l.b16 %v9293
        %v9557 = vunpack.c.l.b16 %v9294
        %v9558 = vunpack.c.l.b16 %v9295
        %v9559 = vunpack.c.l.b16 %v9296
        %v9560 = vunpack.c.l.b16 %v9297
        %v9561 = vunpack.c.l.b16 %v9298
        %v9562 = vunpack.c.l.b16 %v9299
        %v9563 = vunpack.c.l.b16 %v9300
        %v9564 = vunpack.c.l.b16 %v9301
        %v9565 = vunpack.c.l.b16 %v9302
        %v9566 = vunpack.c.l.b16 %v9303
        %v9567 = vunpack.c.l.b16 %v9304
        %v9568 = vunpack.c.l.b16 %v9305
        %v9569 = vunpack.c.l.b16 %v9306
        %v9570 = vunpack.c.l.b16 %v9307
        %v9571 = vunpack.c.l.b16 %v9308
        %v9572 = vunpack.c.l.b16 %v9309
        %v9573 = vunpack.c.l.b16 %v9310
        %v9574 = vunpack.c.l.b16 %v9311
        %v9575 = vunpack.c.l.b16 %v9312
        %v9576 = vunpack.c.l.b16 %v9313
        %v9577 = vunpack.c.l.b16 %v9314
        %v9578 = vunpack.c.l.b16 %v9315
        %v9579 = vunpack.c.l.b16 %v9316
        %v9580 = vunpack.c.l.b16 %v9317
        %v9581 = vunpack.c.l.b16 %v9318
        %v9582 = vunpack.c.l.b16 %v9319
        %v9583 = vunpack.c.l.b16 %v9320
        %v9584 = vunpack.c.l.b16 %v9321
        %v9585 = vunpack.c.l.b16 %v9322
        %v9586 = vunpack.c.l.b16 %v9323
        %v9587 = vunpack.c.l.b16 %v9324
        %v9588 = vunpack.c.l.b16 %v9325
        %v9589 = vunpack.c.l.b16 %v9326
        %v9590 = vunpack.c.l.b16 %v9327
        %v9591 = vunpack.c.l.b16 %v9328
        %v9592 = vunpack.c.l.b16 %v9329
        %v9593 = vunpack.c.l.b16 %v9330
        %v9594 = vunpack.c.l.b16 %v9331
        %v9595 = vunpack.c.l.b16 %v9332
        %v9596 = vunpack.c.l.b16 %v9333
        %v9597 = vunpack.c.l.b16 %v9334
        %v9598 = vunpack.c.l.b16 %v9335
        %v9599 = vunpack.c.l.b16 %v9336
        %v9600 = vunpack.c.l.b16 %v9337
        %v9601 = vunpack.c.l.b16 %v9338
        %v9602 = vunpack.c.l.b16 %v9339
        %v9603 = vunpack.c.l.b16 %v9340
        %v9604 = vunpack.c.l.b16 %v9341
        %v9605 = vunpack.c.l.b16 %v9342
        %v9606 = vunpack.c.l.b16 %v9343
        %v9607 = vunpack.c.l.b16 %v9344
        %v9608 = vunpack.c.l.b16 %v9345
        %v9609 = vunpack.c.l.b16 %v9346
        %v9610 = vunpack.c.l.b16 %v9347
        %v9611 = vunpack.c.l.b16 %v9348
        %v9612 = vunpack.c.l.b16 %v9349
        %v9613 = vunpack.c.l.b16 %v9350
        %v9614 = vunpack.c.l.b16 %v9351
        %v9615 = vunpack.c.l.b16 %v9352
        %v9616 = vunpack.c.l.b16 %v9353
        %v9617 = vunpack.c.l.b16 %v9354
        %v9618 = vunpack.c.l.b16 %v9355
        %v9619 = vunpack.c.l.b16 %v9356
        %v9620 = vunpack.c.l.b16 %v9357
        %v9621 = vunpack.c.l.b16 %v9358
        %v9622 = vunpack.c.l.b16 %v9359
        %v9623 = vunpack.c.l.b16 %v9360
        %v9624 = vunpack.c.l.b16 %v9361
        %v9625 = vunpack.c.l.b16 %v9362
        %v9626 = vunpack.c.l.b16 %v9363
        %v9627 = vunpack.c.l.b16 %v9364
        %v9628 = vunpack.c.l.b16 %v9365
        %v9629 = vunpack.c.l.b16 %v9366
        %v9630 = vunpack.c.l.b16 %v9367
        %v9631 = vunpack.c.l.b16 %v9368
        %v9632 = vunpack.c.l.b16 %v9369
        %v9633 = vunpack.c.l.b16 %v9370
        %v9634 = vunpack.c.l.b16 %v9371
        %v9635 = vunpack.c.l.b16 %v9372
        %v9636 = vunpack.c.l.b16 %v9373
        %v9637 = vunpack.c.l.b16 %v9374
        %v9638 = vunpack.c.l.b16 %v9375
        %v9639 = vunpack.c.l.b16 %v9376
        %v9640 = vunpack.c.l.b16 %v9377
        %v9641 = vunpack.c.l.b16 %v9378
        %v9642 = vunpack.c.l.b16 %v9379
        %v9643 = vunpack.c.l.b16 %v9380
        %v9644 = vunpack.c.l.b16 %v9381
        %v9645 = vunpack.c.l.b16 %v9382
        %v9646 = vunpack.c.l.b16 %v9383
        %v9647 = vunpack.c.l.b16 %v9384
        %v9648 = vunpack.c.l.b16 %v9385
        %v9649 = vunpack.c.l.b16 %v9386
        %v9650 = vunpack.c.l.b16 %v9387
        %v9651 = vunpack.c.l.b16 %v9388
        %v9652 = vunpack.c.l.b16 %v9389
        %v9653 = vunpack.c.l.b16 %v9390
        %v9654 = vunpack.c.l.b16 %v9391
        %v9655 = vunpack.c.l.b16 %v9392
        %v9656 = vunpack.c.l.b16 %v9393
        %v9657 = vunpack.c.l.b16 %v9394
        %v9658 = vunpack.c.l.b16 %v9395
        %v9659 = vunpack.c.l.b16 %v9396
        %v9660 = vunpack.c.l.b16 %v9397
        %v9661 = vunpack.c.l.b16 %v9398
        %v9662 = vunpack.c.l.b16 %v9399
        %v9663 = vunpack.c.l.b16 %v9400
        %v9664 = vunpack.c.l.b16 %v9401
        %v9665 = vunpack.c.l.b16 %v9402
        %v9666 = vunpack.c.l.b16 %v9403
        %v9667 = vunpack.c.l.b16 %v9404
        %v9668 = vunpack.c.l.b16 %v9405
        %v9669 = vpack.c.b16 %v9542, %v9541
        %v9670 = vpack.c.b16 %v9544, %v9543
        %v9671 = vpack.c.b16 %v9546, %v9545
        %v9672 = vpack.c.b16 %v9548, %v9547
        %v9673 = vpack.c.b16 %v9550, %v9549
        %v9674 = vpack.c.b16 %v9552, %v9551
        %v9675 = vpack.c.b16 %v9554, %v9553
        %v9676 = vpack.c.b16 %v9556, %v9555
        %v9677 = vpack.c.b16 %v9558, %v9557
        %v9678 = vpack.c.b16 %v9560, %v9559
        %v9679 = vpack.c.b16 %v9562, %v9561
        %v9680 = vpack.c.b16 %v9564, %v9563
        %v9681 = vpack.c.b16 %v9566, %v9565
        %v9682 = vpack.c.b16 %v9568, %v9567
        %v9683 = vpack.c.b16 %v9570, %v9569
        %v9684 = vpack.c.b16 %v9572, %v9571
        %v9685 = vpack.c.b16 %v9574, %v9573
        %v9686 = vpack.c.b16 %v9576, %v9575
        %v9687 = vpack.c.b16 %v9578, %v9577
        %v9688 = vpack.c.b16 %v9580, %v9579
        %v9689 = vpack.c.b16 %v9582, %v9581
        %v9690 = vpack.c.b16 %v9584, %v9583
        %v9691 = vpack.c.b16 %v9586, %v9585
        %v9692 = vpack.c.b16 %v9588, %v9587
        %v9693 = vpack.c.b16 %v9590, %v9589
        %v9694 = vpack.c.b16 %v9592, %v9591
        %v9695 = vpack.c.b16 %v9594, %v9593
        %v9696 = vpack.c.b16 %v9596, %v9595
        %v9697 = vpack.c.b16 %v9598, %v9597
        %v9698 = vpack.c.b16 %v9600, %v9599
        %v9699 = vpack.c.b16 %v9602, %v9601
        %v9700 = vpack.c.b16 %v9604, %v9603
        %v9701 = vpack.c.b16 %v9606, %v9605
        %v9702 = vpack.c.b16 %v9608, %v9607
        %v9703 = vpack.c.b16 %v9610, %v9609
        %v9704 = vpack.c.b16 %v9612, %v9611
        %v9705 = vpack.c.b16 %v9614, %v9613
        %v9706 = vpack.c.b16 %v9616, %v9615
        %v9707 = vpack.c.b16 %v9618, %v9617
        %v9708 = vpack.c.b16 %v9620, %v9619
        %v9709 = vpack.c.b16 %v9622, %v9621
        %v9710 = vpack.c.b16 %v9624, %v9623
        %v9711 = vpack.c.b16 %v9626, %v9625
        %v9712 = vpack.c.b16 %v9628, %v9627
        %v9713 = vpack.c.b16 %v9630, %v9629
        %v9714 = vpack.c.b16 %v9632, %v9631
        %v9715 = vpack.c.b16 %v9634, %v9633
        %v9716 = vpack.c.b16 %v9636, %v9635
        %v9717 = vpack.c.b16 %v9638, %v9637
        %v9718 = vpack.c.b16 %v9640, %v9639
        %v9719 = vpack.c.b16 %v9642, %v9641
        %v9720 = vpack.c.b16 %v9644, %v9643
        %v9721 = vpack.c.b16 %v9646, %v9645
        %v9722 = vpack.c.b16 %v9648, %v9647
        %v9723 = vpack.c.b16 %v9650, %v9649
        %v9724 = vpack.c.b16 %v9652, %v9651
        %v9725 = vpack.c.b16 %v9654, %v9653
        %v9726 = vpack.c.b16 %v9656, %v9655
        %v9727 = vpack.c.b16 %v9658, %v9657
        %v9728 = vpack.c.b16 %v9660, %v9659
        %v9729 = vpack.c.b16 %v9662, %v9661
        %v9730 = vpack.c.b16 %v9664, %v9663
        %v9731 = vpack.c.b16 %v9666, %v9665
        %v9732 = vpack.c.b16 %v9668, %v9667
        %9797 = vmatprep.subr.bf16.mxu0 0
        %9798 = vmatpush1.bf16.msra.mxu0 %v9669
        %9799 = vmatprep.subr.bf16.mxu0 0
        %9800 = vmatpush1.bf16.msra.mxu0 %v9670
        %9801 = vmatprep.subr.bf16.mxu0 0
        %9802 = vmatpush1.bf16.msra.mxu0 %v9671
        %9803 = vmatprep.subr.bf16.mxu0 0
        %9804 = vmatpush1.bf16.msra.mxu0 %v9672
        %9805 = vmatprep.subr.bf16.mxu0 0
        %9806 = vmatpush1.bf16.msra.mxu0 %v9673
        %9807 = vmatprep.subr.bf16.mxu0 0
        %9808 = vmatpush1.bf16.msra.mxu0 %v9674
        %9809 = vmatprep.subr.bf16.mxu0 0
        %9810 = vmatpush1.bf16.msra.mxu0 %v9675
        %9811 = vmatprep.subr.bf16.mxu0 0
        %9812 = vmatpush1.bf16.msra.mxu0 %v9676
        %9813 = vmatprep.subr.bf16.mxu0 0
        %9814 = vmatpush1.bf16.msra.mxu0 %v9677
        %9815 = vmatprep.subr.bf16.mxu0 0
        %9816 = vmatpush1.bf16.msra.mxu0 %v9678
        %9817 = vmatprep.subr.bf16.mxu0 0
        %9818 = vmatpush1.bf16.msra.mxu0 %v9679
        %9819 = vmatprep.subr.bf16.mxu0 0
        %9820 = vmatpush1.bf16.msra.mxu0 %v9680
        %9821 = vmatprep.subr.bf16.mxu0 0
        %9822 = vmatpush1.bf16.msra.mxu0 %v9681
        %9823 = vmatprep.subr.bf16.mxu0 0
        %9824 = vmatpush1.bf16.msra.mxu0 %v9682
        %9825 = vmatprep.subr.bf16.mxu0 0
        %9826 = vmatpush1.bf16.msra.mxu0 %v9683
        %9827 = vmatprep.subr.bf16.mxu0 0
        %9828 = vmatpush1.bf16.msra.mxu0 %v9684
        %9829 = vmatprep.mubr.bf16.mxu0 %v9271
        %9830 = vmatmul.mubr.bf16.gmra.mrb[0].mxu0 %v9270
        %v9831 = vpop.f32.mrb[0].mxu0
        %v9832 = vadd.f32 %v9411, %v9831
        %v9833 = vpop.f32.mrb[0].mxu0
        %v9834 = vpop.f32.mrb[0].mxu0
        %v9835 = vpop.f32.mrb[0].mxu0
        %9836 = vdwg.mxu0
        %9837 = vmatprep.subr.bf16.mxu0 0
        %9838 = vmatpush1.bf16.msra.mxu0 %v9685
        %9839 = vmatprep.subr.bf16.mxu0 0
        %9840 = vmatpush1.bf16.msra.mxu0 %v9686
        %9841 = vmatprep.subr.bf16.mxu0 0
        %9842 = vmatpush1.bf16.msra.mxu0 %v9687
        %9843 = vmatprep.subr.bf16.mxu0 0
        %9844 = vmatpush1.bf16.msra.mxu0 %v9688
        %9845 = vmatprep.subr.bf16.mxu0 0
        %9846 = vmatpush1.bf16.msra.mxu0 %v9689
        %9847 = vmatprep.subr.bf16.mxu0 0
        %9848 = vmatpush1.bf16.msra.mxu0 %v9690
        %9849 = vmatprep.subr.bf16.mxu0 0
        %9850 = vmatpush1.bf16.msra.mxu0 %v9691
        %9851 = vmatprep.subr.bf16.mxu0 0
        %9852 = vmatpush1.bf16.msra.mxu0 %v9692
        %9853 = vmatprep.subr.bf16.mxu0 0
        %9854 = vmatpush1.bf16.msra.mxu0 %v9693
        %9855 = vmatprep.subr.bf16.mxu0 0
        %9856 = vmatpush1.bf16.msra.mxu0 %v9694
        %9857 = vmatprep.subr.bf16.mxu0 0
        %9858 = vmatpush1.bf16.msra.mxu0 %v9695
        %9859 = vmatprep.subr.bf16.mxu0 0
        %9860 = vmatpush1.bf16.msra.mxu0 %v9696
        %9861 = vmatprep.subr.bf16.mxu0 0
        %9862 = vmatpush1.bf16.msra.mxu0 %v9697
        %9863 = vmatprep.subr.bf16.mxu0 0
        %9864 = vmatpush1.bf16.msra.mxu0 %v9698
        %9865 = vmatprep.subr.bf16.mxu0 0
        %9866 = vmatpush1.bf16.msra.mxu0 %v9699
        %9867 = vmatprep.subr.bf16.mxu0 0
        %9868 = vmatpush1.bf16.msra.mxu0 %v9700
        %9869 = vmatprep.mubr.bf16.mxu0 %v9273
        %9870 = vmatmul.mubr.bf16.gmra.mrb[0].mxu0 %v9272
        %v9871 = vpop.f32.mrb[0].mxu0
        %v9872 = vadd.f32 %v9832, %v9871
        %v9873 = vpop.f32.mrb[0].mxu0
        %v9874 = vpop.f32.mrb[0].mxu0
        %v9875 = vpop.f32.mrb[0].mxu0
        %9876 = vdwg.mxu0
        %9877 = vmatprep.subr.bf16.mxu0 0
        %9878 = vmatpush1.bf16.msra.mxu0 %v9701
        %9879 = vmatprep.subr.bf16.mxu0 0
        %9880 = vmatpush1.bf16.msra.mxu0 %v9702
        %9881 = vmatprep.subr.bf16.mxu0 0
        %9882 = vmatpush1.bf16.msra.mxu0 %v9703
        %9883 = vmatprep.subr.bf16.mxu0 0
        %9884 = vmatpush1.bf16.msra.mxu0 %v9704
        %9885 = vmatprep.subr.bf16.mxu0 0
        %9886 = vmatpush1.bf16.msra.mxu0 %v9705
        %9887 = vmatprep.subr.bf16.mxu0 0
        %9888 = vmatpush1.bf16.msra.mxu0 %v9706
        %9889 = vmatprep.subr.bf16.mxu0 0
        %9890 = vmatpush1.bf16.msra.mxu0 %v9707
        %9891 = vmatprep.subr.bf16.mxu0 0
        %9892 = vmatpush1.bf16.msra.mxu0 %v9708
        %9893 = vmatprep.subr.bf16.mxu0 0
        %9894 = vmatpush1.bf16.msra.mxu0 %v9709
        %9895 = vmatprep.subr.bf16.mxu0 0
        %9896 = vmatpush1.bf16.msra.mxu0 %v9710
        %9897 = vmatprep.subr.bf16.mxu0 0
        %9898 = vmatpush1.bf16.msra.mxu0 %v9711
        %9899 = vmatprep.subr.bf16.mxu0 0
        %9900 = vmatpush1.bf16.msra.mxu0 %v9712
        %9901 = vmatprep.subr.bf16.mxu0 0
        %9902 = vmatpush1.bf16.msra.mxu0 %v9713
        %9903 = vmatprep.subr.bf16.mxu0 0
        %9904 = vmatpush1.bf16.msra.mxu0 %v9714
        %9905 = vmatprep.subr.bf16.mxu0 0
        %9906 = vmatpush1.bf16.msra.mxu0 %v9715
        %9907 = vmatprep.subr.bf16.mxu0 0
        %9908 = vmatpush1.bf16.msra.mxu0 %v9716
        %9909 = vmatprep.mubr.bf16.mxu0 %v9275
        %9910 = vmatmul.mubr.bf16.gmra.mrb[0].mxu0 %v9274
        %v9911 = vpop.f32.mrb[0].mxu0
        %v9912 = vadd.f32 %v9872, %v9911
        %v9913 = vpop.f32.mrb[0].mxu0
        %v9914 = vpop.f32.mrb[0].mxu0
        %v9915 = vpop.f32.mrb[0].mxu0
        %9916 = vdwg.mxu0
        %9917 = vmatprep.subr.bf16.mxu0 0
        %9918 = vmatpush1.bf16.msra.mxu0 %v9717
        %9919 = vmatprep.subr.bf16.mxu0 0
        %9920 = vmatpush1.bf16.msra.mxu0 %v9718
        %9921 = vmatprep.subr.bf16.mxu0 0
        %9922 = vmatpush1.bf16.msra.mxu0 %v9719
        %9923 = vmatprep.subr.bf16.mxu0 0
        %9924 = vmatpush1.bf16.msra.mxu0 %v9720
        %9925 = vmatprep.subr.bf16.mxu0 0
        %9926 = vmatpush1.bf16.msra.mxu0 %v9721
        %9927 = vmatprep.subr.bf16.mxu0 0
        %9928 = vmatpush1.bf16.msra.mxu0 %v9722
        %9929 = vmatprep.subr.bf16.mxu0 0
        %9930 = vmatpush1.bf16.msra.mxu0 %v9723
        %9931 = vmatprep.subr.bf16.mxu0 0
        %9932 = vmatpush1.bf16.msra.mxu0 %v9724
        %9933 = vmatprep.subr.bf16.mxu0 0
        %9934 = vmatpush1.bf16.msra.mxu0 %v9725
        %9935 = vmatprep.subr.bf16.mxu0 0
        %9936 = vmatpush1.bf16.msra.mxu0 %v9726
        %9937 = vmatprep.subr.bf16.mxu0 0
        %9938 = vmatpush1.bf16.msra.mxu0 %v9727
        %9939 = vmatprep.subr.bf16.mxu0 0
        %9940 = vmatpush1.bf16.msra.mxu0 %v9728
        %9941 = vmatprep.subr.bf16.mxu0 0
        %9942 = vmatpush1.bf16.msra.mxu0 %v9729
        %9943 = vmatprep.subr.bf16.mxu0 0
        %9944 = vmatpush1.bf16.msra.mxu0 %v9730
        %9945 = vmatprep.subr.bf16.mxu0 0
        %9946 = vmatpush1.bf16.msra.mxu0 %v9731
        %9947 = vmatprep.subr.bf16.mxu0 0
        %9948 = vmatpush1.bf16.msra.mxu0 %v9732
        %9949 = vmatprep.mubr.bf16.mxu0 %v9277
        %9950 = vmatmul.mubr.bf16.gmra.mrb[0].mxu0 %v9276
        %v9951 = vpop.f32.mrb[0].mxu0
        %v9952 = vadd.f32 %v9912, %v9951
        %v9953 = vpop.f32.mrb[0].mxu0
        %v9954 = vpop.f32.mrb[0].mxu0
        %v9955 = vpop.f32.mrb[0].mxu0
        %9956 = vdwg.mxu0
        %v9957 = vmax.f32 %v9952, 0.0
        %v9958 = vpack.c.bf16 %v9957, %v9957
        %v9959 = vld [vmem:[%s4] sm:$0xf]
        %v9960 = vld [vmem:[%s4 + $0x4] sm:$0xf]
        %v9961 = vld [vmem:[%s4 + $0x8] sm:$0xf]
        %v9962 = vld [vmem:[%s4 + $0xc] sm:$0xf]
        %v9963 = vld [vmem:[%s4 + $0x10] sm:$0xf]
        %v9964 = vld [vmem:[%s4 + $0x14] sm:$0xf]
        %v9965 = vld [vmem:[%s4 + $0x18] sm:$0xf]
        %v9966 = vld [vmem:[%s4 + $0x1c] sm:$0xf]
        %v9967 = vld [vmem:[%s4 + $0x20] sm:$0xf]
        %v9968 = vld [vmem:[%s4 + $0x24] sm:$0xf]
        %v9969 = vld [vmem:[%s4 + $0x28] sm:$0xf]
        %v9970 = vld [vmem:[%s4 + $0x2c] sm:$0xf]
        %v9971 = vld [vmem:[%s4 + $0x30] sm:$0xf]
        %v9972 = vld [vmem:[%s4 + $0x34] sm:$0xf]
        %v9973 = vld [vmem:[%s4 + $0x38] sm:$0xf]
        %v9974 = vld [vmem:[%s4 + $0x3c] sm:$0xf]
        %v9975 = vld [vmem:[%s8] sm:$0x1]
        %v9977 = vlaneseq
        %v9978 = vshrl.u32 %v9977, 7
        %v9979 = vsub.s32 0, %v9978
        %v9980 = vrot.slane %v9975, %v9979
        %v9998 = vunpack.c.l.b16 %v9959
        %v9999 = vunpack.c.l.b16 %v9960
        %v10000 = vunpack.c.l.b16 %v9961
        %v10001 = vunpack.c.l.b16 %v9962
        %v10002 = vunpack.c.l.b16 %v9963
        %v10003 = vunpack.c.l.b16 %v9964
        %v10004 = vunpack.c.l.b16 %v9965
        %v10005 = vunpack.c.l.b16 %v9966
        %v10006 = vunpack.c.l.b16 %v9967
        %v10007 = vunpack.c.l.b16 %v9968
        %v10008 = vunpack.c.l.b16 %v9969
        %v10009 = vunpack.c.l.b16 %v9970
        %v10010 = vunpack.c.l.b16 %v9971
        %v10011 = vunpack.c.l.b16 %v9972
        %v10012 = vunpack.c.l.b16 %v9973
        %v10013 = vunpack.c.l.b16 %v9974
        %v10014 = vpack.c.b16 %v9999, %v9998
        %v10015 = vpack.c.b16 %v10001, %v10000
        %v10016 = vpack.c.b16 %v10003, %v10002
        %v10017 = vpack.c.b16 %v10005, %v10004
        %v10018 = vpack.c.b16 %v10007, %v10006
        %v10019 = vpack.c.b16 %v10009, %v10008
        %v10020 = vpack.c.b16 %v10011, %v10010
        %v10021 = vpack.c.b16 %v10013, %v10012
        %10030 = vmatprep.subr.bf16.mxu0 0
        %10031 = vmatpush1.bf16.msra.mxu0 %v10014
        %10032 = vmatprep.subr.bf16.mxu0 0
        %10033 = vmatpush1.bf16.msra.mxu0 %v10015
        %10034 = vmatprep.subr.bf16.mxu0 0
        %10035 = vmatpush1.bf16.msra.mxu0 %v10016
        %10036 = vmatprep.subr.bf16.mxu0 0
        %10037 = vmatpush1.bf16.msra.mxu0 %v10017
        %10038 = vmatprep.subr.bf16.mxu0 0
        %10039 = vmatpush1.bf16.msra.mxu0 %v10018
        %10040 = vmatprep.subr.bf16.mxu0 0
        %10041 = vmatpush1.bf16.msra.mxu0 %v10019
        %10042 = vmatprep.subr.bf16.mxu0 0
        %10043 = vmatpush1.bf16.msra.mxu0 %v10020
        %10044 = vmatprep.subr.bf16.mxu0 0
        %10045 = vmatpush1.bf16.msra.mxu0 %v10021
        %10046 = vmatprep.subr.bf16.mxu0 0
        %10047 = vmatpush1.bf16.msra.mxu0 0
        %10048 = vmatprep.subr.bf16.mxu0 0
        %10049 = vmatpush1.bf16.msra.mxu0 0
        %10050 = vmatprep.subr.bf16.mxu0 0
        %10051 = vmatpush1.bf16.msra.mxu0 0
        %10052 = vmatprep.subr.bf16.mxu0 0
        %10053 = vmatpush1.bf16.msra.mxu0 0
        %10054 = vmatprep.subr.bf16.mxu0 0
        %10055 = vmatpush1.bf16.msra.mxu0 0
        %10056 = vmatprep.subr.bf16.mxu0 0
        %10057 = vmatpush1.bf16.msra.mxu0 0
        %10058 = vmatprep.subr.bf16.mxu0 0
        %10059 = vmatpush1.bf16.msra.mxu0 0
        %10060 = vmatprep.subr.bf16.mxu0 0
        %10061 = vmatpush1.bf16.msra.mxu0 0
        %10062 = vmatprep.mubr.bf16.mxu0 0
        %10063 = vmatmul.mubr.bf16.gmra.mrb[0].mxu0 %v9958
        %v10064 = vpop.f32.mrb[0].mxu0
        %v10065 = vadd.f32 %v9980, %v10064
        %v10066 = vpop.f32.mrb[0].mxu0
        %v10067 = vpop.f32.mrb[0].mxu0
        %v10068 = vpop.f32.mrb[0].mxu0
        %10069 = vdwg.mxu0
        %10070 = vst [vmem:[%s554] sm:$0xff] %v10065
        %s10071 = sand.u32 %s225, 1
        %s10072 = scalar_lea.sflag [#allocation4], %s10071
        %s10073 = sand.u32 %s225, 1
        %s10074 = smul.addr %s10073, 8
        %s10075 = scalar_lea.vmem [#allocation3], %s10074
        // Predicated region
        $region95: #{_fwd.1} parent=89 // pred_check
          %p10076 = pneg %p235
        $region96: #{_fwd.1} parent=89 // pred_check_branch
          %10078 = sbr.rel (%p10076) target = $region98
        $region97: #{_fwd.1} parent=89 // pred_region
          %s10080 = ssub.s32 128, 128
          %10081 = vsyncadd %s10072, %s10080
          %s10082 = smul.addr %s23, 128
          %s10083 = scalar_lea.hbm %s9, %s10082
          %s10085 = sshll.u32 %s10075, 4
          %s10086 = int_to_ptr.vmem [resolvable:$true] %s10085
          %10088 = dma.vmem_to_hbm [thread:$0]  %s10086, 128, %s10083, %s10072
        $region98: #{_fwd.1} parent=89 // pred_fallthru
          _
      $region90: #{_fwd.1} parent=5 // pred_fallthru
        _
      %p10089 = scmp.le.s32.totalorder 2, %s18
      // Predicated region
      $region99: #{_fwd.1} parent=5 // pred_check
        %p10090 = pneg %p10089
      $region100: #{_fwd.1} parent=5 // pred_check_branch
        %10092 = sbr.rel (%p10090) target = $region102
      $region101: #{_fwd.1} parent=5 // pred_region
        %s10093 = ssub.s32 %s18, 2
        // Predicated region
        $region103: #{_fwd.1} parent=101 // pred_check
          %p10094 = pneg %p241
        $region104: #{_fwd.1} parent=101 // pred_check_branch
          %10096 = sbr.rel (%p10094) target = $region106
        $region105: #{_fwd.1} parent=101 // pred_region
          %s10097 = sand.u32 %s226, 1
          %s10098 = scalar_lea.sflag [#allocation4], %s10097
          %s10099 = sand.u32 %s226, 1
          %s10100 = smul.addr %s10099, 8
          %s10101 = scalar_lea.vmem [#allocation3], %s10100
          %10102 = dma.done %s10098, 128
        $region106: #{_fwd.1} parent=101 // pred_fallthru
          _
      $region102: #{_fwd.1} parent=5 // pred_fallthru
        _
    $region6: #{_fwd.1} parent=1 // loop_footer
      %s22 = sadd.s32 1, %s18
    $region7: #{_fwd.1} parent=1 // loop_footer_branch
      %17 = sbr.rel target = $region3
    $region8: #{_fwd.1} parent=1 // loop_exit
      _
    %10103 = vsyncpa [#allocation4], 1
    %s10104 = scalar_lea.sflag [#allocation4], 1
    %10105 = vsyncpa %s10104, 1

</llo_original>
